<compile_context>
chip_gen: v5e
topology: v5e:2x2
jax: 0.10.0
libtpu: 0.0.40
codegen_flags: <defaults>
</compile_context>

<pallas_src>
import jax
import jax.numpy as jnp
from jax.experimental import pallas as pl
from jax.experimental.pallas import tpu as pltpu


def _round_up(x, m):
    return ((x + m - 1) // m) * m


def _pick_tile(m, tile_default):
    """Row tile: multiple of 8, >= 2 grid steps when possible (v7x has 2 TensorCores);
    a single full-extent block only for tiny m (< 16)."""
    if m < 16:
        return m
    return max(8, min(_round_up(tile_default, 8), _round_up(pl.cdiv(m, 2), 8)))


# ---------------------------------------------------------------------------
# Kernel A: fused conv-as-GEMM (single dot over 4 stacked pool groups)
#           + bias + ReLU + 2x2 maxpool epilogue
# ---------------------------------------------------------------------------

def _conv_pool_kernel(p_ref, w_ref, b_ref, o_ref):
    g, tm, k = p_ref.shape                       # g == 4 pool positions
    x = p_ref[...].reshape(g * tm, k)            # free view: tm % 8 == 0
    y = jnp.dot(x, w_ref[...], preferred_element_type=jnp.float32)  # (4*tm, N) f32
    m = y[0:tm]
    for gi in range(1, g):                       # 4-way pool max on the VPU
        m = jnp.maximum(m, y[gi * tm:(gi + 1) * tm])
    o_ref[...] = jnp.maximum(m + b_ref[...], 0.0).astype(o_ref.dtype)


def conv_relu_pool(patches, w, b, *, tile_m=1024):
    """patches: (4, M, K) bf16 im2col groups (one per 2x2 pool position),
    w: (K, N) bf16, b: (1, N) f32 -> pooled+activated conv output (M, N) bf16."""
    G, M, K = patches.shape
    N = w.shape[1]
    tm = _pick_tile(M, tile_m)
    return pl.pallas_call(
        _conv_pool_kernel,
        out_shape=jax.ShapeDtypeStruct((M, N), jnp.bfloat16),
        grid=(pl.cdiv(M, tm),),
        in_specs=[pl.BlockSpec((G, tm, K), lambda i: (0, i, 0)),
                  pl.BlockSpec((K, N), lambda i: (0, 0)),
                  pl.BlockSpec((1, N), lambda i: (0, 0))],
        out_specs=pl.BlockSpec((tm, N), lambda i: (i, 0)),
        compiler_params=pltpu.CompilerParams(
            dimension_semantics=("parallel",),
            # let XLA fuse the im2col slices/concat straight into the patch operand
            allow_input_fusion=[True, False, False]),
    )(patches, w, b)


# ---------------------------------------------------------------------------
# Kernel B: fused fc1 -> ReLU -> fc2 -> ReLU -> fc3 (lane-dense, 128-padded)
# ---------------------------------------------------------------------------

def _mlp_kernel(x_ref, w1_ref, b1_ref, w2_ref, b2_ref, w3_ref, b3_ref, o_ref):
    h = jnp.dot(x_ref[...], w1_ref[...], preferred_element_type=jnp.float32) + b1_ref[...]
    h = jnp.maximum(h, 0.0).astype(w2_ref.dtype)
    h = jnp.dot(h, w2_ref[...], preferred_element_type=jnp.float32) + b2_ref[...]
    h = jnp.maximum(h, 0.0).astype(w3_ref.dtype)
    o = jnp.dot(h, w3_ref[...], preferred_element_type=jnp.float32) + b3_ref[...]
    o_ref[...] = o.astype(o_ref.dtype)


def mlp_head(x, p, *, tile_b=1024):
    """x: (B, 400) bf16 -> (B, 10) f32 (computed as lane-dense (B, 128), sliced)."""
    B, K = x.shape
    N = p["fw3"].shape[1]                        # 128 (padded)
    tb = _pick_tile(B, tile_b)

    def full(arr):
        return pl.BlockSpec(arr.shape, lambda i: (0, 0))

    out = pl.pallas_call(
        _mlp_kernel,
        out_shape=jax.ShapeDtypeStruct((B, N), jnp.float32),
        grid=(pl.cdiv(B, tb),),
        in_specs=[pl.BlockSpec((tb, K), lambda i: (i, 0)),
                  full(p["fw1"]), full(p["fb1"]),
                  full(p["fw2"]), full(p["fb2"]),
                  full(p["fw3"]), full(p["fb3"])],
        out_specs=pl.BlockSpec((tb, N), lambda i: (i, 0)),
        compiler_params=pltpu.CompilerParams(
            dimension_semantics=("parallel",)),
    )(x, p["fw1"], p["fb1"], p["fw2"], p["fb2"], p["fw3"], p["fb3"])
    return out[:, :10]


# ---------------------------------------------------------------------------
# XLA-side glue: im2col split into the four 2x2-pool positions (static slices,
# stacked into one (4, M, K) operand; fusible into the pallas_call input)
# ---------------------------------------------------------------------------

def pooled_patch_groups(x, kh, kw):
    """x: (B, H, W, C) NHWC. Valid conv (kh,kw), stride 1, then 2x2/2 maxpool.
    Returns (4, B*ph*pw, kh*kw*C) patches (one group per pool position), patch
    feature order (kh, kw, C), rows ordered (b, h, w)."""
    B, H, W, C = x.shape
    oh, ow = H - kh + 1, W - kw + 1
    ph, pw = oh // 2, ow // 2
    groups = []
    for dr in range(2):
        for ds in range(2):
            cols = []
            for i in range(kh):
                for j in range(kw):
                    sl = x[:, dr + i: dr + i + 2 * ph: 2,
                              ds + j: ds + j + 2 * pw: 2, :]        # (B, ph, pw, C)
                    cols.append(sl)
            g = jnp.concatenate(cols, axis=-1)                       # (B, ph, pw, kh*kw*C)
            groups.append(g.reshape(B * ph * pw, kh * kw * C))
    return jnp.stack(groups, axis=0), (B, ph, pw)


# ---------------------------------------------------------------------------
# Parameters (deterministic, synthetic — shapes from Net.__init__)
# ---------------------------------------------------------------------------

def _uniform(key, shape, fan_in):
    bound = 1.0 / jnp.sqrt(float(fan_in))
    return jax.random.uniform(key, shape, jnp.float32, -bound, bound)


def init_raw_params(key):
    """PyTorch-layout parameters."""
    ks = jax.random.split(key, 10)
    return dict(
        w1=_uniform(ks[0], (6, 3, 5, 5), 3 * 5 * 5),
        b1=_uniform(ks[1], (6,), 3 * 5 * 5),
        w2=_uniform(ks[2], (16, 6, 5, 5), 6 * 5 * 5),
        b2=_uniform(ks[3], (16,), 6 * 5 * 5),
        fw1=_uniform(ks[4], (120, 400), 400),
        fb1=_uniform(ks[5], (120,), 400),
        fw2=_uniform(ks[6], (84, 120), 120),
        fb2=_uniform(ks[7], (84,), 120),
        fw3=_uniform(ks[8], (10, 84), 84),
        fb3=_uniform(ks[9], (10,), 84),
    )


def prep_params(raw):
    """Kernel-layout parameters: bf16 MXU operands, f32 biases, fc path padded to 128."""
    bf16 = jnp.bfloat16
    # conv weights (O, I, kh, kw) -> (kh*kw*I, O), matching the (kh, kw, C) patch order.
    w1_g = jnp.transpose(raw["w1"], (2, 3, 1, 0)).reshape(5 * 5 * 3, 6).astype(bf16)
    w2_g = jnp.transpose(raw["w2"], (2, 3, 1, 0)).reshape(5 * 5 * 6, 16).astype(bf16)

    # Fold PyTorch's NCHW x.view(-1, 400) ordering into fc1's weight rows, so the
    # conv path hands over an HWC-flattened activation with no runtime transpose.
    idx = jnp.arange(16 * 5 * 5)
    perm = (idx % 16) * 25 + (idx // 16)                  # hwc flat index -> chw flat index
    fw1 = raw["fw1"].T[perm]                              # (400, 120)

    # Zero-pad fc widths 120/84/10 -> 128 for lane-dense intermediates and stores.
    fw1 = jnp.pad(fw1, ((0, 0), (0, 8))).astype(bf16)                 # (400, 128)
    fb1 = jnp.pad(raw["fb1"], (0, 8)).reshape(1, 128)                  # f32
    fw2 = jnp.pad(raw["fw2"].T, ((0, 8), (0, 44))).astype(bf16)        # (128, 128)
    fb2 = jnp.pad(raw["fb2"], (0, 44)).reshape(1, 128)
    fw3 = jnp.pad(raw["fw3"].T, ((0, 44), (0, 118))).astype(bf16)      # (128, 128)
    fb3 = jnp.pad(raw["fb3"], (0, 118)).reshape(1, 128)

    return dict(
        w1=w1_g, b1=raw["b1"].reshape(1, 6),
        w2=w2_g, b2=raw["b2"].reshape(1, 16),
        fw1=fw1, fb1=fb1, fw2=fw2, fb2=fb2, fw3=fw3, fb3=fb3,
    )


# ---------------------------------------------------------------------------
# Forward pass (mirrors Net.forward)
# ---------------------------------------------------------------------------

def net_forward(x_nchw, p, *, tile_m=1024, tile_b=1024):
    B = x_nchw.shape[0]
    x = jnp.transpose(x_nchw, (0, 2, 3, 1)).astype(jnp.bfloat16)    # NCHW -> NHWC, bf16

    # conv1(3->6,5x5) + ReLU + pool1, fused.
    g1, (_, ph, pw) = pooled_patch_groups(x, 5, 5)                  # (4, B*196, 75)
    y = conv_relu_pool(g1, p["w1"], p["b1"], tile_m=tile_m)         # (B*196, 6) bf16
    y = y.reshape(B, ph, pw, 6)                                     # (B, 14, 14, 6)

    # conv2(6->16,5x5) + ReLU + pool2, fused.
    g2, (_, ph, pw) = pooled_patch_groups(y, 5, 5)                  # (4, B*25, 150)
    y = conv_relu_pool(g2, p["w2"], p["b2"], tile_m=tile_m)         # (B*25, 16) bf16

    # HWC-flatten (contiguous, free); PyTorch's CHW view(-1,400) ordering was folded
    # into fc1's weight rows in prep_params().
    y = y.reshape(B, ph * pw * 16)                                  # (B, 400)

    # fc1 -> ReLU -> fc2 -> ReLU -> fc3, fused & lane-dense.
    return mlp_head(y, p, tile_b=tile_b)                            # (B, 10)


# ---------------------------------------------------------------------------
# Pure-JAX f32 reference (mirrors the PyTorch module) for the correctness check
# ---------------------------------------------------------------------------

def reference_forward(x_nchw, raw):
    def conv(x, w, b):
        y = jax.lax.conv_general_dilated(
            x, w, window_strides=(1, 1), padding="VALID",
            dimension_numbers=("NCHW", "OIHW", "NCHW"))
        return jax.nn.relu(y + b[None, :, None, None])

    def pool(x):  # 2x2 / stride 2 max pool on NCHW
        return jnp.maximum(
            jnp.maximum(x[:, :, 0::2, 0::2], x[:, :, 0::2, 1::2]),
            jnp.maximum(x[:, :, 1::2, 0::2], x[:, :, 1::2, 1::2]))

    y = pool(conv(x_nchw, raw["w1"], raw["b1"]))
    y = pool(conv(y, raw["w2"], raw["b2"]))
    y = y.reshape(y.shape[0], -1)                                   # NCHW flatten (= view)
    y = jax.nn.relu(y @ raw["fw1"].T + raw["fb1"])
    y = jax.nn.relu(y @ raw["fw2"].T + raw["fb2"])
    return y @ raw["fw3"].T + raw["fb3"]


if __name__ == "__main__":
    key = jax.random.PRNGKey(0)
    k_param, k_x = jax.random.split(key)
    raw = init_raw_params(k_param)
    params = prep_params(raw)

    # PyTorch conv input layout: NCHW. Net.forward implies (B, 3, 32, 32).
    x = jax.random.normal(k_x, (2, 3, 32, 32), dtype=jnp.float32)

    out = jax.jit(net_forward)(x, params)
    out = jax.block_until_ready(out)
    assert out.shape == (2, 10), out.shape
    assert bool(jnp.all(jnp.isfinite(out)))

    # Tolerance loosened vs the pure-f32 reference because MXU operands are bf16
    # (f32 accumulation); observed error is well under this bound for LeNet scales.
    ref = reference_forward(x, raw)
    max_err = float(jnp.max(jnp.abs(out - ref)))
    assert max_err < 5e-2, f"mismatch vs reference: {max_err}"

    print("KERNEL_OK")
</pallas_src>

<mosaic_0001>
module attributes {stable_mosaic.version = 11 : i64} {
  func.func @_conv_pool_kernel(%arg0: i32, %arg1: memref<4x200x75xbf16, #tpu.memory_space<vmem>>, %arg2: memref<75x6xbf16, #tpu.memory_space<vmem>>, %arg3: memref<1x6xf32, #tpu.memory_space<vmem>>, %arg4: memref<200x6xbf16, #tpu.memory_space<vmem>>) attributes {dimension_semantics = [#tpu.dimension_semantics<parallel>], iteration_bounds = array<i64: 2>, scalar_prefetch = 0 : i64, scratch_operands = 0 : i64, tpu.core_type = #tpu.core_type<tc>, window_params = [{transform_indices = @transform_0, window_bounds = array<i64: 4, 200, 75>}, {pipeline_mode = #tpu.pipeline_mode<synchronous>, transform_indices = @transform_1, window_bounds = array<i64: 75, 6>}, {pipeline_mode = #tpu.pipeline_mode<synchronous>, transform_indices = @transform_2, window_bounds = array<i64: 1, 6>}, {transform_indices = @transform_3, window_bounds = array<i64: 200, 6>}]} {
    %c0 = arith.constant 0 : index
    %c0_0 = arith.constant 0 : index
    %c0_1 = arith.constant 0 : index
    %0 = vector.load %arg1[%c0, %c0_0, %c0_1] : memref<4x200x75xbf16, #tpu.memory_space<vmem>>, vector<4x200x75xbf16>
    %1 = vector.shape_cast %0 : vector<4x200x75xbf16> to vector<800x75xbf16>
    %c0_2 = arith.constant 0 : index
    %c0_3 = arith.constant 0 : index
    %2 = vector.load %arg2[%c0_2, %c0_3] : memref<75x6xbf16, #tpu.memory_space<vmem>>, vector<75x6xbf16>
    %cst = arith.constant dense<0.000000e+00> : vector<800x6xf32>
    %3 = tpu.matmul %1, %2, %cst {dimension_numbers = #tpu.dot_dimension_numbers<[1], [0], [0], [1], [0, 0, 1, 1], [], []>} : vector<800x75xbf16>, vector<75x6xbf16>, vector<800x6xf32> -> vector<800x6xf32>
    %4 = vector.extract_strided_slice %3 {offsets = [0, 0], sizes = [200, 6], strides = [1, 1]} : vector<800x6xf32> to vector<200x6xf32>
    %5 = vector.extract_strided_slice %3 {offsets = [200, 0], sizes = [200, 6], strides = [1, 1]} : vector<800x6xf32> to vector<200x6xf32>
    %6 = arith.maximumf %4, %5 : vector<200x6xf32>
    %7 = vector.extract_strided_slice %3 {offsets = [400, 0], sizes = [200, 6], strides = [1, 1]} : vector<800x6xf32> to vector<200x6xf32>
    %8 = arith.maximumf %6, %7 : vector<200x6xf32>
    %9 = vector.extract_strided_slice %3 {offsets = [600, 0], sizes = [200, 6], strides = [1, 1]} : vector<800x6xf32> to vector<200x6xf32>
    %10 = arith.maximumf %8, %9 : vector<200x6xf32>
    %c0_4 = arith.constant 0 : index
    %c0_5 = arith.constant 0 : index
    %11 = vector.load %arg3[%c0_4, %c0_5] : memref<1x6xf32, #tpu.memory_space<vmem>>, vector<1x6xf32>
    %12 = vector.broadcast %11 : vector<1x6xf32> to vector<200x6xf32>
    %13 = arith.addf %10, %12 : vector<200x6xf32>
    %cst_6 = arith.constant 0.000000e+00 : f32
    %14 = vector.broadcast %cst_6 : f32 to vector<200x6xf32>
    %15 = arith.maximumf %13, %14 : vector<200x6xf32>
    %16 = arith.truncf %15 : vector<200x6xf32> to vector<200x6xbf16>
    %c0_7 = arith.constant 0 : index
    %c0_8 = arith.constant 0 : index
    %17 = vector.load %arg4[%c0_7, %c0_8] : memref<200x6xbf16, #tpu.memory_space<vmem>>, vector<200x6xbf16>
    tpu.vector_store %arg4[%c0_7, %c0_8], %16 {strides = array<i32>} : memref<200x6xbf16, #tpu.memory_space<vmem>>, vector<200x6xbf16>,
    return
  }
  func.func @transform_0(%arg0: i32) -> (i32, i32, i32) {
    %c0_i32 = arith.constant 0 : i32
    %c0_i32_0 = arith.constant 0 : i32
    %c0_i32_1 = arith.constant 0 : i32
    return %c0_i32, %arg0, %c0_i32_0 : i32, i32, i32
  }
  func.func @transform_1(%arg0: i32) -> (i32, i32) {
    %c0_i32 = arith.constant 0 : i32
    %c0_i32_0 = arith.constant 0 : i32
    %c0_i32_1 = arith.constant 0 : i32
    return %c0_i32, %c0_i32_0 : i32, i32
  }
  func.func @transform_2(%arg0: i32) -> (i32, i32) {
    %c0_i32 = arith.constant 0 : i32
    %c0_i32_0 = arith.constant 0 : i32
    %c0_i32_1 = arith.constant 0 : i32
    return %c0_i32, %c0_i32_0 : i32, i32
  }
  func.func @transform_3(%arg0: i32) -> (i32, i32) {
    %c0_i32 = arith.constant 0 : i32
    %c0_i32_0 = arith.constant 0 : i32
    return %arg0, %c0_i32 : i32, i32
  }
}

module attributes {stable_mosaic.version = 11 : i64} {
  func.func @_conv_pool_kernel(%arg0: i32, %arg1: memref<4x32x150xbf16, #tpu.memory_space<vmem>>, %arg2: memref<150x16xbf16, #tpu.memory_space<vmem>>, %arg3: memref<1x16xf32, #tpu.memory_space<vmem>>, %arg4: memref<32x16xbf16, #tpu.memory_space<vmem>>) attributes {dimension_semantics = [#tpu.dimension_semantics<parallel>], iteration_bounds = array<i64: 2>, scalar_prefetch = 0 : i64, scratch_operands = 0 : i64, tpu.core_type = #tpu.core_type<tc>, window_params = [{transform_indices = @transform_0, window_bounds = array<i64: 4, 32, 150>}, {pipeline_mode = #tpu.pipeline_mode<synchronous>, transform_indices = @transform_1, window_bounds = array<i64: 150, 16>}, {pipeline_mode = #tpu.pipeline_mode<synchronous>, transform_indices = @transform_2, window_bounds = array<i64: 1, 16>}, {transform_indices = @transform_3, window_bounds = array<i64: 32, 16>}]} {
    %c0 = arith.constant 0 : index
    %c0_0 = arith.constant 0 : index
    %c0_1 = arith.constant 0 : index
    %0 = vector.load %arg1[%c0, %c0_0, %c0_1] : memref<4x32x150xbf16, #tpu.memory_space<vmem>>, vector<4x32x150xbf16>
    %1 = vector.shape_cast %0 : vector<4x32x150xbf16> to vector<128x150xbf16>
    %c0_2 = arith.constant 0 : index
    %c0_3 = arith.constant 0 : index
    %2 = vector.load %arg2[%c0_2, %c0_3] : memref<150x16xbf16, #tpu.memory_space<vmem>>, vector<150x16xbf16>
    %cst = arith.constant dense<0.000000e+00> : vector<128x16xf32>
    %3 = tpu.matmul %1, %2, %cst {dimension_numbers = #tpu.dot_dimension_numbers<[1], [0], [0], [1], [0, 0, 1, 1], [], []>} : vector<128x150xbf16>, vector<150x16xbf16>, vector<128x16xf32> -> vector<128x16xf32>
    %4 = vector.extract_strided_slice %3 {offsets = [0, 0], sizes = [32, 16], strides = [1, 1]} : vector<128x16xf32> to vector<32x16xf32>
    %5 = vector.extract_strided_slice %3 {offsets = [32, 0], sizes = [32, 16], strides = [1, 1]} : vector<128x16xf32> to vector<32x16xf32>
    %6 = arith.maximumf %4, %5 : vector<32x16xf32>
    %7 = vector.extract_strided_slice %3 {offsets = [64, 0], sizes = [32, 16], strides = [1, 1]} : vector<128x16xf32> to vector<32x16xf32>
    %8 = arith.maximumf %6, %7 : vector<32x16xf32>
    %9 = vector.extract_strided_slice %3 {offsets = [96, 0], sizes = [32, 16], strides = [1, 1]} : vector<128x16xf32> to vector<32x16xf32>
    %10 = arith.maximumf %8, %9 : vector<32x16xf32>
    %c0_4 = arith.constant 0 : index
    %c0_5 = arith.constant 0 : index
    %11 = vector.load %arg3[%c0_4, %c0_5] : memref<1x16xf32, #tpu.memory_space<vmem>>, vector<1x16xf32>
    %12 = vector.broadcast %11 : vector<1x16xf32> to vector<32x16xf32>
    %13 = arith.addf %10, %12 : vector<32x16xf32>
    %cst_6 = arith.constant 0.000000e+00 : f32
    %14 = vector.broadcast %cst_6 : f32 to vector<32x16xf32>
    %15 = arith.maximumf %13, %14 : vector<32x16xf32>
    %16 = arith.truncf %15 : vector<32x16xf32> to vector<32x16xbf16>
    %c0_7 = arith.constant 0 : index
    %c0_8 = arith.constant 0 : index
    %17 = vector.load %arg4[%c0_7, %c0_8] : memref<32x16xbf16, #tpu.memory_space<vmem>>, vector<32x16xbf16>
    tpu.vector_store %arg4[%c0_7, %c0_8], %16 {strides = array<i32>} : memref<32x16xbf16, #tpu.memory_space<vmem>>, vector<32x16xbf16>,
    return
  }
  func.func @transform_0(%arg0: i32) -> (i32, i32, i32) {
    %c0_i32 = arith.constant 0 : i32
    %c0_i32_0 = arith.constant 0 : i32
    %c0_i32_1 = arith.constant 0 : i32
    return %c0_i32, %arg0, %c0_i32_0 : i32, i32, i32
  }
  func.func @transform_1(%arg0: i32) -> (i32, i32) {
    %c0_i32 = arith.constant 0 : i32
    %c0_i32_0 = arith.constant 0 : i32
    %c0_i32_1 = arith.constant 0 : i32
    return %c0_i32, %c0_i32_0 : i32, i32
  }
  func.func @transform_2(%arg0: i32) -> (i32, i32) {
    %c0_i32 = arith.constant 0 : i32
    %c0_i32_0 = arith.constant 0 : i32
    %c0_i32_1 = arith.constant 0 : i32
    return %c0_i32, %c0_i32_0 : i32, i32
  }
  func.func @transform_3(%arg0: i32) -> (i32, i32) {
    %c0_i32 = arith.constant 0 : i32
    %c0_i32_0 = arith.constant 0 : i32
    return %arg0, %c0_i32 : i32, i32
  }
}

module attributes {stable_mosaic.version = 11 : i64} {
  func.func @_mlp_kernel(%arg0: i32, %arg1: memref<2x400xbf16, #tpu.memory_space<vmem>>, %arg2: memref<400x128xbf16, #tpu.memory_space<vmem>>, %arg3: memref<1x128xf32, #tpu.memory_space<vmem>>, %arg4: memref<128x128xbf16, #tpu.memory_space<vmem>>, %arg5: memref<1x128xf32, #tpu.memory_space<vmem>>, %arg6: memref<128x128xbf16, #tpu.memory_space<vmem>>, %arg7: memref<1x128xf32, #tpu.memory_space<vmem>>, %arg8: memref<2x128xf32, #tpu.memory_space<vmem>>) attributes {dimension_semantics = [#tpu.dimension_semantics<parallel>], iteration_bounds = array<i64: 1>, scalar_prefetch = 0 : i64, scratch_operands = 0 : i64, tpu.core_type = #tpu.core_type<tc>, window_params = [{transform_indices = @transform_0, window_bounds = array<i64: 2, 400>}, {pipeline_mode = #tpu.pipeline_mode<synchronous>, transform_indices = @transform_1, window_bounds = array<i64: 400, 128>}, {pipeline_mode = #tpu.pipeline_mode<synchronous>, transform_indices = @transform_2, window_bounds = array<i64: 1, 128>}, {pipeline_mode = #tpu.pipeline_mode<synchronous>, transform_indices = @transform_3, window_bounds = array<i64: 128, 128>}, {pipeline_mode = #tpu.pipeline_mode<synchronous>, transform_indices = @transform_4, window_bounds = array<i64: 1, 128>}, {pipeline_mode = #tpu.pipeline_mode<synchronous>, transform_indices = @transform_5, window_bounds = array<i64: 128, 128>}, {pipeline_mode = #tpu.pipeline_mode<synchronous>, transform_indices = @transform_6, window_bounds = array<i64: 1, 128>}, {transform_indices = @transform_7, window_bounds = array<i64: 2, 128>}]} {
    %c0 = arith.constant 0 : index
    %c0_0 = arith.constant 0 : index
    %0 = vector.load %arg1[%c0, %c0_0] : memref<2x400xbf16, #tpu.memory_space<vmem>>, vector<2x400xbf16>
    %c0_1 = arith.constant 0 : index
    %c0_2 = arith.constant 0 : index
    %1 = vector.load %arg2[%c0_1, %c0_2] : memref<400x128xbf16, #tpu.memory_space<vmem>>, vector<400x128xbf16>
    %cst = arith.constant dense<0.000000e+00> : vector<2x128xf32>
    %2 = tpu.matmul %0, %1, %cst {dimension_numbers = #tpu.dot_dimension_numbers<[1], [0], [0], [1], [0, 0, 1, 1], [], []>} : vector<2x400xbf16>, vector<400x128xbf16>, vector<2x128xf32> -> vector<2x128xf32>
    %c0_3 = arith.constant 0 : index
    %c0_4 = arith.constant 0 : index
    %3 = vector.load %arg3[%c0_3, %c0_4] : memref<1x128xf32, #tpu.memory_space<vmem>>, vector<1x128xf32>
    %4 = vector.broadcast %3 : vector<1x128xf32> to vector<2x128xf32>
    %5 = arith.addf %2, %4 : vector<2x128xf32>
    %cst_5 = arith.constant 0.000000e+00 : f32
    %6 = vector.broadcast %cst_5 : f32 to vector<2x128xf32>
    %7 = arith.maximumf %5, %6 : vector<2x128xf32>
    %8 = arith.truncf %7 : vector<2x128xf32> to vector<2x128xbf16>
    %c0_6 = arith.constant 0 : index
    %c0_7 = arith.constant 0 : index
    %9 = vector.load %arg4[%c0_6, %c0_7] : memref<128x128xbf16, #tpu.memory_space<vmem>>, vector<128x128xbf16>
    %cst_8 = arith.constant dense<0.000000e+00> : vector<2x128xf32>
    %10 = tpu.matmul %8, %9, %cst_8 {dimension_numbers = #tpu.dot_dimension_numbers<[1], [0], [0], [1], [0, 0, 1, 1], [], []>} : vector<2x128xbf16>, vector<128x128xbf16>, vector<2x128xf32> -> vector<2x128xf32>
    %c0_9 = arith.constant 0 : index
    %c0_10 = arith.constant 0 : index
    %11 = vector.load %arg5[%c0_9, %c0_10] : memref<1x128xf32, #tpu.memory_space<vmem>>, vector<1x128xf32>
    %12 = vector.broadcast %11 : vector<1x128xf32> to vector<2x128xf32>
    %13 = arith.addf %10, %12 : vector<2x128xf32>
    %cst_11 = arith.constant 0.000000e+00 : f32
    %14 = vector.broadcast %cst_11 : f32 to vector<2x128xf32>
    %15 = arith.maximumf %13, %14 : vector<2x128xf32>
    %16 = arith.truncf %15 : vector<2x128xf32> to vector<2x128xbf16>
    %c0_12 = arith.constant 0 : index
    %c0_13 = arith.constant 0 : index
    %17 = vector.load %arg6[%c0_12, %c0_13] : memref<128x128xbf16, #tpu.memory_space<vmem>>, vector<128x128xbf16>
    %cst_14 = arith.constant dense<0.000000e+00> : vector<2x128xf32>
    %18 = tpu.matmul %16, %17, %cst_14 {dimension_numbers = #tpu.dot_dimension_numbers<[1], [0], [0], [1], [0, 0, 1, 1], [], []>} : vector<2x128xbf16>, vector<128x128xbf16>, vector<2x128xf32> -> vector<2x128xf32>
    %c0_15 = arith.constant 0 : index
    %c0_16 = arith.constant 0 : index
    %19 = vector.load %arg7[%c0_15, %c0_16] : memref<1x128xf32, #tpu.memory_space<vmem>>, vector<1x128xf32>
    %20 = vector.broadcast %19 : vector<1x128xf32> to vector<2x128xf32>
    %21 = arith.addf %18, %20 : vector<2x128xf32>
    %c0_17 = arith.constant 0 : index
    %c0_18 = arith.constant 0 : index
    %22 = vector.load %arg8[%c0_17, %c0_18] : memref<2x128xf32, #tpu.memory_space<vmem>>, vector<2x128xf32>
    tpu.vector_store %arg8[%c0_17, %c0_18], %21 {strides = array<i32>} : memref<2x128xf32, #tpu.memory_space<vmem>>, vector<2x128xf32>,
    return
  }
  func.func @transform_0(%arg0: i32) -> (i32, i32) {
    %c0_i32 = arith.constant 0 : i32
    %c0_i32_0 = arith.constant 0 : i32
    return %arg0, %c0_i32 : i32, i32
  }
  func.func @transform_1(%arg0: i32) -> (i32, i32) {
    %c0_i32 = arith.constant 0 : i32
    %c0_i32_0 = arith.constant 0 : i32
    %c0_i32_1 = arith.constant 0 : i32
    return %c0_i32, %c0_i32_0 : i32, i32
  }
  func.func @transform_2(%arg0: i32) -> (i32, i32) {
    %c0_i32 = arith.constant 0 : i32
    %c0_i32_0 = arith.constant 0 : i32
    %c0_i32_1 = arith.constant 0 : i32
    return %c0_i32, %c0_i32_0 : i32, i32
  }
  func.func @transform_3(%arg0: i32) -> (i32, i32) {
    %c0_i32 = arith.constant 0 : i32
    %c0_i32_0 = arith.constant 0 : i32
    %c0_i32_1 = arith.constant 0 : i32
    return %c0_i32, %c0_i32_0 : i32, i32
  }
  func.func @transform_4(%arg0: i32) -> (i32, i32) {
    %c0_i32 = arith.constant 0 : i32
    %c0_i32_0 = arith.constant 0 : i32
    %c0_i32_1 = arith.constant 0 : i32
    return %c0_i32, %c0_i32_0 : i32, i32
  }
  func.func @transform_5(%arg0: i32) -> (i32, i32) {
    %c0_i32 = arith.constant 0 : i32
    %c0_i32_0 = arith.constant 0 : i32
    %c0_i32_1 = arith.constant 0 : i32
    return %c0_i32, %c0_i32_0 : i32, i32
  }
  func.func @transform_6(%arg0: i32) -> (i32, i32) {
    %c0_i32 = arith.constant 0 : i32
    %c0_i32_0 = arith.constant 0 : i32
    %c0_i32_1 = arith.constant 0 : i32
    return %c0_i32, %c0_i32_0 : i32, i32
  }
  func.func @transform_7(%arg0: i32) -> (i32, i32) {
    %c0_i32 = arith.constant 0 : i32
    %c0_i32_0 = arith.constant 0 : i32
    return %arg0, %c0_i32 : i32, i32
  }
}

</mosaic_0001>

<llo_original>
// kernel: net_forward.6
$region0: #{net_forward.6}
  #allocation0 [shape = 'u32[]', space=smem, size = 0x4, offset = 0x4, fixed_abs, tag = 'smem constant byte address 0x4 - core index']
  #allocation1 [shape = 'u32[72,128]{1,0:T(1,128)}', space=vmem, size = 0x9000, scoped, tag = 'internal scratch']
  #allocation2 [shape = 'u32[2048]{0}', space=vmem, size = 0x2000, scoped, tag = 'scoped memory for net_forward.6']
  #allocation3 [shape = 'u32[2048]{0}', space=vmem, size = 0x2000, scoped, tag = 'scoped memory for net_forward.6']
  #allocation4 [shape = 'u32[2048]{0}', space=vmem, size = 0x2000, scoped, tag = 'scoped memory for net_forward.6']
  #allocation5 [shape = 'u32[2048]{0}', space=vmem, size = 0x2000, scoped, tag = 'scoped memory for net_forward.6']
  #allocation6 [shape = 'u32[2048]{0}', space=vmem, size = 0x2000, scoped, tag = 'scoped memory for net_forward.6']
  #allocation7 [shape = 'u32[2048]{0}', space=vmem, size = 0x2000, scoped, tag = 'scoped memory for net_forward.6']
  #allocation8 [shape = 'u32[2048]{0}', space=vmem, size = 0x2000, scoped, tag = 'scoped memory for net_forward.6']
  #allocation9 [shape = 'u32[2048]{0}', space=vmem, size = 0x2000, scoped, tag = 'scoped memory for net_forward.6']
  #allocation10 [shape = 'u32[2048]{0}', space=vmem, size = 0x2000, scoped, tag = 'scoped memory for net_forward.6']
  #allocation11 [shape = 'u32[2048]{0}', space=vmem, size = 0x2000, scoped, tag = 'scoped memory for net_forward.6']
  #allocation12 [shape = 'u32[2048]{0}', space=vmem, size = 0x2000, scoped, tag = 'scoped memory for net_forward.6']
  #allocation13 [shape = 'u32[2048]{0}', space=vmem, size = 0x2000, scoped, tag = 'scoped memory for net_forward.6']
  #allocation14 [shape = 'u32[2048]{0}', space=vmem, size = 0x2000, scoped, tag = 'scoped memory for net_forward.6']
  #allocation15 [shape = 'u32[2048]{0}', space=vmem, size = 0x2000, scoped, tag = 'scoped memory for net_forward.6']
  #allocation16 [shape = 'u32[2048]{0}', space=vmem, size = 0x2000, scoped, tag = 'scoped memory for net_forward.6']
  #allocation17 [shape = 'u32[2048]{0}', space=vmem, size = 0x2000, scoped, tag = 'scoped memory for net_forward.6']
  #allocation18 [shape = 'u32[2048]{0}', space=vmem, size = 0x2000, scoped, tag = 'scoped memory for net_forward.6']
  #allocation19 [shape = 'u32[2048]{0}', space=vmem, size = 0x2000, scoped, tag = 'scoped memory for net_forward.6']
  #allocation20 [shape = 'u32[2048]{0}', space=vmem, size = 0x2000, scoped, tag = 'scoped memory for net_forward.6']
  #allocation21 [shape = 'u32[2048]{0}', space=vmem, size = 0x2000, scoped, tag = 'scoped memory for net_forward.6']
  %s0 = inlined_call_operand.vmem [shape: bf16[75,6], index: 0, kind: input, shape index: {}]
  %s1 = inlined_call_operand.vmem [shape: f32[1,6], index: 1, kind: input, shape index: {}]
  %s2 = inlined_call_operand.vmem [shape: bf16[1,392,75], index: 2, kind: input, shape index: {}]
  %s3 = inlined_call_operand.<no memory space> [shape: bf16[], index: 3, kind: input, shape index: {}]
  %s4 = inlined_call_operand.vmem [shape: bf16[1,392,75], index: 4, kind: input, shape index: {}]
  %s5 = inlined_call_operand.vmem [shape: bf16[1,392,75], index: 5, kind: input, shape index: {}]
  %s6 = inlined_call_operand.vmem [shape: bf16[1,392,75], index: 6, kind: input, shape index: {}]
  %s7 = inlined_call_operand.vmem [shape: bf16[392,6], index: 7, kind: output, shape index: {}]
  %s8 = sld [smem:[#allocation0]]
  $region101: #{net_forward.6} parent=0
    _
  %s10 = ssub.s32 1, %s8
  %s11 = scalar_select 0, %s10, %s8
  %v12 = vstv %s3
  %v13 = vunpack.i.l.bf16 %v12
  %v15 = vunpack.i.h.bf16 %v12
  %v17 = vstv %s3
  %v18 = vunpack.i.l.bf16 %v17
  %v20 = vunpack.i.h.bf16 %v17
  %v22 = vstv %s3
  %v23 = vunpack.i.l.bf16 %v22
  %v25 = vunpack.i.h.bf16 %v22
  %v27 = vstv %s3
  %v28 = vunpack.i.l.bf16 %v27
  %v30 = vunpack.i.h.bf16 %v27
  $region1: #{net_forward.6} parent=0
    #allocation22 [shape = 'u8[102400]{0}', space=vmem, size = 0x19000, scoped, tag = 'output window, operand 0']
    loop: start=0, step=1, limit=4
    $region2: #{net_forward.6} parent=1 // loop_pre_header
      _
    $region3: #{net_forward.6} parent=1 // loop_header
      %s33 = sphi 0, %s37
      %p34 = scmp.ge.s32.totalorder %s33, 4
      %s47 = sphi 0, %s49
      %s50 = sphi 0, %s47
      %s51 = sphi 0, %s50
      %s67 = sphi 0, %s51
      %s77 = sphi 0, %s79
      %s80 = sphi 0, %s77
      %s81 = sphi 0, %s80
      %s97 = sphi 0, %s81
      %s107 = sphi 0, %s109
      %s110 = sphi 0, %s107
      %s111 = sphi 0, %s110
      %s127 = sphi 0, %s111
      %s133 = sphi 0, %s135
      %s136 = sphi 0, %s133
      %s137 = sphi 0, %s136
      %s153 = sphi 0, %s137
      %s157 = sphi 0, %s157
      %s159 = sphi 0, %s157
      %s160 = sphi 0, %s159
      %s174 = sphi 0, %s160
      %s178 = sphi 0, %s178
      %s180 = sphi 0, %s178
      %s181 = sphi 0, %s180
      %s195 = sphi 0, %s181
      %s201 = sphi 0, %s203
      %s204 = sphi 0, %s201
      %s205 = sphi 0, %s204
      %s221 = sphi 0, %s205
    $region4: #{net_forward.6} parent=1 // loop_header_branch
      %36 = sbr.rel (%p34) target = $region8
    $region5: #{net_forward.6} parent=1 // loop_body
      %s38 = ssub.s32 %s33, 1
      %s39 = ssub.s32 %s33, 2
      %s40 = sadd.s32 %s33, 1
      %s43 = ssub.s32 0, 0
      %s44 = ssub.s32 %s33, %s40
      %s45 = sor.u32 %s43, %s44
      %p46 = scmp.eq.s32.totalorder %s45, 0
      %s48 = sadd.s32 %s47, 1
      %s49 = scalar_select %p46, %s47, %s48
      %p52 = pneg %p46
      %p53 = scmp.eq.s32.totalorder %s33, 1
      %p54 = por %p52, %p53
      %p55 = scmp.ne.s32.totalorder %s47, %s50
      %p56 = scmp.eq.s32.totalorder %s33, 0
      %p57 = por %p55, %p56
      %p58 = scmp.ne.s32.totalorder %s47, %s50
      %p59 = scmp.eq.s32.totalorder %s38, 1
      %p60 = por %p58, %p59
      %p61 = scmp.ne.s32.totalorder %s50, %s51
      %p62 = scmp.eq.s32.totalorder %s38, 0
      %p63 = por %p61, %p62
      %p64 = scmp.ne.s32.totalorder %s50, %s51
      %p65 = scmp.eq.s32.totalorder %s39, 1
      %p66 = por %p64, %p65
      %p68 = scmp.ne.s32.totalorder %s51, %s67
      %p69 = scmp.eq.s32.totalorder %s39, 0
      %p70 = por %p68, %p69
      %s73 = ssub.s32 0, 0
      %s74 = ssub.s32 %s33, %s40
      %s75 = sor.u32 %s73, %s74
      %p76 = scmp.eq.s32.totalorder %s75, 0
      %s78 = sadd.s32 %s77, 1
      %s79 = scalar_select %p76, %s77, %s78
      %p82 = pneg %p76
      %p83 = scmp.eq.s32.totalorder %s33, 1
      %p84 = por %p82, %p83
      %p85 = scmp.ne.s32.totalorder %s77, %s80
      %p86 = scmp.eq.s32.totalorder %s33, 0
      %p87 = por %p85, %p86
      %p88 = scmp.ne.s32.totalorder %s77, %s80
      %p89 = scmp.eq.s32.totalorder %s38, 1
      %p90 = por %p88, %p89
      %p91 = scmp.ne.s32.totalorder %s80, %s81
      %p92 = scmp.eq.s32.totalorder %s38, 0
      %p93 = por %p91, %p92
      %p94 = scmp.ne.s32.totalorder %s80, %s81
      %p95 = scmp.eq.s32.totalorder %s39, 1
      %p96 = por %p94, %p95
      %p98 = scmp.ne.s32.totalorder %s81, %s97
      %p99 = scmp.eq.s32.totalorder %s39, 0
      %p100 = por %p98, %p99
      %s103 = ssub.s32 0, 0
      %s104 = ssub.s32 %s33, %s40
      %s105 = sor.u32 %s103, %s104
      %p106 = scmp.eq.s32.totalorder %s105, 0
      %s108 = sadd.s32 %s107, 1
      %s109 = scalar_select %p106, %s107, %s108
      %p112 = pneg %p106
      %p113 = scmp.eq.s32.totalorder %s33, 1
      %p114 = por %p112, %p113
      %p115 = scmp.ne.s32.totalorder %s107, %s110
      %p116 = scmp.eq.s32.totalorder %s33, 0
      %p117 = por %p115, %p116
      %p118 = scmp.ne.s32.totalorder %s107, %s110
      %p119 = scmp.eq.s32.totalorder %s38, 1
      %p120 = por %p118, %p119
      %p121 = scmp.ne.s32.totalorder %s110, %s111
      %p122 = scmp.eq.s32.totalorder %s38, 0
      %p123 = por %p121, %p122
      %p124 = scmp.ne.s32.totalorder %s110, %s111
      %p125 = scmp.eq.s32.totalorder %s39, 1
      %p126 = por %p124, %p125
      %p128 = scmp.ne.s32.totalorder %s111, %s127
      %p129 = scmp.eq.s32.totalorder %s39, 0
      %p130 = por %p128, %p129
      %s131 = ssub.s32 %s33, %s40
      %p132 = scmp.eq.s32.totalorder %s131, 0
      %s134 = sadd.s32 %s133, 1
      %s135 = scalar_select %p132, %s133, %s134
      %p138 = pneg %p132
      %p139 = scmp.eq.s32.totalorder %s33, 1
      %p140 = por %p138, %p139
      %p141 = scmp.ne.s32.totalorder %s133, %s136
      %p142 = scmp.eq.s32.totalorder %s33, 0
      %p143 = por %p141, %p142
      %p144 = scmp.ne.s32.totalorder %s133, %s136
      %p145 = scmp.eq.s32.totalorder %s38, 1
      %p146 = por %p144, %p145
      %p147 = scmp.ne.s32.totalorder %s136, %s137
      %p148 = scmp.eq.s32.totalorder %s38, 0
      %p149 = por %p147, %p148
      %p150 = scmp.ne.s32.totalorder %s136, %s137
      %p151 = scmp.eq.s32.totalorder %s39, 1
      %p152 = por %p150, %p151
      %p154 = scmp.ne.s32.totalorder %s137, %s153
      %p155 = scmp.eq.s32.totalorder %s39, 0
      %p156 = por %p154, %p155
      %s158 = sadd.s32 %s157, 1
      %p161 = scmp.eq.s32.totalorder %s33, 1
      %p162 = scmp.ne.s32.totalorder %s157, %s159
      %p163 = scmp.eq.s32.totalorder %s33, 0
      %p164 = por %p162, %p163
      %p165 = scmp.ne.s32.totalorder %s157, %s159
      %p166 = scmp.eq.s32.totalorder %s38, 1
      %p167 = por %p165, %p166
      %p168 = scmp.ne.s32.totalorder %s159, %s160
      %p169 = scmp.eq.s32.totalorder %s38, 0
      %p170 = por %p168, %p169
      %p171 = scmp.ne.s32.totalorder %s159, %s160
      %p172 = scmp.eq.s32.totalorder %s39, 1
      %p173 = por %p171, %p172
      %p175 = scmp.ne.s32.totalorder %s160, %s174
      %p176 = scmp.eq.s32.totalorder %s39, 0
      %p177 = por %p175, %p176
      %s179 = sadd.s32 %s178, 1
      %p182 = scmp.eq.s32.totalorder %s33, 1
      %p183 = scmp.ne.s32.totalorder %s178, %s180
      %p184 = scmp.eq.s32.totalorder %s33, 0
      %p185 = por %p183, %p184
      %p186 = scmp.ne.s32.totalorder %s178, %s180
      %p187 = scmp.eq.s32.totalorder %s38, 1
      %p188 = por %p186, %p187
      %p189 = scmp.ne.s32.totalorder %s180, %s181
      %p190 = scmp.eq.s32.totalorder %s38, 0
      %p191 = por %p189, %p190
      %p192 = scmp.ne.s32.totalorder %s180, %s181
      %p193 = scmp.eq.s32.totalorder %s39, 1
      %p194 = por %p192, %p193
      %p196 = scmp.ne.s32.totalorder %s181, %s195
      %p197 = scmp.eq.s32.totalorder %s39, 0
      %p198 = por %p196, %p197
      %s199 = ssub.s32 %s33, %s40
      %p200 = scmp.eq.s32.totalorder %s199, 0
      %s202 = sadd.s32 %s201, 1
      %s203 = scalar_select %p200, %s201, %s202
      %p206 = pneg %p200
      %p207 = scmp.eq.s32.totalorder %s33, 1
      %p208 = por %p206, %p207
      %p209 = scmp.ne.s32.totalorder %s201, %s204
      %p210 = scmp.eq.s32.totalorder %s33, 0
      %p211 = por %p209, %p210
      %p212 = scmp.ne.s32.totalorder %s201, %s204
      %p213 = scmp.eq.s32.totalorder %s38, 1
      %p214 = por %p212, %p213
      %p215 = scmp.ne.s32.totalorder %s204, %s205
      %p216 = scmp.eq.s32.totalorder %s38, 0
      %p217 = por %p215, %p216
      %p218 = scmp.ne.s32.totalorder %s204, %s205
      %p219 = scmp.eq.s32.totalorder %s39, 1
      %p220 = por %p218, %p219
      %p222 = scmp.ne.s32.totalorder %s205, %s221
      %p223 = scmp.eq.s32.totalorder %s39, 0
      %p224 = por %p222, %p223
      %p225 = scmp.le.s32.totalorder 1, %s33
      %p226 = scmp.lt.s32.totalorder %s33, 3
      %p227 = pnand %p225, %p226
      %p228 = pneg %p227
      // Predicated region
      $region9: #{net_forward.6} parent=5 // pred_check
        _
      $region10: #{net_forward.6} parent=5 // pred_check_branch
        %230 = sbr.rel (%p227) target = $region12
      $region11: #{net_forward.6} parent=5 // pred_region
        %s231 = ssub.s32 %s33, 1
        // Predicated region
        $region13: #{net_forward.6} parent=11 // pred_check
          %p232 = pneg %p170
        $region14: #{net_forward.6} parent=11 // pred_check_branch
          %234 = sbr.rel (%p232) target = $region16
        $region15: #{net_forward.6} parent=11 // pred_region
          _
        $region16: #{net_forward.6} parent=11 // pred_fallthru
          _
        // Predicated region
        $region17: #{net_forward.6} parent=11 // pred_check
          %p235 = pneg %p191
        $region18: #{net_forward.6} parent=11 // pred_check_branch
          %237 = sbr.rel (%p235) target = $region20
        $region19: #{net_forward.6} parent=11 // pred_region
          _
        $region20: #{net_forward.6} parent=11 // pred_fallthru
          _
      $region12: #{net_forward.6} parent=5 // pred_fallthru
        _
      %p238 = scmp.lt.s32.totalorder %s33, 2
      // Predicated region
      $region21: #{net_forward.6} parent=5 // pred_check
        %p239 = pneg %p238
      $region22: #{net_forward.6} parent=5 // pred_check_branch
        %241 = sbr.rel (%p239) target = $region24
      $region23: #{net_forward.6} parent=5 // pred_region
        // Predicated region
        $region25: #{net_forward.6} parent=23 // pred_check
          %p242 = pneg %p57
        $region26: #{net_forward.6} parent=23 // pred_check_branch
          %244 = sbr.rel (%p242) target = $region28
        $region27: #{net_forward.6} parent=23 // pred_region
          %s246 = smul.u32 25, %s33
          %s247 = ssub.s32 1, 0
          %s248 = smul.u32 4, %s247
          %s249 = ssub.s32 49, %s246
          %p250 = scmp.lt.s32.totalorder %s249, 25
          %s251 = scalar_select %p250, %s249, 25
          %s252 = smul.u32 %s248, %s251
          %p253 = scmp.lt.s32.totalorder 0, 0
          %s254 = scalar_select %p253, 0, 0
          %p255 = scmp.lt.s32.totalorder %s246, 48
          %s256 = scalar_select %p255, %s246, 48
          %s257 = smul.addr %s254, 49
          %s258 = sadd.s32 %s256, %s257
          %s259 = smul.addr %s258, 4
          %s260 = scalar_lea.vmem %s2, %s259
          %s262 = smul.u32 25, %s33
          %s263 = ssub.s32 1, 0
          %s264 = smul.u32 4, %s263
          %s265 = ssub.s32 49, %s262
          %p266 = scmp.lt.s32.totalorder %s265, 25
          %s267 = scalar_select %p266, %s265, 25
          %s268 = smul.u32 %s264, %s267
        $region28: #{net_forward.6} parent=23 // pred_fallthru
          _
        // Predicated region
        $region29: #{net_forward.6} parent=23 // pred_check
          %p269 = pneg %p87
        $region30: #{net_forward.6} parent=23 // pred_check_branch
          %271 = sbr.rel (%p269) target = $region32
        $region31: #{net_forward.6} parent=23 // pred_region
          %s273 = smul.u32 25, %s33
          %s274 = ssub.s32 1, 0
          %s275 = smul.u32 4, %s274
          %s276 = ssub.s32 49, %s273
          %p277 = scmp.lt.s32.totalorder %s276, 25
          %s278 = scalar_select %p277, %s276, 25
          %s279 = smul.u32 %s275, %s278
          %p280 = scmp.lt.s32.totalorder 0, 0
          %s281 = scalar_select %p280, 0, 0
          %p282 = scmp.lt.s32.totalorder %s273, 48
          %s283 = scalar_select %p282, %s273, 48
          %s284 = smul.addr %s281, 49
          %s285 = sadd.s32 %s283, %s284
          %s286 = smul.addr %s285, 4
          %s287 = scalar_lea.vmem %s4, %s286
          %s289 = smul.u32 25, %s33
          %s290 = ssub.s32 1, 0
          %s291 = smul.u32 4, %s290
          %s292 = ssub.s32 49, %s289
          %p293 = scmp.lt.s32.totalorder %s292, 25
          %s294 = scalar_select %p293, %s292, 25
          %s295 = smul.u32 %s291, %s294
        $region32: #{net_forward.6} parent=23 // pred_fallthru
          _
        // Predicated region
        $region33: #{net_forward.6} parent=23 // pred_check
          %p296 = pneg %p117
        $region34: #{net_forward.6} parent=23 // pred_check_branch
          %298 = sbr.rel (%p296) target = $region36
        $region35: #{net_forward.6} parent=23 // pred_region
          %s300 = smul.u32 25, %s33
          %s301 = ssub.s32 1, 0
          %s302 = smul.u32 4, %s301
          %s303 = ssub.s32 49, %s300
          %p304 = scmp.lt.s32.totalorder %s303, 25
          %s305 = scalar_select %p304, %s303, 25
          %s306 = smul.u32 %s302, %s305
          %p307 = scmp.lt.s32.totalorder 0, 0
          %s308 = scalar_select %p307, 0, 0
          %p309 = scmp.lt.s32.totalorder %s300, 48
          %s310 = scalar_select %p309, %s300, 48
          %s311 = smul.addr %s308, 49
          %s312 = sadd.s32 %s310, %s311
          %s313 = smul.addr %s312, 4
          %s314 = scalar_lea.vmem %s5, %s313
          %s316 = smul.u32 25, %s33
          %s317 = ssub.s32 1, 0
          %s318 = smul.u32 4, %s317
          %s319 = ssub.s32 49, %s316
          %p320 = scmp.lt.s32.totalorder %s319, 25
          %s321 = scalar_select %p320, %s319, 25
          %s322 = smul.u32 %s318, %s321
        $region36: #{net_forward.6} parent=23 // pred_fallthru
          _
        // Predicated region
        $region37: #{net_forward.6} parent=23 // pred_check
          %p323 = pneg %p143
        $region38: #{net_forward.6} parent=23 // pred_check_branch
          %325 = sbr.rel (%p323) target = $region40
        $region39: #{net_forward.6} parent=23 // pred_region
          %s326 = smul.u32 25, %s33
          %s327 = ssub.s32 49, %s326
          %p328 = scmp.lt.s32.totalorder %s327, 25
          %s329 = scalar_select %p328, %s327, 25
          %s330 = smul.u32 4, %s329
          %p331 = scmp.lt.s32.totalorder %s326, 48
          %s332 = scalar_select %p331, %s326, 48
          %s333 = smul.addr %s332, 4
          %s334 = scalar_lea.vmem %s6, %s333
          %s335 = smul.u32 25, %s33
          %s336 = ssub.s32 49, %s335
          %p337 = scmp.lt.s32.totalorder %s336, 25
          %s338 = scalar_select %p337, %s336, 25
          %s339 = smul.u32 4, %s338
        $region40: #{net_forward.6} parent=23 // pred_fallthru
          _
      $region24: #{net_forward.6} parent=5 // pred_fallthru
        _
      %p340 = scmp.le.s32.totalorder 1, %s33
      %p341 = scmp.lt.s32.totalorder %s33, 3
      %p342 = pnand %p340, %p341
      %p343 = pneg %p342
      // Predicated region
      $region41: #{net_forward.6} parent=5 // pred_check
        _
      $region42: #{net_forward.6} parent=5 // pred_check_branch
        %345 = sbr.rel (%p342) target = $region44
      $region43: #{net_forward.6} parent=5 // pred_region
        #allocation23 [shape = 'u8[204800]{0}', space=vmem, size = 0x32000, dematerialized = true, scoped, tag = 'FusionAdapter Buffer %fusion.1 = bf16[4,392,75]{2,1,0:T(8,128)(2,1)} fusion(%param_2.3, %param_3.2, %param_4.2, %param_5.3, %param_6.2), kind=kLoop, calls=%fused_computation.1.clone, metadata={op_name="jit(net_forward)/concatenate" stack_frame_id=11}']
        %s346 = ssub.s32 %s33, 1
        %s348 = smul.u32 25, %s38
        %s349 = ssub.s32 1, 0
        %s350 = smul.u32 4, %s349
        %s351 = ssub.s32 49, %s348
        %p352 = scmp.lt.s32.totalorder %s351, 25
        %s353 = scalar_select %p352, %s351, 25
        %s354 = smul.u32 %s350, %s353
        %p355 = scmp.lt.s32.totalorder 0, 0
        %s356 = scalar_select %p355, 0, 0
        %p357 = scmp.lt.s32.totalorder %s348, 48
        %s358 = scalar_select %p357, %s348, 48
        %s359 = smul.addr %s356, 49
        %s360 = sadd.s32 %s358, %s359
        %s361 = smul.addr %s360, 4
        %s362 = scalar_lea.vmem %s2, %s361
        %p363 = pneg %p63
        %p364 = pneg %p60
        %s366 = smul.u32 25, %s38
        %s367 = ssub.s32 1, 0
        %s368 = smul.u32 4, %s367
        %s369 = ssub.s32 49, %s366
        %p370 = scmp.lt.s32.totalorder %s369, 25
        %s371 = scalar_select %p370, %s369, 25
        %s372 = smul.u32 %s368, %s371
        %p373 = scmp.lt.s32.totalorder 0, 0
        %s374 = scalar_select %p373, 0, 0
        %p375 = scmp.lt.s32.totalorder %s366, 48
        %s376 = scalar_select %p375, %s366, 48
        %s377 = smul.addr %s374, 49
        %s378 = sadd.s32 %s376, %s377
        %s379 = smul.addr %s378, 4
        %s380 = scalar_lea.vmem %s4, %s379
        %p381 = pneg %p93
        %p382 = pneg %p90
        %s384 = smul.u32 25, %s38
        %s385 = ssub.s32 1, 0
        %s386 = smul.u32 4, %s385
        %s387 = ssub.s32 49, %s384
        %p388 = scmp.lt.s32.totalorder %s387, 25
        %s389 = scalar_select %p388, %s387, 25
        %s390 = smul.u32 %s386, %s389
        %p391 = scmp.lt.s32.totalorder 0, 0
        %s392 = scalar_select %p391, 0, 0
        %p393 = scmp.lt.s32.totalorder %s384, 48
        %s394 = scalar_select %p393, %s384, 48
        %s395 = smul.addr %s392, 49
        %s396 = sadd.s32 %s394, %s395
        %s397 = smul.addr %s396, 4
        %s398 = scalar_lea.vmem %s5, %s397
        %p399 = pneg %p123
        %p400 = pneg %p120
        %s401 = smul.u32 25, %s38
        %s402 = ssub.s32 49, %s401
        %p403 = scmp.lt.s32.totalorder %s402, 25
        %s404 = scalar_select %p403, %s402, 25
        %s405 = smul.u32 4, %s404
        %p406 = scmp.lt.s32.totalorder %s401, 48
        %s407 = scalar_select %p406, %s401, 48
        %s408 = smul.addr %s407, 4
        %s409 = scalar_lea.vmem %s6, %s408
        %p410 = pneg %p149
        %p411 = pneg %p146
        %p412 = pneg %p170
        %p413 = pneg %p167
        %p414 = pneg %p191
        %p415 = pneg %p188
        %p416 = pneg %p217
        %p417 = pneg %p214
        %s418 = sand.u32 %s204, 1
        %s419 = sand.u32 %s204, 1
        %s420 = smul.addr %s419, 100
        %s421 = scalar_lea.vmem [#allocation22], %s420
        %s423 = smul.u32 25, %s38
        %s424 = ssub.s32 1, 0
        %s425 = smul.u32 4, %s424
        %s426 = ssub.s32 49, %s423
        %p427 = scmp.lt.s32.totalorder %s426, 25
        %s428 = scalar_select %p427, %s426, 25
        %s429 = smul.u32 %s425, %s428
        %p430 = scmp.lt.s32.totalorder 0, 0
        %s431 = scalar_select %p430, 0, 0
        %p432 = scmp.lt.s32.totalorder %s423, 48
        %s433 = scalar_select %p432, %s423, 48
        %s434 = smul.addr %s431, 49
        %s435 = sadd.s32 %s433, %s434
        %s436 = smul.addr %s435, 4
        %s437 = scalar_lea.vmem %s2, %s436
        %s439 = smul.u32 25, %s38
        %s440 = ssub.s32 1, 0
        %s441 = smul.u32 4, %s440
        %s442 = ssub.s32 49, %s439
        %p443 = scmp.lt.s32.totalorder %s442, 25
        %s444 = scalar_select %p443, %s442, 25
        %s445 = smul.u32 %s441, %s444
        %s447 = smul.u32 25, %s38
        %s448 = ssub.s32 1, 0
        %s449 = smul.u32 4, %s448
        %s450 = ssub.s32 49, %s447
        %p451 = scmp.lt.s32.totalorder %s450, 25
        %s452 = scalar_select %p451, %s450, 25
        %s453 = smul.u32 %s449, %s452
        %p454 = scmp.lt.s32.totalorder 0, 0
        %s455 = scalar_select %p454, 0, 0
        %p456 = scmp.lt.s32.totalorder %s447, 48
        %s457 = scalar_select %p456, %s447, 48
        %s458 = smul.addr %s455, 49
        %s459 = sadd.s32 %s457, %s458
        %s460 = smul.addr %s459, 4
        %s461 = scalar_lea.vmem %s4, %s460
        %s463 = smul.u32 25, %s38
        %s464 = ssub.s32 1, 0
        %s465 = smul.u32 4, %s464
        %s466 = ssub.s32 49, %s463
        %p467 = scmp.lt.s32.totalorder %s466, 25
        %s468 = scalar_select %p467, %s466, 25
        %s469 = smul.u32 %s465, %s468
        %s471 = smul.u32 25, %s38
        %s472 = ssub.s32 1, 0
        %s473 = smul.u32 4, %s472
        %s474 = ssub.s32 49, %s471
        %p475 = scmp.lt.s32.totalorder %s474, 25
        %s476 = scalar_select %p475, %s474, 25
        %s477 = smul.u32 %s473, %s476
        %p478 = scmp.lt.s32.totalorder 0, 0
        %s479 = scalar_select %p478, 0, 0
        %p480 = scmp.lt.s32.totalorder %s471, 48
        %s481 = scalar_select %p480, %s471, 48
        %s482 = smul.addr %s479, 49
        %s483 = sadd.s32 %s481, %s482
        %s484 = smul.addr %s483, 4
        %s485 = scalar_lea.vmem %s5, %s484
        %s487 = smul.u32 25, %s38
        %s488 = ssub.s32 1, 0
        %s489 = smul.u32 4, %s488
        %s490 = ssub.s32 49, %s487
        %p491 = scmp.lt.s32.totalorder %s490, 25
        %s492 = scalar_select %p491, %s490, 25
        %s493 = smul.u32 %s489, %s492
        %s494 = smul.u32 25, %s38
        %s495 = ssub.s32 49, %s494
        %p496 = scmp.lt.s32.totalorder %s495, 25
        %s497 = scalar_select %p496, %s495, 25
        %s498 = smul.u32 4, %s497
        %p499 = scmp.lt.s32.totalorder %s494, 48
        %s500 = scalar_select %p499, %s494, 48
        %s501 = smul.addr %s500, 4
        %s502 = scalar_lea.vmem %s6, %s501
        %s503 = smul.u32 25, %s38
        %s504 = ssub.s32 49, %s503
        %p505 = scmp.lt.s32.totalorder %s504, 25
        %s506 = scalar_select %p505, %s504, 25
        %s507 = smul.u32 4, %s506
        %s508 = smul.u32 25, %s38
        %s509 = ssub.s32 49, %s508
        %p510 = scmp.lt.s32.totalorder %s509, 25
        %s511 = scalar_select %p510, %s509, 25
        %s512 = smul.u32 4, %s511
        %s513 = ssub.s32 0, 0
        %p514 = scmp.lt.s32.totalorder %s513, 0
        %s515 = scalar_select %p514, 0, 255
        %s516 = sshrl.u32 %s515, 1
        %s517 = sor.u32 %s515, %s516
        %s518 = sand.u32 %s517, 85
        %s519 = sshrl.u32 %s518, 1
        %s520 = sor.u32 %s518, %s519
        %s521 = sand.u32 51, %s520
        %s522 = sshrl.u32 %s521, 2
        %s523 = sor.u32 %s521, %s522
        %s524 = sand.u32 15, %s523
        %v525 = vld [vmem:[%s437] sm:%s524]
        %v526 = vunpack.c.l.bf16 %v525
        %v527 = vunpack.c.h.bf16 %v525
        %s528 = smul.u32 25, %s38
        %s529 = ssub.s32 0, 0
        %p530 = scmp.lt.s32.totalorder %s529, 0
        %s531 = scalar_select %p530, 0, 255
        %s532 = sshrl.u32 %s531, 1
        %s533 = sor.u32 %s531, %s532
        %s534 = sand.u32 %s533, 85
        %s535 = sshrl.u32 %s534, 1
        %s536 = sor.u32 %s534, %s535
        %s537 = sand.u32 51, %s536
        %s538 = sshrl.u32 %s537, 2
        %s539 = sor.u32 %s537, %s538
        %s540 = sand.u32 15, %s539
        %v541 = vld [vmem:[%s461] sm:%s540]
        %v542 = vunpack.c.l.bf16 %v541
        %v543 = vunpack.c.h.bf16 %v541
        %s544 = smul.u32 25, %s38
        %s545 = ssub.s32 0, 0
        %p546 = scmp.lt.s32.totalorder %s545, 0
        %s547 = scalar_select %p546, 0, 255
        %s548 = sshrl.u32 %s547, 1
        %s549 = sor.u32 %s547, %s548
        %s550 = sand.u32 %s549, 85
        %s551 = sshrl.u32 %s550, 1
        %s552 = sor.u32 %s550, %s551
        %s553 = sand.u32 51, %s552
        %s554 = sshrl.u32 %s553, 2
        %s555 = sor.u32 %s553, %s554
        %s556 = sand.u32 15, %s555
        %v557 = vld [vmem:[%s485] sm:%s556]
        %v558 = vunpack.c.l.bf16 %v557
        %v559 = vunpack.c.h.bf16 %v557
        %s560 = smul.u32 25, %s38
        %s562 = sor.u32 255, 127
        %s563 = sand.u32 %s562, 85
        %s564 = sshrl.u32 %s563, 1
        %s565 = sor.u32 %s563, %s564
        %s566 = sand.u32 51, %s565
        %s567 = sshrl.u32 %s566, 2
        %s568 = sor.u32 %s566, %s567
        %s569 = sand.u32 15, %s568
        %v570 = vld [vmem:[%s502] sm:%s569]
        %v571 = vunpack.c.l.bf16 %v570
        %v572 = vunpack.c.h.bf16 %v570
        %v573 = vlaneseq
        %v574 = vand.u32 %v573, 127
        %vm576 = vcmp.lt.s32.totalorder %v574, 75
        %v577 = vsel %vm576, %v571, %v28
        %578 = xla_tuple %v577, %v23
        %579 = xla_tuple %578
        %v580 = vmax.f32 %v577, %v23
        %581 = xla_tuple %v580
        %582 = xla_tuple %v580, %v18
        %583 = xla_tuple %582
        %v584 = vmax.f32 %v580, %v18
        %585 = xla_tuple %v584
        %586 = xla_tuple %v584, %v13
        %587 = xla_tuple %586
        %v588 = vmax.f32 %v584, %v13
        %589 = xla_tuple %v588
        %v590 = vpack.c.bf16 0.0, %v588
        %s592 = ssub.s32 16, 1
        %593 = vst [vmem:[#allocation23] sm:%s592] %v590
        %s594 = scalar_lea.vmem %s437, 4
        %s595 = ssub.s32 0, 0
        %p596 = scmp.lt.s32.totalorder %s595, 0
        %s597 = scalar_select %p596, 0, 255
        %s598 = sshrl.u32 %s597, 1
        %s599 = sor.u32 %s597, %s598
        %s600 = sand.u32 %s599, 85
        %s601 = sshrl.u32 %s600, 1
        %s602 = sor.u32 %s600, %s601
        %s603 = sand.u32 51, %s602
        %s604 = sshrl.u32 %s603, 2
        %s605 = sor.u32 %s603, %s604
        %s606 = sand.u32 15, %s605
        %v607 = vld [vmem:[%s594] sm:%s606]
        %v608 = vunpack.c.l.bf16 %v607
        %v609 = vunpack.c.h.bf16 %v607
        %s610 = scalar_lea.vmem %s461, 4
        %s611 = ssub.s32 0, 0
        %p612 = scmp.lt.s32.totalorder %s611, 0
        %s613 = scalar_select %p612, 0, 255
        %s614 = sshrl.u32 %s613, 1
        %s615 = sor.u32 %s613, %s614
        %s616 = sand.u32 %s615, 85
        %s617 = sshrl.u32 %s616, 1
        %s618 = sor.u32 %s616, %s617
        %s619 = sand.u32 51, %s618
        %s620 = sshrl.u32 %s619, 2
        %s621 = sor.u32 %s619, %s620
        %s622 = sand.u32 15, %s621
        %v623 = vld [vmem:[%s610] sm:%s622]
        %v624 = vunpack.c.l.bf16 %v623
        %v625 = vunpack.c.h.bf16 %v623
        %s626 = scalar_lea.vmem %s485, 4
        %s627 = ssub.s32 0, 0
        %p628 = scmp.lt.s32.totalorder %s627, 0
        %s629 = scalar_select %p628, 0, 255
        %s630 = sshrl.u32 %s629, 1
        %s631 = sor.u32 %s629, %s630
        %s632 = sand.u32 %s631, 85
        %s633 = sshrl.u32 %s632, 1
        %s634 = sor.u32 %s632, %s633
        %s635 = sand.u32 51, %s634
        %s636 = sshrl.u32 %s635, 2
        %s637 = sor.u32 %s635, %s636
        %s638 = sand.u32 15, %s637
        %v639 = vld [vmem:[%s626] sm:%s638]
        %v640 = vunpack.c.l.bf16 %v639
        %v641 = vunpack.c.h.bf16 %v639
        %s642 = scalar_lea.vmem %s502, 4
        %s644 = sor.u32 255, 127
        %s645 = sand.u32 %s644, 85
        %s646 = sshrl.u32 %s645, 1
        %s647 = sor.u32 %s645, %s646
        %s648 = sand.u32 51, %s647
        %s649 = sshrl.u32 %s648, 2
        %s650 = sor.u32 %s648, %s649
        %s651 = sand.u32 15, %s650
        %v652 = vld [vmem:[%s642] sm:%s651]
        %v653 = vunpack.c.l.bf16 %v652
        %v654 = vunpack.c.h.bf16 %v652
        %v655 = vlaneseq
        %v656 = vand.u32 %v655, 127
        %vm658 = vcmp.lt.s32.totalorder %v656, 75
        %v659 = vsel %vm658, %v653, %v28
        %660 = xla_tuple %v659, %v23
        %661 = xla_tuple %660
        %v662 = vmax.f32 %v659, %v23
        %663 = xla_tuple %v662
        %664 = xla_tuple %v662, %v18
        %665 = xla_tuple %664
        %v666 = vmax.f32 %v662, %v18
        %667 = xla_tuple %v666
        %668 = xla_tuple %v666, %v13
        %669 = xla_tuple %668
        %v670 = vmax.f32 %v666, %v13
        %671 = xla_tuple %v670
        %s672 = scalar_lea.vmem [#allocation23], 4
        %v673 = vpack.c.bf16 0.0, %v670
        %s675 = ssub.s32 16, 1
        %676 = vst [vmem:[%s672] sm:%s675] %v673
        %s677 = scalar_lea.vmem %s437, 8
        %s678 = ssub.s32 0, 0
        %p679 = scmp.lt.s32.totalorder %s678, 0
        %s680 = scalar_select %p679, 0, 255
        %s681 = sshrl.u32 %s680, 1
        %s682 = sor.u32 %s680, %s681
        %s683 = sand.u32 %s682, 85
        %s684 = sshrl.u32 %s683, 1
        %s685 = sor.u32 %s683, %s684
        %s686 = sand.u32 51, %s685
        %s687 = sshrl.u32 %s686, 2
        %s688 = sor.u32 %s686, %s687
        %s689 = sand.u32 15, %s688
        %v690 = vld [vmem:[%s677] sm:%s689]
        %v691 = vunpack.c.l.bf16 %v690
        %v692 = vunpack.c.h.bf16 %v690
        %s693 = scalar_lea.vmem %s461, 8
        %s694 = ssub.s32 0, 0
        %p695 = scmp.lt.s32.totalorder %s694, 0
        %s696 = scalar_select %p695, 0, 255
        %s697 = sshrl.u32 %s696, 1
        %s698 = sor.u32 %s696, %s697
        %s699 = sand.u32 %s698, 85
        %s700 = sshrl.u32 %s699, 1
        %s701 = sor.u32 %s699, %s700
        %s702 = sand.u32 51, %s701
        %s703 = sshrl.u32 %s702, 2
        %s704 = sor.u32 %s702, %s703
        %s705 = sand.u32 15, %s704
        %v706 = vld [vmem:[%s693] sm:%s705]
        %v707 = vunpack.c.l.bf16 %v706
        %v708 = vunpack.c.h.bf16 %v706
        %s709 = scalar_lea.vmem %s485, 8
        %s710 = ssub.s32 0, 0
        %p711 = scmp.lt.s32.totalorder %s710, 0
        %s712 = scalar_select %p711, 0, 255
        %s713 = sshrl.u32 %s712, 1
        %s714 = sor.u32 %s712, %s713
        %s715 = sand.u32 %s714, 85
        %s716 = sshrl.u32 %s715, 1
        %s717 = sor.u32 %s715, %s716
        %s718 = sand.u32 51, %s717
        %s719 = sshrl.u32 %s718, 2
        %s720 = sor.u32 %s718, %s719
        %s721 = sand.u32 15, %s720
        %v722 = vld [vmem:[%s709] sm:%s721]
        %v723 = vunpack.c.l.bf16 %v722
        %v724 = vunpack.c.h.bf16 %v722
        %s725 = scalar_lea.vmem %s502, 8
        %s727 = sor.u32 255, 127
        %s728 = sand.u32 %s727, 85
        %s729 = sshrl.u32 %s728, 1
        %s730 = sor.u32 %s728, %s729
        %s731 = sand.u32 51, %s730
        %s732 = sshrl.u32 %s731, 2
        %s733 = sor.u32 %s731, %s732
        %s734 = sand.u32 15, %s733
        %v735 = vld [vmem:[%s725] sm:%s734]
        %v736 = vunpack.c.l.bf16 %v735
        %v737 = vunpack.c.h.bf16 %v735
        %v738 = vlaneseq
        %v739 = vand.u32 %v738, 127
        %vm741 = vcmp.lt.s32.totalorder %v739, 75
        %v742 = vsel %vm741, %v736, %v28
        %743 = xla_tuple %v742, %v23
        %744 = xla_tuple %743
        %v745 = vmax.f32 %v742, %v23
        %746 = xla_tuple %v745
        %747 = xla_tuple %v745, %v18
        %748 = xla_tuple %747
        %v749 = vmax.f32 %v745, %v18
        %750 = xla_tuple %v749
        %751 = xla_tuple %v749, %v13
        %752 = xla_tuple %751
        %v753 = vmax.f32 %v749, %v13
        %754 = xla_tuple %v753
        %s755 = scalar_lea.vmem [#allocation23], 8
        %v756 = vpack.c.bf16 0.0, %v753
        %s758 = ssub.s32 16, 1
        %759 = vst [vmem:[%s755] sm:%s758] %v756
        %s760 = scalar_lea.vmem %s437, 12
        %s761 = ssub.s32 0, 0
        %p762 = scmp.lt.s32.totalorder %s761, 0
        %s763 = scalar_select %p762, 0, 255
        %s764 = sshrl.u32 %s763, 1
        %s765 = sor.u32 %s763, %s764
        %s766 = sand.u32 %s765, 85
        %s767 = sshrl.u32 %s766, 1
        %s768 = sor.u32 %s766, %s767
        %s769 = sand.u32 51, %s768
        %s770 = sshrl.u32 %s769, 2
        %s771 = sor.u32 %s769, %s770
        %s772 = sand.u32 15, %s771
        %v773 = vld [vmem:[%s760] sm:%s772]
        %v774 = vunpack.c.l.bf16 %v773
        %v775 = vunpack.c.h.bf16 %v773
        %s776 = scalar_lea.vmem %s461, 12
        %s777 = ssub.s32 0, 0
        %p778 = scmp.lt.s32.totalorder %s777, 0
        %s779 = scalar_select %p778, 0, 255
        %s780 = sshrl.u32 %s779, 1
        %s781 = sor.u32 %s779, %s780
        %s782 = sand.u32 %s781, 85
        %s783 = sshrl.u32 %s782, 1
        %s784 = sor.u32 %s782, %s783
        %s785 = sand.u32 51, %s784
        %s786 = sshrl.u32 %s785, 2
        %s787 = sor.u32 %s785, %s786
        %s788 = sand.u32 15, %s787
        %v789 = vld [vmem:[%s776] sm:%s788]
        %v790 = vunpack.c.l.bf16 %v789
        %v791 = vunpack.c.h.bf16 %v789
        %s792 = scalar_lea.vmem %s485, 12
        %s793 = ssub.s32 0, 0
        %p794 = scmp.lt.s32.totalorder %s793, 0
        %s795 = scalar_select %p794, 0, 255
        %s796 = sshrl.u32 %s795, 1
        %s797 = sor.u32 %s795, %s796
        %s798 = sand.u32 %s797, 85
        %s799 = sshrl.u32 %s798, 1
        %s800 = sor.u32 %s798, %s799
        %s801 = sand.u32 51, %s800
        %s802 = sshrl.u32 %s801, 2
        %s803 = sor.u32 %s801, %s802
        %s804 = sand.u32 15, %s803
        %v805 = vld [vmem:[%s792] sm:%s804]
        %v806 = vunpack.c.l.bf16 %v805
        %v807 = vunpack.c.h.bf16 %v805
        %s808 = scalar_lea.vmem %s502, 12
        %s810 = sor.u32 255, 127
        %s811 = sand.u32 %s810, 85
        %s812 = sshrl.u32 %s811, 1
        %s813 = sor.u32 %s811, %s812
        %s814 = sand.u32 51, %s813
        %s815 = sshrl.u32 %s814, 2
        %s816 = sor.u32 %s814, %s815
        %s817 = sand.u32 15, %s816
        %v818 = vld [vmem:[%s808] sm:%s817]
        %v819 = vunpack.c.l.bf16 %v818
        %v820 = vunpack.c.h.bf16 %v818
        %v821 = vlaneseq
        %v822 = vand.u32 %v821, 127
        %vm824 = vcmp.lt.s32.totalorder %v822, 75
        %v825 = vsel %vm824, %v819, %v28
        %826 = xla_tuple %v825, %v23
        %827 = xla_tuple %826
        %v828 = vmax.f32 %v825, %v23
        %829 = xla_tuple %v828
        %830 = xla_tuple %v828, %v18
        %831 = xla_tuple %830
        %v832 = vmax.f32 %v828, %v18
        %833 = xla_tuple %v832
        %834 = xla_tuple %v832, %v13
        %835 = xla_tuple %834
        %v836 = vmax.f32 %v832, %v13
        %837 = xla_tuple %v836
        %s838 = scalar_lea.vmem [#allocation23], 12
        %v839 = vpack.c.bf16 0.0, %v836
        %s841 = ssub.s32 16, 1
        %842 = vst [vmem:[%s838] sm:%s841] %v839
        %s843 = scalar_lea.vmem %s437, 16
        %s844 = ssub.s32 0, 0
        %p845 = scmp.lt.s32.totalorder %s844, 0
        %s846 = scalar_select %p845, 0, 255
        %s847 = sshrl.u32 %s846, 1
        %s848 = sor.u32 %s846, %s847
        %s849 = sand.u32 %s848, 85
        %s850 = sshrl.u32 %s849, 1
        %s851 = sor.u32 %s849, %s850
        %s852 = sand.u32 51, %s851
        %s853 = sshrl.u32 %s852, 2
        %s854 = sor.u32 %s852, %s853
        %s855 = sand.u32 15, %s854
        %v856 = vld [vmem:[%s843] sm:%s855]
        %v857 = vunpack.c.l.bf16 %v856
        %v858 = vunpack.c.h.bf16 %v856
        %s859 = scalar_lea.vmem %s461, 16
        %s860 = ssub.s32 0, 0
        %p861 = scmp.lt.s32.totalorder %s860, 0
        %s862 = scalar_select %p861, 0, 255
        %s863 = sshrl.u32 %s862, 1
        %s864 = sor.u32 %s862, %s863
        %s865 = sand.u32 %s864, 85
        %s866 = sshrl.u32 %s865, 1
        %s867 = sor.u32 %s865, %s866
        %s868 = sand.u32 51, %s867
        %s869 = sshrl.u32 %s868, 2
        %s870 = sor.u32 %s868, %s869
        %s871 = sand.u32 15, %s870
        %v872 = vld [vmem:[%s859] sm:%s871]
        %v873 = vunpack.c.l.bf16 %v872
        %v874 = vunpack.c.h.bf16 %v872
        %s875 = scalar_lea.vmem %s485, 16
        %s876 = ssub.s32 0, 0
        %p877 = scmp.lt.s32.totalorder %s876, 0
        %s878 = scalar_select %p877, 0, 255
        %s879 = sshrl.u32 %s878, 1
        %s880 = sor.u32 %s878, %s879
        %s881 = sand.u32 %s880, 85
        %s882 = sshrl.u32 %s881, 1
        %s883 = sor.u32 %s881, %s882
        %s884 = sand.u32 51, %s883
        %s885 = sshrl.u32 %s884, 2
        %s886 = sor.u32 %s884, %s885
        %s887 = sand.u32 15, %s886
        %v888 = vld [vmem:[%s875] sm:%s887]
        %v889 = vunpack.c.l.bf16 %v888
        %v890 = vunpack.c.h.bf16 %v888
        %s891 = scalar_lea.vmem %s502, 16
        %s893 = sor.u32 255, 127
        %s894 = sand.u32 %s893, 85
        %s895 = sshrl.u32 %s894, 1
        %s896 = sor.u32 %s894, %s895
        %s897 = sand.u32 51, %s896
        %s898 = sshrl.u32 %s897, 2
        %s899 = sor.u32 %s897, %s898
        %s900 = sand.u32 15, %s899
        %v901 = vld [vmem:[%s891] sm:%s900]
        %v902 = vunpack.c.l.bf16 %v901
        %v903 = vunpack.c.h.bf16 %v901
        %v904 = vlaneseq
        %v905 = vand.u32 %v904, 127
        %vm907 = vcmp.lt.s32.totalorder %v905, 75
        %v908 = vsel %vm907, %v902, %v28
        %909 = xla_tuple %v908, %v23
        %910 = xla_tuple %909
        %v911 = vmax.f32 %v908, %v23
        %912 = xla_tuple %v911
        %913 = xla_tuple %v911, %v18
        %914 = xla_tuple %913
        %v915 = vmax.f32 %v911, %v18
        %916 = xla_tuple %v915
        %917 = xla_tuple %v915, %v13
        %918 = xla_tuple %917
        %v919 = vmax.f32 %v915, %v13
        %920 = xla_tuple %v919
        %s921 = scalar_lea.vmem [#allocation23], 16
        %v922 = vpack.c.bf16 0.0, %v919
        %s924 = ssub.s32 16, 1
        %925 = vst [vmem:[%s921] sm:%s924] %v922
        %s926 = scalar_lea.vmem %s437, 20
        %s927 = ssub.s32 0, 0
        %p928 = scmp.lt.s32.totalorder %s927, 0
        %s929 = scalar_select %p928, 0, 255
        %s930 = sshrl.u32 %s929, 1
        %s931 = sor.u32 %s929, %s930
        %s932 = sand.u32 %s931, 85
        %s933 = sshrl.u32 %s932, 1
        %s934 = sor.u32 %s932, %s933
        %s935 = sand.u32 51, %s934
        %s936 = sshrl.u32 %s935, 2
        %s937 = sor.u32 %s935, %s936
        %s938 = sand.u32 15, %s937
        %v939 = vld [vmem:[%s926] sm:%s938]
        %v940 = vunpack.c.l.bf16 %v939
        %v941 = vunpack.c.h.bf16 %v939
        %s942 = scalar_lea.vmem %s461, 20
        %s943 = ssub.s32 0, 0
        %p944 = scmp.lt.s32.totalorder %s943, 0
        %s945 = scalar_select %p944, 0, 255
        %s946 = sshrl.u32 %s945, 1
        %s947 = sor.u32 %s945, %s946
        %s948 = sand.u32 %s947, 85
        %s949 = sshrl.u32 %s948, 1
        %s950 = sor.u32 %s948, %s949
        %s951 = sand.u32 51, %s950
        %s952 = sshrl.u32 %s951, 2
        %s953 = sor.u32 %s951, %s952
        %s954 = sand.u32 15, %s953
        %v955 = vld [vmem:[%s942] sm:%s954]
        %v956 = vunpack.c.l.bf16 %v955
        %v957 = vunpack.c.h.bf16 %v955
        %s958 = scalar_lea.vmem %s485, 20
        %s959 = ssub.s32 0, 0
        %p960 = scmp.lt.s32.totalorder %s959, 0
        %s961 = scalar_select %p960, 0, 255
        %s962 = sshrl.u32 %s961, 1
        %s963 = sor.u32 %s961, %s962
        %s964 = sand.u32 %s963, 85
        %s965 = sshrl.u32 %s964, 1
        %s966 = sor.u32 %s964, %s965
        %s967 = sand.u32 51, %s966
        %s968 = sshrl.u32 %s967, 2
        %s969 = sor.u32 %s967, %s968
        %s970 = sand.u32 15, %s969
        %v971 = vld [vmem:[%s958] sm:%s970]
        %v972 = vunpack.c.l.bf16 %v971
        %v973 = vunpack.c.h.bf16 %v971
        %s974 = scalar_lea.vmem %s502, 20
        %s976 = sor.u32 255, 127
        %s977 = sand.u32 %s976, 85
        %s978 = sshrl.u32 %s977, 1
        %s979 = sor.u32 %s977, %s978
        %s980 = sand.u32 51, %s979
        %s981 = sshrl.u32 %s980, 2
        %s982 = sor.u32 %s980, %s981
        %s983 = sand.u32 15, %s982
        %v984 = vld [vmem:[%s974] sm:%s983]
        %v985 = vunpack.c.l.bf16 %v984
        %v986 = vunpack.c.h.bf16 %v984
        %v987 = vlaneseq
        %v988 = vand.u32 %v987, 127
        %vm990 = vcmp.lt.s32.totalorder %v988, 75
        %v991 = vsel %vm990, %v985, %v28
        %992 = xla_tuple %v991, %v23
        %993 = xla_tuple %992
        %v994 = vmax.f32 %v991, %v23
        %995 = xla_tuple %v994
        %996 = xla_tuple %v994, %v18
        %997 = xla_tuple %996
        %v998 = vmax.f32 %v994, %v18
        %999 = xla_tuple %v998
        %1000 = xla_tuple %v998, %v13
        %1001 = xla_tuple %1000
        %v1002 = vmax.f32 %v998, %v13
        %1003 = xla_tuple %v1002
        %s1004 = scalar_lea.vmem [#allocation23], 20
        %v1005 = vpack.c.bf16 0.0, %v1002
        %s1007 = ssub.s32 16, 1
        %1008 = vst [vmem:[%s1004] sm:%s1007] %v1005
        %s1009 = scalar_lea.vmem %s437, 24
        %s1010 = ssub.s32 0, 0
        %p1011 = scmp.lt.s32.totalorder %s1010, 0
        %s1012 = scalar_select %p1011, 0, 255
        %s1013 = sshrl.u32 %s1012, 1
        %s1014 = sor.u32 %s1012, %s1013
        %s1015 = sand.u32 %s1014, 85
        %s1016 = sshrl.u32 %s1015, 1
        %s1017 = sor.u32 %s1015, %s1016
        %s1018 = sand.u32 51, %s1017
        %s1019 = sshrl.u32 %s1018, 2
        %s1020 = sor.u32 %s1018, %s1019
        %s1021 = sand.u32 15, %s1020
        %v1022 = vld [vmem:[%s1009] sm:%s1021]
        %v1023 = vunpack.c.l.bf16 %v1022
        %v1024 = vunpack.c.h.bf16 %v1022
        %s1025 = scalar_lea.vmem %s461, 24
        %s1026 = ssub.s32 0, 0
        %p1027 = scmp.lt.s32.totalorder %s1026, 0
        %s1028 = scalar_select %p1027, 0, 255
        %s1029 = sshrl.u32 %s1028, 1
        %s1030 = sor.u32 %s1028, %s1029
        %s1031 = sand.u32 %s1030, 85
        %s1032 = sshrl.u32 %s1031, 1
        %s1033 = sor.u32 %s1031, %s1032
        %s1034 = sand.u32 51, %s1033
        %s1035 = sshrl.u32 %s1034, 2
        %s1036 = sor.u32 %s1034, %s1035
        %s1037 = sand.u32 15, %s1036
        %v1038 = vld [vmem:[%s1025] sm:%s1037]
        %v1039 = vunpack.c.l.bf16 %v1038
        %v1040 = vunpack.c.h.bf16 %v1038
        %s1041 = scalar_lea.vmem %s485, 24
        %s1042 = ssub.s32 0, 0
        %p1043 = scmp.lt.s32.totalorder %s1042, 0
        %s1044 = scalar_select %p1043, 0, 255
        %s1045 = sshrl.u32 %s1044, 1
        %s1046 = sor.u32 %s1044, %s1045
        %s1047 = sand.u32 %s1046, 85
        %s1048 = sshrl.u32 %s1047, 1
        %s1049 = sor.u32 %s1047, %s1048
        %s1050 = sand.u32 51, %s1049
        %s1051 = sshrl.u32 %s1050, 2
        %s1052 = sor.u32 %s1050, %s1051
        %s1053 = sand.u32 15, %s1052
        %v1054 = vld [vmem:[%s1041] sm:%s1053]
        %v1055 = vunpack.c.l.bf16 %v1054
        %v1056 = vunpack.c.h.bf16 %v1054
        %s1057 = scalar_lea.vmem %s502, 24
        %s1059 = sor.u32 255, 127
        %s1060 = sand.u32 %s1059, 85
        %s1061 = sshrl.u32 %s1060, 1
        %s1062 = sor.u32 %s1060, %s1061
        %s1063 = sand.u32 51, %s1062
        %s1064 = sshrl.u32 %s1063, 2
        %s1065 = sor.u32 %s1063, %s1064
        %s1066 = sand.u32 15, %s1065
        %v1067 = vld [vmem:[%s1057] sm:%s1066]
        %v1068 = vunpack.c.l.bf16 %v1067
        %v1069 = vunpack.c.h.bf16 %v1067
        %v1070 = vlaneseq
        %v1071 = vand.u32 %v1070, 127
        %vm1073 = vcmp.lt.s32.totalorder %v1071, 75
        %v1074 = vsel %vm1073, %v1068, %v28
        %1075 = xla_tuple %v1074, %v23
        %1076 = xla_tuple %1075
        %v1077 = vmax.f32 %v1074, %v23
        %1078 = xla_tuple %v1077
        %1079 = xla_tuple %v1077, %v18
        %1080 = xla_tuple %1079
        %v1081 = vmax.f32 %v1077, %v18
        %1082 = xla_tuple %v1081
        %1083 = xla_tuple %v1081, %v13
        %1084 = xla_tuple %1083
        %v1085 = vmax.f32 %v1081, %v13
        %1086 = xla_tuple %v1085
        %s1087 = scalar_lea.vmem [#allocation23], 24
        %v1088 = vpack.c.bf16 0.0, %v1085
        %s1090 = ssub.s32 16, 1
        %1091 = vst [vmem:[%s1087] sm:%s1090] %v1088
        %s1092 = scalar_lea.vmem %s437, 28
        %s1093 = ssub.s32 0, 0
        %p1094 = scmp.lt.s32.totalorder %s1093, 0
        %s1095 = scalar_select %p1094, 0, 255
        %s1096 = sshrl.u32 %s1095, 1
        %s1097 = sor.u32 %s1095, %s1096
        %s1098 = sand.u32 %s1097, 85
        %s1099 = sshrl.u32 %s1098, 1
        %s1100 = sor.u32 %s1098, %s1099
        %s1101 = sand.u32 51, %s1100
        %s1102 = sshrl.u32 %s1101, 2
        %s1103 = sor.u32 %s1101, %s1102
        %s1104 = sand.u32 15, %s1103
        %v1105 = vld [vmem:[%s1092] sm:%s1104]
        %v1106 = vunpack.c.l.bf16 %v1105
        %v1107 = vunpack.c.h.bf16 %v1105
        %s1108 = scalar_lea.vmem %s461, 28
        %s1109 = ssub.s32 0, 0
        %p1110 = scmp.lt.s32.totalorder %s1109, 0
        %s1111 = scalar_select %p1110, 0, 255
        %s1112 = sshrl.u32 %s1111, 1
        %s1113 = sor.u32 %s1111, %s1112
        %s1114 = sand.u32 %s1113, 85
        %s1115 = sshrl.u32 %s1114, 1
        %s1116 = sor.u32 %s1114, %s1115
        %s1117 = sand.u32 51, %s1116
        %s1118 = sshrl.u32 %s1117, 2
        %s1119 = sor.u32 %s1117, %s1118
        %s1120 = sand.u32 15, %s1119
        %v1121 = vld [vmem:[%s1108] sm:%s1120]
        %v1122 = vunpack.c.l.bf16 %v1121
        %v1123 = vunpack.c.h.bf16 %v1121
        %s1124 = scalar_lea.vmem %s485, 28
        %s1125 = ssub.s32 0, 0
        %p1126 = scmp.lt.s32.totalorder %s1125, 0
        %s1127 = scalar_select %p1126, 0, 255
        %s1128 = sshrl.u32 %s1127, 1
        %s1129 = sor.u32 %s1127, %s1128
        %s1130 = sand.u32 %s1129, 85
        %s1131 = sshrl.u32 %s1130, 1
        %s1132 = sor.u32 %s1130, %s1131
        %s1133 = sand.u32 51, %s1132
        %s1134 = sshrl.u32 %s1133, 2
        %s1135 = sor.u32 %s1133, %s1134
        %s1136 = sand.u32 15, %s1135
        %v1137 = vld [vmem:[%s1124] sm:%s1136]
        %v1138 = vunpack.c.l.bf16 %v1137
        %v1139 = vunpack.c.h.bf16 %v1137
        %s1140 = scalar_lea.vmem %s502, 28
        %s1142 = sor.u32 255, 127
        %s1143 = sand.u32 %s1142, 85
        %s1144 = sshrl.u32 %s1143, 1
        %s1145 = sor.u32 %s1143, %s1144
        %s1146 = sand.u32 51, %s1145
        %s1147 = sshrl.u32 %s1146, 2
        %s1148 = sor.u32 %s1146, %s1147
        %s1149 = sand.u32 15, %s1148
        %v1150 = vld [vmem:[%s1140] sm:%s1149]
        %v1151 = vunpack.c.l.bf16 %v1150
        %v1152 = vunpack.c.h.bf16 %v1150
        %v1153 = vlaneseq
        %v1154 = vand.u32 %v1153, 127
        %vm1156 = vcmp.lt.s32.totalorder %v1154, 75
        %v1157 = vsel %vm1156, %v1151, %v28
        %1158 = xla_tuple %v1157, %v23
        %1159 = xla_tuple %1158
        %v1160 = vmax.f32 %v1157, %v23
        %1161 = xla_tuple %v1160
        %1162 = xla_tuple %v1160, %v18
        %1163 = xla_tuple %1162
        %v1164 = vmax.f32 %v1160, %v18
        %1165 = xla_tuple %v1164
        %1166 = xla_tuple %v1164, %v13
        %1167 = xla_tuple %1166
        %v1168 = vmax.f32 %v1164, %v13
        %1169 = xla_tuple %v1168
        %s1170 = scalar_lea.vmem [#allocation23], 28
        %v1171 = vpack.c.bf16 0.0, %v1168
        %s1173 = ssub.s32 16, 1
        %1174 = vst [vmem:[%s1170] sm:%s1173] %v1171
        %s1175 = scalar_lea.vmem %s437, 32
        %s1176 = ssub.s32 0, 0
        %p1177 = scmp.lt.s32.totalorder %s1176, 0
        %s1178 = scalar_select %p1177, 0, 255
        %s1179 = sshrl.u32 %s1178, 1
        %s1180 = sor.u32 %s1178, %s1179
        %s1181 = sand.u32 %s1180, 85
        %s1182 = sshrl.u32 %s1181, 1
        %s1183 = sor.u32 %s1181, %s1182
        %s1184 = sand.u32 51, %s1183
        %s1185 = sshrl.u32 %s1184, 2
        %s1186 = sor.u32 %s1184, %s1185
        %s1187 = sand.u32 15, %s1186
        %v1188 = vld [vmem:[%s1175] sm:%s1187]
        %v1189 = vunpack.c.l.bf16 %v1188
        %v1190 = vunpack.c.h.bf16 %v1188
        %s1191 = scalar_lea.vmem %s461, 32
        %s1192 = ssub.s32 0, 0
        %p1193 = scmp.lt.s32.totalorder %s1192, 0
        %s1194 = scalar_select %p1193, 0, 255
        %s1195 = sshrl.u32 %s1194, 1
        %s1196 = sor.u32 %s1194, %s1195
        %s1197 = sand.u32 %s1196, 85
        %s1198 = sshrl.u32 %s1197, 1
        %s1199 = sor.u32 %s1197, %s1198
        %s1200 = sand.u32 51, %s1199
        %s1201 = sshrl.u32 %s1200, 2
        %s1202 = sor.u32 %s1200, %s1201
        %s1203 = sand.u32 15, %s1202
        %v1204 = vld [vmem:[%s1191] sm:%s1203]
        %v1205 = vunpack.c.l.bf16 %v1204
        %v1206 = vunpack.c.h.bf16 %v1204
        %s1207 = scalar_lea.vmem %s485, 32
        %s1208 = ssub.s32 0, 0
        %p1209 = scmp.lt.s32.totalorder %s1208, 0
        %s1210 = scalar_select %p1209, 0, 255
        %s1211 = sshrl.u32 %s1210, 1
        %s1212 = sor.u32 %s1210, %s1211
        %s1213 = sand.u32 %s1212, 85
        %s1214 = sshrl.u32 %s1213, 1
        %s1215 = sor.u32 %s1213, %s1214
        %s1216 = sand.u32 51, %s1215
        %s1217 = sshrl.u32 %s1216, 2
        %s1218 = sor.u32 %s1216, %s1217
        %s1219 = sand.u32 15, %s1218
        %v1220 = vld [vmem:[%s1207] sm:%s1219]
        %v1221 = vunpack.c.l.bf16 %v1220
        %v1222 = vunpack.c.h.bf16 %v1220
        %s1223 = scalar_lea.vmem %s502, 32
        %s1225 = sor.u32 255, 127
        %s1226 = sand.u32 %s1225, 85
        %s1227 = sshrl.u32 %s1226, 1
        %s1228 = sor.u32 %s1226, %s1227
        %s1229 = sand.u32 51, %s1228
        %s1230 = sshrl.u32 %s1229, 2
        %s1231 = sor.u32 %s1229, %s1230
        %s1232 = sand.u32 15, %s1231
        %v1233 = vld [vmem:[%s1223] sm:%s1232]
        %v1234 = vunpack.c.l.bf16 %v1233
        %v1235 = vunpack.c.h.bf16 %v1233
        %v1236 = vlaneseq
        %v1237 = vand.u32 %v1236, 127
        %vm1239 = vcmp.lt.s32.totalorder %v1237, 75
        %v1240 = vsel %vm1239, %v1234, %v28
        %1241 = xla_tuple %v1240, %v23
        %1242 = xla_tuple %1241
        %v1243 = vmax.f32 %v1240, %v23
        %1244 = xla_tuple %v1243
        %1245 = xla_tuple %v1243, %v18
        %1246 = xla_tuple %1245
        %v1247 = vmax.f32 %v1243, %v18
        %1248 = xla_tuple %v1247
        %1249 = xla_tuple %v1247, %v13
        %1250 = xla_tuple %1249
        %v1251 = vmax.f32 %v1247, %v13
        %1252 = xla_tuple %v1251
        %s1253 = scalar_lea.vmem [#allocation23], 32
        %v1254 = vpack.c.bf16 0.0, %v1251
        %s1256 = ssub.s32 16, 1
        %1257 = vst [vmem:[%s1253] sm:%s1256] %v1254
        %s1258 = scalar_lea.vmem %s437, 36
        %s1259 = ssub.s32 0, 0
        %p1260 = scmp.lt.s32.totalorder %s1259, 0
        %s1261 = scalar_select %p1260, 0, 255
        %s1262 = sshrl.u32 %s1261, 1
        %s1263 = sor.u32 %s1261, %s1262
        %s1264 = sand.u32 %s1263, 85
        %s1265 = sshrl.u32 %s1264, 1
        %s1266 = sor.u32 %s1264, %s1265
        %s1267 = sand.u32 51, %s1266
        %s1268 = sshrl.u32 %s1267, 2
        %s1269 = sor.u32 %s1267, %s1268
        %s1270 = sand.u32 15, %s1269
        %v1271 = vld [vmem:[%s1258] sm:%s1270]
        %v1272 = vunpack.c.l.bf16 %v1271
        %v1273 = vunpack.c.h.bf16 %v1271
        %s1274 = scalar_lea.vmem %s461, 36
        %s1275 = ssub.s32 0, 0
        %p1276 = scmp.lt.s32.totalorder %s1275, 0
        %s1277 = scalar_select %p1276, 0, 255
        %s1278 = sshrl.u32 %s1277, 1
        %s1279 = sor.u32 %s1277, %s1278
        %s1280 = sand.u32 %s1279, 85
        %s1281 = sshrl.u32 %s1280, 1
        %s1282 = sor.u32 %s1280, %s1281
        %s1283 = sand.u32 51, %s1282
        %s1284 = sshrl.u32 %s1283, 2
        %s1285 = sor.u32 %s1283, %s1284
        %s1286 = sand.u32 15, %s1285
        %v1287 = vld [vmem:[%s1274] sm:%s1286]
        %v1288 = vunpack.c.l.bf16 %v1287
        %v1289 = vunpack.c.h.bf16 %v1287
        %s1290 = scalar_lea.vmem %s485, 36
        %s1291 = ssub.s32 0, 0
        %p1292 = scmp.lt.s32.totalorder %s1291, 0
        %s1293 = scalar_select %p1292, 0, 255
        %s1294 = sshrl.u32 %s1293, 1
        %s1295 = sor.u32 %s1293, %s1294
        %s1296 = sand.u32 %s1295, 85
        %s1297 = sshrl.u32 %s1296, 1
        %s1298 = sor.u32 %s1296, %s1297
        %s1299 = sand.u32 51, %s1298
        %s1300 = sshrl.u32 %s1299, 2
        %s1301 = sor.u32 %s1299, %s1300
        %s1302 = sand.u32 15, %s1301
        %v1303 = vld [vmem:[%s1290] sm:%s1302]
        %v1304 = vunpack.c.l.bf16 %v1303
        %v1305 = vunpack.c.h.bf16 %v1303
        %s1306 = scalar_lea.vmem %s502, 36
        %s1308 = sor.u32 255, 127
        %s1309 = sand.u32 %s1308, 85
        %s1310 = sshrl.u32 %s1309, 1
        %s1311 = sor.u32 %s1309, %s1310
        %s1312 = sand.u32 51, %s1311
        %s1313 = sshrl.u32 %s1312, 2
        %s1314 = sor.u32 %s1312, %s1313
        %s1315 = sand.u32 15, %s1314
        %v1316 = vld [vmem:[%s1306] sm:%s1315]
        %v1317 = vunpack.c.l.bf16 %v1316
        %v1318 = vunpack.c.h.bf16 %v1316
        %v1319 = vlaneseq
        %v1320 = vand.u32 %v1319, 127
        %vm1322 = vcmp.lt.s32.totalorder %v1320, 75
        %v1323 = vsel %vm1322, %v1317, %v28
        %1324 = xla_tuple %v1323, %v23
        %1325 = xla_tuple %1324
        %v1326 = vmax.f32 %v1323, %v23
        %1327 = xla_tuple %v1326
        %1328 = xla_tuple %v1326, %v18
        %1329 = xla_tuple %1328
        %v1330 = vmax.f32 %v1326, %v18
        %1331 = xla_tuple %v1330
        %1332 = xla_tuple %v1330, %v13
        %1333 = xla_tuple %1332
        %v1334 = vmax.f32 %v1330, %v13
        %1335 = xla_tuple %v1334
        %s1336 = scalar_lea.vmem [#allocation23], 36
        %v1337 = vpack.c.bf16 0.0, %v1334
        %s1339 = ssub.s32 16, 1
        %1340 = vst [vmem:[%s1336] sm:%s1339] %v1337
        %s1341 = scalar_lea.vmem %s437, 40
        %s1342 = ssub.s32 0, 0
        %p1343 = scmp.lt.s32.totalorder %s1342, 0
        %s1344 = scalar_select %p1343, 0, 255
        %s1345 = sshrl.u32 %s1344, 1
        %s1346 = sor.u32 %s1344, %s1345
        %s1347 = sand.u32 %s1346, 85
        %s1348 = sshrl.u32 %s1347, 1
        %s1349 = sor.u32 %s1347, %s1348
        %s1350 = sand.u32 51, %s1349
        %s1351 = sshrl.u32 %s1350, 2
        %s1352 = sor.u32 %s1350, %s1351
        %s1353 = sand.u32 15, %s1352
        %v1354 = vld [vmem:[%s1341] sm:%s1353]
        %v1355 = vunpack.c.l.bf16 %v1354
        %v1356 = vunpack.c.h.bf16 %v1354
        %s1357 = scalar_lea.vmem %s461, 40
        %s1358 = ssub.s32 0, 0
        %p1359 = scmp.lt.s32.totalorder %s1358, 0
        %s1360 = scalar_select %p1359, 0, 255
        %s1361 = sshrl.u32 %s1360, 1
        %s1362 = sor.u32 %s1360, %s1361
        %s1363 = sand.u32 %s1362, 85
        %s1364 = sshrl.u32 %s1363, 1
        %s1365 = sor.u32 %s1363, %s1364
        %s1366 = sand.u32 51, %s1365
        %s1367 = sshrl.u32 %s1366, 2
        %s1368 = sor.u32 %s1366, %s1367
        %s1369 = sand.u32 15, %s1368
        %v1370 = vld [vmem:[%s1357] sm:%s1369]
        %v1371 = vunpack.c.l.bf16 %v1370
        %v1372 = vunpack.c.h.bf16 %v1370
        %s1373 = scalar_lea.vmem %s485, 40
        %s1374 = ssub.s32 0, 0
        %p1375 = scmp.lt.s32.totalorder %s1374, 0
        %s1376 = scalar_select %p1375, 0, 255
        %s1377 = sshrl.u32 %s1376, 1
        %s1378 = sor.u32 %s1376, %s1377
        %s1379 = sand.u32 %s1378, 85
        %s1380 = sshrl.u32 %s1379, 1
        %s1381 = sor.u32 %s1379, %s1380
        %s1382 = sand.u32 51, %s1381
        %s1383 = sshrl.u32 %s1382, 2
        %s1384 = sor.u32 %s1382, %s1383
        %s1385 = sand.u32 15, %s1384
        %v1386 = vld [vmem:[%s1373] sm:%s1385]
        %v1387 = vunpack.c.l.bf16 %v1386
        %v1388 = vunpack.c.h.bf16 %v1386
        %s1389 = scalar_lea.vmem %s502, 40
        %s1391 = sor.u32 255, 127
        %s1392 = sand.u32 %s1391, 85
        %s1393 = sshrl.u32 %s1392, 1
        %s1394 = sor.u32 %s1392, %s1393
        %s1395 = sand.u32 51, %s1394
        %s1396 = sshrl.u32 %s1395, 2
        %s1397 = sor.u32 %s1395, %s1396
        %s1398 = sand.u32 15, %s1397
        %v1399 = vld [vmem:[%s1389] sm:%s1398]
        %v1400 = vunpack.c.l.bf16 %v1399
        %v1401 = vunpack.c.h.bf16 %v1399
        %v1402 = vlaneseq
        %v1403 = vand.u32 %v1402, 127
        %vm1405 = vcmp.lt.s32.totalorder %v1403, 75
        %v1406 = vsel %vm1405, %v1400, %v28
        %1407 = xla_tuple %v1406, %v23
        %1408 = xla_tuple %1407
        %v1409 = vmax.f32 %v1406, %v23
        %1410 = xla_tuple %v1409
        %1411 = xla_tuple %v1409, %v18
        %1412 = xla_tuple %1411
        %v1413 = vmax.f32 %v1409, %v18
        %1414 = xla_tuple %v1413
        %1415 = xla_tuple %v1413, %v13
        %1416 = xla_tuple %1415
        %v1417 = vmax.f32 %v1413, %v13
        %1418 = xla_tuple %v1417
        %s1419 = scalar_lea.vmem [#allocation23], 40
        %v1420 = vpack.c.bf16 0.0, %v1417
        %s1422 = ssub.s32 16, 1
        %1423 = vst [vmem:[%s1419] sm:%s1422] %v1420
        %s1424 = scalar_lea.vmem %s437, 44
        %s1425 = ssub.s32 0, 0
        %p1426 = scmp.lt.s32.totalorder %s1425, 0
        %s1427 = scalar_select %p1426, 0, 255
        %s1428 = sshrl.u32 %s1427, 1
        %s1429 = sor.u32 %s1427, %s1428
        %s1430 = sand.u32 %s1429, 85
        %s1431 = sshrl.u32 %s1430, 1
        %s1432 = sor.u32 %s1430, %s1431
        %s1433 = sand.u32 51, %s1432
        %s1434 = sshrl.u32 %s1433, 2
        %s1435 = sor.u32 %s1433, %s1434
        %s1436 = sand.u32 15, %s1435
        %v1437 = vld [vmem:[%s1424] sm:%s1436]
        %v1438 = vunpack.c.l.bf16 %v1437
        %v1439 = vunpack.c.h.bf16 %v1437
        %s1440 = scalar_lea.vmem %s461, 44
        %s1441 = ssub.s32 0, 0
        %p1442 = scmp.lt.s32.totalorder %s1441, 0
        %s1443 = scalar_select %p1442, 0, 255
        %s1444 = sshrl.u32 %s1443, 1
        %s1445 = sor.u32 %s1443, %s1444
        %s1446 = sand.u32 %s1445, 85
        %s1447 = sshrl.u32 %s1446, 1
        %s1448 = sor.u32 %s1446, %s1447
        %s1449 = sand.u32 51, %s1448
        %s1450 = sshrl.u32 %s1449, 2
        %s1451 = sor.u32 %s1449, %s1450
        %s1452 = sand.u32 15, %s1451
        %v1453 = vld [vmem:[%s1440] sm:%s1452]
        %v1454 = vunpack.c.l.bf16 %v1453
        %v1455 = vunpack.c.h.bf16 %v1453
        %s1456 = scalar_lea.vmem %s485, 44
        %s1457 = ssub.s32 0, 0
        %p1458 = scmp.lt.s32.totalorder %s1457, 0
        %s1459 = scalar_select %p1458, 0, 255
        %s1460 = sshrl.u32 %s1459, 1
        %s1461 = sor.u32 %s1459, %s1460
        %s1462 = sand.u32 %s1461, 85
        %s1463 = sshrl.u32 %s1462, 1
        %s1464 = sor.u32 %s1462, %s1463
        %s1465 = sand.u32 51, %s1464
        %s1466 = sshrl.u32 %s1465, 2
        %s1467 = sor.u32 %s1465, %s1466
        %s1468 = sand.u32 15, %s1467
        %v1469 = vld [vmem:[%s1456] sm:%s1468]
        %v1470 = vunpack.c.l.bf16 %v1469
        %v1471 = vunpack.c.h.bf16 %v1469
        %s1472 = scalar_lea.vmem %s502, 44
        %s1474 = sor.u32 255, 127
        %s1475 = sand.u32 %s1474, 85
        %s1476 = sshrl.u32 %s1475, 1
        %s1477 = sor.u32 %s1475, %s1476
        %s1478 = sand.u32 51, %s1477
        %s1479 = sshrl.u32 %s1478, 2
        %s1480 = sor.u32 %s1478, %s1479
        %s1481 = sand.u32 15, %s1480
        %v1482 = vld [vmem:[%s1472] sm:%s1481]
        %v1483 = vunpack.c.l.bf16 %v1482
        %v1484 = vunpack.c.h.bf16 %v1482
        %v1485 = vlaneseq
        %v1486 = vand.u32 %v1485, 127
        %vm1488 = vcmp.lt.s32.totalorder %v1486, 75
        %v1489 = vsel %vm1488, %v1483, %v28
        %1490 = xla_tuple %v1489, %v23
        %1491 = xla_tuple %1490
        %v1492 = vmax.f32 %v1489, %v23
        %1493 = xla_tuple %v1492
        %1494 = xla_tuple %v1492, %v18
        %1495 = xla_tuple %1494
        %v1496 = vmax.f32 %v1492, %v18
        %1497 = xla_tuple %v1496
        %1498 = xla_tuple %v1496, %v13
        %1499 = xla_tuple %1498
        %v1500 = vmax.f32 %v1496, %v13
        %1501 = xla_tuple %v1500
        %s1502 = scalar_lea.vmem [#allocation23], 44
        %v1503 = vpack.c.bf16 0.0, %v1500
        %s1505 = ssub.s32 16, 1
        %1506 = vst [vmem:[%s1502] sm:%s1505] %v1503
        %s1507 = scalar_lea.vmem %s437, 48
        %s1508 = ssub.s32 0, 0
        %p1509 = scmp.lt.s32.totalorder %s1508, 0
        %s1510 = scalar_select %p1509, 0, 255
        %s1511 = sshrl.u32 %s1510, 1
        %s1512 = sor.u32 %s1510, %s1511
        %s1513 = sand.u32 %s1512, 85
        %s1514 = sshrl.u32 %s1513, 1
        %s1515 = sor.u32 %s1513, %s1514
        %s1516 = sand.u32 51, %s1515
        %s1517 = sshrl.u32 %s1516, 2
        %s1518 = sor.u32 %s1516, %s1517
        %s1519 = sand.u32 15, %s1518
        %v1520 = vld [vmem:[%s1507] sm:%s1519]
        %v1521 = vunpack.c.l.bf16 %v1520
        %v1522 = vunpack.c.h.bf16 %v1520
        %s1523 = scalar_lea.vmem %s461, 48
        %s1524 = ssub.s32 0, 0
        %p1525 = scmp.lt.s32.totalorder %s1524, 0
        %s1526 = scalar_select %p1525, 0, 255
        %s1527 = sshrl.u32 %s1526, 1
        %s1528 = sor.u32 %s1526, %s1527
        %s1529 = sand.u32 %s1528, 85
        %s1530 = sshrl.u32 %s1529, 1
        %s1531 = sor.u32 %s1529, %s1530
        %s1532 = sand.u32 51, %s1531
        %s1533 = sshrl.u32 %s1532, 2
        %s1534 = sor.u32 %s1532, %s1533
        %s1535 = sand.u32 15, %s1534
        %v1536 = vld [vmem:[%s1523] sm:%s1535]
        %v1537 = vunpack.c.l.bf16 %v1536
        %v1538 = vunpack.c.h.bf16 %v1536
        %s1539 = scalar_lea.vmem %s485, 48
        %s1540 = ssub.s32 0, 0
        %p1541 = scmp.lt.s32.totalorder %s1540, 0
        %s1542 = scalar_select %p1541, 0, 255
        %s1543 = sshrl.u32 %s1542, 1
        %s1544 = sor.u32 %s1542, %s1543
        %s1545 = sand.u32 %s1544, 85
        %s1546 = sshrl.u32 %s1545, 1
        %s1547 = sor.u32 %s1545, %s1546
        %s1548 = sand.u32 51, %s1547
        %s1549 = sshrl.u32 %s1548, 2
        %s1550 = sor.u32 %s1548, %s1549
        %s1551 = sand.u32 15, %s1550
        %v1552 = vld [vmem:[%s1539] sm:%s1551]
        %v1553 = vunpack.c.l.bf16 %v1552
        %v1554 = vunpack.c.h.bf16 %v1552
        %s1555 = scalar_lea.vmem %s502, 48
        %s1557 = sor.u32 255, 127
        %s1558 = sand.u32 %s1557, 85
        %s1559 = sshrl.u32 %s1558, 1
        %s1560 = sor.u32 %s1558, %s1559
        %s1561 = sand.u32 51, %s1560
        %s1562 = sshrl.u32 %s1561, 2
        %s1563 = sor.u32 %s1561, %s1562
        %s1564 = sand.u32 15, %s1563
        %v1565 = vld [vmem:[%s1555] sm:%s1564]
        %v1566 = vunpack.c.l.bf16 %v1565
        %v1567 = vunpack.c.h.bf16 %v1565
        %v1568 = vlaneseq
        %v1569 = vand.u32 %v1568, 127
        %vm1571 = vcmp.lt.s32.totalorder %v1569, 75
        %v1572 = vsel %vm1571, %v1566, %v28
        %1573 = xla_tuple %v1572, %v23
        %1574 = xla_tuple %1573
        %v1575 = vmax.f32 %v1572, %v23
        %1576 = xla_tuple %v1575
        %1577 = xla_tuple %v1575, %v18
        %1578 = xla_tuple %1577
        %v1579 = vmax.f32 %v1575, %v18
        %1580 = xla_tuple %v1579
        %1581 = xla_tuple %v1579, %v13
        %1582 = xla_tuple %1581
        %v1583 = vmax.f32 %v1579, %v13
        %1584 = xla_tuple %v1583
        %s1585 = scalar_lea.vmem [#allocation23], 48
        %v1586 = vpack.c.bf16 0.0, %v1583
        %s1588 = ssub.s32 16, 1
        %1589 = vst [vmem:[%s1585] sm:%s1588] %v1586
        %s1590 = scalar_lea.vmem %s437, 52
        %s1591 = ssub.s32 0, 0
        %p1592 = scmp.lt.s32.totalorder %s1591, 0
        %s1593 = scalar_select %p1592, 0, 255
        %s1594 = sshrl.u32 %s1593, 1
        %s1595 = sor.u32 %s1593, %s1594
        %s1596 = sand.u32 %s1595, 85
        %s1597 = sshrl.u32 %s1596, 1
        %s1598 = sor.u32 %s1596, %s1597
        %s1599 = sand.u32 51, %s1598
        %s1600 = sshrl.u32 %s1599, 2
        %s1601 = sor.u32 %s1599, %s1600
        %s1602 = sand.u32 15, %s1601
        %v1603 = vld [vmem:[%s1590] sm:%s1602]
        %v1604 = vunpack.c.l.bf16 %v1603
        %v1605 = vunpack.c.h.bf16 %v1603
        %s1606 = scalar_lea.vmem %s461, 52
        %s1607 = ssub.s32 0, 0
        %p1608 = scmp.lt.s32.totalorder %s1607, 0
        %s1609 = scalar_select %p1608, 0, 255
        %s1610 = sshrl.u32 %s1609, 1
        %s1611 = sor.u32 %s1609, %s1610
        %s1612 = sand.u32 %s1611, 85
        %s1613 = sshrl.u32 %s1612, 1
        %s1614 = sor.u32 %s1612, %s1613
        %s1615 = sand.u32 51, %s1614
        %s1616 = sshrl.u32 %s1615, 2
        %s1617 = sor.u32 %s1615, %s1616
        %s1618 = sand.u32 15, %s1617
        %v1619 = vld [vmem:[%s1606] sm:%s1618]
        %v1620 = vunpack.c.l.bf16 %v1619
        %v1621 = vunpack.c.h.bf16 %v1619
        %s1622 = scalar_lea.vmem %s485, 52
        %s1623 = ssub.s32 0, 0
        %p1624 = scmp.lt.s32.totalorder %s1623, 0
        %s1625 = scalar_select %p1624, 0, 255
        %s1626 = sshrl.u32 %s1625, 1
        %s1627 = sor.u32 %s1625, %s1626
        %s1628 = sand.u32 %s1627, 85
        %s1629 = sshrl.u32 %s1628, 1
        %s1630 = sor.u32 %s1628, %s1629
        %s1631 = sand.u32 51, %s1630
        %s1632 = sshrl.u32 %s1631, 2
        %s1633 = sor.u32 %s1631, %s1632
        %s1634 = sand.u32 15, %s1633
        %v1635 = vld [vmem:[%s1622] sm:%s1634]
        %v1636 = vunpack.c.l.bf16 %v1635
        %v1637 = vunpack.c.h.bf16 %v1635
        %s1638 = scalar_lea.vmem %s502, 52
        %s1640 = sor.u32 255, 127
        %s1641 = sand.u32 %s1640, 85
        %s1642 = sshrl.u32 %s1641, 1
        %s1643 = sor.u32 %s1641, %s1642
        %s1644 = sand.u32 51, %s1643
        %s1645 = sshrl.u32 %s1644, 2
        %s1646 = sor.u32 %s1644, %s1645
        %s1647 = sand.u32 15, %s1646
        %v1648 = vld [vmem:[%s1638] sm:%s1647]
        %v1649 = vunpack.c.l.bf16 %v1648
        %v1650 = vunpack.c.h.bf16 %v1648
        %v1651 = vlaneseq
        %v1652 = vand.u32 %v1651, 127
        %vm1654 = vcmp.lt.s32.totalorder %v1652, 75
        %v1655 = vsel %vm1654, %v1649, %v28
        %1656 = xla_tuple %v1655, %v23
        %1657 = xla_tuple %1656
        %v1658 = vmax.f32 %v1655, %v23
        %1659 = xla_tuple %v1658
        %1660 = xla_tuple %v1658, %v18
        %1661 = xla_tuple %1660
        %v1662 = vmax.f32 %v1658, %v18
        %1663 = xla_tuple %v1662
        %1664 = xla_tuple %v1662, %v13
        %1665 = xla_tuple %1664
        %v1666 = vmax.f32 %v1662, %v13
        %1667 = xla_tuple %v1666
        %s1668 = scalar_lea.vmem [#allocation23], 52
        %v1669 = vpack.c.bf16 0.0, %v1666
        %s1671 = ssub.s32 16, 1
        %1672 = vst [vmem:[%s1668] sm:%s1671] %v1669
        %s1673 = scalar_lea.vmem %s437, 56
        %s1674 = ssub.s32 0, 0
        %p1675 = scmp.lt.s32.totalorder %s1674, 0
        %s1676 = scalar_select %p1675, 0, 255
        %s1677 = sshrl.u32 %s1676, 1
        %s1678 = sor.u32 %s1676, %s1677
        %s1679 = sand.u32 %s1678, 85
        %s1680 = sshrl.u32 %s1679, 1
        %s1681 = sor.u32 %s1679, %s1680
        %s1682 = sand.u32 51, %s1681
        %s1683 = sshrl.u32 %s1682, 2
        %s1684 = sor.u32 %s1682, %s1683
        %s1685 = sand.u32 15, %s1684
        %v1686 = vld [vmem:[%s1673] sm:%s1685]
        %v1687 = vunpack.c.l.bf16 %v1686
        %v1688 = vunpack.c.h.bf16 %v1686
        %s1689 = scalar_lea.vmem %s461, 56
        %s1690 = ssub.s32 0, 0
        %p1691 = scmp.lt.s32.totalorder %s1690, 0
        %s1692 = scalar_select %p1691, 0, 255
        %s1693 = sshrl.u32 %s1692, 1
        %s1694 = sor.u32 %s1692, %s1693
        %s1695 = sand.u32 %s1694, 85
        %s1696 = sshrl.u32 %s1695, 1
        %s1697 = sor.u32 %s1695, %s1696
        %s1698 = sand.u32 51, %s1697
        %s1699 = sshrl.u32 %s1698, 2
        %s1700 = sor.u32 %s1698, %s1699
        %s1701 = sand.u32 15, %s1700
        %v1702 = vld [vmem:[%s1689] sm:%s1701]
        %v1703 = vunpack.c.l.bf16 %v1702
        %v1704 = vunpack.c.h.bf16 %v1702
        %s1705 = scalar_lea.vmem %s485, 56
        %s1706 = ssub.s32 0, 0
        %p1707 = scmp.lt.s32.totalorder %s1706, 0
        %s1708 = scalar_select %p1707, 0, 255
        %s1709 = sshrl.u32 %s1708, 1
        %s1710 = sor.u32 %s1708, %s1709
        %s1711 = sand.u32 %s1710, 85
        %s1712 = sshrl.u32 %s1711, 1
        %s1713 = sor.u32 %s1711, %s1712
        %s1714 = sand.u32 51, %s1713
        %s1715 = sshrl.u32 %s1714, 2
        %s1716 = sor.u32 %s1714, %s1715
        %s1717 = sand.u32 15, %s1716
        %v1718 = vld [vmem:[%s1705] sm:%s1717]
        %v1719 = vunpack.c.l.bf16 %v1718
        %v1720 = vunpack.c.h.bf16 %v1718
        %s1721 = scalar_lea.vmem %s502, 56
        %s1723 = sor.u32 255, 127
        %s1724 = sand.u32 %s1723, 85
        %s1725 = sshrl.u32 %s1724, 1
        %s1726 = sor.u32 %s1724, %s1725
        %s1727 = sand.u32 51, %s1726
        %s1728 = sshrl.u32 %s1727, 2
        %s1729 = sor.u32 %s1727, %s1728
        %s1730 = sand.u32 15, %s1729
        %v1731 = vld [vmem:[%s1721] sm:%s1730]
        %v1732 = vunpack.c.l.bf16 %v1731
        %v1733 = vunpack.c.h.bf16 %v1731
        %v1734 = vlaneseq
        %v1735 = vand.u32 %v1734, 127
        %vm1737 = vcmp.lt.s32.totalorder %v1735, 75
        %v1738 = vsel %vm1737, %v1732, %v28
        %1739 = xla_tuple %v1738, %v23
        %1740 = xla_tuple %1739
        %v1741 = vmax.f32 %v1738, %v23
        %1742 = xla_tuple %v1741
        %1743 = xla_tuple %v1741, %v18
        %1744 = xla_tuple %1743
        %v1745 = vmax.f32 %v1741, %v18
        %1746 = xla_tuple %v1745
        %1747 = xla_tuple %v1745, %v13
        %1748 = xla_tuple %1747
        %v1749 = vmax.f32 %v1745, %v13
        %1750 = xla_tuple %v1749
        %s1751 = scalar_lea.vmem [#allocation23], 56
        %v1752 = vpack.c.bf16 0.0, %v1749
        %s1754 = ssub.s32 16, 1
        %1755 = vst [vmem:[%s1751] sm:%s1754] %v1752
        %s1756 = scalar_lea.vmem %s437, 60
        %s1757 = ssub.s32 0, 0
        %p1758 = scmp.lt.s32.totalorder %s1757, 0
        %s1759 = scalar_select %p1758, 0, 255
        %s1760 = sshrl.u32 %s1759, 1
        %s1761 = sor.u32 %s1759, %s1760
        %s1762 = sand.u32 %s1761, 85
        %s1763 = sshrl.u32 %s1762, 1
        %s1764 = sor.u32 %s1762, %s1763
        %s1765 = sand.u32 51, %s1764
        %s1766 = sshrl.u32 %s1765, 2
        %s1767 = sor.u32 %s1765, %s1766
        %s1768 = sand.u32 15, %s1767
        %v1769 = vld [vmem:[%s1756] sm:%s1768]
        %v1770 = vunpack.c.l.bf16 %v1769
        %v1771 = vunpack.c.h.bf16 %v1769
        %s1772 = scalar_lea.vmem %s461, 60
        %s1773 = ssub.s32 0, 0
        %p1774 = scmp.lt.s32.totalorder %s1773, 0
        %s1775 = scalar_select %p1774, 0, 255
        %s1776 = sshrl.u32 %s1775, 1
        %s1777 = sor.u32 %s1775, %s1776
        %s1778 = sand.u32 %s1777, 85
        %s1779 = sshrl.u32 %s1778, 1
        %s1780 = sor.u32 %s1778, %s1779
        %s1781 = sand.u32 51, %s1780
        %s1782 = sshrl.u32 %s1781, 2
        %s1783 = sor.u32 %s1781, %s1782
        %s1784 = sand.u32 15, %s1783
        %v1785 = vld [vmem:[%s1772] sm:%s1784]
        %v1786 = vunpack.c.l.bf16 %v1785
        %v1787 = vunpack.c.h.bf16 %v1785
        %s1788 = scalar_lea.vmem %s485, 60
        %s1789 = ssub.s32 0, 0
        %p1790 = scmp.lt.s32.totalorder %s1789, 0
        %s1791 = scalar_select %p1790, 0, 255
        %s1792 = sshrl.u32 %s1791, 1
        %s1793 = sor.u32 %s1791, %s1792
        %s1794 = sand.u32 %s1793, 85
        %s1795 = sshrl.u32 %s1794, 1
        %s1796 = sor.u32 %s1794, %s1795
        %s1797 = sand.u32 51, %s1796
        %s1798 = sshrl.u32 %s1797, 2
        %s1799 = sor.u32 %s1797, %s1798
        %s1800 = sand.u32 15, %s1799
        %v1801 = vld [vmem:[%s1788] sm:%s1800]
        %v1802 = vunpack.c.l.bf16 %v1801
        %v1803 = vunpack.c.h.bf16 %v1801
        %s1804 = scalar_lea.vmem %s502, 60
        %s1806 = sor.u32 255, 127
        %s1807 = sand.u32 %s1806, 85
        %s1808 = sshrl.u32 %s1807, 1
        %s1809 = sor.u32 %s1807, %s1808
        %s1810 = sand.u32 51, %s1809
        %s1811 = sshrl.u32 %s1810, 2
        %s1812 = sor.u32 %s1810, %s1811
        %s1813 = sand.u32 15, %s1812
        %v1814 = vld [vmem:[%s1804] sm:%s1813]
        %v1815 = vunpack.c.l.bf16 %v1814
        %v1816 = vunpack.c.h.bf16 %v1814
        %v1817 = vlaneseq
        %v1818 = vand.u32 %v1817, 127
        %vm1820 = vcmp.lt.s32.totalorder %v1818, 75
        %v1821 = vsel %vm1820, %v1815, %v28
        %1822 = xla_tuple %v1821, %v23
        %1823 = xla_tuple %1822
        %v1824 = vmax.f32 %v1821, %v23
        %1825 = xla_tuple %v1824
        %1826 = xla_tuple %v1824, %v18
        %1827 = xla_tuple %1826
        %v1828 = vmax.f32 %v1824, %v18
        %1829 = xla_tuple %v1828
        %1830 = xla_tuple %v1828, %v13
        %1831 = xla_tuple %1830
        %v1832 = vmax.f32 %v1828, %v13
        %1833 = xla_tuple %v1832
        %s1834 = scalar_lea.vmem [#allocation23], 60
        %v1835 = vpack.c.bf16 0.0, %v1832
        %s1837 = ssub.s32 16, 1
        %1838 = vst [vmem:[%s1834] sm:%s1837] %v1835
        %s1839 = scalar_lea.vmem %s437, 64
        %s1840 = ssub.s32 0, 0
        %p1841 = scmp.lt.s32.totalorder %s1840, 0
        %s1842 = scalar_select %p1841, 0, 255
        %s1843 = sshrl.u32 %s1842, 1
        %s1844 = sor.u32 %s1842, %s1843
        %s1845 = sand.u32 %s1844, 85
        %s1846 = sshrl.u32 %s1845, 1
        %s1847 = sor.u32 %s1845, %s1846
        %s1848 = sand.u32 51, %s1847
        %s1849 = sshrl.u32 %s1848, 2
        %s1850 = sor.u32 %s1848, %s1849
        %s1851 = sand.u32 15, %s1850
        %v1852 = vld [vmem:[%s1839] sm:%s1851]
        %v1853 = vunpack.c.l.bf16 %v1852
        %v1854 = vunpack.c.h.bf16 %v1852
        %s1855 = scalar_lea.vmem %s461, 64
        %s1856 = ssub.s32 0, 0
        %p1857 = scmp.lt.s32.totalorder %s1856, 0
        %s1858 = scalar_select %p1857, 0, 255
        %s1859 = sshrl.u32 %s1858, 1
        %s1860 = sor.u32 %s1858, %s1859
        %s1861 = sand.u32 %s1860, 85
        %s1862 = sshrl.u32 %s1861, 1
        %s1863 = sor.u32 %s1861, %s1862
        %s1864 = sand.u32 51, %s1863
        %s1865 = sshrl.u32 %s1864, 2
        %s1866 = sor.u32 %s1864, %s1865
        %s1867 = sand.u32 15, %s1866
        %v1868 = vld [vmem:[%s1855] sm:%s1867]
        %v1869 = vunpack.c.l.bf16 %v1868
        %v1870 = vunpack.c.h.bf16 %v1868
        %s1871 = scalar_lea.vmem %s485, 64
        %s1872 = ssub.s32 0, 0
        %p1873 = scmp.lt.s32.totalorder %s1872, 0
        %s1874 = scalar_select %p1873, 0, 255
        %s1875 = sshrl.u32 %s1874, 1
        %s1876 = sor.u32 %s1874, %s1875
        %s1877 = sand.u32 %s1876, 85
        %s1878 = sshrl.u32 %s1877, 1
        %s1879 = sor.u32 %s1877, %s1878
        %s1880 = sand.u32 51, %s1879
        %s1881 = sshrl.u32 %s1880, 2
        %s1882 = sor.u32 %s1880, %s1881
        %s1883 = sand.u32 15, %s1882
        %v1884 = vld [vmem:[%s1871] sm:%s1883]
        %v1885 = vunpack.c.l.bf16 %v1884
        %v1886 = vunpack.c.h.bf16 %v1884
        %s1887 = scalar_lea.vmem %s502, 64
        %s1889 = sor.u32 255, 127
        %s1890 = sand.u32 %s1889, 85
        %s1891 = sshrl.u32 %s1890, 1
        %s1892 = sor.u32 %s1890, %s1891
        %s1893 = sand.u32 51, %s1892
        %s1894 = sshrl.u32 %s1893, 2
        %s1895 = sor.u32 %s1893, %s1894
        %s1896 = sand.u32 15, %s1895
        %v1897 = vld [vmem:[%s1887] sm:%s1896]
        %v1898 = vunpack.c.l.bf16 %v1897
        %v1899 = vunpack.c.h.bf16 %v1897
        %v1900 = vlaneseq
        %v1901 = vand.u32 %v1900, 127
        %vm1903 = vcmp.lt.s32.totalorder %v1901, 75
        %v1904 = vsel %vm1903, %v1898, %v28
        %1905 = xla_tuple %v1904, %v23
        %1906 = xla_tuple %1905
        %v1907 = vmax.f32 %v1904, %v23
        %1908 = xla_tuple %v1907
        %1909 = xla_tuple %v1907, %v18
        %1910 = xla_tuple %1909
        %v1911 = vmax.f32 %v1907, %v18
        %1912 = xla_tuple %v1911
        %1913 = xla_tuple %v1911, %v13
        %1914 = xla_tuple %1913
        %v1915 = vmax.f32 %v1911, %v13
        %1916 = xla_tuple %v1915
        %s1917 = scalar_lea.vmem [#allocation23], 64
        %v1918 = vpack.c.bf16 0.0, %v1915
        %s1920 = ssub.s32 16, 1
        %1921 = vst [vmem:[%s1917] sm:%s1920] %v1918
        %s1922 = scalar_lea.vmem %s437, 68
        %s1923 = ssub.s32 0, 0
        %p1924 = scmp.lt.s32.totalorder %s1923, 0
        %s1925 = scalar_select %p1924, 0, 255
        %s1926 = sshrl.u32 %s1925, 1
        %s1927 = sor.u32 %s1925, %s1926
        %s1928 = sand.u32 %s1927, 85
        %s1929 = sshrl.u32 %s1928, 1
        %s1930 = sor.u32 %s1928, %s1929
        %s1931 = sand.u32 51, %s1930
        %s1932 = sshrl.u32 %s1931, 2
        %s1933 = sor.u32 %s1931, %s1932
        %s1934 = sand.u32 15, %s1933
        %v1935 = vld [vmem:[%s1922] sm:%s1934]
        %v1936 = vunpack.c.l.bf16 %v1935
        %v1937 = vunpack.c.h.bf16 %v1935
        %s1938 = scalar_lea.vmem %s461, 68
        %s1939 = ssub.s32 0, 0
        %p1940 = scmp.lt.s32.totalorder %s1939, 0
        %s1941 = scalar_select %p1940, 0, 255
        %s1942 = sshrl.u32 %s1941, 1
        %s1943 = sor.u32 %s1941, %s1942
        %s1944 = sand.u32 %s1943, 85
        %s1945 = sshrl.u32 %s1944, 1
        %s1946 = sor.u32 %s1944, %s1945
        %s1947 = sand.u32 51, %s1946
        %s1948 = sshrl.u32 %s1947, 2
        %s1949 = sor.u32 %s1947, %s1948
        %s1950 = sand.u32 15, %s1949
        %v1951 = vld [vmem:[%s1938] sm:%s1950]
        %v1952 = vunpack.c.l.bf16 %v1951
        %v1953 = vunpack.c.h.bf16 %v1951
        %s1954 = scalar_lea.vmem %s485, 68
        %s1955 = ssub.s32 0, 0
        %p1956 = scmp.lt.s32.totalorder %s1955, 0
        %s1957 = scalar_select %p1956, 0, 255
        %s1958 = sshrl.u32 %s1957, 1
        %s1959 = sor.u32 %s1957, %s1958
        %s1960 = sand.u32 %s1959, 85
        %s1961 = sshrl.u32 %s1960, 1
        %s1962 = sor.u32 %s1960, %s1961
        %s1963 = sand.u32 51, %s1962
        %s1964 = sshrl.u32 %s1963, 2
        %s1965 = sor.u32 %s1963, %s1964
        %s1966 = sand.u32 15, %s1965
        %v1967 = vld [vmem:[%s1954] sm:%s1966]
        %v1968 = vunpack.c.l.bf16 %v1967
        %v1969 = vunpack.c.h.bf16 %v1967
        %s1970 = scalar_lea.vmem %s502, 68
        %s1972 = sor.u32 255, 127
        %s1973 = sand.u32 %s1972, 85
        %s1974 = sshrl.u32 %s1973, 1
        %s1975 = sor.u32 %s1973, %s1974
        %s1976 = sand.u32 51, %s1975
        %s1977 = sshrl.u32 %s1976, 2
        %s1978 = sor.u32 %s1976, %s1977
        %s1979 = sand.u32 15, %s1978
        %v1980 = vld [vmem:[%s1970] sm:%s1979]
        %v1981 = vunpack.c.l.bf16 %v1980
        %v1982 = vunpack.c.h.bf16 %v1980
        %v1983 = vlaneseq
        %v1984 = vand.u32 %v1983, 127
        %vm1986 = vcmp.lt.s32.totalorder %v1984, 75
        %v1987 = vsel %vm1986, %v1981, %v28
        %1988 = xla_tuple %v1987, %v23
        %1989 = xla_tuple %1988
        %v1990 = vmax.f32 %v1987, %v23
        %1991 = xla_tuple %v1990
        %1992 = xla_tuple %v1990, %v18
        %1993 = xla_tuple %1992
        %v1994 = vmax.f32 %v1990, %v18
        %1995 = xla_tuple %v1994
        %1996 = xla_tuple %v1994, %v13
        %1997 = xla_tuple %1996
        %v1998 = vmax.f32 %v1994, %v13
        %1999 = xla_tuple %v1998
        %s2000 = scalar_lea.vmem [#allocation23], 68
        %v2001 = vpack.c.bf16 0.0, %v1998
        %s2003 = ssub.s32 16, 1
        %2004 = vst [vmem:[%s2000] sm:%s2003] %v2001
        %s2005 = scalar_lea.vmem %s437, 72
        %s2006 = ssub.s32 0, 0
        %p2007 = scmp.lt.s32.totalorder %s2006, 0
        %s2008 = scalar_select %p2007, 0, 255
        %s2009 = sshrl.u32 %s2008, 1
        %s2010 = sor.u32 %s2008, %s2009
        %s2011 = sand.u32 %s2010, 85
        %s2012 = sshrl.u32 %s2011, 1
        %s2013 = sor.u32 %s2011, %s2012
        %s2014 = sand.u32 51, %s2013
        %s2015 = sshrl.u32 %s2014, 2
        %s2016 = sor.u32 %s2014, %s2015
        %s2017 = sand.u32 15, %s2016
        %v2018 = vld [vmem:[%s2005] sm:%s2017]
        %v2019 = vunpack.c.l.bf16 %v2018
        %v2020 = vunpack.c.h.bf16 %v2018
        %s2021 = scalar_lea.vmem %s461, 72
        %s2022 = ssub.s32 0, 0
        %p2023 = scmp.lt.s32.totalorder %s2022, 0
        %s2024 = scalar_select %p2023, 0, 255
        %s2025 = sshrl.u32 %s2024, 1
        %s2026 = sor.u32 %s2024, %s2025
        %s2027 = sand.u32 %s2026, 85
        %s2028 = sshrl.u32 %s2027, 1
        %s2029 = sor.u32 %s2027, %s2028
        %s2030 = sand.u32 51, %s2029
        %s2031 = sshrl.u32 %s2030, 2
        %s2032 = sor.u32 %s2030, %s2031
        %s2033 = sand.u32 15, %s2032
        %v2034 = vld [vmem:[%s2021] sm:%s2033]
        %v2035 = vunpack.c.l.bf16 %v2034
        %v2036 = vunpack.c.h.bf16 %v2034
        %s2037 = scalar_lea.vmem %s485, 72
        %s2038 = ssub.s32 0, 0
        %p2039 = scmp.lt.s32.totalorder %s2038, 0
        %s2040 = scalar_select %p2039, 0, 255
        %s2041 = sshrl.u32 %s2040, 1
        %s2042 = sor.u32 %s2040, %s2041
        %s2043 = sand.u32 %s2042, 85
        %s2044 = sshrl.u32 %s2043, 1
        %s2045 = sor.u32 %s2043, %s2044
        %s2046 = sand.u32 51, %s2045
        %s2047 = sshrl.u32 %s2046, 2
        %s2048 = sor.u32 %s2046, %s2047
        %s2049 = sand.u32 15, %s2048
        %v2050 = vld [vmem:[%s2037] sm:%s2049]
        %v2051 = vunpack.c.l.bf16 %v2050
        %v2052 = vunpack.c.h.bf16 %v2050
        %s2053 = scalar_lea.vmem %s502, 72
        %s2055 = sor.u32 255, 127
        %s2056 = sand.u32 %s2055, 85
        %s2057 = sshrl.u32 %s2056, 1
        %s2058 = sor.u32 %s2056, %s2057
        %s2059 = sand.u32 51, %s2058
        %s2060 = sshrl.u32 %s2059, 2
        %s2061 = sor.u32 %s2059, %s2060
        %s2062 = sand.u32 15, %s2061
        %v2063 = vld [vmem:[%s2053] sm:%s2062]
        %v2064 = vunpack.c.l.bf16 %v2063
        %v2065 = vunpack.c.h.bf16 %v2063
        %v2066 = vlaneseq
        %v2067 = vand.u32 %v2066, 127
        %vm2069 = vcmp.lt.s32.totalorder %v2067, 75
        %v2070 = vsel %vm2069, %v2064, %v28
        %2071 = xla_tuple %v2070, %v23
        %2072 = xla_tuple %2071
        %v2073 = vmax.f32 %v2070, %v23
        %2074 = xla_tuple %v2073
        %2075 = xla_tuple %v2073, %v18
        %2076 = xla_tuple %2075
        %v2077 = vmax.f32 %v2073, %v18
        %2078 = xla_tuple %v2077
        %2079 = xla_tuple %v2077, %v13
        %2080 = xla_tuple %2079
        %v2081 = vmax.f32 %v2077, %v13
        %2082 = xla_tuple %v2081
        %s2083 = scalar_lea.vmem [#allocation23], 72
        %v2084 = vpack.c.bf16 0.0, %v2081
        %s2086 = ssub.s32 16, 1
        %2087 = vst [vmem:[%s2083] sm:%s2086] %v2084
        %s2088 = scalar_lea.vmem %s437, 76
        %s2089 = ssub.s32 0, 0
        %p2090 = scmp.lt.s32.totalorder %s2089, 0
        %s2091 = scalar_select %p2090, 0, 255
        %s2092 = sshrl.u32 %s2091, 1
        %s2093 = sor.u32 %s2091, %s2092
        %s2094 = sand.u32 %s2093, 85
        %s2095 = sshrl.u32 %s2094, 1
        %s2096 = sor.u32 %s2094, %s2095
        %s2097 = sand.u32 51, %s2096
        %s2098 = sshrl.u32 %s2097, 2
        %s2099 = sor.u32 %s2097, %s2098
        %s2100 = sand.u32 15, %s2099
        %v2101 = vld [vmem:[%s2088] sm:%s2100]
        %v2102 = vunpack.c.l.bf16 %v2101
        %v2103 = vunpack.c.h.bf16 %v2101
        %s2104 = scalar_lea.vmem %s461, 76
        %s2105 = ssub.s32 0, 0
        %p2106 = scmp.lt.s32.totalorder %s2105, 0
        %s2107 = scalar_select %p2106, 0, 255
        %s2108 = sshrl.u32 %s2107, 1
        %s2109 = sor.u32 %s2107, %s2108
        %s2110 = sand.u32 %s2109, 85
        %s2111 = sshrl.u32 %s2110, 1
        %s2112 = sor.u32 %s2110, %s2111
        %s2113 = sand.u32 51, %s2112
        %s2114 = sshrl.u32 %s2113, 2
        %s2115 = sor.u32 %s2113, %s2114
        %s2116 = sand.u32 15, %s2115
        %v2117 = vld [vmem:[%s2104] sm:%s2116]
        %v2118 = vunpack.c.l.bf16 %v2117
        %v2119 = vunpack.c.h.bf16 %v2117
        %s2120 = scalar_lea.vmem %s485, 76
        %s2121 = ssub.s32 0, 0
        %p2122 = scmp.lt.s32.totalorder %s2121, 0
        %s2123 = scalar_select %p2122, 0, 255
        %s2124 = sshrl.u32 %s2123, 1
        %s2125 = sor.u32 %s2123, %s2124
        %s2126 = sand.u32 %s2125, 85
        %s2127 = sshrl.u32 %s2126, 1
        %s2128 = sor.u32 %s2126, %s2127
        %s2129 = sand.u32 51, %s2128
        %s2130 = sshrl.u32 %s2129, 2
        %s2131 = sor.u32 %s2129, %s2130
        %s2132 = sand.u32 15, %s2131
        %v2133 = vld [vmem:[%s2120] sm:%s2132]
        %v2134 = vunpack.c.l.bf16 %v2133
        %v2135 = vunpack.c.h.bf16 %v2133
        %s2136 = scalar_lea.vmem %s502, 76
        %s2138 = sor.u32 255, 127
        %s2139 = sand.u32 %s2138, 85
        %s2140 = sshrl.u32 %s2139, 1
        %s2141 = sor.u32 %s2139, %s2140
        %s2142 = sand.u32 51, %s2141
        %s2143 = sshrl.u32 %s2142, 2
        %s2144 = sor.u32 %s2142, %s2143
        %s2145 = sand.u32 15, %s2144
        %v2146 = vld [vmem:[%s2136] sm:%s2145]
        %v2147 = vunpack.c.l.bf16 %v2146
        %v2148 = vunpack.c.h.bf16 %v2146
        %v2149 = vlaneseq
        %v2150 = vand.u32 %v2149, 127
        %vm2152 = vcmp.lt.s32.totalorder %v2150, 75
        %v2153 = vsel %vm2152, %v2147, %v28
        %2154 = xla_tuple %v2153, %v23
        %2155 = xla_tuple %2154
        %v2156 = vmax.f32 %v2153, %v23
        %2157 = xla_tuple %v2156
        %2158 = xla_tuple %v2156, %v18
        %2159 = xla_tuple %2158
        %v2160 = vmax.f32 %v2156, %v18
        %2161 = xla_tuple %v2160
        %2162 = xla_tuple %v2160, %v13
        %2163 = xla_tuple %2162
        %v2164 = vmax.f32 %v2160, %v13
        %2165 = xla_tuple %v2164
        %s2166 = scalar_lea.vmem [#allocation23], 76
        %v2167 = vpack.c.bf16 0.0, %v2164
        %s2169 = ssub.s32 16, 1
        %2170 = vst [vmem:[%s2166] sm:%s2169] %v2167
        %s2171 = scalar_lea.vmem %s437, 80
        %s2172 = ssub.s32 0, 0
        %p2173 = scmp.lt.s32.totalorder %s2172, 0
        %s2174 = scalar_select %p2173, 0, 255
        %s2175 = sshrl.u32 %s2174, 1
        %s2176 = sor.u32 %s2174, %s2175
        %s2177 = sand.u32 %s2176, 85
        %s2178 = sshrl.u32 %s2177, 1
        %s2179 = sor.u32 %s2177, %s2178
        %s2180 = sand.u32 51, %s2179
        %s2181 = sshrl.u32 %s2180, 2
        %s2182 = sor.u32 %s2180, %s2181
        %s2183 = sand.u32 15, %s2182
        %v2184 = vld [vmem:[%s2171] sm:%s2183]
        %v2185 = vunpack.c.l.bf16 %v2184
        %v2186 = vunpack.c.h.bf16 %v2184
        %s2187 = scalar_lea.vmem %s461, 80
        %s2188 = ssub.s32 0, 0
        %p2189 = scmp.lt.s32.totalorder %s2188, 0
        %s2190 = scalar_select %p2189, 0, 255
        %s2191 = sshrl.u32 %s2190, 1
        %s2192 = sor.u32 %s2190, %s2191
        %s2193 = sand.u32 %s2192, 85
        %s2194 = sshrl.u32 %s2193, 1
        %s2195 = sor.u32 %s2193, %s2194
        %s2196 = sand.u32 51, %s2195
        %s2197 = sshrl.u32 %s2196, 2
        %s2198 = sor.u32 %s2196, %s2197
        %s2199 = sand.u32 15, %s2198
        %v2200 = vld [vmem:[%s2187] sm:%s2199]
        %v2201 = vunpack.c.l.bf16 %v2200
        %v2202 = vunpack.c.h.bf16 %v2200
        %s2203 = scalar_lea.vmem %s485, 80
        %s2204 = ssub.s32 0, 0
        %p2205 = scmp.lt.s32.totalorder %s2204, 0
        %s2206 = scalar_select %p2205, 0, 255
        %s2207 = sshrl.u32 %s2206, 1
        %s2208 = sor.u32 %s2206, %s2207
        %s2209 = sand.u32 %s2208, 85
        %s2210 = sshrl.u32 %s2209, 1
        %s2211 = sor.u32 %s2209, %s2210
        %s2212 = sand.u32 51, %s2211
        %s2213 = sshrl.u32 %s2212, 2
        %s2214 = sor.u32 %s2212, %s2213
        %s2215 = sand.u32 15, %s2214
        %v2216 = vld [vmem:[%s2203] sm:%s2215]
        %v2217 = vunpack.c.l.bf16 %v2216
        %v2218 = vunpack.c.h.bf16 %v2216
        %s2219 = scalar_lea.vmem %s502, 80
        %s2221 = sor.u32 255, 127
        %s2222 = sand.u32 %s2221, 85
        %s2223 = sshrl.u32 %s2222, 1
        %s2224 = sor.u32 %s2222, %s2223
        %s2225 = sand.u32 51, %s2224
        %s2226 = sshrl.u32 %s2225, 2
        %s2227 = sor.u32 %s2225, %s2226
        %s2228 = sand.u32 15, %s2227
        %v2229 = vld [vmem:[%s2219] sm:%s2228]
        %v2230 = vunpack.c.l.bf16 %v2229
        %v2231 = vunpack.c.h.bf16 %v2229
        %v2232 = vlaneseq
        %v2233 = vand.u32 %v2232, 127
        %vm2235 = vcmp.lt.s32.totalorder %v2233, 75
        %v2236 = vsel %vm2235, %v2230, %v28
        %2237 = xla_tuple %v2236, %v23
        %2238 = xla_tuple %2237
        %v2239 = vmax.f32 %v2236, %v23
        %2240 = xla_tuple %v2239
        %2241 = xla_tuple %v2239, %v18
        %2242 = xla_tuple %2241
        %v2243 = vmax.f32 %v2239, %v18
        %2244 = xla_tuple %v2243
        %2245 = xla_tuple %v2243, %v13
        %2246 = xla_tuple %2245
        %v2247 = vmax.f32 %v2243, %v13
        %2248 = xla_tuple %v2247
        %s2249 = scalar_lea.vmem [#allocation23], 80
        %v2250 = vpack.c.bf16 0.0, %v2247
        %s2252 = ssub.s32 16, 1
        %2253 = vst [vmem:[%s2249] sm:%s2252] %v2250
        %s2254 = scalar_lea.vmem %s437, 84
        %s2255 = ssub.s32 0, 0
        %p2256 = scmp.lt.s32.totalorder %s2255, 0
        %s2257 = scalar_select %p2256, 0, 255
        %s2258 = sshrl.u32 %s2257, 1
        %s2259 = sor.u32 %s2257, %s2258
        %s2260 = sand.u32 %s2259, 85
        %s2261 = sshrl.u32 %s2260, 1
        %s2262 = sor.u32 %s2260, %s2261
        %s2263 = sand.u32 51, %s2262
        %s2264 = sshrl.u32 %s2263, 2
        %s2265 = sor.u32 %s2263, %s2264
        %s2266 = sand.u32 15, %s2265
        %v2267 = vld [vmem:[%s2254] sm:%s2266]
        %v2268 = vunpack.c.l.bf16 %v2267
        %v2269 = vunpack.c.h.bf16 %v2267
        %s2270 = scalar_lea.vmem %s461, 84
        %s2271 = ssub.s32 0, 0
        %p2272 = scmp.lt.s32.totalorder %s2271, 0
        %s2273 = scalar_select %p2272, 0, 255
        %s2274 = sshrl.u32 %s2273, 1
        %s2275 = sor.u32 %s2273, %s2274
        %s2276 = sand.u32 %s2275, 85
        %s2277 = sshrl.u32 %s2276, 1
        %s2278 = sor.u32 %s2276, %s2277
        %s2279 = sand.u32 51, %s2278
        %s2280 = sshrl.u32 %s2279, 2
        %s2281 = sor.u32 %s2279, %s2280
        %s2282 = sand.u32 15, %s2281
        %v2283 = vld [vmem:[%s2270] sm:%s2282]
        %v2284 = vunpack.c.l.bf16 %v2283
        %v2285 = vunpack.c.h.bf16 %v2283
        %s2286 = scalar_lea.vmem %s485, 84
        %s2287 = ssub.s32 0, 0
        %p2288 = scmp.lt.s32.totalorder %s2287, 0
        %s2289 = scalar_select %p2288, 0, 255
        %s2290 = sshrl.u32 %s2289, 1
        %s2291 = sor.u32 %s2289, %s2290
        %s2292 = sand.u32 %s2291, 85
        %s2293 = sshrl.u32 %s2292, 1
        %s2294 = sor.u32 %s2292, %s2293
        %s2295 = sand.u32 51, %s2294
        %s2296 = sshrl.u32 %s2295, 2
        %s2297 = sor.u32 %s2295, %s2296
        %s2298 = sand.u32 15, %s2297
        %v2299 = vld [vmem:[%s2286] sm:%s2298]
        %v2300 = vunpack.c.l.bf16 %v2299
        %v2301 = vunpack.c.h.bf16 %v2299
        %s2302 = scalar_lea.vmem %s502, 84
        %s2304 = sor.u32 255, 127
        %s2305 = sand.u32 %s2304, 85
        %s2306 = sshrl.u32 %s2305, 1
        %s2307 = sor.u32 %s2305, %s2306
        %s2308 = sand.u32 51, %s2307
        %s2309 = sshrl.u32 %s2308, 2
        %s2310 = sor.u32 %s2308, %s2309
        %s2311 = sand.u32 15, %s2310
        %v2312 = vld [vmem:[%s2302] sm:%s2311]
        %v2313 = vunpack.c.l.bf16 %v2312
        %v2314 = vunpack.c.h.bf16 %v2312
        %v2315 = vlaneseq
        %v2316 = vand.u32 %v2315, 127
        %vm2318 = vcmp.lt.s32.totalorder %v2316, 75
        %v2319 = vsel %vm2318, %v2313, %v28
        %2320 = xla_tuple %v2319, %v23
        %2321 = xla_tuple %2320
        %v2322 = vmax.f32 %v2319, %v23
        %2323 = xla_tuple %v2322
        %2324 = xla_tuple %v2322, %v18
        %2325 = xla_tuple %2324
        %v2326 = vmax.f32 %v2322, %v18
        %2327 = xla_tuple %v2326
        %2328 = xla_tuple %v2326, %v13
        %2329 = xla_tuple %2328
        %v2330 = vmax.f32 %v2326, %v13
        %2331 = xla_tuple %v2330
        %s2332 = scalar_lea.vmem [#allocation23], 84
        %v2333 = vpack.c.bf16 0.0, %v2330
        %s2335 = ssub.s32 16, 1
        %2336 = vst [vmem:[%s2332] sm:%s2335] %v2333
        %s2337 = scalar_lea.vmem %s437, 88
        %s2338 = ssub.s32 0, 0
        %p2339 = scmp.lt.s32.totalorder %s2338, 0
        %s2340 = scalar_select %p2339, 0, 255
        %s2341 = sshrl.u32 %s2340, 1
        %s2342 = sor.u32 %s2340, %s2341
        %s2343 = sand.u32 %s2342, 85
        %s2344 = sshrl.u32 %s2343, 1
        %s2345 = sor.u32 %s2343, %s2344
        %s2346 = sand.u32 51, %s2345
        %s2347 = sshrl.u32 %s2346, 2
        %s2348 = sor.u32 %s2346, %s2347
        %s2349 = sand.u32 15, %s2348
        %v2350 = vld [vmem:[%s2337] sm:%s2349]
        %v2351 = vunpack.c.l.bf16 %v2350
        %v2352 = vunpack.c.h.bf16 %v2350
        %s2353 = scalar_lea.vmem %s461, 88
        %s2354 = ssub.s32 0, 0
        %p2355 = scmp.lt.s32.totalorder %s2354, 0
        %s2356 = scalar_select %p2355, 0, 255
        %s2357 = sshrl.u32 %s2356, 1
        %s2358 = sor.u32 %s2356, %s2357
        %s2359 = sand.u32 %s2358, 85
        %s2360 = sshrl.u32 %s2359, 1
        %s2361 = sor.u32 %s2359, %s2360
        %s2362 = sand.u32 51, %s2361
        %s2363 = sshrl.u32 %s2362, 2
        %s2364 = sor.u32 %s2362, %s2363
        %s2365 = sand.u32 15, %s2364
        %v2366 = vld [vmem:[%s2353] sm:%s2365]
        %v2367 = vunpack.c.l.bf16 %v2366
        %v2368 = vunpack.c.h.bf16 %v2366
        %s2369 = scalar_lea.vmem %s485, 88
        %s2370 = ssub.s32 0, 0
        %p2371 = scmp.lt.s32.totalorder %s2370, 0
        %s2372 = scalar_select %p2371, 0, 255
        %s2373 = sshrl.u32 %s2372, 1
        %s2374 = sor.u32 %s2372, %s2373
        %s2375 = sand.u32 %s2374, 85
        %s2376 = sshrl.u32 %s2375, 1
        %s2377 = sor.u32 %s2375, %s2376
        %s2378 = sand.u32 51, %s2377
        %s2379 = sshrl.u32 %s2378, 2
        %s2380 = sor.u32 %s2378, %s2379
        %s2381 = sand.u32 15, %s2380
        %v2382 = vld [vmem:[%s2369] sm:%s2381]
        %v2383 = vunpack.c.l.bf16 %v2382
        %v2384 = vunpack.c.h.bf16 %v2382
        %s2385 = scalar_lea.vmem %s502, 88
        %s2387 = sor.u32 255, 127
        %s2388 = sand.u32 %s2387, 85
        %s2389 = sshrl.u32 %s2388, 1
        %s2390 = sor.u32 %s2388, %s2389
        %s2391 = sand.u32 51, %s2390
        %s2392 = sshrl.u32 %s2391, 2
        %s2393 = sor.u32 %s2391, %s2392
        %s2394 = sand.u32 15, %s2393
        %v2395 = vld [vmem:[%s2385] sm:%s2394]
        %v2396 = vunpack.c.l.bf16 %v2395
        %v2397 = vunpack.c.h.bf16 %v2395
        %v2398 = vlaneseq
        %v2399 = vand.u32 %v2398, 127
        %vm2401 = vcmp.lt.s32.totalorder %v2399, 75
        %v2402 = vsel %vm2401, %v2396, %v28
        %2403 = xla_tuple %v2402, %v23
        %2404 = xla_tuple %2403
        %v2405 = vmax.f32 %v2402, %v23
        %2406 = xla_tuple %v2405
        %2407 = xla_tuple %v2405, %v18
        %2408 = xla_tuple %2407
        %v2409 = vmax.f32 %v2405, %v18
        %2410 = xla_tuple %v2409
        %2411 = xla_tuple %v2409, %v13
        %2412 = xla_tuple %2411
        %v2413 = vmax.f32 %v2409, %v13
        %2414 = xla_tuple %v2413
        %s2415 = scalar_lea.vmem [#allocation23], 88
        %v2416 = vpack.c.bf16 0.0, %v2413
        %s2418 = ssub.s32 16, 1
        %2419 = vst [vmem:[%s2415] sm:%s2418] %v2416
        %s2420 = scalar_lea.vmem %s437, 92
        %s2421 = ssub.s32 0, 0
        %p2422 = scmp.lt.s32.totalorder %s2421, 0
        %s2423 = scalar_select %p2422, 0, 255
        %s2424 = sshrl.u32 %s2423, 1
        %s2425 = sor.u32 %s2423, %s2424
        %s2426 = sand.u32 %s2425, 85
        %s2427 = sshrl.u32 %s2426, 1
        %s2428 = sor.u32 %s2426, %s2427
        %s2429 = sand.u32 51, %s2428
        %s2430 = sshrl.u32 %s2429, 2
        %s2431 = sor.u32 %s2429, %s2430
        %s2432 = sand.u32 15, %s2431
        %v2433 = vld [vmem:[%s2420] sm:%s2432]
        %v2434 = vunpack.c.l.bf16 %v2433
        %v2435 = vunpack.c.h.bf16 %v2433
        %s2436 = scalar_lea.vmem %s461, 92
        %s2437 = ssub.s32 0, 0
        %p2438 = scmp.lt.s32.totalorder %s2437, 0
        %s2439 = scalar_select %p2438, 0, 255
        %s2440 = sshrl.u32 %s2439, 1
        %s2441 = sor.u32 %s2439, %s2440
        %s2442 = sand.u32 %s2441, 85
        %s2443 = sshrl.u32 %s2442, 1
        %s2444 = sor.u32 %s2442, %s2443
        %s2445 = sand.u32 51, %s2444
        %s2446 = sshrl.u32 %s2445, 2
        %s2447 = sor.u32 %s2445, %s2446
        %s2448 = sand.u32 15, %s2447
        %v2449 = vld [vmem:[%s2436] sm:%s2448]
        %v2450 = vunpack.c.l.bf16 %v2449
        %v2451 = vunpack.c.h.bf16 %v2449
        %s2452 = scalar_lea.vmem %s485, 92
        %s2453 = ssub.s32 0, 0
        %p2454 = scmp.lt.s32.totalorder %s2453, 0
        %s2455 = scalar_select %p2454, 0, 255
        %s2456 = sshrl.u32 %s2455, 1
        %s2457 = sor.u32 %s2455, %s2456
        %s2458 = sand.u32 %s2457, 85
        %s2459 = sshrl.u32 %s2458, 1
        %s2460 = sor.u32 %s2458, %s2459
        %s2461 = sand.u32 51, %s2460
        %s2462 = sshrl.u32 %s2461, 2
        %s2463 = sor.u32 %s2461, %s2462
        %s2464 = sand.u32 15, %s2463
        %v2465 = vld [vmem:[%s2452] sm:%s2464]
        %v2466 = vunpack.c.l.bf16 %v2465
        %v2467 = vunpack.c.h.bf16 %v2465
        %s2468 = scalar_lea.vmem %s502, 92
        %s2470 = sor.u32 255, 127
        %s2471 = sand.u32 %s2470, 85
        %s2472 = sshrl.u32 %s2471, 1
        %s2473 = sor.u32 %s2471, %s2472
        %s2474 = sand.u32 51, %s2473
        %s2475 = sshrl.u32 %s2474, 2
        %s2476 = sor.u32 %s2474, %s2475
        %s2477 = sand.u32 15, %s2476
        %v2478 = vld [vmem:[%s2468] sm:%s2477]
        %v2479 = vunpack.c.l.bf16 %v2478
        %v2480 = vunpack.c.h.bf16 %v2478
        %v2481 = vlaneseq
        %v2482 = vand.u32 %v2481, 127
        %vm2484 = vcmp.lt.s32.totalorder %v2482, 75
        %v2485 = vsel %vm2484, %v2479, %v28
        %2486 = xla_tuple %v2485, %v23
        %2487 = xla_tuple %2486
        %v2488 = vmax.f32 %v2485, %v23
        %2489 = xla_tuple %v2488
        %2490 = xla_tuple %v2488, %v18
        %2491 = xla_tuple %2490
        %v2492 = vmax.f32 %v2488, %v18
        %2493 = xla_tuple %v2492
        %2494 = xla_tuple %v2492, %v13
        %2495 = xla_tuple %2494
        %v2496 = vmax.f32 %v2492, %v13
        %2497 = xla_tuple %v2496
        %s2498 = scalar_lea.vmem [#allocation23], 92
        %v2499 = vpack.c.bf16 0.0, %v2496
        %s2501 = ssub.s32 16, 1
        %2502 = vst [vmem:[%s2498] sm:%s2501] %v2499
        %s2503 = scalar_lea.vmem %s437, 96
        %s2504 = sadd.s32 %s439, 24
        %s2505 = ssub.s32 0, 0
        %s2506 = ssub.s32 48, %s2504
        %s2507 = sor.u32 %s2505, %s2506
        %p2508 = scmp.lt.s32.totalorder %s2507, 0
        %s2509 = scalar_select %p2508, 0, 255
        %s2510 = sshrl.u32 %s2509, 1
        %s2511 = sor.u32 %s2509, %s2510
        %s2512 = sand.u32 %s2511, 85
        %s2513 = sshrl.u32 %s2512, 1
        %s2514 = sor.u32 %s2512, %s2513
        %s2515 = sand.u32 51, %s2514
        %s2516 = sshrl.u32 %s2515, 2
        %s2517 = sor.u32 %s2515, %s2516
        %s2518 = sand.u32 15, %s2517
        %v2519 = vld [vmem:[%s2503] sm:%s2518]
        %v2520 = vunpack.c.l.bf16 %v2519
        %v2521 = vunpack.c.h.bf16 %v2519
        %s2522 = sadd.s32 %s528, 24
        %s2523 = ssub.s32 48, %s2522
        %s2524 = sor.u32 4294967293, %s2523
        %v2525 = vstv %s2524
        %vm2526 = vcmp.lt.s32.totalorder %v2525, 0
        %v2527 = vsel %vm2526, %v13, %v2520
        %v2528 = vlaneseq
        %v2529 = vand.u32 %v2528, 127
        %vm2531 = vcmp.lt.s32.totalorder %v2529, 75
        %v2532 = vsel %vm2531, %v2527, %v13
        %s2533 = scalar_lea.vmem %s461, 96
        %s2534 = sadd.s32 %s463, 24
        %s2535 = ssub.s32 0, 0
        %s2536 = ssub.s32 48, %s2534
        %s2537 = sor.u32 %s2535, %s2536
        %p2538 = scmp.lt.s32.totalorder %s2537, 0
        %s2539 = scalar_select %p2538, 0, 255
        %s2540 = sshrl.u32 %s2539, 1
        %s2541 = sor.u32 %s2539, %s2540
        %s2542 = sand.u32 %s2541, 85
        %s2543 = sshrl.u32 %s2542, 1
        %s2544 = sor.u32 %s2542, %s2543
        %s2545 = sand.u32 51, %s2544
        %s2546 = sshrl.u32 %s2545, 2
        %s2547 = sor.u32 %s2545, %s2546
        %s2548 = sand.u32 15, %s2547
        %v2549 = vld [vmem:[%s2533] sm:%s2548]
        %v2550 = vunpack.c.l.bf16 %v2549
        %v2551 = vunpack.c.h.bf16 %v2549
        %s2552 = sadd.s32 %s544, 24
        %s2553 = ssub.s32 48, %s2552
        %s2554 = sor.u32 4294967294, %s2553
        %v2555 = vstv %s2554
        %vm2556 = vcmp.lt.s32.totalorder %v2555, 0
        %v2557 = vsel %vm2556, %v18, %v2550
        %v2558 = vlaneseq
        %v2559 = vand.u32 %v2558, 127
        %vm2561 = vcmp.lt.s32.totalorder %v2559, 75
        %v2562 = vsel %vm2561, %v2557, %v18
        %s2563 = scalar_lea.vmem %s485, 96
        %s2564 = sadd.s32 %s487, 24
        %s2565 = ssub.s32 0, 0
        %s2566 = ssub.s32 48, %s2564
        %s2567 = sor.u32 %s2565, %s2566
        %p2568 = scmp.lt.s32.totalorder %s2567, 0
        %s2569 = scalar_select %p2568, 0, 255
        %s2570 = sshrl.u32 %s2569, 1
        %s2571 = sor.u32 %s2569, %s2570
        %s2572 = sand.u32 %s2571, 85
        %s2573 = sshrl.u32 %s2572, 1
        %s2574 = sor.u32 %s2572, %s2573
        %s2575 = sand.u32 51, %s2574
        %s2576 = sshrl.u32 %s2575, 2
        %s2577 = sor.u32 %s2575, %s2576
        %s2578 = sand.u32 15, %s2577
        %v2579 = vld [vmem:[%s2563] sm:%s2578]
        %v2580 = vunpack.c.l.bf16 %v2579
        %v2581 = vunpack.c.h.bf16 %v2579
        %s2582 = sadd.s32 %s560, 24
        %s2583 = ssub.s32 48, %s2582
        %s2584 = scalar_lea.vmem %s502, 96
        %s2585 = sadd.s32 %s503, 24
        %s2586 = ssub.s32 48, %s2585
        %p2587 = scmp.lt.s32.totalorder %s2586, 0
        %s2588 = scalar_select %p2587, 0, 255
        %s2589 = sshrl.u32 %s2588, 1
        %s2590 = sor.u32 %s2588, %s2589
        %s2591 = sand.u32 %s2590, 85
        %s2592 = sshrl.u32 %s2591, 1
        %s2593 = sor.u32 %s2591, %s2592
        %s2594 = sand.u32 51, %s2593
        %s2595 = sshrl.u32 %s2594, 2
        %s2596 = sor.u32 %s2594, %s2595
        %s2597 = sand.u32 15, %s2596
        %v2598 = vld [vmem:[%s2584] sm:%s2597]
        %v2599 = vunpack.c.l.bf16 %v2598
        %v2600 = vunpack.c.h.bf16 %v2598
        %s2601 = sadd.s32 %s503, 24
        %s2602 = ssub.s32 48, %s2601
        %v2603 = vstv %s2602
        %vm2604 = vcmp.lt.s32.totalorder %v2603, 0
        %v2605 = vsel %vm2604, %v28, %v2599
        %v2606 = vlaneseq
        %v2607 = vand.u32 %v2606, 127
        %vm2609 = vcmp.lt.s32.totalorder %v2607, 75
        %v2610 = vsel %vm2609, %v2605, %v28
        %2611 = xla_tuple %v2610, %v23
        %2612 = xla_tuple %2611
        %v2613 = vmax.f32 %v2610, %v23
        %2614 = xla_tuple %v2613
        %2615 = xla_tuple %v2613, %v2562
        %2616 = xla_tuple %2615
        %v2617 = vmax.f32 %v2613, %v2562
        %2618 = xla_tuple %v2617
        %2619 = xla_tuple %v2617, %v2532
        %2620 = xla_tuple %2619
        %v2621 = vmax.f32 %v2617, %v2532
        %2622 = xla_tuple %v2621
        %s2623 = scalar_lea.vmem [#allocation23], 96
        %v2624 = vpack.c.bf16 0.0, %v2621
        %s2626 = ssub.s32 16, 1
        %2627 = vst [vmem:[%s2623] sm:%s2626] %v2624
        %v2628 = vlaneseq
        %v2629 = vand.u32 %v2628, 127
        %vm2631 = vcmp.lt.s32.totalorder %v2629, 75
        %v2632 = vsel %vm2631, %v558, %v23
        %2633 = xla_tuple %v28, %v2632
        %2634 = xla_tuple %2633
        %v2635 = vmax.f32 %v28, %v2632
        %2636 = xla_tuple %v2635
        %2637 = xla_tuple %v2635, %v18
        %2638 = xla_tuple %2637
        %v2639 = vmax.f32 %v2635, %v18
        %2640 = xla_tuple %v2639
        %2641 = xla_tuple %v2639, %v13
        %2642 = xla_tuple %2641
        %v2643 = vmax.f32 %v2639, %v13
        %2644 = xla_tuple %v2643
        %s2645 = scalar_lea.vmem [#allocation23], 100
        %v2646 = vpack.c.bf16 0.0, %v2643
        %s2648 = ssub.s32 16, 1
        %2649 = vst [vmem:[%s2645] sm:%s2648] %v2646
        %s2650 = scalar_lea.vmem %s437, 4
        %s2651 = scalar_lea.vmem %s461, 4
        %s2652 = scalar_lea.vmem %s485, 4
        %v2653 = vlaneseq
        %v2654 = vand.u32 %v2653, 127
        %vm2656 = vcmp.lt.s32.totalorder %v2654, 75
        %v2657 = vsel %vm2656, %v640, %v23
        %2658 = xla_tuple %v28, %v2657
        %2659 = xla_tuple %2658
        %v2660 = vmax.f32 %v28, %v2657
        %2661 = xla_tuple %v2660
        %2662 = xla_tuple %v2660, %v18
        %2663 = xla_tuple %2662
        %v2664 = vmax.f32 %v2660, %v18
        %2665 = xla_tuple %v2664
        %2666 = xla_tuple %v2664, %v13
        %2667 = xla_tuple %2666
        %v2668 = vmax.f32 %v2664, %v13
        %2669 = xla_tuple %v2668
        %s2670 = scalar_lea.vmem [#allocation23], 104
        %v2671 = vpack.c.bf16 0.0, %v2668
        %s2673 = ssub.s32 16, 1
        %2674 = vst [vmem:[%s2670] sm:%s2673] %v2671
        %s2675 = scalar_lea.vmem %s437, 8
        %s2676 = scalar_lea.vmem %s461, 8
        %s2677 = scalar_lea.vmem %s485, 8
        %v2678 = vlaneseq
        %v2679 = vand.u32 %v2678, 127
        %vm2681 = vcmp.lt.s32.totalorder %v2679, 75
        %v2682 = vsel %vm2681, %v723, %v23
        %2683 = xla_tuple %v28, %v2682
        %2684 = xla_tuple %2683
        %v2685 = vmax.f32 %v28, %v2682
        %2686 = xla_tuple %v2685
        %2687 = xla_tuple %v2685, %v18
        %2688 = xla_tuple %2687
        %v2689 = vmax.f32 %v2685, %v18
        %2690 = xla_tuple %v2689
        %2691 = xla_tuple %v2689, %v13
        %2692 = xla_tuple %2691
        %v2693 = vmax.f32 %v2689, %v13
        %2694 = xla_tuple %v2693
        %s2695 = scalar_lea.vmem [#allocation23], 108
        %v2696 = vpack.c.bf16 0.0, %v2693
        %s2698 = ssub.s32 16, 1
        %2699 = vst [vmem:[%s2695] sm:%s2698] %v2696
        %s2700 = scalar_lea.vmem %s437, 12
        %s2701 = scalar_lea.vmem %s461, 12
        %s2702 = scalar_lea.vmem %s485, 12
        %v2703 = vlaneseq
        %v2704 = vand.u32 %v2703, 127
        %vm2706 = vcmp.lt.s32.totalorder %v2704, 75
        %v2707 = vsel %vm2706, %v806, %v23
        %2708 = xla_tuple %v28, %v2707
        %2709 = xla_tuple %2708
        %v2710 = vmax.f32 %v28, %v2707
        %2711 = xla_tuple %v2710
        %2712 = xla_tuple %v2710, %v18
        %2713 = xla_tuple %2712
        %v2714 = vmax.f32 %v2710, %v18
        %2715 = xla_tuple %v2714
        %2716 = xla_tuple %v2714, %v13
        %2717 = xla_tuple %2716
        %v2718 = vmax.f32 %v2714, %v13
        %2719 = xla_tuple %v2718
        %s2720 = scalar_lea.vmem [#allocation23], 112
        %v2721 = vpack.c.bf16 0.0, %v2718
        %s2723 = ssub.s32 16, 1
        %2724 = vst [vmem:[%s2720] sm:%s2723] %v2721
        %s2725 = scalar_lea.vmem %s437, 16
        %s2726 = scalar_lea.vmem %s461, 16
        %s2727 = scalar_lea.vmem %s485, 16
        %v2728 = vlaneseq
        %v2729 = vand.u32 %v2728, 127
        %vm2731 = vcmp.lt.s32.totalorder %v2729, 75
        %v2732 = vsel %vm2731, %v889, %v23
        %2733 = xla_tuple %v28, %v2732
        %2734 = xla_tuple %2733
        %v2735 = vmax.f32 %v28, %v2732
        %2736 = xla_tuple %v2735
        %2737 = xla_tuple %v2735, %v18
        %2738 = xla_tuple %2737
        %v2739 = vmax.f32 %v2735, %v18
        %2740 = xla_tuple %v2739
        %2741 = xla_tuple %v2739, %v13
        %2742 = xla_tuple %2741
        %v2743 = vmax.f32 %v2739, %v13
        %2744 = xla_tuple %v2743
        %s2745 = scalar_lea.vmem [#allocation23], 116
        %v2746 = vpack.c.bf16 0.0, %v2743
        %s2748 = ssub.s32 16, 1
        %2749 = vst [vmem:[%s2745] sm:%s2748] %v2746
        %s2750 = scalar_lea.vmem %s437, 20
        %s2751 = scalar_lea.vmem %s461, 20
        %s2752 = scalar_lea.vmem %s485, 20
        %v2753 = vlaneseq
        %v2754 = vand.u32 %v2753, 127
        %vm2756 = vcmp.lt.s32.totalorder %v2754, 75
        %v2757 = vsel %vm2756, %v972, %v23
        %2758 = xla_tuple %v28, %v2757
        %2759 = xla_tuple %2758
        %v2760 = vmax.f32 %v28, %v2757
        %2761 = xla_tuple %v2760
        %2762 = xla_tuple %v2760, %v18
        %2763 = xla_tuple %2762
        %v2764 = vmax.f32 %v2760, %v18
        %2765 = xla_tuple %v2764
        %2766 = xla_tuple %v2764, %v13
        %2767 = xla_tuple %2766
        %v2768 = vmax.f32 %v2764, %v13
        %2769 = xla_tuple %v2768
        %s2770 = scalar_lea.vmem [#allocation23], 120
        %v2771 = vpack.c.bf16 0.0, %v2768
        %s2773 = ssub.s32 16, 1
        %2774 = vst [vmem:[%s2770] sm:%s2773] %v2771
        %s2775 = scalar_lea.vmem %s437, 24
        %s2776 = scalar_lea.vmem %s461, 24
        %s2777 = scalar_lea.vmem %s485, 24
        %v2778 = vlaneseq
        %v2779 = vand.u32 %v2778, 127
        %vm2781 = vcmp.lt.s32.totalorder %v2779, 75
        %v2782 = vsel %vm2781, %v1055, %v23
        %2783 = xla_tuple %v28, %v2782
        %2784 = xla_tuple %2783
        %v2785 = vmax.f32 %v28, %v2782
        %2786 = xla_tuple %v2785
        %2787 = xla_tuple %v2785, %v18
        %2788 = xla_tuple %2787
        %v2789 = vmax.f32 %v2785, %v18
        %2790 = xla_tuple %v2789
        %2791 = xla_tuple %v2789, %v13
        %2792 = xla_tuple %2791
        %v2793 = vmax.f32 %v2789, %v13
        %2794 = xla_tuple %v2793
        %s2795 = scalar_lea.vmem [#allocation23], 124
        %v2796 = vpack.c.bf16 0.0, %v2793
        %s2798 = ssub.s32 16, 1
        %2799 = vst [vmem:[%s2795] sm:%s2798] %v2796
        %s2800 = scalar_lea.vmem %s437, 28
        %s2801 = scalar_lea.vmem %s461, 28
        %s2802 = scalar_lea.vmem %s485, 28
        %v2803 = vlaneseq
        %v2804 = vand.u32 %v2803, 127
        %vm2806 = vcmp.lt.s32.totalorder %v2804, 75
        %v2807 = vsel %vm2806, %v1138, %v23
        %2808 = xla_tuple %v28, %v2807
        %2809 = xla_tuple %2808
        %v2810 = vmax.f32 %v28, %v2807
        %2811 = xla_tuple %v2810
        %2812 = xla_tuple %v2810, %v18
        %2813 = xla_tuple %2812
        %v2814 = vmax.f32 %v2810, %v18
        %2815 = xla_tuple %v2814
        %2816 = xla_tuple %v2814, %v13
        %2817 = xla_tuple %2816
        %v2818 = vmax.f32 %v2814, %v13
        %2819 = xla_tuple %v2818
        %s2820 = scalar_lea.vmem [#allocation23], 128
        %v2821 = vpack.c.bf16 0.0, %v2818
        %s2823 = ssub.s32 16, 1
        %2824 = vst [vmem:[%s2820] sm:%s2823] %v2821
        %s2825 = scalar_lea.vmem %s437, 32
        %s2826 = scalar_lea.vmem %s461, 32
        %s2827 = scalar_lea.vmem %s485, 32
        %v2828 = vlaneseq
        %v2829 = vand.u32 %v2828, 127
        %vm2831 = vcmp.lt.s32.totalorder %v2829, 75
        %v2832 = vsel %vm2831, %v1221, %v23
        %2833 = xla_tuple %v28, %v2832
        %2834 = xla_tuple %2833
        %v2835 = vmax.f32 %v28, %v2832
        %2836 = xla_tuple %v2835
        %2837 = xla_tuple %v2835, %v18
        %2838 = xla_tuple %2837
        %v2839 = vmax.f32 %v2835, %v18
        %2840 = xla_tuple %v2839
        %2841 = xla_tuple %v2839, %v13
        %2842 = xla_tuple %2841
        %v2843 = vmax.f32 %v2839, %v13
        %2844 = xla_tuple %v2843
        %s2845 = scalar_lea.vmem [#allocation23], 132
        %v2846 = vpack.c.bf16 0.0, %v2843
        %s2848 = ssub.s32 16, 1
        %2849 = vst [vmem:[%s2845] sm:%s2848] %v2846
        %s2850 = scalar_lea.vmem %s437, 36
        %s2851 = scalar_lea.vmem %s461, 36
        %s2852 = scalar_lea.vmem %s485, 36
        %v2853 = vlaneseq
        %v2854 = vand.u32 %v2853, 127
        %vm2856 = vcmp.lt.s32.totalorder %v2854, 75
        %v2857 = vsel %vm2856, %v1304, %v23
        %2858 = xla_tuple %v28, %v2857
        %2859 = xla_tuple %2858
        %v2860 = vmax.f32 %v28, %v2857
        %2861 = xla_tuple %v2860
        %2862 = xla_tuple %v2860, %v18
        %2863 = xla_tuple %2862
        %v2864 = vmax.f32 %v2860, %v18
        %2865 = xla_tuple %v2864
        %2866 = xla_tuple %v2864, %v13
        %2867 = xla_tuple %2866
        %v2868 = vmax.f32 %v2864, %v13
        %2869 = xla_tuple %v2868
        %s2870 = scalar_lea.vmem [#allocation23], 136
        %v2871 = vpack.c.bf16 0.0, %v2868
        %s2873 = ssub.s32 16, 1
        %2874 = vst [vmem:[%s2870] sm:%s2873] %v2871
        %s2875 = scalar_lea.vmem %s437, 40
        %s2876 = scalar_lea.vmem %s461, 40
        %s2877 = scalar_lea.vmem %s485, 40
        %v2878 = vlaneseq
        %v2879 = vand.u32 %v2878, 127
        %vm2881 = vcmp.lt.s32.totalorder %v2879, 75
        %v2882 = vsel %vm2881, %v1387, %v23
        %2883 = xla_tuple %v28, %v2882
        %2884 = xla_tuple %2883
        %v2885 = vmax.f32 %v28, %v2882
        %2886 = xla_tuple %v2885
        %2887 = xla_tuple %v2885, %v18
        %2888 = xla_tuple %2887
        %v2889 = vmax.f32 %v2885, %v18
        %2890 = xla_tuple %v2889
        %2891 = xla_tuple %v2889, %v13
        %2892 = xla_tuple %2891
        %v2893 = vmax.f32 %v2889, %v13
        %2894 = xla_tuple %v2893
        %s2895 = scalar_lea.vmem [#allocation23], 140
        %v2896 = vpack.c.bf16 0.0, %v2893
        %s2898 = ssub.s32 16, 1
        %2899 = vst [vmem:[%s2895] sm:%s2898] %v2896
        %s2900 = scalar_lea.vmem %s437, 44
        %s2901 = scalar_lea.vmem %s461, 44
        %s2902 = scalar_lea.vmem %s485, 44
        %v2903 = vlaneseq
        %v2904 = vand.u32 %v2903, 127
        %vm2906 = vcmp.lt.s32.totalorder %v2904, 75
        %v2907 = vsel %vm2906, %v1470, %v23
        %2908 = xla_tuple %v28, %v2907
        %2909 = xla_tuple %2908
        %v2910 = vmax.f32 %v28, %v2907
        %2911 = xla_tuple %v2910
        %2912 = xla_tuple %v2910, %v18
        %2913 = xla_tuple %2912
        %v2914 = vmax.f32 %v2910, %v18
        %2915 = xla_tuple %v2914
        %2916 = xla_tuple %v2914, %v13
        %2917 = xla_tuple %2916
        %v2918 = vmax.f32 %v2914, %v13
        %2919 = xla_tuple %v2918
        %s2920 = scalar_lea.vmem [#allocation23], 144
        %v2921 = vpack.c.bf16 0.0, %v2918
        %s2923 = ssub.s32 16, 1
        %2924 = vst [vmem:[%s2920] sm:%s2923] %v2921
        %s2925 = scalar_lea.vmem %s437, 48
        %s2926 = scalar_lea.vmem %s461, 48
        %s2927 = scalar_lea.vmem %s485, 48
        %v2928 = vlaneseq
        %v2929 = vand.u32 %v2928, 127
        %vm2931 = vcmp.lt.s32.totalorder %v2929, 75
        %v2932 = vsel %vm2931, %v1553, %v23
        %2933 = xla_tuple %v28, %v2932
        %2934 = xla_tuple %2933
        %v2935 = vmax.f32 %v28, %v2932
        %2936 = xla_tuple %v2935
        %2937 = xla_tuple %v2935, %v18
        %2938 = xla_tuple %2937
        %v2939 = vmax.f32 %v2935, %v18
        %2940 = xla_tuple %v2939
        %2941 = xla_tuple %v2939, %v13
        %2942 = xla_tuple %2941
        %v2943 = vmax.f32 %v2939, %v13
        %2944 = xla_tuple %v2943
        %s2945 = scalar_lea.vmem [#allocation23], 148
        %v2946 = vpack.c.bf16 0.0, %v2943
        %s2948 = ssub.s32 16, 1
        %2949 = vst [vmem:[%s2945] sm:%s2948] %v2946
        %s2950 = scalar_lea.vmem %s437, 52
        %s2951 = scalar_lea.vmem %s461, 52
        %s2952 = scalar_lea.vmem %s485, 52
        %v2953 = vlaneseq
        %v2954 = vand.u32 %v2953, 127
        %vm2956 = vcmp.lt.s32.totalorder %v2954, 75
        %v2957 = vsel %vm2956, %v1636, %v23
        %2958 = xla_tuple %v28, %v2957
        %2959 = xla_tuple %2958
        %v2960 = vmax.f32 %v28, %v2957
        %2961 = xla_tuple %v2960
        %2962 = xla_tuple %v2960, %v18
        %2963 = xla_tuple %2962
        %v2964 = vmax.f32 %v2960, %v18
        %2965 = xla_tuple %v2964
        %2966 = xla_tuple %v2964, %v13
        %2967 = xla_tuple %2966
        %v2968 = vmax.f32 %v2964, %v13
        %2969 = xla_tuple %v2968
        %s2970 = scalar_lea.vmem [#allocation23], 152
        %v2971 = vpack.c.bf16 0.0, %v2968
        %s2973 = ssub.s32 16, 1
        %2974 = vst [vmem:[%s2970] sm:%s2973] %v2971
        %s2975 = scalar_lea.vmem %s437, 56
        %s2976 = scalar_lea.vmem %s461, 56
        %s2977 = scalar_lea.vmem %s485, 56
        %v2978 = vlaneseq
        %v2979 = vand.u32 %v2978, 127
        %vm2981 = vcmp.lt.s32.totalorder %v2979, 75
        %v2982 = vsel %vm2981, %v1719, %v23
        %2983 = xla_tuple %v28, %v2982
        %2984 = xla_tuple %2983
        %v2985 = vmax.f32 %v28, %v2982
        %2986 = xla_tuple %v2985
        %2987 = xla_tuple %v2985, %v18
        %2988 = xla_tuple %2987
        %v2989 = vmax.f32 %v2985, %v18
        %2990 = xla_tuple %v2989
        %2991 = xla_tuple %v2989, %v13
        %2992 = xla_tuple %2991
        %v2993 = vmax.f32 %v2989, %v13
        %2994 = xla_tuple %v2993
        %s2995 = scalar_lea.vmem [#allocation23], 156
        %v2996 = vpack.c.bf16 0.0, %v2993
        %s2998 = ssub.s32 16, 1
        %2999 = vst [vmem:[%s2995] sm:%s2998] %v2996
        %s3000 = scalar_lea.vmem %s437, 60
        %s3001 = scalar_lea.vmem %s461, 60
        %s3002 = scalar_lea.vmem %s485, 60
        %v3003 = vlaneseq
        %v3004 = vand.u32 %v3003, 127
        %vm3006 = vcmp.lt.s32.totalorder %v3004, 75
        %v3007 = vsel %vm3006, %v1802, %v23
        %3008 = xla_tuple %v28, %v3007
        %3009 = xla_tuple %3008
        %v3010 = vmax.f32 %v28, %v3007
        %3011 = xla_tuple %v3010
        %3012 = xla_tuple %v3010, %v18
        %3013 = xla_tuple %3012
        %v3014 = vmax.f32 %v3010, %v18
        %3015 = xla_tuple %v3014
        %3016 = xla_tuple %v3014, %v13
        %3017 = xla_tuple %3016
        %v3018 = vmax.f32 %v3014, %v13
        %3019 = xla_tuple %v3018
        %s3020 = scalar_lea.vmem [#allocation23], 160
        %v3021 = vpack.c.bf16 0.0, %v3018
        %s3023 = ssub.s32 16, 1
        %3024 = vst [vmem:[%s3020] sm:%s3023] %v3021
        %s3025 = scalar_lea.vmem %s437, 64
        %s3026 = scalar_lea.vmem %s461, 64
        %s3027 = scalar_lea.vmem %s485, 64
        %v3028 = vlaneseq
        %v3029 = vand.u32 %v3028, 127
        %vm3031 = vcmp.lt.s32.totalorder %v3029, 75
        %v3032 = vsel %vm3031, %v1885, %v23
        %3033 = xla_tuple %v28, %v3032
        %3034 = xla_tuple %3033
        %v3035 = vmax.f32 %v28, %v3032
        %3036 = xla_tuple %v3035
        %3037 = xla_tuple %v3035, %v18
        %3038 = xla_tuple %3037
        %v3039 = vmax.f32 %v3035, %v18
        %3040 = xla_tuple %v3039
        %3041 = xla_tuple %v3039, %v13
        %3042 = xla_tuple %3041
        %v3043 = vmax.f32 %v3039, %v13
        %3044 = xla_tuple %v3043
        %s3045 = scalar_lea.vmem [#allocation23], 164
        %v3046 = vpack.c.bf16 0.0, %v3043
        %s3048 = ssub.s32 16, 1
        %3049 = vst [vmem:[%s3045] sm:%s3048] %v3046
        %s3050 = scalar_lea.vmem %s437, 68
        %s3051 = scalar_lea.vmem %s461, 68
        %s3052 = scalar_lea.vmem %s485, 68
        %v3053 = vlaneseq
        %v3054 = vand.u32 %v3053, 127
        %vm3056 = vcmp.lt.s32.totalorder %v3054, 75
        %v3057 = vsel %vm3056, %v1968, %v23
        %3058 = xla_tuple %v28, %v3057
        %3059 = xla_tuple %3058
        %v3060 = vmax.f32 %v28, %v3057
        %3061 = xla_tuple %v3060
        %3062 = xla_tuple %v3060, %v18
        %3063 = xla_tuple %3062
        %v3064 = vmax.f32 %v3060, %v18
        %3065 = xla_tuple %v3064
        %3066 = xla_tuple %v3064, %v13
        %3067 = xla_tuple %3066
        %v3068 = vmax.f32 %v3064, %v13
        %3069 = xla_tuple %v3068
        %s3070 = scalar_lea.vmem [#allocation23], 168
        %v3071 = vpack.c.bf16 0.0, %v3068
        %s3073 = ssub.s32 16, 1
        %3074 = vst [vmem:[%s3070] sm:%s3073] %v3071
        %s3075 = scalar_lea.vmem %s437, 72
        %s3076 = scalar_lea.vmem %s461, 72
        %s3077 = scalar_lea.vmem %s485, 72
        %v3078 = vlaneseq
        %v3079 = vand.u32 %v3078, 127
        %vm3081 = vcmp.lt.s32.totalorder %v3079, 75
        %v3082 = vsel %vm3081, %v2051, %v23
        %3083 = xla_tuple %v28, %v3082
        %3084 = xla_tuple %3083
        %v3085 = vmax.f32 %v28, %v3082
        %3086 = xla_tuple %v3085
        %3087 = xla_tuple %v3085, %v18
        %3088 = xla_tuple %3087
        %v3089 = vmax.f32 %v3085, %v18
        %3090 = xla_tuple %v3089
        %3091 = xla_tuple %v3089, %v13
        %3092 = xla_tuple %3091
        %v3093 = vmax.f32 %v3089, %v13
        %3094 = xla_tuple %v3093
        %s3095 = scalar_lea.vmem [#allocation23], 172
        %v3096 = vpack.c.bf16 0.0, %v3093
        %s3098 = ssub.s32 16, 1
        %3099 = vst [vmem:[%s3095] sm:%s3098] %v3096
        %s3100 = scalar_lea.vmem %s437, 76
        %s3101 = scalar_lea.vmem %s461, 76
        %s3102 = scalar_lea.vmem %s485, 76
        %v3103 = vlaneseq
        %v3104 = vand.u32 %v3103, 127
        %vm3106 = vcmp.lt.s32.totalorder %v3104, 75
        %v3107 = vsel %vm3106, %v2134, %v23
        %3108 = xla_tuple %v28, %v3107
        %3109 = xla_tuple %3108
        %v3110 = vmax.f32 %v28, %v3107
        %3111 = xla_tuple %v3110
        %3112 = xla_tuple %v3110, %v18
        %3113 = xla_tuple %3112
        %v3114 = vmax.f32 %v3110, %v18
        %3115 = xla_tuple %v3114
        %3116 = xla_tuple %v3114, %v13
        %3117 = xla_tuple %3116
        %v3118 = vmax.f32 %v3114, %v13
        %3119 = xla_tuple %v3118
        %s3120 = scalar_lea.vmem [#allocation23], 176
        %v3121 = vpack.c.bf16 0.0, %v3118
        %s3123 = ssub.s32 16, 1
        %3124 = vst [vmem:[%s3120] sm:%s3123] %v3121
        %s3125 = scalar_lea.vmem %s437, 80
        %s3126 = scalar_lea.vmem %s461, 80
        %s3127 = scalar_lea.vmem %s485, 80
        %v3128 = vlaneseq
        %v3129 = vand.u32 %v3128, 127
        %vm3131 = vcmp.lt.s32.totalorder %v3129, 75
        %v3132 = vsel %vm3131, %v2217, %v23
        %3133 = xla_tuple %v28, %v3132
        %3134 = xla_tuple %3133
        %v3135 = vmax.f32 %v28, %v3132
        %3136 = xla_tuple %v3135
        %3137 = xla_tuple %v3135, %v18
        %3138 = xla_tuple %3137
        %v3139 = vmax.f32 %v3135, %v18
        %3140 = xla_tuple %v3139
        %3141 = xla_tuple %v3139, %v13
        %3142 = xla_tuple %3141
        %v3143 = vmax.f32 %v3139, %v13
        %3144 = xla_tuple %v3143
        %s3145 = scalar_lea.vmem [#allocation23], 180
        %v3146 = vpack.c.bf16 0.0, %v3143
        %s3148 = ssub.s32 16, 1
        %3149 = vst [vmem:[%s3145] sm:%s3148] %v3146
        %s3150 = scalar_lea.vmem %s437, 84
        %s3151 = scalar_lea.vmem %s461, 84
        %s3152 = scalar_lea.vmem %s485, 84
        %v3153 = vlaneseq
        %v3154 = vand.u32 %v3153, 127
        %vm3156 = vcmp.lt.s32.totalorder %v3154, 75
        %v3157 = vsel %vm3156, %v2300, %v23
        %3158 = xla_tuple %v28, %v3157
        %3159 = xla_tuple %3158
        %v3160 = vmax.f32 %v28, %v3157
        %3161 = xla_tuple %v3160
        %3162 = xla_tuple %v3160, %v18
        %3163 = xla_tuple %3162
        %v3164 = vmax.f32 %v3160, %v18
        %3165 = xla_tuple %v3164
        %3166 = xla_tuple %v3164, %v13
        %3167 = xla_tuple %3166
        %v3168 = vmax.f32 %v3164, %v13
        %3169 = xla_tuple %v3168
        %s3170 = scalar_lea.vmem [#allocation23], 184
        %v3171 = vpack.c.bf16 0.0, %v3168
        %s3173 = ssub.s32 16, 1
        %3174 = vst [vmem:[%s3170] sm:%s3173] %v3171
        %s3175 = scalar_lea.vmem %s437, 88
        %s3176 = scalar_lea.vmem %s461, 88
        %s3177 = scalar_lea.vmem %s485, 88
        %v3178 = vlaneseq
        %v3179 = vand.u32 %v3178, 127
        %vm3181 = vcmp.lt.s32.totalorder %v3179, 75
        %v3182 = vsel %vm3181, %v2383, %v23
        %3183 = xla_tuple %v28, %v3182
        %3184 = xla_tuple %3183
        %v3185 = vmax.f32 %v28, %v3182
        %3186 = xla_tuple %v3185
        %3187 = xla_tuple %v3185, %v18
        %3188 = xla_tuple %3187
        %v3189 = vmax.f32 %v3185, %v18
        %3190 = xla_tuple %v3189
        %3191 = xla_tuple %v3189, %v13
        %3192 = xla_tuple %3191
        %v3193 = vmax.f32 %v3189, %v13
        %3194 = xla_tuple %v3193
        %s3195 = scalar_lea.vmem [#allocation23], 188
        %v3196 = vpack.c.bf16 0.0, %v3193
        %s3198 = ssub.s32 16, 1
        %3199 = vst [vmem:[%s3195] sm:%s3198] %v3196
        %s3200 = scalar_lea.vmem %s437, 92
        %s3201 = scalar_lea.vmem %s461, 92
        %s3202 = scalar_lea.vmem %s485, 92
        %v3203 = vlaneseq
        %v3204 = vand.u32 %v3203, 127
        %vm3206 = vcmp.lt.s32.totalorder %v3204, 75
        %v3207 = vsel %vm3206, %v2466, %v23
        %3208 = xla_tuple %v28, %v3207
        %3209 = xla_tuple %3208
        %v3210 = vmax.f32 %v28, %v3207
        %3211 = xla_tuple %v3210
        %3212 = xla_tuple %v3210, %v18
        %3213 = xla_tuple %3212
        %v3214 = vmax.f32 %v3210, %v18
        %3215 = xla_tuple %v3214
        %3216 = xla_tuple %v3214, %v13
        %3217 = xla_tuple %3216
        %v3218 = vmax.f32 %v3214, %v13
        %3219 = xla_tuple %v3218
        %s3220 = scalar_lea.vmem [#allocation23], 192
        %v3221 = vpack.c.bf16 0.0, %v3218
        %s3223 = ssub.s32 16, 1
        %3224 = vst [vmem:[%s3220] sm:%s3223] %v3221
        %s3225 = scalar_lea.vmem %s437, 96
        %s3226 = sadd.s32 %s528, 24
        %s3227 = ssub.s32 48, %s3226
        %s3228 = sor.u32 4294967294, %s3227
        %v3229 = vstv %s3228
        %vm3230 = vcmp.lt.s32.totalorder %v3229, 0
        %v3231 = vsel %vm3230, %v13, %v2520
        %v3232 = vlaneseq
        %v3233 = vand.u32 %v3232, 127
        %vm3235 = vcmp.lt.s32.totalorder %v3233, 75
        %v3236 = vsel %vm3235, %v3231, %v13
        %s3237 = scalar_lea.vmem %s461, 96
        %s3238 = sadd.s32 %s544, 24
        %s3239 = ssub.s32 48, %s3238
        %s3240 = scalar_lea.vmem %s485, 96
        %s3241 = sadd.s32 %s560, 24
        %s3242 = ssub.s32 48, %s3241
        %v3243 = vstv %s3242
        %vm3244 = vcmp.lt.s32.totalorder %v3243, 0
        %v3245 = vsel %vm3244, %v23, %v2580
        %v3246 = vlaneseq
        %v3247 = vand.u32 %v3246, 127
        %vm3249 = vcmp.lt.s32.totalorder %v3247, 75
        %v3250 = vsel %vm3249, %v3245, %v23
        %3251 = xla_tuple %v28, %v3250
        %3252 = xla_tuple %3251
        %v3253 = vmax.f32 %v28, %v3250
        %3254 = xla_tuple %v3253
        %3255 = xla_tuple %v3253, %v18
        %3256 = xla_tuple %3255
        %v3257 = vmax.f32 %v3253, %v18
        %3258 = xla_tuple %v3257
        %3259 = xla_tuple %v3257, %v3236
        %3260 = xla_tuple %3259
        %v3261 = vmax.f32 %v3257, %v3236
        %3262 = xla_tuple %v3261
        %s3263 = scalar_lea.vmem [#allocation23], 196
        %v3264 = vpack.c.bf16 0.0, %v3261
        %s3266 = ssub.s32 16, 1
        %3267 = vst [vmem:[%s3263] sm:%s3266] %v3264
        %v3268 = vlaneseq
        %v3269 = vand.u32 %v3268, 127
        %vm3271 = vcmp.lt.s32.totalorder %v3269, 75
        %v3272 = vsel %vm3271, %v542, %v18
        %3273 = xla_tuple %v28, %v23
        %3274 = xla_tuple %3273
        %v3275 = vmax.f32 %v28, %v23
        %3276 = xla_tuple %v3275
        %3277 = xla_tuple %v3275, %v3272
        %3278 = xla_tuple %3277
        %v3279 = vmax.f32 %v3275, %v3272
        %3280 = xla_tuple %v3279
        %3281 = xla_tuple %v3279, %v13
        %3282 = xla_tuple %3281
        %v3283 = vmax.f32 %v3279, %v13
        %3284 = xla_tuple %v3283
        %s3285 = scalar_lea.vmem [#allocation23], 200
        %v3286 = vpack.c.bf16 0.0, %v3283
        %s3288 = ssub.s32 16, 1
        %3289 = vst [vmem:[%s3285] sm:%s3288] %v3286
        %s3290 = scalar_lea.vmem %s437, 4
        %s3291 = scalar_lea.vmem %s461, 4
        %v3292 = vlaneseq
        %v3293 = vand.u32 %v3292, 127
        %vm3295 = vcmp.lt.s32.totalorder %v3293, 75
        %v3296 = vsel %vm3295, %v624, %v18
        %s3297 = scalar_lea.vmem %s485, 4
        %3298 = xla_tuple %v28, %v23
        %3299 = xla_tuple %3298
        %v3300 = vmax.f32 %v28, %v23
        %3301 = xla_tuple %v3300
        %3302 = xla_tuple %v3300, %v3296
        %3303 = xla_tuple %3302
        %v3304 = vmax.f32 %v3300, %v3296
        %3305 = xla_tuple %v3304
        %3306 = xla_tuple %v3304, %v13
        %3307 = xla_tuple %3306
        %v3308 = vmax.f32 %v3304, %v13
        %3309 = xla_tuple %v3308
        %s3310 = scalar_lea.vmem [#allocation23], 204
        %v3311 = vpack.c.bf16 0.0, %v3308
        %s3313 = ssub.s32 16, 1
        %3314 = vst [vmem:[%s3310] sm:%s3313] %v3311
        %s3315 = scalar_lea.vmem %s437, 8
        %s3316 = scalar_lea.vmem %s461, 8
        %v3317 = vlaneseq
        %v3318 = vand.u32 %v3317, 127
        %vm3320 = vcmp.lt.s32.totalorder %v3318, 75
        %v3321 = vsel %vm3320, %v707, %v18
        %s3322 = scalar_lea.vmem %s485, 8
        %3323 = xla_tuple %v28, %v23
        %3324 = xla_tuple %3323
        %v3325 = vmax.f32 %v28, %v23
        %3326 = xla_tuple %v3325
        %3327 = xla_tuple %v3325, %v3321
        %3328 = xla_tuple %3327
        %v3329 = vmax.f32 %v3325, %v3321
        %3330 = xla_tuple %v3329
        %3331 = xla_tuple %v3329, %v13
        %3332 = xla_tuple %3331
        %v3333 = vmax.f32 %v3329, %v13
        %3334 = xla_tuple %v3333
        %s3335 = scalar_lea.vmem [#allocation23], 208
        %v3336 = vpack.c.bf16 0.0, %v3333
        %s3338 = ssub.s32 16, 1
        %3339 = vst [vmem:[%s3335] sm:%s3338] %v3336
        %s3340 = scalar_lea.vmem %s437, 12
        %s3341 = scalar_lea.vmem %s461, 12
        %v3342 = vlaneseq
        %v3343 = vand.u32 %v3342, 127
        %vm3345 = vcmp.lt.s32.totalorder %v3343, 75
        %v3346 = vsel %vm3345, %v790, %v18
        %s3347 = scalar_lea.vmem %s485, 12
        %3348 = xla_tuple %v28, %v23
        %3349 = xla_tuple %3348
        %v3350 = vmax.f32 %v28, %v23
        %3351 = xla_tuple %v3350
        %3352 = xla_tuple %v3350, %v3346
        %3353 = xla_tuple %3352
        %v3354 = vmax.f32 %v3350, %v3346
        %3355 = xla_tuple %v3354
        %3356 = xla_tuple %v3354, %v13
        %3357 = xla_tuple %3356
        %v3358 = vmax.f32 %v3354, %v13
        %3359 = xla_tuple %v3358
        %s3360 = scalar_lea.vmem [#allocation23], 212
        %v3361 = vpack.c.bf16 0.0, %v3358
        %s3363 = ssub.s32 16, 1
        %3364 = vst [vmem:[%s3360] sm:%s3363] %v3361
        %s3365 = scalar_lea.vmem %s437, 16
        %s3366 = scalar_lea.vmem %s461, 16
        %v3367 = vlaneseq
        %v3368 = vand.u32 %v3367, 127
        %vm3370 = vcmp.lt.s32.totalorder %v3368, 75
        %v3371 = vsel %vm3370, %v873, %v18
        %s3372 = scalar_lea.vmem %s485, 16
        %3373 = xla_tuple %v28, %v23
        %3374 = xla_tuple %3373
        %v3375 = vmax.f32 %v28, %v23
        %3376 = xla_tuple %v3375
        %3377 = xla_tuple %v3375, %v3371
        %3378 = xla_tuple %3377
        %v3379 = vmax.f32 %v3375, %v3371
        %3380 = xla_tuple %v3379
        %3381 = xla_tuple %v3379, %v13
        %3382 = xla_tuple %3381
        %v3383 = vmax.f32 %v3379, %v13
        %3384 = xla_tuple %v3383
        %s3385 = scalar_lea.vmem [#allocation23], 216
        %v3386 = vpack.c.bf16 0.0, %v3383
        %s3388 = ssub.s32 16, 1
        %3389 = vst [vmem:[%s3385] sm:%s3388] %v3386
        %s3390 = scalar_lea.vmem %s437, 20
        %s3391 = scalar_lea.vmem %s461, 20
        %v3392 = vlaneseq
        %v3393 = vand.u32 %v3392, 127
        %vm3395 = vcmp.lt.s32.totalorder %v3393, 75
        %v3396 = vsel %vm3395, %v956, %v18
        %s3397 = scalar_lea.vmem %s485, 20
        %3398 = xla_tuple %v28, %v23
        %3399 = xla_tuple %3398
        %v3400 = vmax.f32 %v28, %v23
        %3401 = xla_tuple %v3400
        %3402 = xla_tuple %v3400, %v3396
        %3403 = xla_tuple %3402
        %v3404 = vmax.f32 %v3400, %v3396
        %3405 = xla_tuple %v3404
        %3406 = xla_tuple %v3404, %v13
        %3407 = xla_tuple %3406
        %v3408 = vmax.f32 %v3404, %v13
        %3409 = xla_tuple %v3408
        %s3410 = scalar_lea.vmem [#allocation23], 220
        %v3411 = vpack.c.bf16 0.0, %v3408
        %s3413 = ssub.s32 16, 1
        %3414 = vst [vmem:[%s3410] sm:%s3413] %v3411
        %s3415 = scalar_lea.vmem %s437, 24
        %s3416 = scalar_lea.vmem %s461, 24
        %v3417 = vlaneseq
        %v3418 = vand.u32 %v3417, 127
        %vm3420 = vcmp.lt.s32.totalorder %v3418, 75
        %v3421 = vsel %vm3420, %v1039, %v18
        %s3422 = scalar_lea.vmem %s485, 24
        %3423 = xla_tuple %v28, %v23
        %3424 = xla_tuple %3423
        %v3425 = vmax.f32 %v28, %v23
        %3426 = xla_tuple %v3425
        %3427 = xla_tuple %v3425, %v3421
        %3428 = xla_tuple %3427
        %v3429 = vmax.f32 %v3425, %v3421
        %3430 = xla_tuple %v3429
        %3431 = xla_tuple %v3429, %v13
        %3432 = xla_tuple %3431
        %v3433 = vmax.f32 %v3429, %v13
        %3434 = xla_tuple %v3433
        %s3435 = scalar_lea.vmem [#allocation23], 224
        %v3436 = vpack.c.bf16 0.0, %v3433
        %s3438 = ssub.s32 16, 1
        %3439 = vst [vmem:[%s3435] sm:%s3438] %v3436
        %s3440 = scalar_lea.vmem %s437, 28
        %s3441 = scalar_lea.vmem %s461, 28
        %v3442 = vlaneseq
        %v3443 = vand.u32 %v3442, 127
        %vm3445 = vcmp.lt.s32.totalorder %v3443, 75
        %v3446 = vsel %vm3445, %v1122, %v18
        %s3447 = scalar_lea.vmem %s485, 28
        %3448 = xla_tuple %v28, %v23
        %3449 = xla_tuple %3448
        %v3450 = vmax.f32 %v28, %v23
        %3451 = xla_tuple %v3450
        %3452 = xla_tuple %v3450, %v3446
        %3453 = xla_tuple %3452
        %v3454 = vmax.f32 %v3450, %v3446
        %3455 = xla_tuple %v3454
        %3456 = xla_tuple %v3454, %v13
        %3457 = xla_tuple %3456
        %v3458 = vmax.f32 %v3454, %v13
        %3459 = xla_tuple %v3458
        %s3460 = scalar_lea.vmem [#allocation23], 228
        %v3461 = vpack.c.bf16 0.0, %v3458
        %s3463 = ssub.s32 16, 1
        %3464 = vst [vmem:[%s3460] sm:%s3463] %v3461
        %s3465 = scalar_lea.vmem %s437, 32
        %s3466 = scalar_lea.vmem %s461, 32
        %v3467 = vlaneseq
        %v3468 = vand.u32 %v3467, 127
        %vm3470 = vcmp.lt.s32.totalorder %v3468, 75
        %v3471 = vsel %vm3470, %v1205, %v18
        %s3472 = scalar_lea.vmem %s485, 32
        %3473 = xla_tuple %v28, %v23
        %3474 = xla_tuple %3473
        %v3475 = vmax.f32 %v28, %v23
        %3476 = xla_tuple %v3475
        %3477 = xla_tuple %v3475, %v3471
        %3478 = xla_tuple %3477
        %v3479 = vmax.f32 %v3475, %v3471
        %3480 = xla_tuple %v3479
        %3481 = xla_tuple %v3479, %v13
        %3482 = xla_tuple %3481
        %v3483 = vmax.f32 %v3479, %v13
        %3484 = xla_tuple %v3483
        %s3485 = scalar_lea.vmem [#allocation23], 232
        %v3486 = vpack.c.bf16 0.0, %v3483
        %s3488 = ssub.s32 16, 1
        %3489 = vst [vmem:[%s3485] sm:%s3488] %v3486
        %s3490 = scalar_lea.vmem %s437, 36
        %s3491 = scalar_lea.vmem %s461, 36
        %v3492 = vlaneseq
        %v3493 = vand.u32 %v3492, 127
        %vm3495 = vcmp.lt.s32.totalorder %v3493, 75
        %v3496 = vsel %vm3495, %v1288, %v18
        %s3497 = scalar_lea.vmem %s485, 36
        %3498 = xla_tuple %v28, %v23
        %3499 = xla_tuple %3498
        %v3500 = vmax.f32 %v28, %v23
        %3501 = xla_tuple %v3500
        %3502 = xla_tuple %v3500, %v3496
        %3503 = xla_tuple %3502
        %v3504 = vmax.f32 %v3500, %v3496
        %3505 = xla_tuple %v3504
        %3506 = xla_tuple %v3504, %v13
        %3507 = xla_tuple %3506
        %v3508 = vmax.f32 %v3504, %v13
        %3509 = xla_tuple %v3508
        %s3510 = scalar_lea.vmem [#allocation23], 236
        %v3511 = vpack.c.bf16 0.0, %v3508
        %s3513 = ssub.s32 16, 1
        %3514 = vst [vmem:[%s3510] sm:%s3513] %v3511
        %s3515 = scalar_lea.vmem %s437, 40
        %s3516 = scalar_lea.vmem %s461, 40
        %v3517 = vlaneseq
        %v3518 = vand.u32 %v3517, 127
        %vm3520 = vcmp.lt.s32.totalorder %v3518, 75
        %v3521 = vsel %vm3520, %v1371, %v18
        %s3522 = scalar_lea.vmem %s485, 40
        %3523 = xla_tuple %v28, %v23
        %3524 = xla_tuple %3523
        %v3525 = vmax.f32 %v28, %v23
        %3526 = xla_tuple %v3525
        %3527 = xla_tuple %v3525, %v3521
        %3528 = xla_tuple %3527
        %v3529 = vmax.f32 %v3525, %v3521
        %3530 = xla_tuple %v3529
        %3531 = xla_tuple %v3529, %v13
        %3532 = xla_tuple %3531
        %v3533 = vmax.f32 %v3529, %v13
        %3534 = xla_tuple %v3533
        %s3535 = scalar_lea.vmem [#allocation23], 240
        %v3536 = vpack.c.bf16 0.0, %v3533
        %s3538 = ssub.s32 16, 1
        %3539 = vst [vmem:[%s3535] sm:%s3538] %v3536
        %s3540 = scalar_lea.vmem %s437, 44
        %s3541 = scalar_lea.vmem %s461, 44
        %v3542 = vlaneseq
        %v3543 = vand.u32 %v3542, 127
        %vm3545 = vcmp.lt.s32.totalorder %v3543, 75
        %v3546 = vsel %vm3545, %v1454, %v18
        %s3547 = scalar_lea.vmem %s485, 44
        %3548 = xla_tuple %v28, %v23
        %3549 = xla_tuple %3548
        %v3550 = vmax.f32 %v28, %v23
        %3551 = xla_tuple %v3550
        %3552 = xla_tuple %v3550, %v3546
        %3553 = xla_tuple %3552
        %v3554 = vmax.f32 %v3550, %v3546
        %3555 = xla_tuple %v3554
        %3556 = xla_tuple %v3554, %v13
        %3557 = xla_tuple %3556
        %v3558 = vmax.f32 %v3554, %v13
        %3559 = xla_tuple %v3558
        %s3560 = scalar_lea.vmem [#allocation23], 244
        %v3561 = vpack.c.bf16 0.0, %v3558
        %s3563 = ssub.s32 16, 1
        %3564 = vst [vmem:[%s3560] sm:%s3563] %v3561
        %s3565 = scalar_lea.vmem %s437, 48
        %s3566 = scalar_lea.vmem %s461, 48
        %v3567 = vlaneseq
        %v3568 = vand.u32 %v3567, 127
        %vm3570 = vcmp.lt.s32.totalorder %v3568, 75
        %v3571 = vsel %vm3570, %v1537, %v18
        %s3572 = scalar_lea.vmem %s485, 48
        %3573 = xla_tuple %v28, %v23
        %3574 = xla_tuple %3573
        %v3575 = vmax.f32 %v28, %v23
        %3576 = xla_tuple %v3575
        %3577 = xla_tuple %v3575, %v3571
        %3578 = xla_tuple %3577
        %v3579 = vmax.f32 %v3575, %v3571
        %3580 = xla_tuple %v3579
        %3581 = xla_tuple %v3579, %v13
        %3582 = xla_tuple %3581
        %v3583 = vmax.f32 %v3579, %v13
        %3584 = xla_tuple %v3583
        %s3585 = scalar_lea.vmem [#allocation23], 248
        %v3586 = vpack.c.bf16 0.0, %v3583
        %s3588 = ssub.s32 16, 1
        %3589 = vst [vmem:[%s3585] sm:%s3588] %v3586
        %s3590 = scalar_lea.vmem %s437, 52
        %s3591 = scalar_lea.vmem %s461, 52
        %v3592 = vlaneseq
        %v3593 = vand.u32 %v3592, 127
        %vm3595 = vcmp.lt.s32.totalorder %v3593, 75
        %v3596 = vsel %vm3595, %v1620, %v18
        %s3597 = scalar_lea.vmem %s485, 52
        %3598 = xla_tuple %v28, %v23
        %3599 = xla_tuple %3598
        %v3600 = vmax.f32 %v28, %v23
        %3601 = xla_tuple %v3600
        %3602 = xla_tuple %v3600, %v3596
        %3603 = xla_tuple %3602
        %v3604 = vmax.f32 %v3600, %v3596
        %3605 = xla_tuple %v3604
        %3606 = xla_tuple %v3604, %v13
        %3607 = xla_tuple %3606
        %v3608 = vmax.f32 %v3604, %v13
        %3609 = xla_tuple %v3608
        %s3610 = scalar_lea.vmem [#allocation23], 252
        %v3611 = vpack.c.bf16 0.0, %v3608
        %s3613 = ssub.s32 16, 1
        %3614 = vst [vmem:[%s3610] sm:%s3613] %v3611
        %s3615 = scalar_lea.vmem %s437, 56
        %s3616 = scalar_lea.vmem %s461, 56
        %v3617 = vlaneseq
        %v3618 = vand.u32 %v3617, 127
        %vm3620 = vcmp.lt.s32.totalorder %v3618, 75
        %v3621 = vsel %vm3620, %v1703, %v18
        %s3622 = scalar_lea.vmem %s485, 56
        %3623 = xla_tuple %v28, %v23
        %3624 = xla_tuple %3623
        %v3625 = vmax.f32 %v28, %v23
        %3626 = xla_tuple %v3625
        %3627 = xla_tuple %v3625, %v3621
        %3628 = xla_tuple %3627
        %v3629 = vmax.f32 %v3625, %v3621
        %3630 = xla_tuple %v3629
        %3631 = xla_tuple %v3629, %v13
        %3632 = xla_tuple %3631
        %v3633 = vmax.f32 %v3629, %v13
        %3634 = xla_tuple %v3633
        %s3635 = scalar_lea.vmem [#allocation23], 256
        %v3636 = vpack.c.bf16 0.0, %v3633
        %s3638 = ssub.s32 16, 1
        %3639 = vst [vmem:[%s3635] sm:%s3638] %v3636
        %s3640 = scalar_lea.vmem %s437, 60
        %s3641 = scalar_lea.vmem %s461, 60
        %v3642 = vlaneseq
        %v3643 = vand.u32 %v3642, 127
        %vm3645 = vcmp.lt.s32.totalorder %v3643, 75
        %v3646 = vsel %vm3645, %v1786, %v18
        %s3647 = scalar_lea.vmem %s485, 60
        %3648 = xla_tuple %v28, %v23
        %3649 = xla_tuple %3648
        %v3650 = vmax.f32 %v28, %v23
        %3651 = xla_tuple %v3650
        %3652 = xla_tuple %v3650, %v3646
        %3653 = xla_tuple %3652
        %v3654 = vmax.f32 %v3650, %v3646
        %3655 = xla_tuple %v3654
        %3656 = xla_tuple %v3654, %v13
        %3657 = xla_tuple %3656
        %v3658 = vmax.f32 %v3654, %v13
        %3659 = xla_tuple %v3658
        %s3660 = scalar_lea.vmem [#allocation23], 260
        %v3661 = vpack.c.bf16 0.0, %v3658
        %s3663 = ssub.s32 16, 1
        %3664 = vst [vmem:[%s3660] sm:%s3663] %v3661
        %s3665 = scalar_lea.vmem %s437, 64
        %s3666 = scalar_lea.vmem %s461, 64
        %v3667 = vlaneseq
        %v3668 = vand.u32 %v3667, 127
        %vm3670 = vcmp.lt.s32.totalorder %v3668, 75
        %v3671 = vsel %vm3670, %v1869, %v18
        %s3672 = scalar_lea.vmem %s485, 64
        %3673 = xla_tuple %v28, %v23
        %3674 = xla_tuple %3673
        %v3675 = vmax.f32 %v28, %v23
        %3676 = xla_tuple %v3675
        %3677 = xla_tuple %v3675, %v3671
        %3678 = xla_tuple %3677
        %v3679 = vmax.f32 %v3675, %v3671
        %3680 = xla_tuple %v3679
        %3681 = xla_tuple %v3679, %v13
        %3682 = xla_tuple %3681
        %v3683 = vmax.f32 %v3679, %v13
        %3684 = xla_tuple %v3683
        %s3685 = scalar_lea.vmem [#allocation23], 264
        %v3686 = vpack.c.bf16 0.0, %v3683
        %s3688 = ssub.s32 16, 1
        %3689 = vst [vmem:[%s3685] sm:%s3688] %v3686
        %s3690 = scalar_lea.vmem %s437, 68
        %s3691 = scalar_lea.vmem %s461, 68
        %v3692 = vlaneseq
        %v3693 = vand.u32 %v3692, 127
        %vm3695 = vcmp.lt.s32.totalorder %v3693, 75
        %v3696 = vsel %vm3695, %v1952, %v18
        %s3697 = scalar_lea.vmem %s485, 68
        %3698 = xla_tuple %v28, %v23
        %3699 = xla_tuple %3698
        %v3700 = vmax.f32 %v28, %v23
        %3701 = xla_tuple %v3700
        %3702 = xla_tuple %v3700, %v3696
        %3703 = xla_tuple %3702
        %v3704 = vmax.f32 %v3700, %v3696
        %3705 = xla_tuple %v3704
        %3706 = xla_tuple %v3704, %v13
        %3707 = xla_tuple %3706
        %v3708 = vmax.f32 %v3704, %v13
        %3709 = xla_tuple %v3708
        %s3710 = scalar_lea.vmem [#allocation23], 268
        %v3711 = vpack.c.bf16 0.0, %v3708
        %s3713 = ssub.s32 16, 1
        %3714 = vst [vmem:[%s3710] sm:%s3713] %v3711
        %s3715 = scalar_lea.vmem %s437, 72
        %s3716 = scalar_lea.vmem %s461, 72
        %v3717 = vlaneseq
        %v3718 = vand.u32 %v3717, 127
        %vm3720 = vcmp.lt.s32.totalorder %v3718, 75
        %v3721 = vsel %vm3720, %v2035, %v18
        %s3722 = scalar_lea.vmem %s485, 72
        %3723 = xla_tuple %v28, %v23
        %3724 = xla_tuple %3723
        %v3725 = vmax.f32 %v28, %v23
        %3726 = xla_tuple %v3725
        %3727 = xla_tuple %v3725, %v3721
        %3728 = xla_tuple %3727
        %v3729 = vmax.f32 %v3725, %v3721
        %3730 = xla_tuple %v3729
        %3731 = xla_tuple %v3729, %v13
        %3732 = xla_tuple %3731
        %v3733 = vmax.f32 %v3729, %v13
        %3734 = xla_tuple %v3733
        %s3735 = scalar_lea.vmem [#allocation23], 272
        %v3736 = vpack.c.bf16 0.0, %v3733
        %s3738 = ssub.s32 16, 1
        %3739 = vst [vmem:[%s3735] sm:%s3738] %v3736
        %s3740 = scalar_lea.vmem %s437, 76
        %s3741 = scalar_lea.vmem %s461, 76
        %v3742 = vlaneseq
        %v3743 = vand.u32 %v3742, 127
        %vm3745 = vcmp.lt.s32.totalorder %v3743, 75
        %v3746 = vsel %vm3745, %v2118, %v18
        %s3747 = scalar_lea.vmem %s485, 76
        %3748 = xla_tuple %v28, %v23
        %3749 = xla_tuple %3748
        %v3750 = vmax.f32 %v28, %v23
        %3751 = xla_tuple %v3750
        %3752 = xla_tuple %v3750, %v3746
        %3753 = xla_tuple %3752
        %v3754 = vmax.f32 %v3750, %v3746
        %3755 = xla_tuple %v3754
        %3756 = xla_tuple %v3754, %v13
        %3757 = xla_tuple %3756
        %v3758 = vmax.f32 %v3754, %v13
        %3759 = xla_tuple %v3758
        %s3760 = scalar_lea.vmem [#allocation23], 276
        %v3761 = vpack.c.bf16 0.0, %v3758
        %s3763 = ssub.s32 16, 1
        %3764 = vst [vmem:[%s3760] sm:%s3763] %v3761
        %s3765 = scalar_lea.vmem %s437, 80
        %s3766 = scalar_lea.vmem %s461, 80
        %v3767 = vlaneseq
        %v3768 = vand.u32 %v3767, 127
        %vm3770 = vcmp.lt.s32.totalorder %v3768, 75
        %v3771 = vsel %vm3770, %v2201, %v18
        %s3772 = scalar_lea.vmem %s485, 80
        %3773 = xla_tuple %v28, %v23
        %3774 = xla_tuple %3773
        %v3775 = vmax.f32 %v28, %v23
        %3776 = xla_tuple %v3775
        %3777 = xla_tuple %v3775, %v3771
        %3778 = xla_tuple %3777
        %v3779 = vmax.f32 %v3775, %v3771
        %3780 = xla_tuple %v3779
        %3781 = xla_tuple %v3779, %v13
        %3782 = xla_tuple %3781
        %v3783 = vmax.f32 %v3779, %v13
        %3784 = xla_tuple %v3783
        %s3785 = scalar_lea.vmem [#allocation23], 280
        %v3786 = vpack.c.bf16 0.0, %v3783
        %s3788 = ssub.s32 16, 1
        %3789 = vst [vmem:[%s3785] sm:%s3788] %v3786
        %s3790 = scalar_lea.vmem %s437, 84
        %s3791 = scalar_lea.vmem %s461, 84
        %v3792 = vlaneseq
        %v3793 = vand.u32 %v3792, 127
        %vm3795 = vcmp.lt.s32.totalorder %v3793, 75
        %v3796 = vsel %vm3795, %v2284, %v18
        %s3797 = scalar_lea.vmem %s485, 84
        %3798 = xla_tuple %v28, %v23
        %3799 = xla_tuple %3798
        %v3800 = vmax.f32 %v28, %v23
        %3801 = xla_tuple %v3800
        %3802 = xla_tuple %v3800, %v3796
        %3803 = xla_tuple %3802
        %v3804 = vmax.f32 %v3800, %v3796
        %3805 = xla_tuple %v3804
        %3806 = xla_tuple %v3804, %v13
        %3807 = xla_tuple %3806
        %v3808 = vmax.f32 %v3804, %v13
        %3809 = xla_tuple %v3808
        %s3810 = scalar_lea.vmem [#allocation23], 284
        %v3811 = vpack.c.bf16 0.0, %v3808
        %s3813 = ssub.s32 16, 1
        %3814 = vst [vmem:[%s3810] sm:%s3813] %v3811
        %s3815 = scalar_lea.vmem %s437, 88
        %s3816 = scalar_lea.vmem %s461, 88
        %v3817 = vlaneseq
        %v3818 = vand.u32 %v3817, 127
        %vm3820 = vcmp.lt.s32.totalorder %v3818, 75
        %v3821 = vsel %vm3820, %v2367, %v18
        %s3822 = scalar_lea.vmem %s485, 88
        %3823 = xla_tuple %v28, %v23
        %3824 = xla_tuple %3823
        %v3825 = vmax.f32 %v28, %v23
        %3826 = xla_tuple %v3825
        %3827 = xla_tuple %v3825, %v3821
        %3828 = xla_tuple %3827
        %v3829 = vmax.f32 %v3825, %v3821
        %3830 = xla_tuple %v3829
        %3831 = xla_tuple %v3829, %v13
        %3832 = xla_tuple %3831
        %v3833 = vmax.f32 %v3829, %v13
        %3834 = xla_tuple %v3833
        %s3835 = scalar_lea.vmem [#allocation23], 288
        %v3836 = vpack.c.bf16 0.0, %v3833
        %s3838 = ssub.s32 16, 1
        %3839 = vst [vmem:[%s3835] sm:%s3838] %v3836
        %s3840 = scalar_lea.vmem %s437, 92
        %s3841 = scalar_lea.vmem %s461, 92
        %v3842 = vlaneseq
        %v3843 = vand.u32 %v3842, 127
        %vm3845 = vcmp.lt.s32.totalorder %v3843, 75
        %v3846 = vsel %vm3845, %v2450, %v18
        %s3847 = scalar_lea.vmem %s485, 92
        %3848 = xla_tuple %v28, %v23
        %3849 = xla_tuple %3848
        %v3850 = vmax.f32 %v28, %v23
        %3851 = xla_tuple %v3850
        %3852 = xla_tuple %v3850, %v3846
        %3853 = xla_tuple %3852
        %v3854 = vmax.f32 %v3850, %v3846
        %3855 = xla_tuple %v3854
        %3856 = xla_tuple %v3854, %v13
        %3857 = xla_tuple %3856
        %v3858 = vmax.f32 %v3854, %v13
        %3859 = xla_tuple %v3858
        %s3860 = scalar_lea.vmem [#allocation23], 292
        %v3861 = vpack.c.bf16 0.0, %v3858
        %s3863 = ssub.s32 16, 1
        %3864 = vst [vmem:[%s3860] sm:%s3863] %v3861
        %s3865 = scalar_lea.vmem %s437, 96
        %s3866 = sadd.s32 %s528, 24
        %s3867 = ssub.s32 48, %s3866
        %s3868 = scalar_lea.vmem %s461, 96
        %s3869 = sadd.s32 %s544, 24
        %s3870 = ssub.s32 48, %s3869
        %v3871 = vstv %s3870
        %vm3872 = vcmp.lt.s32.totalorder %v3871, 0
        %v3873 = vsel %vm3872, %v18, %v2550
        %v3874 = vlaneseq
        %v3875 = vand.u32 %v3874, 127
        %vm3877 = vcmp.lt.s32.totalorder %v3875, 75
        %v3878 = vsel %vm3877, %v3873, %v18
        %s3879 = scalar_lea.vmem %s485, 96
        %s3880 = sadd.s32 %s560, 24
        %s3881 = ssub.s32 48, %s3880
        %3882 = xla_tuple %v28, %v23
        %3883 = xla_tuple %3882
        %v3884 = vmax.f32 %v28, %v23
        %3885 = xla_tuple %v3884
        %3886 = xla_tuple %v3884, %v3878
        %3887 = xla_tuple %3886
        %v3888 = vmax.f32 %v3884, %v3878
        %3889 = xla_tuple %v3888
        %3890 = xla_tuple %v3888, %v13
        %3891 = xla_tuple %3890
        %v3892 = vmax.f32 %v3888, %v13
        %3893 = xla_tuple %v3892
        %s3894 = scalar_lea.vmem [#allocation23], 296
        %v3895 = vpack.c.bf16 0.0, %v3892
        %s3897 = ssub.s32 16, 1
        %3898 = vst [vmem:[%s3894] sm:%s3897] %v3895
        %v3899 = vlaneseq
        %v3900 = vand.u32 %v3899, 127
        %vm3902 = vcmp.lt.s32.totalorder %v3900, 75
        %v3903 = vsel %vm3902, %v526, %v13
        %3904 = xla_tuple %v28, %v23
        %3905 = xla_tuple %3904
        %v3906 = vmax.f32 %v28, %v23
        %3907 = xla_tuple %v3906
        %3908 = xla_tuple %v3906, %v18
        %3909 = xla_tuple %3908
        %v3910 = vmax.f32 %v3906, %v18
        %3911 = xla_tuple %v3910
        %3912 = xla_tuple %v3910, %v3903
        %3913 = xla_tuple %3912
        %v3914 = vmax.f32 %v3910, %v3903
        %3915 = xla_tuple %v3914
        %s3916 = scalar_lea.vmem [#allocation23], 300
        %v3917 = vpack.c.bf16 0.0, %v3914
        %s3919 = ssub.s32 16, 1
        %3920 = vst [vmem:[%s3916] sm:%s3919] %v3917
        %s3921 = scalar_lea.vmem %s437, 4
        %v3922 = vlaneseq
        %v3923 = vand.u32 %v3922, 127
        %vm3925 = vcmp.lt.s32.totalorder %v3923, 75
        %v3926 = vsel %vm3925, %v608, %v13
        %s3927 = scalar_lea.vmem %s461, 4
        %s3928 = scalar_lea.vmem %s485, 4
        %3929 = xla_tuple %v28, %v23
        %3930 = xla_tuple %3929
        %v3931 = vmax.f32 %v28, %v23
        %3932 = xla_tuple %v3931
        %3933 = xla_tuple %v3931, %v18
        %3934 = xla_tuple %3933
        %v3935 = vmax.f32 %v3931, %v18
        %3936 = xla_tuple %v3935
        %3937 = xla_tuple %v3935, %v3926
        %3938 = xla_tuple %3937
        %v3939 = vmax.f32 %v3935, %v3926
        %3940 = xla_tuple %v3939
        %s3941 = scalar_lea.vmem [#allocation23], 304
        %v3942 = vpack.c.bf16 0.0, %v3939
        %s3944 = ssub.s32 16, 1
        %3945 = vst [vmem:[%s3941] sm:%s3944] %v3942
        %s3946 = scalar_lea.vmem %s437, 8
        %v3947 = vlaneseq
        %v3948 = vand.u32 %v3947, 127
        %vm3950 = vcmp.lt.s32.totalorder %v3948, 75
        %v3951 = vsel %vm3950, %v691, %v13
        %s3952 = scalar_lea.vmem %s461, 8
        %s3953 = scalar_lea.vmem %s485, 8
        %3954 = xla_tuple %v28, %v23
        %3955 = xla_tuple %3954
        %v3956 = vmax.f32 %v28, %v23
        %3957 = xla_tuple %v3956
        %3958 = xla_tuple %v3956, %v18
        %3959 = xla_tuple %3958
        %v3960 = vmax.f32 %v3956, %v18
        %3961 = xla_tuple %v3960
        %3962 = xla_tuple %v3960, %v3951
        %3963 = xla_tuple %3962
        %v3964 = vmax.f32 %v3960, %v3951
        %3965 = xla_tuple %v3964
        %s3966 = scalar_lea.vmem [#allocation23], 308
        %v3967 = vpack.c.bf16 0.0, %v3964
        %s3969 = ssub.s32 16, 1
        %3970 = vst [vmem:[%s3966] sm:%s3969] %v3967
        %s3971 = scalar_lea.vmem %s437, 12
        %v3972 = vlaneseq
        %v3973 = vand.u32 %v3972, 127
        %vm3975 = vcmp.lt.s32.totalorder %v3973, 75
        %v3976 = vsel %vm3975, %v774, %v13
        %s3977 = scalar_lea.vmem %s461, 12
        %s3978 = scalar_lea.vmem %s485, 12
        %3979 = xla_tuple %v28, %v23
        %3980 = xla_tuple %3979
        %v3981 = vmax.f32 %v28, %v23
        %3982 = xla_tuple %v3981
        %3983 = xla_tuple %v3981, %v18
        %3984 = xla_tuple %3983
        %v3985 = vmax.f32 %v3981, %v18
        %3986 = xla_tuple %v3985
        %3987 = xla_tuple %v3985, %v3976
        %3988 = xla_tuple %3987
        %v3989 = vmax.f32 %v3985, %v3976
        %3990 = xla_tuple %v3989
        %s3991 = scalar_lea.vmem [#allocation23], 312
        %v3992 = vpack.c.bf16 0.0, %v3989
        %s3994 = ssub.s32 16, 1
        %3995 = vst [vmem:[%s3991] sm:%s3994] %v3992
        %s3996 = scalar_lea.vmem %s437, 16
        %v3997 = vlaneseq
        %v3998 = vand.u32 %v3997, 127
        %vm4000 = vcmp.lt.s32.totalorder %v3998, 75
        %v4001 = vsel %vm4000, %v857, %v13
        %s4002 = scalar_lea.vmem %s461, 16
        %s4003 = scalar_lea.vmem %s485, 16
        %4004 = xla_tuple %v28, %v23
        %4005 = xla_tuple %4004
        %v4006 = vmax.f32 %v28, %v23
        %4007 = xla_tuple %v4006
        %4008 = xla_tuple %v4006, %v18
        %4009 = xla_tuple %4008
        %v4010 = vmax.f32 %v4006, %v18
        %4011 = xla_tuple %v4010
        %4012 = xla_tuple %v4010, %v4001
        %4013 = xla_tuple %4012
        %v4014 = vmax.f32 %v4010, %v4001
        %4015 = xla_tuple %v4014
        %s4016 = scalar_lea.vmem [#allocation23], 316
        %v4017 = vpack.c.bf16 0.0, %v4014
        %s4019 = ssub.s32 16, 1
        %4020 = vst [vmem:[%s4016] sm:%s4019] %v4017
        %s4021 = scalar_lea.vmem %s437, 20
        %v4022 = vlaneseq
        %v4023 = vand.u32 %v4022, 127
        %vm4025 = vcmp.lt.s32.totalorder %v4023, 75
        %v4026 = vsel %vm4025, %v940, %v13
        %s4027 = scalar_lea.vmem %s461, 20
        %s4028 = scalar_lea.vmem %s485, 20
        %4029 = xla_tuple %v28, %v23
        %4030 = xla_tuple %4029
        %v4031 = vmax.f32 %v28, %v23
        %4032 = xla_tuple %v4031
        %4033 = xla_tuple %v4031, %v18
        %4034 = xla_tuple %4033
        %v4035 = vmax.f32 %v4031, %v18
        %4036 = xla_tuple %v4035
        %4037 = xla_tuple %v4035, %v4026
        %4038 = xla_tuple %4037
        %v4039 = vmax.f32 %v4035, %v4026
        %4040 = xla_tuple %v4039
        %s4041 = scalar_lea.vmem [#allocation23], 320
        %v4042 = vpack.c.bf16 0.0, %v4039
        %s4044 = ssub.s32 16, 1
        %4045 = vst [vmem:[%s4041] sm:%s4044] %v4042
        %s4046 = scalar_lea.vmem %s437, 24
        %v4047 = vlaneseq
        %v4048 = vand.u32 %v4047, 127
        %vm4050 = vcmp.lt.s32.totalorder %v4048, 75
        %v4051 = vsel %vm4050, %v1023, %v13
        %s4052 = scalar_lea.vmem %s461, 24
        %s4053 = scalar_lea.vmem %s485, 24
        %4054 = xla_tuple %v28, %v23
        %4055 = xla_tuple %4054
        %v4056 = vmax.f32 %v28, %v23
        %4057 = xla_tuple %v4056
        %4058 = xla_tuple %v4056, %v18
        %4059 = xla_tuple %4058
        %v4060 = vmax.f32 %v4056, %v18
        %4061 = xla_tuple %v4060
        %4062 = xla_tuple %v4060, %v4051
        %4063 = xla_tuple %4062
        %v4064 = vmax.f32 %v4060, %v4051
        %4065 = xla_tuple %v4064
        %s4066 = scalar_lea.vmem [#allocation23], 324
        %v4067 = vpack.c.bf16 0.0, %v4064
        %s4069 = ssub.s32 16, 1
        %4070 = vst [vmem:[%s4066] sm:%s4069] %v4067
        %s4071 = scalar_lea.vmem %s437, 28
        %v4072 = vlaneseq
        %v4073 = vand.u32 %v4072, 127
        %vm4075 = vcmp.lt.s32.totalorder %v4073, 75
        %v4076 = vsel %vm4075, %v1106, %v13
        %s4077 = scalar_lea.vmem %s461, 28
        %s4078 = scalar_lea.vmem %s485, 28
        %4079 = xla_tuple %v28, %v23
        %4080 = xla_tuple %4079
        %v4081 = vmax.f32 %v28, %v23
        %4082 = xla_tuple %v4081
        %4083 = xla_tuple %v4081, %v18
        %4084 = xla_tuple %4083
        %v4085 = vmax.f32 %v4081, %v18
        %4086 = xla_tuple %v4085
        %4087 = xla_tuple %v4085, %v4076
        %4088 = xla_tuple %4087
        %v4089 = vmax.f32 %v4085, %v4076
        %4090 = xla_tuple %v4089
        %s4091 = scalar_lea.vmem [#allocation23], 328
        %v4092 = vpack.c.bf16 0.0, %v4089
        %s4094 = ssub.s32 16, 1
        %4095 = vst [vmem:[%s4091] sm:%s4094] %v4092
        %s4096 = scalar_lea.vmem %s437, 32
        %v4097 = vlaneseq
        %v4098 = vand.u32 %v4097, 127
        %vm4100 = vcmp.lt.s32.totalorder %v4098, 75
        %v4101 = vsel %vm4100, %v1189, %v13
        %s4102 = scalar_lea.vmem %s461, 32
        %s4103 = scalar_lea.vmem %s485, 32
        %4104 = xla_tuple %v28, %v23
        %4105 = xla_tuple %4104
        %v4106 = vmax.f32 %v28, %v23
        %4107 = xla_tuple %v4106
        %4108 = xla_tuple %v4106, %v18
        %4109 = xla_tuple %4108
        %v4110 = vmax.f32 %v4106, %v18
        %4111 = xla_tuple %v4110
        %4112 = xla_tuple %v4110, %v4101
        %4113 = xla_tuple %4112
        %v4114 = vmax.f32 %v4110, %v4101
        %4115 = xla_tuple %v4114
        %s4116 = scalar_lea.vmem [#allocation23], 332
        %v4117 = vpack.c.bf16 0.0, %v4114
        %s4119 = ssub.s32 16, 1
        %4120 = vst [vmem:[%s4116] sm:%s4119] %v4117
        %s4121 = scalar_lea.vmem %s437, 36
        %v4122 = vlaneseq
        %v4123 = vand.u32 %v4122, 127
        %vm4125 = vcmp.lt.s32.totalorder %v4123, 75
        %v4126 = vsel %vm4125, %v1272, %v13
        %s4127 = scalar_lea.vmem %s461, 36
        %s4128 = scalar_lea.vmem %s485, 36
        %4129 = xla_tuple %v28, %v23
        %4130 = xla_tuple %4129
        %v4131 = vmax.f32 %v28, %v23
        %4132 = xla_tuple %v4131
        %4133 = xla_tuple %v4131, %v18
        %4134 = xla_tuple %4133
        %v4135 = vmax.f32 %v4131, %v18
        %4136 = xla_tuple %v4135
        %4137 = xla_tuple %v4135, %v4126
        %4138 = xla_tuple %4137
        %v4139 = vmax.f32 %v4135, %v4126
        %4140 = xla_tuple %v4139
        %s4141 = scalar_lea.vmem [#allocation23], 336
        %v4142 = vpack.c.bf16 0.0, %v4139
        %s4144 = ssub.s32 16, 1
        %4145 = vst [vmem:[%s4141] sm:%s4144] %v4142
        %s4146 = scalar_lea.vmem %s437, 40
        %v4147 = vlaneseq
        %v4148 = vand.u32 %v4147, 127
        %vm4150 = vcmp.lt.s32.totalorder %v4148, 75
        %v4151 = vsel %vm4150, %v1355, %v13
        %s4152 = scalar_lea.vmem %s461, 40
        %s4153 = scalar_lea.vmem %s485, 40
        %4154 = xla_tuple %v28, %v23
        %4155 = xla_tuple %4154
        %v4156 = vmax.f32 %v28, %v23
        %4157 = xla_tuple %v4156
        %4158 = xla_tuple %v4156, %v18
        %4159 = xla_tuple %4158
        %v4160 = vmax.f32 %v4156, %v18
        %4161 = xla_tuple %v4160
        %4162 = xla_tuple %v4160, %v4151
        %4163 = xla_tuple %4162
        %v4164 = vmax.f32 %v4160, %v4151
        %4165 = xla_tuple %v4164
        %s4166 = scalar_lea.vmem [#allocation23], 340
        %v4167 = vpack.c.bf16 0.0, %v4164
        %s4169 = ssub.s32 16, 1
        %4170 = vst [vmem:[%s4166] sm:%s4169] %v4167
        %s4171 = scalar_lea.vmem %s437, 44
        %v4172 = vlaneseq
        %v4173 = vand.u32 %v4172, 127
        %vm4175 = vcmp.lt.s32.totalorder %v4173, 75
        %v4176 = vsel %vm4175, %v1438, %v13
        %s4177 = scalar_lea.vmem %s461, 44
        %s4178 = scalar_lea.vmem %s485, 44
        %4179 = xla_tuple %v28, %v23
        %4180 = xla_tuple %4179
        %v4181 = vmax.f32 %v28, %v23
        %4182 = xla_tuple %v4181
        %4183 = xla_tuple %v4181, %v18
        %4184 = xla_tuple %4183
        %v4185 = vmax.f32 %v4181, %v18
        %4186 = xla_tuple %v4185
        %4187 = xla_tuple %v4185, %v4176
        %4188 = xla_tuple %4187
        %v4189 = vmax.f32 %v4185, %v4176
        %4190 = xla_tuple %v4189
        %s4191 = scalar_lea.vmem [#allocation23], 344
        %v4192 = vpack.c.bf16 0.0, %v4189
        %s4194 = ssub.s32 16, 1
        %4195 = vst [vmem:[%s4191] sm:%s4194] %v4192
        %s4196 = scalar_lea.vmem %s437, 48
        %v4197 = vlaneseq
        %v4198 = vand.u32 %v4197, 127
        %vm4200 = vcmp.lt.s32.totalorder %v4198, 75
        %v4201 = vsel %vm4200, %v1521, %v13
        %s4202 = scalar_lea.vmem %s461, 48
        %s4203 = scalar_lea.vmem %s485, 48
        %4204 = xla_tuple %v28, %v23
        %4205 = xla_tuple %4204
        %v4206 = vmax.f32 %v28, %v23
        %4207 = xla_tuple %v4206
        %4208 = xla_tuple %v4206, %v18
        %4209 = xla_tuple %4208
        %v4210 = vmax.f32 %v4206, %v18
        %4211 = xla_tuple %v4210
        %4212 = xla_tuple %v4210, %v4201
        %4213 = xla_tuple %4212
        %v4214 = vmax.f32 %v4210, %v4201
        %4215 = xla_tuple %v4214
        %s4216 = scalar_lea.vmem [#allocation23], 348
        %v4217 = vpack.c.bf16 0.0, %v4214
        %s4219 = ssub.s32 16, 1
        %4220 = vst [vmem:[%s4216] sm:%s4219] %v4217
        %s4221 = scalar_lea.vmem %s437, 52
        %v4222 = vlaneseq
        %v4223 = vand.u32 %v4222, 127
        %vm4225 = vcmp.lt.s32.totalorder %v4223, 75
        %v4226 = vsel %vm4225, %v1604, %v13
        %s4227 = scalar_lea.vmem %s461, 52
        %s4228 = scalar_lea.vmem %s485, 52
        %4229 = xla_tuple %v28, %v23
        %4230 = xla_tuple %4229
        %v4231 = vmax.f32 %v28, %v23
        %4232 = xla_tuple %v4231
        %4233 = xla_tuple %v4231, %v18
        %4234 = xla_tuple %4233
        %v4235 = vmax.f32 %v4231, %v18
        %4236 = xla_tuple %v4235
        %4237 = xla_tuple %v4235, %v4226
        %4238 = xla_tuple %4237
        %v4239 = vmax.f32 %v4235, %v4226
        %4240 = xla_tuple %v4239
        %s4241 = scalar_lea.vmem [#allocation23], 352
        %v4242 = vpack.c.bf16 0.0, %v4239
        %s4244 = ssub.s32 16, 1
        %4245 = vst [vmem:[%s4241] sm:%s4244] %v4242
        %s4246 = scalar_lea.vmem %s437, 56
        %v4247 = vlaneseq
        %v4248 = vand.u32 %v4247, 127
        %vm4250 = vcmp.lt.s32.totalorder %v4248, 75
        %v4251 = vsel %vm4250, %v1687, %v13
        %s4252 = scalar_lea.vmem %s461, 56
        %s4253 = scalar_lea.vmem %s485, 56
        %4254 = xla_tuple %v28, %v23
        %4255 = xla_tuple %4254
        %v4256 = vmax.f32 %v28, %v23
        %4257 = xla_tuple %v4256
        %4258 = xla_tuple %v4256, %v18
        %4259 = xla_tuple %4258
        %v4260 = vmax.f32 %v4256, %v18
        %4261 = xla_tuple %v4260
        %4262 = xla_tuple %v4260, %v4251
        %4263 = xla_tuple %4262
        %v4264 = vmax.f32 %v4260, %v4251
        %4265 = xla_tuple %v4264
        %s4266 = scalar_lea.vmem [#allocation23], 356
        %v4267 = vpack.c.bf16 0.0, %v4264
        %s4269 = ssub.s32 16, 1
        %4270 = vst [vmem:[%s4266] sm:%s4269] %v4267
        %s4271 = scalar_lea.vmem %s437, 60
        %v4272 = vlaneseq
        %v4273 = vand.u32 %v4272, 127
        %vm4275 = vcmp.lt.s32.totalorder %v4273, 75
        %v4276 = vsel %vm4275, %v1770, %v13
        %s4277 = scalar_lea.vmem %s461, 60
        %s4278 = scalar_lea.vmem %s485, 60
        %4279 = xla_tuple %v28, %v23
        %4280 = xla_tuple %4279
        %v4281 = vmax.f32 %v28, %v23
        %4282 = xla_tuple %v4281
        %4283 = xla_tuple %v4281, %v18
        %4284 = xla_tuple %4283
        %v4285 = vmax.f32 %v4281, %v18
        %4286 = xla_tuple %v4285
        %4287 = xla_tuple %v4285, %v4276
        %4288 = xla_tuple %4287
        %v4289 = vmax.f32 %v4285, %v4276
        %4290 = xla_tuple %v4289
        %s4291 = scalar_lea.vmem [#allocation23], 360
        %v4292 = vpack.c.bf16 0.0, %v4289
        %s4294 = ssub.s32 16, 1
        %4295 = vst [vmem:[%s4291] sm:%s4294] %v4292
        %s4296 = scalar_lea.vmem %s437, 64
        %v4297 = vlaneseq
        %v4298 = vand.u32 %v4297, 127
        %vm4300 = vcmp.lt.s32.totalorder %v4298, 75
        %v4301 = vsel %vm4300, %v1853, %v13
        %s4302 = scalar_lea.vmem %s461, 64
        %s4303 = scalar_lea.vmem %s485, 64
        %4304 = xla_tuple %v28, %v23
        %4305 = xla_tuple %4304
        %v4306 = vmax.f32 %v28, %v23
        %4307 = xla_tuple %v4306
        %4308 = xla_tuple %v4306, %v18
        %4309 = xla_tuple %4308
        %v4310 = vmax.f32 %v4306, %v18
        %4311 = xla_tuple %v4310
        %4312 = xla_tuple %v4310, %v4301
        %4313 = xla_tuple %4312
        %v4314 = vmax.f32 %v4310, %v4301
        %4315 = xla_tuple %v4314
        %s4316 = scalar_lea.vmem [#allocation23], 364
        %v4317 = vpack.c.bf16 0.0, %v4314
        %s4319 = ssub.s32 16, 1
        %4320 = vst [vmem:[%s4316] sm:%s4319] %v4317
        %s4321 = scalar_lea.vmem %s437, 68
        %v4322 = vlaneseq
        %v4323 = vand.u32 %v4322, 127
        %vm4325 = vcmp.lt.s32.totalorder %v4323, 75
        %v4326 = vsel %vm4325, %v1936, %v13
        %s4327 = scalar_lea.vmem %s461, 68
        %s4328 = scalar_lea.vmem %s485, 68
        %4329 = xla_tuple %v28, %v23
        %4330 = xla_tuple %4329
        %v4331 = vmax.f32 %v28, %v23
        %4332 = xla_tuple %v4331
        %4333 = xla_tuple %v4331, %v18
        %4334 = xla_tuple %4333
        %v4335 = vmax.f32 %v4331, %v18
        %4336 = xla_tuple %v4335
        %4337 = xla_tuple %v4335, %v4326
        %4338 = xla_tuple %4337
        %v4339 = vmax.f32 %v4335, %v4326
        %4340 = xla_tuple %v4339
        %s4341 = scalar_lea.vmem [#allocation23], 368
        %v4342 = vpack.c.bf16 0.0, %v4339
        %s4344 = ssub.s32 16, 1
        %4345 = vst [vmem:[%s4341] sm:%s4344] %v4342
        %s4346 = scalar_lea.vmem %s437, 72
        %v4347 = vlaneseq
        %v4348 = vand.u32 %v4347, 127
        %vm4350 = vcmp.lt.s32.totalorder %v4348, 75
        %v4351 = vsel %vm4350, %v2019, %v13
        %s4352 = scalar_lea.vmem %s461, 72
        %s4353 = scalar_lea.vmem %s485, 72
        %4354 = xla_tuple %v28, %v23
        %4355 = xla_tuple %4354
        %v4356 = vmax.f32 %v28, %v23
        %4357 = xla_tuple %v4356
        %4358 = xla_tuple %v4356, %v18
        %4359 = xla_tuple %4358
        %v4360 = vmax.f32 %v4356, %v18
        %4361 = xla_tuple %v4360
        %4362 = xla_tuple %v4360, %v4351
        %4363 = xla_tuple %4362
        %v4364 = vmax.f32 %v4360, %v4351
        %4365 = xla_tuple %v4364
        %s4366 = scalar_lea.vmem [#allocation23], 372
        %v4367 = vpack.c.bf16 0.0, %v4364
        %s4369 = ssub.s32 16, 1
        %4370 = vst [vmem:[%s4366] sm:%s4369] %v4367
        %s4371 = scalar_lea.vmem %s437, 76
        %v4372 = vlaneseq
        %v4373 = vand.u32 %v4372, 127
        %vm4375 = vcmp.lt.s32.totalorder %v4373, 75
        %v4376 = vsel %vm4375, %v2102, %v13
        %s4377 = scalar_lea.vmem %s461, 76
        %s4378 = scalar_lea.vmem %s485, 76
        %4379 = xla_tuple %v28, %v23
        %4380 = xla_tuple %4379
        %v4381 = vmax.f32 %v28, %v23
        %4382 = xla_tuple %v4381
        %4383 = xla_tuple %v4381, %v18
        %4384 = xla_tuple %4383
        %v4385 = vmax.f32 %v4381, %v18
        %4386 = xla_tuple %v4385
        %4387 = xla_tuple %v4385, %v4376
        %4388 = xla_tuple %4387
        %v4389 = vmax.f32 %v4385, %v4376
        %4390 = xla_tuple %v4389
        %s4391 = scalar_lea.vmem [#allocation23], 376
        %v4392 = vpack.c.bf16 0.0, %v4389
        %s4394 = ssub.s32 16, 1
        %4395 = vst [vmem:[%s4391] sm:%s4394] %v4392
        %s4396 = scalar_lea.vmem %s437, 80
        %v4397 = vlaneseq
        %v4398 = vand.u32 %v4397, 127
        %vm4400 = vcmp.lt.s32.totalorder %v4398, 75
        %v4401 = vsel %vm4400, %v2185, %v13
        %s4402 = scalar_lea.vmem %s461, 80
        %s4403 = scalar_lea.vmem %s485, 80
        %4404 = xla_tuple %v28, %v23
        %4405 = xla_tuple %4404
        %v4406 = vmax.f32 %v28, %v23
        %4407 = xla_tuple %v4406
        %4408 = xla_tuple %v4406, %v18
        %4409 = xla_tuple %4408
        %v4410 = vmax.f32 %v4406, %v18
        %4411 = xla_tuple %v4410
        %4412 = xla_tuple %v4410, %v4401
        %4413 = xla_tuple %4412
        %v4414 = vmax.f32 %v4410, %v4401
        %4415 = xla_tuple %v4414
        %s4416 = scalar_lea.vmem [#allocation23], 380
        %v4417 = vpack.c.bf16 0.0, %v4414
        %s4419 = ssub.s32 16, 1
        %4420 = vst [vmem:[%s4416] sm:%s4419] %v4417
        %s4421 = scalar_lea.vmem %s437, 84
        %v4422 = vlaneseq
        %v4423 = vand.u32 %v4422, 127
        %vm4425 = vcmp.lt.s32.totalorder %v4423, 75
        %v4426 = vsel %vm4425, %v2268, %v13
        %s4427 = scalar_lea.vmem %s461, 84
        %s4428 = scalar_lea.vmem %s485, 84
        %4429 = xla_tuple %v28, %v23
        %4430 = xla_tuple %4429
        %v4431 = vmax.f32 %v28, %v23
        %4432 = xla_tuple %v4431
        %4433 = xla_tuple %v4431, %v18
        %4434 = xla_tuple %4433
        %v4435 = vmax.f32 %v4431, %v18
        %4436 = xla_tuple %v4435
        %4437 = xla_tuple %v4435, %v4426
        %4438 = xla_tuple %4437
        %v4439 = vmax.f32 %v4435, %v4426
        %4440 = xla_tuple %v4439
        %s4441 = scalar_lea.vmem [#allocation23], 384
        %v4442 = vpack.c.bf16 0.0, %v4439
        %s4444 = ssub.s32 16, 1
        %4445 = vst [vmem:[%s4441] sm:%s4444] %v4442
        %s4446 = scalar_lea.vmem %s437, 88
        %v4447 = vlaneseq
        %v4448 = vand.u32 %v4447, 127
        %vm4450 = vcmp.lt.s32.totalorder %v4448, 75
        %v4451 = vsel %vm4450, %v2351, %v13
        %s4452 = scalar_lea.vmem %s461, 88
        %s4453 = scalar_lea.vmem %s485, 88
        %4454 = xla_tuple %v28, %v23
        %4455 = xla_tuple %4454
        %v4456 = vmax.f32 %v28, %v23
        %4457 = xla_tuple %v4456
        %4458 = xla_tuple %v4456, %v18
        %4459 = xla_tuple %4458
        %v4460 = vmax.f32 %v4456, %v18
        %4461 = xla_tuple %v4460
        %4462 = xla_tuple %v4460, %v4451
        %4463 = xla_tuple %4462
        %v4464 = vmax.f32 %v4460, %v4451
        %4465 = xla_tuple %v4464
        %s4466 = scalar_lea.vmem [#allocation23], 388
        %v4467 = vpack.c.bf16 0.0, %v4464
        %s4469 = ssub.s32 16, 1
        %4470 = vst [vmem:[%s4466] sm:%s4469] %v4467
        %s4471 = scalar_lea.vmem %s437, 92
        %v4472 = vlaneseq
        %v4473 = vand.u32 %v4472, 127
        %vm4475 = vcmp.lt.s32.totalorder %v4473, 75
        %v4476 = vsel %vm4475, %v2434, %v13
        %s4477 = scalar_lea.vmem %s461, 92
        %s4478 = scalar_lea.vmem %s485, 92
        %4479 = xla_tuple %v28, %v23
        %4480 = xla_tuple %4479
        %v4481 = vmax.f32 %v28, %v23
        %4482 = xla_tuple %v4481
        %4483 = xla_tuple %v4481, %v18
        %4484 = xla_tuple %4483
        %v4485 = vmax.f32 %v4481, %v18
        %4486 = xla_tuple %v4485
        %4487 = xla_tuple %v4485, %v4476
        %4488 = xla_tuple %4487
        %v4489 = vmax.f32 %v4485, %v4476
        %4490 = xla_tuple %v4489
        %s4491 = scalar_lea.vmem [#allocation23], 392
        %v4492 = vpack.c.bf16 0.0, %v4489
        %s4494 = ssub.s32 16, 1
        %4495 = vst [vmem:[%s4491] sm:%s4494] %v4492
        %s4496 = scalar_lea.vmem %s437, 96
        %s4497 = sadd.s32 %s528, 24
        %s4498 = ssub.s32 48, %s4497
        %v4499 = vstv %s4498
        %vm4500 = vcmp.lt.s32.totalorder %v4499, 0
        %v4501 = vsel %vm4500, %v13, %v2520
        %v4502 = vlaneseq
        %v4503 = vand.u32 %v4502, 127
        %vm4505 = vcmp.lt.s32.totalorder %v4503, 75
        %v4506 = vsel %vm4505, %v4501, %v13
        %s4507 = scalar_lea.vmem %s461, 96
        %s4508 = sadd.s32 %s544, 24
        %s4509 = ssub.s32 48, %s4508
        %s4510 = scalar_lea.vmem %s485, 96
        %s4511 = sadd.s32 %s560, 24
        %s4512 = ssub.s32 48, %s4511
        %s4513 = sor.u32 4294967294, %s4512
        %v4514 = vstv %s4513
        %vm4515 = vcmp.lt.s32.totalorder %v4514, 0
        %v4516 = vsel %vm4515, %v23, %v2580
        %v4517 = vlaneseq
        %v4518 = vand.u32 %v4517, 127
        %vm4520 = vcmp.lt.s32.totalorder %v4518, 75
        %v4521 = vsel %vm4520, %v4516, %v23
        %4522 = xla_tuple %v28, %v4521
        %4523 = xla_tuple %4522
        %v4524 = vmax.f32 %v28, %v4521
        %4525 = xla_tuple %v4524
        %4526 = xla_tuple %v4524, %v18
        %4527 = xla_tuple %4526
        %v4528 = vmax.f32 %v4524, %v18
        %4529 = xla_tuple %v4528
        %4530 = xla_tuple %v4528, %v4506
        %4531 = xla_tuple %4530
        %v4532 = vmax.f32 %v4528, %v4506
        %4533 = xla_tuple %v4532
        %s4534 = scalar_lea.vmem [#allocation23], 396
        %v4535 = vpack.c.bf16 0.0, %v4532
        %s4537 = ssub.s32 16, 1
        %4538 = vst [vmem:[%s4534] sm:%s4537] %v4535
        %v4540 = vld [vmem:[#allocation23] sm:$0xf]
        %v4541 = vld [vmem:[#allocation23 + $0x4] sm:$0xf]
        %v4542 = vld [vmem:[#allocation23 + $0x8] sm:$0xf]
        %v4543 = vld [vmem:[#allocation23 + $0xc] sm:$0xf]
        %v4544 = vld [vmem:[#allocation23 + $0x10] sm:$0xf]
        %v4545 = vld [vmem:[#allocation23 + $0x14] sm:$0xf]
        %v4546 = vld [vmem:[#allocation23 + $0x18] sm:$0xf]
        %v4547 = vld [vmem:[#allocation23 + $0x1c] sm:$0xf]
        %v4548 = vld [vmem:[#allocation23 + $0x20] sm:$0xf]
        %v4549 = vld [vmem:[#allocation23 + $0x24] sm:$0xf]
        %v4550 = vld [vmem:[#allocation23 + $0x28] sm:$0xf]
        %v4551 = vld [vmem:[#allocation23 + $0x2c] sm:$0xf]
        %v4552 = vld [vmem:[#allocation23 + $0x30] sm:$0xf]
        %v4553 = vld [vmem:[#allocation23 + $0x34] sm:$0xf]
        %v4554 = vld [vmem:[#allocation23 + $0x38] sm:$0xf]
        %v4555 = vld [vmem:[#allocation23 + $0x3c] sm:$0xf]
        %v4556 = vld [vmem:[#allocation23 + $0x40] sm:$0xf]
        %v4557 = vld [vmem:[#allocation23 + $0x44] sm:$0xf]
        %v4558 = vld [vmem:[#allocation23 + $0x48] sm:$0xf]
        %v4559 = vld [vmem:[#allocation23 + $0x4c] sm:$0xf]
        %v4560 = vld [vmem:[#allocation23 + $0x50] sm:$0xf]
        %v4561 = vld [vmem:[#allocation23 + $0x54] sm:$0xf]
        %v4562 = vld [vmem:[#allocation23 + $0x58] sm:$0xf]
        %v4563 = vld [vmem:[#allocation23 + $0x5c] sm:$0xf]
        %v4564 = vld [vmem:[#allocation23 + $0x60] sm:$0xf]
        %v4565 = vld [vmem:[#allocation23 + $0x64] sm:$0xf]
        %v4566 = vld [vmem:[#allocation23 + $0x68] sm:$0xf]
        %v4567 = vld [vmem:[#allocation23 + $0x6c] sm:$0xf]
        %v4568 = vld [vmem:[#allocation23 + $0x70] sm:$0xf]
        %v4569 = vld [vmem:[#allocation23 + $0x74] sm:$0xf]
        %v4570 = vld [vmem:[#allocation23 + $0x78] sm:$0xf]
        %v4571 = vld [vmem:[#allocation23 + $0x7c] sm:$0xf]
        %v4572 = vld [vmem:[#allocation23 + $0x80] sm:$0xf]
        %v4573 = vld [vmem:[#allocation23 + $0x84] sm:$0xf]
        %v4574 = vld [vmem:[#allocation23 + $0x88] sm:$0xf]
        %v4575 = vld [vmem:[#allocation23 + $0x8c] sm:$0xf]
        %v4576 = vld [vmem:[#allocation23 + $0x90] sm:$0xf]
        %v4577 = vld [vmem:[#allocation23 + $0x94] sm:$0xf]
        %v4578 = vld [vmem:[#allocation23 + $0x98] sm:$0xf]
        %v4579 = vld [vmem:[#allocation23 + $0x9c] sm:$0xf]
        %v4580 = vld [vmem:[#allocation23 + $0xa0] sm:$0xf]
        %v4581 = vld [vmem:[#allocation23 + $0xa4] sm:$0xf]
        %v4582 = vld [vmem:[#allocation23 + $0xa8] sm:$0xf]
        %v4583 = vld [vmem:[#allocation23 + $0xac] sm:$0xf]
        %v4584 = vld [vmem:[#allocation23 + $0xb0] sm:$0xf]
        %v4585 = vld [vmem:[#allocation23 + $0xb4] sm:$0xf]
        %v4586 = vld [vmem:[#allocation23 + $0xb8] sm:$0xf]
        %v4587 = vld [vmem:[#allocation23 + $0xbc] sm:$0xf]
        %v4588 = vld [vmem:[#allocation23 + $0xc0] sm:$0xf]
        %v4589 = vld [vmem:[#allocation23 + $0xc4] sm:$0xf]
        %v4590 = vld [vmem:[#allocation23 + $0xc8] sm:$0xf]
        %v4591 = vld [vmem:[#allocation23 + $0xcc] sm:$0xf]
        %v4592 = vld [vmem:[#allocation23 + $0xd0] sm:$0xf]
        %v4593 = vld [vmem:[#allocation23 + $0xd4] sm:$0xf]
        %v4594 = vld [vmem:[#allocation23 + $0xd8] sm:$0xf]
        %v4595 = vld [vmem:[#allocation23 + $0xdc] sm:$0xf]
        %v4596 = vld [vmem:[#allocation23 + $0xe0] sm:$0xf]
        %v4597 = vld [vmem:[#allocation23 + $0xe4] sm:$0xf]
        %v4598 = vld [vmem:[#allocation23 + $0xe8] sm:$0xf]
        %v4599 = vld [vmem:[#allocation23 + $0xec] sm:$0xf]
        %v4600 = vld [vmem:[#allocation23 + $0xf0] sm:$0xf]
        %v4601 = vld [vmem:[#allocation23 + $0xf4] sm:$0xf]
        %v4602 = vld [vmem:[#allocation23 + $0xf8] sm:$0xf]
        %v4603 = vld [vmem:[#allocation23 + $0xfc] sm:$0xf]
        %v4604 = vld [vmem:[#allocation23 + $0x100] sm:$0xf]
        %v4605 = vld [vmem:[#allocation23 + $0x104] sm:$0xf]
        %v4606 = vld [vmem:[#allocation23 + $0x108] sm:$0xf]
        %v4607 = vld [vmem:[#allocation23 + $0x10c] sm:$0xf]
        %v4608 = vld [vmem:[#allocation23 + $0x110] sm:$0xf]
        %v4609 = vld [vmem:[#allocation23 + $0x114] sm:$0xf]
        %v4610 = vld [vmem:[#allocation23 + $0x118] sm:$0xf]
        %v4611 = vld [vmem:[#allocation23 + $0x11c] sm:$0xf]
        %v4612 = vld [vmem:[#allocation23 + $0x120] sm:$0xf]
        %v4613 = vld [vmem:[#allocation23 + $0x124] sm:$0xf]
        %v4614 = vld [vmem:[#allocation23 + $0x128] sm:$0xf]
        %v4615 = vld [vmem:[#allocation23 + $0x12c] sm:$0xf]
        %v4616 = vld [vmem:[#allocation23 + $0x130] sm:$0xf]
        %v4617 = vld [vmem:[#allocation23 + $0x134] sm:$0xf]
        %v4618 = vld [vmem:[#allocation23 + $0x138] sm:$0xf]
        %v4619 = vld [vmem:[#allocation23 + $0x13c] sm:$0xf]
        %v4620 = vld [vmem:[#allocation23 + $0x140] sm:$0xf]
        %v4621 = vld [vmem:[#allocation23 + $0x144] sm:$0xf]
        %v4622 = vld [vmem:[#allocation23 + $0x148] sm:$0xf]
        %v4623 = vld [vmem:[#allocation23 + $0x14c] sm:$0xf]
        %v4624 = vld [vmem:[#allocation23 + $0x150] sm:$0xf]
        %v4625 = vld [vmem:[#allocation23 + $0x154] sm:$0xf]
        %v4626 = vld [vmem:[#allocation23 + $0x158] sm:$0xf]
        %v4627 = vld [vmem:[#allocation23 + $0x15c] sm:$0xf]
        %v4628 = vld [vmem:[#allocation23 + $0x160] sm:$0xf]
        %v4629 = vld [vmem:[#allocation23 + $0x164] sm:$0xf]
        %v4630 = vld [vmem:[#allocation23 + $0x168] sm:$0xf]
        %v4631 = vld [vmem:[#allocation23 + $0x16c] sm:$0xf]
        %v4632 = vld [vmem:[#allocation23 + $0x170] sm:$0xf]
        %v4633 = vld [vmem:[#allocation23 + $0x174] sm:$0xf]
        %v4634 = vld [vmem:[#allocation23 + $0x178] sm:$0xf]
        %v4635 = vld [vmem:[#allocation23 + $0x17c] sm:$0xf]
        %v4636 = vld [vmem:[#allocation23 + $0x180] sm:$0xf]
        %v4637 = vld [vmem:[#allocation23 + $0x184] sm:$0xf]
        %v4638 = vld [vmem:[#allocation23 + $0x188] sm:$0xf]
        %v4639 = vld [vmem:[#allocation23 + $0x18c] sm:$0xf]
        %v4640 = vld [vmem:[%s0] sm:$0xf]
        %v4641 = vld [vmem:[%s0 + $0x4] sm:$0xf]
        %v4642 = vld [vmem:[%s0 + $0x8] sm:$0xf]
        %v4643 = vld [vmem:[%s0 + $0xc] sm:$0xf]
        %v4644 = vld [vmem:[%s0 + $0x10] sm:$0xf]
        %v4645 = vld [vmem:[%s0 + $0x14] sm:$0xf]
        %v4646 = vld [vmem:[%s0 + $0x18] sm:$0xf]
        %v4647 = vld [vmem:[%s0 + $0x1c] sm:$0xf]
        %v4648 = vld [vmem:[%s0 + $0x20] sm:$0xf]
        %v4649 = vld [vmem:[%s0 + $0x24] sm:$0x3]
        %v4750 = vunpack.c.l.b16 %v4540
        %v4751 = vunpack.c.l.b16 %v4541
        %v4752 = vunpack.c.l.b16 %v4542
        %v4753 = vunpack.c.l.b16 %v4543
        %v4754 = vunpack.c.l.b16 %v4544
        %v4755 = vunpack.c.l.b16 %v4545
        %v4756 = vunpack.c.l.b16 %v4546
        %v4757 = vunpack.c.l.b16 %v4547
        %v4758 = vunpack.c.l.b16 %v4548
        %v4759 = vunpack.c.l.b16 %v4549
        %v4760 = vunpack.c.l.b16 %v4550
        %v4761 = vunpack.c.l.b16 %v4551
        %v4762 = vunpack.c.l.b16 %v4552
        %v4763 = vunpack.c.l.b16 %v4553
        %v4764 = vunpack.c.l.b16 %v4554
        %v4765 = vunpack.c.l.b16 %v4555
        %v4766 = vunpack.c.l.b16 %v4556
        %v4767 = vunpack.c.l.b16 %v4557
        %v4768 = vunpack.c.l.b16 %v4558
        %v4769 = vunpack.c.l.b16 %v4559
        %v4770 = vunpack.c.l.b16 %v4560
        %v4771 = vunpack.c.l.b16 %v4561
        %v4772 = vunpack.c.l.b16 %v4562
        %v4773 = vunpack.c.l.b16 %v4563
        %v4774 = vunpack.c.l.b16 %v4564
        %v4775 = vunpack.c.l.b16 %v4565
        %v4776 = vunpack.c.l.b16 %v4566
        %v4777 = vunpack.c.l.b16 %v4567
        %v4778 = vunpack.c.l.b16 %v4568
        %v4779 = vunpack.c.l.b16 %v4569
        %v4780 = vunpack.c.l.b16 %v4570
        %v4781 = vunpack.c.l.b16 %v4571
        %v4782 = vunpack.c.l.b16 %v4572
        %v4783 = vunpack.c.l.b16 %v4573
        %v4784 = vunpack.c.l.b16 %v4574
        %v4785 = vunpack.c.l.b16 %v4575
        %v4786 = vunpack.c.l.b16 %v4576
        %v4787 = vunpack.c.l.b16 %v4577
        %v4788 = vunpack.c.l.b16 %v4578
        %v4789 = vunpack.c.l.b16 %v4579
        %v4790 = vunpack.c.l.b16 %v4580
        %v4791 = vunpack.c.l.b16 %v4581
        %v4792 = vunpack.c.l.b16 %v4582
        %v4793 = vunpack.c.l.b16 %v4583
        %v4794 = vunpack.c.l.b16 %v4584
        %v4795 = vunpack.c.l.b16 %v4585
        %v4796 = vunpack.c.l.b16 %v4586
        %v4797 = vunpack.c.l.b16 %v4587
        %v4798 = vunpack.c.l.b16 %v4588
        %v4799 = vunpack.c.l.b16 %v4589
        %v4800 = vunpack.c.l.b16 %v4590
        %v4801 = vunpack.c.l.b16 %v4591
        %v4802 = vunpack.c.l.b16 %v4592
        %v4803 = vunpack.c.l.b16 %v4593
        %v4804 = vunpack.c.l.b16 %v4594
        %v4805 = vunpack.c.l.b16 %v4595
        %v4806 = vunpack.c.l.b16 %v4596
        %v4807 = vunpack.c.l.b16 %v4597
        %v4808 = vunpack.c.l.b16 %v4598
        %v4809 = vunpack.c.l.b16 %v4599
        %v4810 = vunpack.c.l.b16 %v4600
        %v4811 = vunpack.c.l.b16 %v4601
        %v4812 = vunpack.c.l.b16 %v4602
        %v4813 = vunpack.c.l.b16 %v4603
        %v4814 = vunpack.c.l.b16 %v4604
        %v4815 = vunpack.c.l.b16 %v4605
        %v4816 = vunpack.c.l.b16 %v4606
        %v4817 = vunpack.c.l.b16 %v4607
        %v4818 = vunpack.c.l.b16 %v4608
        %v4819 = vunpack.c.l.b16 %v4609
        %v4820 = vunpack.c.l.b16 %v4610
        %v4821 = vunpack.c.l.b16 %v4611
        %v4822 = vunpack.c.l.b16 %v4612
        %v4823 = vunpack.c.l.b16 %v4613
        %v4824 = vunpack.c.l.b16 %v4614
        %v4825 = vunpack.c.l.b16 %v4615
        %v4826 = vunpack.c.l.b16 %v4616
        %v4827 = vunpack.c.l.b16 %v4617
        %v4828 = vunpack.c.l.b16 %v4618
        %v4829 = vunpack.c.l.b16 %v4619
        %v4830 = vunpack.c.l.b16 %v4620
        %v4831 = vunpack.c.l.b16 %v4621
        %v4832 = vunpack.c.l.b16 %v4622
        %v4833 = vunpack.c.l.b16 %v4623
        %v4834 = vunpack.c.l.b16 %v4624
        %v4835 = vunpack.c.l.b16 %v4625
        %v4836 = vunpack.c.l.b16 %v4626
        %v4837 = vunpack.c.l.b16 %v4627
        %v4838 = vunpack.c.l.b16 %v4628
        %v4839 = vunpack.c.l.b16 %v4629
        %v4840 = vunpack.c.l.b16 %v4630
        %v4841 = vunpack.c.l.b16 %v4631
        %v4842 = vunpack.c.l.b16 %v4632
        %v4843 = vunpack.c.l.b16 %v4633
        %v4844 = vunpack.c.l.b16 %v4634
        %v4845 = vunpack.c.l.b16 %v4635
        %v4846 = vunpack.c.l.b16 %v4636
        %v4847 = vunpack.c.l.b16 %v4637
        %v4848 = vunpack.c.l.b16 %v4638
        %v4849 = vunpack.c.l.b16 %v4639
        %v4850 = vpack.c.b16 %v4751, %v4750
        %v4851 = vpack.c.b16 %v4753, %v4752
        %v4852 = vpack.c.b16 %v4755, %v4754
        %v4853 = vpack.c.b16 %v4757, %v4756
        %v4854 = vpack.c.b16 %v4759, %v4758
        %v4855 = vpack.c.b16 %v4761, %v4760
        %v4856 = vpack.c.b16 %v4763, %v4762
        %v4857 = vpack.c.b16 %v4765, %v4764
        %v4858 = vpack.c.b16 %v4767, %v4766
        %v4859 = vpack.c.b16 %v4769, %v4768
        %v4860 = vpack.c.b16 %v4771, %v4770
        %v4861 = vpack.c.b16 %v4773, %v4772
        %v4862 = vpack.c.b16 %v4775, %v4774
        %v4863 = vpack.c.b16 %v4777, %v4776
        %v4864 = vpack.c.b16 %v4779, %v4778
        %v4865 = vpack.c.b16 %v4781, %v4780
        %v4866 = vpack.c.b16 %v4783, %v4782
        %v4867 = vpack.c.b16 %v4785, %v4784
        %v4868 = vpack.c.b16 %v4787, %v4786
        %v4869 = vpack.c.b16 %v4789, %v4788
        %v4870 = vpack.c.b16 %v4791, %v4790
        %v4871 = vpack.c.b16 %v4793, %v4792
        %v4872 = vpack.c.b16 %v4795, %v4794
        %v4873 = vpack.c.b16 %v4797, %v4796
        %v4874 = vpack.c.b16 %v4799, %v4798
        %v4875 = vpack.c.b16 %v4801, %v4800
        %v4876 = vpack.c.b16 %v4803, %v4802
        %v4877 = vpack.c.b16 %v4805, %v4804
        %v4878 = vpack.c.b16 %v4807, %v4806
        %v4879 = vpack.c.b16 %v4809, %v4808
        %v4880 = vpack.c.b16 %v4811, %v4810
        %v4881 = vpack.c.b16 %v4813, %v4812
        %v4882 = vpack.c.b16 %v4815, %v4814
        %v4883 = vpack.c.b16 %v4817, %v4816
        %v4884 = vpack.c.b16 %v4819, %v4818
        %v4885 = vpack.c.b16 %v4821, %v4820
        %v4886 = vpack.c.b16 %v4823, %v4822
        %v4887 = vpack.c.b16 %v4825, %v4824
        %v4888 = vpack.c.b16 %v4827, %v4826
        %v4889 = vpack.c.b16 %v4829, %v4828
        %v4890 = vpack.c.b16 %v4831, %v4830
        %v4891 = vpack.c.b16 %v4833, %v4832
        %v4892 = vpack.c.b16 %v4835, %v4834
        %v4893 = vpack.c.b16 %v4837, %v4836
        %v4894 = vpack.c.b16 %v4839, %v4838
        %v4895 = vpack.c.b16 %v4841, %v4840
        %v4896 = vpack.c.b16 %v4843, %v4842
        %v4897 = vpack.c.b16 %v4845, %v4844
        %v4898 = vpack.c.b16 %v4847, %v4846
        %v4899 = vpack.c.b16 %v4849, %v4848
        %v4910 = vunpack.c.l.b16 %v4640
        %v4911 = vunpack.c.l.b16 %v4641
        %v4912 = vunpack.c.l.b16 %v4642
        %v4913 = vunpack.c.l.b16 %v4643
        %v4914 = vunpack.c.l.b16 %v4644
        %v4915 = vunpack.c.l.b16 %v4645
        %v4916 = vunpack.c.l.b16 %v4646
        %v4917 = vunpack.c.l.b16 %v4647
        %v4918 = vunpack.c.l.b16 %v4648
        %v4919 = vunpack.c.l.b16 %v4649
        %v4920 = vpack.c.b16 %v4911, %v4910
        %v4921 = vpack.c.b16 %v4913, %v4912
        %v4922 = vpack.c.b16 %v4915, %v4914
        %v4923 = vpack.c.b16 %v4917, %v4916
        %v4924 = vpack.c.b16 %v4919, %v4918
        %vm4929 = vcmask 613376
        %v4931 = vsel %vm4929, %v4850, 0
        %v4934 = vsel %vm4929, %v4851, 0
        %v4937 = vsel %vm4929, %v4852, 0
        %v4940 = vsel %vm4929, %v4853, 0
        %v4943 = vsel %vm4929, %v4854, 0
        %v4946 = vsel %vm4929, %v4855, 0
        %v4949 = vsel %vm4929, %v4856, 0
        %v4952 = vsel %vm4929, %v4857, 0
        %v4955 = vsel %vm4929, %v4858, 0
        %v4958 = vsel %vm4929, %v4859, 0
        %v4961 = vsel %vm4929, %v4860, 0
        %v4964 = vsel %vm4929, %v4861, 0
        %v4967 = vsel %vm4929, %v4862, 0
        %v4970 = vsel %vm4929, %v4863, 0
        %v4973 = vsel %vm4929, %v4864, 0
        %v4976 = vsel %vm4929, %v4865, 0
        %v4979 = vsel %vm4929, %v4866, 0
        %v4982 = vsel %vm4929, %v4867, 0
        %v4985 = vsel %vm4929, %v4868, 0
        %v4988 = vsel %vm4929, %v4869, 0
        %v4991 = vsel %vm4929, %v4870, 0
        %v4994 = vsel %vm4929, %v4871, 0
        %v4997 = vsel %vm4929, %v4872, 0
        %v5000 = vsel %vm4929, %v4873, 0
        %v5003 = vsel %vm4929, %v4874, 0
        %v5006 = vsel %vm4929, %v4875, 0
        %v5009 = vsel %vm4929, %v4876, 0
        %v5012 = vsel %vm4929, %v4877, 0
        %v5015 = vsel %vm4929, %v4878, 0
        %v5018 = vsel %vm4929, %v4879, 0
        %v5021 = vsel %vm4929, %v4880, 0
        %v5024 = vsel %vm4929, %v4881, 0
        %v5027 = vsel %vm4929, %v4882, 0
        %v5030 = vsel %vm4929, %v4883, 0
        %v5033 = vsel %vm4929, %v4884, 0
        %v5036 = vsel %vm4929, %v4885, 0
        %v5039 = vsel %vm4929, %v4886, 0
        %v5042 = vsel %vm4929, %v4887, 0
        %v5045 = vsel %vm4929, %v4888, 0
        %v5048 = vsel %vm4929, %v4889, 0
        %v5051 = vsel %vm4929, %v4890, 0
        %v5054 = vsel %vm4929, %v4891, 0
        %v5057 = vsel %vm4929, %v4892, 0
        %v5060 = vsel %vm4929, %v4893, 0
        %v5063 = vsel %vm4929, %v4894, 0
        %v5066 = vsel %vm4929, %v4895, 0
        %v5069 = vsel %vm4929, %v4896, 0
        %v5072 = vsel %vm4929, %v4897, 0
        %v5075 = vsel %vm4929, %v4898, 0
        %v5078 = vsel %vm4929, %v4899, 0
        %vm5080 = vcmask 1044480
        %vm5081 = vcmask 1045504
        %v5082 = vsel %vm5080, 4294967295, 65535
        %v5083 = vsel %vm5081, %v5082, 0
        %v5085 = vand.u32 %v4924, %v5083
        %5087 = vmatpush.bf16.msra.mxu0 0
        %5088 = vmatpush.bf16.msra.mxu0 0
        %5089 = vmatpush.bf16.msra.mxu0 0
        %5090 = vmatpush.bf16.msra.mxu0 %v5085
        %5091 = vmatpush.bf16.msra.mxu0 %v4923
        %5092 = vmatpush.bf16.msra.mxu0 %v4922
        %5093 = vmatpush.bf16.msra.mxu0 %v4921
        %5094 = vmatpush.bf16.msra.mxu0 %v4920
        %5095 = vmatmul.bf16.gmra.mxu0 %v4931
        %v5096 = vpop.f32.mrf.mxu0
        %v5097 = vadd.f32 0.0, %v5096
        %v5098 = vpop.f32.mrf.mxu0
        %v5099 = vadd.f32 0.0, %v5098
        %5100 = vmatmul.bf16.gmra.mxu0 %v4934
        %v5101 = vpop.f32.mrf.mxu0
        %v5102 = vadd.f32 0.0, %v5101
        %v5103 = vpop.f32.mrf.mxu0
        %v5104 = vadd.f32 0.0, %v5103
        %5105 = vmatmul.bf16.gmra.mxu0 %v4937
        %v5106 = vpop.f32.mrf.mxu0
        %v5107 = vadd.f32 0.0, %v5106
        %v5108 = vpop.f32.mrf.mxu0
        %v5109 = vadd.f32 0.0, %v5108
        %5110 = vmatmul.bf16.gmra.mxu0 %v4940
        %v5111 = vpop.f32.mrf.mxu0
        %v5112 = vadd.f32 0.0, %v5111
        %v5113 = vpop.f32.mrf.mxu0
        %v5114 = vadd.f32 0.0, %v5113
        %5115 = vmatmul.bf16.gmra.mxu0 %v4943
        %v5116 = vpop.f32.mrf.mxu0
        %v5117 = vadd.f32 0.0, %v5116
        %v5118 = vpop.f32.mrf.mxu0
        %v5119 = vadd.f32 0.0, %v5118
        %5120 = vmatmul.bf16.gmra.mxu0 %v4946
        %v5121 = vpop.f32.mrf.mxu0
        %v5122 = vadd.f32 0.0, %v5121
        %v5123 = vpop.f32.mrf.mxu0
        %v5124 = vadd.f32 0.0, %v5123
        %5125 = vmatmul.bf16.gmra.mxu0 %v4949
        %v5126 = vpop.f32.mrf.mxu0
        %v5127 = vadd.f32 0.0, %v5126
        %v5128 = vpop.f32.mrf.mxu0
        %v5129 = vadd.f32 0.0, %v5128
        %5130 = vmatmul.bf16.gmra.mxu0 %v4952
        %v5131 = vpop.f32.mrf.mxu0
        %v5132 = vadd.f32 0.0, %v5131
        %v5133 = vpop.f32.mrf.mxu0
        %v5134 = vadd.f32 0.0, %v5133
        %5135 = vmatmul.bf16.gmra.mxu0 %v4955
        %v5136 = vpop.f32.mrf.mxu0
        %v5137 = vadd.f32 0.0, %v5136
        %v5138 = vpop.f32.mrf.mxu0
        %v5139 = vadd.f32 0.0, %v5138
        %5140 = vmatmul.bf16.gmra.mxu0 %v4958
        %v5141 = vpop.f32.mrf.mxu0
        %v5142 = vadd.f32 0.0, %v5141
        %v5143 = vpop.f32.mrf.mxu0
        %v5144 = vadd.f32 0.0, %v5143
        %5145 = vmatmul.bf16.gmra.mxu0 %v4961
        %v5146 = vpop.f32.mrf.mxu0
        %v5147 = vadd.f32 0.0, %v5146
        %v5148 = vpop.f32.mrf.mxu0
        %v5149 = vadd.f32 0.0, %v5148
        %5150 = vmatmul.bf16.gmra.mxu0 %v4964
        %v5151 = vpop.f32.mrf.mxu0
        %v5152 = vadd.f32 0.0, %v5151
        %v5153 = vpop.f32.mrf.mxu0
        %v5154 = vadd.f32 0.0, %v5153
        %5155 = vmatmul.bf16.gmra.mxu0 %v4967
        %v5156 = vpop.f32.mrf.mxu0
        %v5157 = vadd.f32 0.0, %v5156
        %v5158 = vpop.f32.mrf.mxu0
        %v5159 = vadd.f32 0.0, %v5158
        %5160 = vmatmul.bf16.gmra.mxu0 %v4970
        %v5161 = vpop.f32.mrf.mxu0
        %v5162 = vadd.f32 0.0, %v5161
        %v5163 = vpop.f32.mrf.mxu0
        %v5164 = vadd.f32 0.0, %v5163
        %5165 = vmatmul.bf16.gmra.mxu0 %v4973
        %v5166 = vpop.f32.mrf.mxu0
        %v5167 = vadd.f32 0.0, %v5166
        %v5168 = vpop.f32.mrf.mxu0
        %v5169 = vadd.f32 0.0, %v5168
        %5170 = vmatmul.bf16.gmra.mxu0 %v4976
        %v5171 = vpop.f32.mrf.mxu0
        %v5172 = vadd.f32 0.0, %v5171
        %v5173 = vpop.f32.mrf.mxu0
        %v5174 = vadd.f32 0.0, %v5173
        %5175 = vmatmul.bf16.gmra.mxu0 %v4979
        %v5176 = vpop.f32.mrf.mxu0
        %v5177 = vadd.f32 0.0, %v5176
        %v5178 = vpop.f32.mrf.mxu0
        %v5179 = vadd.f32 0.0, %v5178
        %5180 = vmatmul.bf16.gmra.mxu0 %v4982
        %v5181 = vpop.f32.mrf.mxu0
        %v5182 = vadd.f32 0.0, %v5181
        %v5183 = vpop.f32.mrf.mxu0
        %v5184 = vadd.f32 0.0, %v5183
        %5185 = vmatmul.bf16.gmra.mxu0 %v4985
        %v5186 = vpop.f32.mrf.mxu0
        %v5187 = vadd.f32 0.0, %v5186
        %v5188 = vpop.f32.mrf.mxu0
        %v5189 = vadd.f32 0.0, %v5188
        %5190 = vmatmul.bf16.gmra.mxu0 %v4988
        %v5191 = vpop.f32.mrf.mxu0
        %v5192 = vadd.f32 0.0, %v5191
        %v5193 = vpop.f32.mrf.mxu0
        %v5194 = vadd.f32 0.0, %v5193
        %5195 = vmatmul.bf16.gmra.mxu0 %v4991
        %v5196 = vpop.f32.mrf.mxu0
        %v5197 = vadd.f32 0.0, %v5196
        %v5198 = vpop.f32.mrf.mxu0
        %v5199 = vadd.f32 0.0, %v5198
        %5200 = vmatmul.bf16.gmra.mxu0 %v4994
        %v5201 = vpop.f32.mrf.mxu0
        %v5202 = vadd.f32 0.0, %v5201
        %v5203 = vpop.f32.mrf.mxu0
        %v5204 = vadd.f32 0.0, %v5203
        %5205 = vmatmul.bf16.gmra.mxu0 %v4997
        %v5206 = vpop.f32.mrf.mxu0
        %v5207 = vadd.f32 0.0, %v5206
        %v5208 = vpop.f32.mrf.mxu0
        %v5209 = vadd.f32 0.0, %v5208
        %5210 = vmatmul.bf16.gmra.mxu0 %v5000
        %v5211 = vpop.f32.mrf.mxu0
        %v5212 = vadd.f32 0.0, %v5211
        %v5213 = vpop.f32.mrf.mxu0
        %v5214 = vadd.f32 0.0, %v5213
        %5215 = vmatmul.bf16.gmra.mxu0 %v5003
        %v5216 = vpop.f32.mrf.mxu0
        %v5217 = vadd.f32 0.0, %v5216
        %v5218 = vpop.f32.mrf.mxu0
        %v5219 = vadd.f32 0.0, %v5218
        %5220 = vmatmul.bf16.gmra.mxu0 %v5006
        %v5221 = vpop.f32.mrf.mxu0
        %v5222 = vadd.f32 0.0, %v5221
        %v5223 = vpop.f32.mrf.mxu0
        %v5224 = vadd.f32 0.0, %v5223
        %5225 = vmatmul.bf16.gmra.mxu0 %v5009
        %v5226 = vpop.f32.mrf.mxu0
        %v5227 = vadd.f32 0.0, %v5226
        %v5228 = vpop.f32.mrf.mxu0
        %v5229 = vadd.f32 0.0, %v5228
        %5230 = vmatmul.bf16.gmra.mxu0 %v5012
        %v5231 = vpop.f32.mrf.mxu0
        %v5232 = vadd.f32 0.0, %v5231
        %v5233 = vpop.f32.mrf.mxu0
        %v5234 = vadd.f32 0.0, %v5233
        %5235 = vmatmul.bf16.gmra.mxu0 %v5015
        %v5236 = vpop.f32.mrf.mxu0
        %v5237 = vadd.f32 0.0, %v5236
        %v5238 = vpop.f32.mrf.mxu0
        %v5239 = vadd.f32 0.0, %v5238
        %5240 = vmatmul.bf16.gmra.mxu0 %v5018
        %v5241 = vpop.f32.mrf.mxu0
        %v5242 = vadd.f32 0.0, %v5241
        %v5243 = vpop.f32.mrf.mxu0
        %v5244 = vadd.f32 0.0, %v5243
        %5245 = vmatmul.bf16.gmra.mxu0 %v5021
        %v5246 = vpop.f32.mrf.mxu0
        %v5247 = vadd.f32 0.0, %v5246
        %v5248 = vpop.f32.mrf.mxu0
        %v5249 = vadd.f32 0.0, %v5248
        %5250 = vmatmul.bf16.gmra.mxu0 %v5024
        %v5251 = vpop.f32.mrf.mxu0
        %v5252 = vadd.f32 0.0, %v5251
        %v5253 = vpop.f32.mrf.mxu0
        %v5254 = vadd.f32 0.0, %v5253
        %5255 = vmatmul.bf16.gmra.mxu0 %v5027
        %v5256 = vpop.f32.mrf.mxu0
        %v5257 = vadd.f32 0.0, %v5256
        %v5258 = vpop.f32.mrf.mxu0
        %v5259 = vadd.f32 0.0, %v5258
        %5260 = vmatmul.bf16.gmra.mxu0 %v5030
        %v5261 = vpop.f32.mrf.mxu0
        %v5262 = vadd.f32 0.0, %v5261
        %v5263 = vpop.f32.mrf.mxu0
        %v5264 = vadd.f32 0.0, %v5263
        %5265 = vmatmul.bf16.gmra.mxu0 %v5033
        %v5266 = vpop.f32.mrf.mxu0
        %v5267 = vadd.f32 0.0, %v5266
        %v5268 = vpop.f32.mrf.mxu0
        %v5269 = vadd.f32 0.0, %v5268
        %5270 = vmatmul.bf16.gmra.mxu0 %v5036
        %v5271 = vpop.f32.mrf.mxu0
        %v5272 = vadd.f32 0.0, %v5271
        %v5273 = vpop.f32.mrf.mxu0
        %v5274 = vadd.f32 0.0, %v5273
        %5275 = vmatmul.bf16.gmra.mxu0 %v5039
        %v5276 = vpop.f32.mrf.mxu0
        %v5277 = vadd.f32 0.0, %v5276
        %v5278 = vpop.f32.mrf.mxu0
        %v5279 = vadd.f32 0.0, %v5278
        %5280 = vmatmul.bf16.gmra.mxu0 %v5042
        %v5281 = vpop.f32.mrf.mxu0
        %v5282 = vadd.f32 0.0, %v5281
        %v5283 = vpop.f32.mrf.mxu0
        %v5284 = vadd.f32 0.0, %v5283
        %5285 = vmatmul.bf16.gmra.mxu0 %v5045
        %v5286 = vpop.f32.mrf.mxu0
        %v5287 = vadd.f32 0.0, %v5286
        %v5288 = vpop.f32.mrf.mxu0
        %v5289 = vadd.f32 0.0, %v5288
        %5290 = vmatmul.bf16.gmra.mxu0 %v5048
        %v5291 = vpop.f32.mrf.mxu0
        %v5292 = vadd.f32 0.0, %v5291
        %v5293 = vpop.f32.mrf.mxu0
        %v5294 = vadd.f32 0.0, %v5293
        %5295 = vmatmul.bf16.gmra.mxu0 %v5051
        %v5296 = vpop.f32.mrf.mxu0
        %v5297 = vadd.f32 0.0, %v5296
        %v5298 = vpop.f32.mrf.mxu0
        %v5299 = vadd.f32 0.0, %v5298
        %5300 = vmatmul.bf16.gmra.mxu0 %v5054
        %v5301 = vpop.f32.mrf.mxu0
        %v5302 = vadd.f32 0.0, %v5301
        %v5303 = vpop.f32.mrf.mxu0
        %v5304 = vadd.f32 0.0, %v5303
        %5305 = vmatmul.bf16.gmra.mxu0 %v5057
        %v5306 = vpop.f32.mrf.mxu0
        %v5307 = vadd.f32 0.0, %v5306
        %v5308 = vpop.f32.mrf.mxu0
        %v5309 = vadd.f32 0.0, %v5308
        %5310 = vmatmul.bf16.gmra.mxu0 %v5060
        %v5311 = vpop.f32.mrf.mxu0
        %v5312 = vadd.f32 0.0, %v5311
        %v5313 = vpop.f32.mrf.mxu0
        %v5314 = vadd.f32 0.0, %v5313
        %5315 = vmatmul.bf16.gmra.mxu0 %v5063
        %v5316 = vpop.f32.mrf.mxu0
        %v5317 = vadd.f32 0.0, %v5316
        %v5318 = vpop.f32.mrf.mxu0
        %v5319 = vadd.f32 0.0, %v5318
        %5320 = vmatmul.bf16.gmra.mxu0 %v5066
        %v5321 = vpop.f32.mrf.mxu0
        %v5322 = vadd.f32 0.0, %v5321
        %v5323 = vpop.f32.mrf.mxu0
        %v5324 = vadd.f32 0.0, %v5323
        %5325 = vmatmul.bf16.gmra.mxu0 %v5069
        %v5326 = vpop.f32.mrf.mxu0
        %v5327 = vadd.f32 0.0, %v5326
        %v5328 = vpop.f32.mrf.mxu0
        %v5329 = vadd.f32 0.0, %v5328
        %5330 = vmatmul.bf16.gmra.mxu0 %v5072
        %v5331 = vpop.f32.mrf.mxu0
        %v5332 = vadd.f32 0.0, %v5331
        %v5333 = vpop.f32.mrf.mxu0
        %v5334 = vadd.f32 0.0, %v5333
        %5335 = vmatmul.bf16.gmra.mxu0 %v5075
        %v5336 = vpop.f32.mrf.mxu0
        %v5337 = vadd.f32 0.0, %v5336
        %v5338 = vpop.f32.mrf.mxu0
        %v5339 = vadd.f32 0.0, %v5338
        %5340 = vmatmul.bf16.gmra.mxu0 %v5078
        %v5341 = vpop.f32.mrf.mxu0
        %v5342 = vadd.f32 0.0, %v5341
        %v5343 = vpop.f32.mrf.mxu0
        %v5344 = vadd.f32 0.0, %v5343
        %5345 = vdwg.mxu0
        %v5346 = vmax.f32 %v5097, %v5159
        %v5347 = vmax.f32 %v5099, %v5162
        %v5348 = vmax.f32 %v5102, %v5164
        %v5349 = vmax.f32 %v5104, %v5167
        %v5350 = vmax.f32 %v5107, %v5169
        %v5351 = vmax.f32 %v5109, %v5172
        %v5352 = vmax.f32 %v5112, %v5174
        %v5353 = vmax.f32 %v5114, %v5177
        %v5354 = vmax.f32 %v5117, %v5179
        %v5355 = vmax.f32 %v5119, %v5182
        %v5356 = vmax.f32 %v5122, %v5184
        %v5357 = vmax.f32 %v5124, %v5187
        %v5358 = vmax.f32 %v5127, %v5189
        %v5359 = vmax.f32 %v5129, %v5192
        %v5360 = vmax.f32 %v5132, %v5194
        %v5361 = vmax.f32 %v5134, %v5197
        %v5362 = vmax.f32 %v5137, %v5199
        %v5363 = vmax.f32 %v5139, %v5202
        %v5364 = vmax.f32 %v5142, %v5204
        %v5365 = vmax.f32 %v5144, %v5207
        %v5366 = vmax.f32 %v5147, %v5209
        %v5367 = vmax.f32 %v5149, %v5212
        %v5368 = vmax.f32 %v5152, %v5214
        %v5369 = vmax.f32 %v5154, %v5217
        %v5370 = vmax.f32 %v5157, %v5219
        %v5371 = vmax.f32 %v5346, %v5222
        %v5372 = vmax.f32 %v5347, %v5224
        %v5373 = vmax.f32 %v5348, %v5227
        %v5374 = vmax.f32 %v5349, %v5229
        %v5375 = vmax.f32 %v5350, %v5232
        %v5376 = vmax.f32 %v5351, %v5234
        %v5377 = vmax.f32 %v5352, %v5237
        %v5378 = vmax.f32 %v5353, %v5239
        %v5379 = vmax.f32 %v5354, %v5242
        %v5380 = vmax.f32 %v5355, %v5244
        %v5381 = vmax.f32 %v5356, %v5247
        %v5382 = vmax.f32 %v5357, %v5249
        %v5383 = vmax.f32 %v5358, %v5252
        %v5384 = vmax.f32 %v5359, %v5254
        %v5385 = vmax.f32 %v5360, %v5257
        %v5386 = vmax.f32 %v5361, %v5259
        %v5387 = vmax.f32 %v5362, %v5262
        %v5388 = vmax.f32 %v5363, %v5264
        %v5389 = vmax.f32 %v5364, %v5267
        %v5390 = vmax.f32 %v5365, %v5269
        %v5391 = vmax.f32 %v5366, %v5272
        %v5392 = vmax.f32 %v5367, %v5274
        %v5393 = vmax.f32 %v5368, %v5277
        %v5394 = vmax.f32 %v5369, %v5279
        %v5395 = vmax.f32 %v5370, %v5282
        %v5396 = vmax.f32 %v5371, %v5284
        %v5397 = vmax.f32 %v5372, %v5287
        %v5398 = vmax.f32 %v5373, %v5289
        %v5399 = vmax.f32 %v5374, %v5292
        %v5400 = vmax.f32 %v5375, %v5294
        %v5401 = vmax.f32 %v5376, %v5297
        %v5402 = vmax.f32 %v5377, %v5299
        %v5403 = vmax.f32 %v5378, %v5302
        %v5404 = vmax.f32 %v5379, %v5304
        %v5405 = vmax.f32 %v5380, %v5307
        %v5406 = vmax.f32 %v5381, %v5309
        %v5407 = vmax.f32 %v5382, %v5312
        %v5408 = vmax.f32 %v5383, %v5314
        %v5409 = vmax.f32 %v5384, %v5317
        %v5410 = vmax.f32 %v5385, %v5319
        %v5411 = vmax.f32 %v5386, %v5322
        %v5412 = vmax.f32 %v5387, %v5324
        %v5413 = vmax.f32 %v5388, %v5327
        %v5414 = vmax.f32 %v5389, %v5329
        %v5415 = vmax.f32 %v5390, %v5332
        %v5416 = vmax.f32 %v5391, %v5334
        %v5417 = vmax.f32 %v5392, %v5337
        %v5418 = vmax.f32 %v5393, %v5339
        %v5419 = vmax.f32 %v5394, %v5342
        %v5420 = vmax.f32 %v5395, %v5344
        %v5421 = vld [vmem:[%s1] sm:$0x1]
        %v5423 = vperm.slane %v5421, 0
        %v5425 = vadd.f32 %v5396, %v5423
        %v5426 = vadd.f32 %v5397, %v5423
        %v5427 = vadd.f32 %v5398, %v5423
        %v5428 = vadd.f32 %v5399, %v5423
        %v5429 = vadd.f32 %v5400, %v5423
        %v5430 = vadd.f32 %v5401, %v5423
        %v5431 = vadd.f32 %v5402, %v5423
        %v5432 = vadd.f32 %v5403, %v5423
        %v5433 = vadd.f32 %v5404, %v5423
        %v5434 = vadd.f32 %v5405, %v5423
        %v5435 = vadd.f32 %v5406, %v5423
        %v5436 = vadd.f32 %v5407, %v5423
        %v5437 = vadd.f32 %v5408, %v5423
        %v5438 = vadd.f32 %v5409, %v5423
        %v5439 = vadd.f32 %v5410, %v5423
        %v5440 = vadd.f32 %v5411, %v5423
        %v5441 = vadd.f32 %v5412, %v5423
        %v5442 = vadd.f32 %v5413, %v5423
        %v5443 = vadd.f32 %v5414, %v5423
        %v5444 = vadd.f32 %v5415, %v5423
        %v5445 = vadd.f32 %v5416, %v5423
        %v5446 = vadd.f32 %v5417, %v5423
        %v5447 = vadd.f32 %v5418, %v5423
        %v5448 = vadd.f32 %v5419, %v5423
        %v5449 = vadd.f32 %v5420, %v5423
        %v5450 = vmax.f32 %v5425, 0.0
        %v5451 = vmax.f32 %v5426, 0.0
        %v5452 = vmax.f32 %v5427, 0.0
        %v5453 = vmax.f32 %v5428, 0.0
        %v5454 = vmax.f32 %v5429, 0.0
        %v5455 = vmax.f32 %v5430, 0.0
        %v5456 = vmax.f32 %v5431, 0.0
        %v5457 = vmax.f32 %v5432, 0.0
        %v5458 = vmax.f32 %v5433, 0.0
        %v5459 = vmax.f32 %v5434, 0.0
        %v5460 = vmax.f32 %v5435, 0.0
        %v5461 = vmax.f32 %v5436, 0.0
        %v5462 = vmax.f32 %v5437, 0.0
        %v5463 = vmax.f32 %v5438, 0.0
        %v5464 = vmax.f32 %v5439, 0.0
        %v5465 = vmax.f32 %v5440, 0.0
        %v5466 = vmax.f32 %v5441, 0.0
        %v5467 = vmax.f32 %v5442, 0.0
        %v5468 = vmax.f32 %v5443, 0.0
        %v5469 = vmax.f32 %v5444, 0.0
        %v5470 = vmax.f32 %v5445, 0.0
        %v5471 = vmax.f32 %v5446, 0.0
        %v5472 = vmax.f32 %v5447, 0.0
        %v5473 = vmax.f32 %v5448, 0.0
        %v5474 = vmax.f32 %v5449, 0.0
        %v5475 = vpack.c.bf16 %v5450, %v5450
        %v5476 = vpack.c.bf16 %v5451, %v5451
        %v5477 = vpack.c.bf16 %v5452, %v5452
        %v5478 = vpack.c.bf16 %v5453, %v5453
        %v5479 = vpack.c.bf16 %v5454, %v5454
        %v5480 = vpack.c.bf16 %v5455, %v5455
        %v5481 = vpack.c.bf16 %v5456, %v5456
        %v5482 = vpack.c.bf16 %v5457, %v5457
        %v5483 = vpack.c.bf16 %v5458, %v5458
        %v5484 = vpack.c.bf16 %v5459, %v5459
        %v5485 = vpack.c.bf16 %v5460, %v5460
        %v5486 = vpack.c.bf16 %v5461, %v5461
        %v5487 = vpack.c.bf16 %v5462, %v5462
        %v5488 = vpack.c.bf16 %v5463, %v5463
        %v5489 = vpack.c.bf16 %v5464, %v5464
        %v5490 = vpack.c.bf16 %v5465, %v5465
        %v5491 = vpack.c.bf16 %v5466, %v5466
        %v5492 = vpack.c.bf16 %v5467, %v5467
        %v5493 = vpack.c.bf16 %v5468, %v5468
        %v5494 = vpack.c.bf16 %v5469, %v5469
        %v5495 = vpack.c.bf16 %v5470, %v5470
        %v5496 = vpack.c.bf16 %v5471, %v5471
        %v5497 = vpack.c.bf16 %v5472, %v5472
        %v5498 = vpack.c.bf16 %v5473, %v5473
        %v5499 = vpack.c.bf16 %v5474, %v5474
        %vm5500 = vcmask 44032
        %5501 = vst.msk [vmem:[%s421] sm:$0xf] %vm5500, %v5475
        %5502 = vst.msk [vmem:[%s421 + $0x4] sm:$0xf] %vm5500, %v5476
        %5503 = vst.msk [vmem:[%s421 + $0x8] sm:$0xf] %vm5500, %v5477
        %5504 = vst.msk [vmem:[%s421 + $0xc] sm:$0xf] %vm5500, %v5478
        %5505 = vst.msk [vmem:[%s421 + $0x10] sm:$0xf] %vm5500, %v5479
        %5506 = vst.msk [vmem:[%s421 + $0x14] sm:$0xf] %vm5500, %v5480
        %5507 = vst.msk [vmem:[%s421 + $0x18] sm:$0xf] %vm5500, %v5481
        %5508 = vst.msk [vmem:[%s421 + $0x1c] sm:$0xf] %vm5500, %v5482
        %5509 = vst.msk [vmem:[%s421 + $0x20] sm:$0xf] %vm5500, %v5483
        %5510 = vst.msk [vmem:[%s421 + $0x24] sm:$0xf] %vm5500, %v5484
        %5511 = vst.msk [vmem:[%s421 + $0x28] sm:$0xf] %vm5500, %v5485
        %5512 = vst.msk [vmem:[%s421 + $0x2c] sm:$0xf] %vm5500, %v5486
        %5513 = vst.msk [vmem:[%s421 + $0x30] sm:$0xf] %vm5500, %v5487
        %5514 = vst.msk [vmem:[%s421 + $0x34] sm:$0xf] %vm5500, %v5488
        %5515 = vst.msk [vmem:[%s421 + $0x38] sm:$0xf] %vm5500, %v5489
        %5516 = vst.msk [vmem:[%s421 + $0x3c] sm:$0xf] %vm5500, %v5490
        %5517 = vst.msk [vmem:[%s421 + $0x40] sm:$0xf] %vm5500, %v5491
        %5518 = vst.msk [vmem:[%s421 + $0x44] sm:$0xf] %vm5500, %v5492
        %5519 = vst.msk [vmem:[%s421 + $0x48] sm:$0xf] %vm5500, %v5493
        %5520 = vst.msk [vmem:[%s421 + $0x4c] sm:$0xf] %vm5500, %v5494
        %5521 = vst.msk [vmem:[%s421 + $0x50] sm:$0xf] %vm5500, %v5495
        %5522 = vst.msk [vmem:[%s421 + $0x54] sm:$0xf] %vm5500, %v5496
        %5523 = vst.msk [vmem:[%s421 + $0x58] sm:$0xf] %vm5500, %v5497
        %5524 = vst.msk [vmem:[%s421 + $0x5c] sm:$0xf] %vm5500, %v5498
        %5525 = vst.msk [vmem:[%s421 + $0x60] sm:$0xf] %vm5500, %v5499
        %s5526 = sand.u32 %s204, 1
        %s5527 = sand.u32 %s204, 1
        %s5528 = smul.addr %s5527, 100
        %s5529 = scalar_lea.vmem [#allocation22], %s5528
        // Predicated region
        $region45: #{net_forward.6} parent=43 // pred_check
          %p5530 = pneg %p214
        $region46: #{net_forward.6} parent=43 // pred_check_branch
          %5532 = sbr.rel (%p5530) target = $region48
        $region47: #{net_forward.6} parent=43 // pred_region
          %s5533 = smul.u32 25, %s38
          %s5534 = ssub.s32 49, %s5533
          %p5535 = scmp.lt.s32.totalorder %s5534, 25
          %s5536 = scalar_select %p5535, %s5534, 25
          %s5537 = smul.u32 4, %s5536
          %p5538 = scmp.ne.s32.totalorder 0, %s5537
          %s5539 = smul.addr %s5533, 4
          %s5540 = scalar_lea.vmem %s7, %s5539
          // Predicated region
          $region49: #{net_forward.6} parent=47 // pred_check
            %p5541 = pneg %p5538
          $region50: #{net_forward.6} parent=47 // pred_check_branch
            %5543 = sbr.rel (%p5541) target = $region52
          $region51: #{net_forward.6} parent=47 // pred_region
            // Predicated region
            $region53: #{net_forward.6} parent=51 // pred_check
              _
            $region54: #{net_forward.6} parent=51 // pred_check_branch
              %5545 = sbr.rel target = $region56
            $region55: #{net_forward.6} parent=51 // pred_region
              // Predicated region
              $region75: #{net_forward.6} parent=55 // pred_check
                _
              $region76: #{net_forward.6} parent=55 // pred_check_branch
                %5644 = sbr.rel (0) target = $region78
              $region77: #{net_forward.6} parent=55 // pred_region
                %s5646 = ssub.s32 16, 1
                %s5647 = sdiv.u32.pop %s5536, 25
                %s5648 = srem.u32.pop %s5536, 25
                // While loop
                $region79: #{net_forward.6} parent=77 // loop_pre_header
                  _
                $region80: #{net_forward.6} parent=77 // loop_header
                  %s5650 = sphi 0, %s5652
                  %p5651 = scmp.ge.s32.totalorder %s5650, %s5647
                  %s5655 = sphi 0, %s5710
                  %s5656 = sphi %s5529, %s5713
                  %s5657 = sphi %s5540, %s5714
                $region81: #{net_forward.6} parent=77 // loop_header_branch
                  %5654 = sbr.rel (%p5651) target = $region85
                $region82: #{net_forward.6} parent=77 // loop_body
                  %v5658 = vld [vmem:[%s5656] sm:%s5646]
                  %5659 = vst [vmem:[%s5657] sm:%s5646] %v5658
                  %v5660 = vld [vmem:[%s5656 + $0x4] sm:%s5646]
                  %5661 = vst [vmem:[%s5657 + $0x4] sm:%s5646] %v5660
                  %v5662 = vld [vmem:[%s5656 + $0x8] sm:%s5646]
                  %5663 = vst [vmem:[%s5657 + $0x8] sm:%s5646] %v5662
                  %v5664 = vld [vmem:[%s5656 + $0xc] sm:%s5646]
                  %5665 = vst [vmem:[%s5657 + $0xc] sm:%s5646] %v5664
                  %v5666 = vld [vmem:[%s5656 + $0x10] sm:%s5646]
                  %5667 = vst [vmem:[%s5657 + $0x10] sm:%s5646] %v5666
                  %v5668 = vld [vmem:[%s5656 + $0x14] sm:%s5646]
                  %5669 = vst [vmem:[%s5657 + $0x14] sm:%s5646] %v5668
                  %v5670 = vld [vmem:[%s5656 + $0x18] sm:%s5646]
                  %5671 = vst [vmem:[%s5657 + $0x18] sm:%s5646] %v5670
                  %v5672 = vld [vmem:[%s5656 + $0x1c] sm:%s5646]
                  %5673 = vst [vmem:[%s5657 + $0x1c] sm:%s5646] %v5672
                  %v5674 = vld [vmem:[%s5656 + $0x20] sm:%s5646]
                  %5675 = vst [vmem:[%s5657 + $0x20] sm:%s5646] %v5674
                  %v5676 = vld [vmem:[%s5656 + $0x24] sm:%s5646]
                  %5677 = vst [vmem:[%s5657 + $0x24] sm:%s5646] %v5676
                  %v5678 = vld [vmem:[%s5656 + $0x28] sm:%s5646]
                  %5679 = vst [vmem:[%s5657 + $0x28] sm:%s5646] %v5678
                  %v5680 = vld [vmem:[%s5656 + $0x2c] sm:%s5646]
                  %5681 = vst [vmem:[%s5657 + $0x2c] sm:%s5646] %v5680
                  %v5682 = vld [vmem:[%s5656 + $0x30] sm:%s5646]
                  %5683 = vst [vmem:[%s5657 + $0x30] sm:%s5646] %v5682
                  %v5684 = vld [vmem:[%s5656 + $0x34] sm:%s5646]
                  %5685 = vst [vmem:[%s5657 + $0x34] sm:%s5646] %v5684
                  %v5686 = vld [vmem:[%s5656 + $0x38] sm:%s5646]
                  %5687 = vst [vmem:[%s5657 + $0x38] sm:%s5646] %v5686
                  %v5688 = vld [vmem:[%s5656 + $0x3c] sm:%s5646]
                  %5689 = vst [vmem:[%s5657 + $0x3c] sm:%s5646] %v5688
                  %v5690 = vld [vmem:[%s5656 + $0x40] sm:%s5646]
                  %5691 = vst [vmem:[%s5657 + $0x40] sm:%s5646] %v5690
                  %v5692 = vld [vmem:[%s5656 + $0x44] sm:%s5646]
                  %5693 = vst [vmem:[%s5657 + $0x44] sm:%s5646] %v5692
                  %v5694 = vld [vmem:[%s5656 + $0x48] sm:%s5646]
                  %5695 = vst [vmem:[%s5657 + $0x48] sm:%s5646] %v5694
                  %v5696 = vld [vmem:[%s5656 + $0x4c] sm:%s5646]
                  %5697 = vst [vmem:[%s5657 + $0x4c] sm:%s5646] %v5696
                  %v5698 = vld [vmem:[%s5656 + $0x50] sm:%s5646]
                  %5699 = vst [vmem:[%s5657 + $0x50] sm:%s5646] %v5698
                  %v5700 = vld [vmem:[%s5656 + $0x54] sm:%s5646]
                  %5701 = vst [vmem:[%s5657 + $0x54] sm:%s5646] %v5700
                  %v5702 = vld [vmem:[%s5656 + $0x58] sm:%s5646]
                  %5703 = vst [vmem:[%s5657 + $0x58] sm:%s5646] %v5702
                  %v5704 = vld [vmem:[%s5656 + $0x5c] sm:%s5646]
                  %5705 = vst [vmem:[%s5657 + $0x5c] sm:%s5646] %v5704
                  %v5706 = vld [vmem:[%s5656 + $0x60] sm:%s5646]
                  %5707 = vst [vmem:[%s5657 + $0x60] sm:%s5646] %v5706
                  %s5708 = sadd.s32 1, %s5655
                  %p5709 = scmp.ge.s32.totalorder %s5708, %s5647
                  %s5710 = scalar_select %p5709, 0, %s5708
                  %s5711 = smul.u32 %s5710, 100
                  %s5712 = smul.u32 %s5710, 100
                  %s5713 = scalar_lea.vmem %s5529, %s5711 [#allocation22]
                  %s5714 = scalar_lea.vmem %s5540, %s5712
                $region83: #{net_forward.6} parent=77 // loop_footer
                  %s5652 = sadd.s32 %s5650, 1
                $region84: #{net_forward.6} parent=77 // loop_footer_branch
                  %5649 = sbr.rel target = $region80
                $region85: #{net_forward.6} parent=77 // loop_exit
                  _
                %s5715 = sdiv.u32.pop %s5536, 25
                %s5716 = srem.u32.pop %s5536, 25
                %s5717 = smul.u32 %s5715, 25
                %s5718 = smul.u32 4, %s5717
                %s5719 = scalar_lea.vmem %s5529, %s5718 [#allocation22]
                %s5720 = smul.u32 4, %s5717
                %s5721 = scalar_lea.vmem %s5540, %s5720
                // While loop
                $region86: #{net_forward.6} parent=77 // loop_pre_header
                  _
                $region87: #{net_forward.6} parent=77 // loop_header
                  %s5723 = sphi 0, %s5725
                  %p5724 = scmp.ge.s32.totalorder %s5723, %s5716
                  %s5728 = sphi 0, %s5735
                  %s5729 = sphi %s5719, %s5738
                  %s5730 = sphi %s5721, %s5739
                $region88: #{net_forward.6} parent=77 // loop_header_branch
                  %5727 = sbr.rel (%p5724) target = $region92
                $region89: #{net_forward.6} parent=77 // loop_body
                  %v5731 = vld [vmem:[%s5729] sm:%s5646]
                  %5732 = vst [vmem:[%s5730] sm:%s5646] %v5731
                  %s5733 = sadd.s32 1, %s5728
                  %p5734 = scmp.ge.s32.totalorder %s5733, %s5716
                  %s5735 = scalar_select %p5734, 0, %s5733
                  %s5736 = smul.u32 %s5735, 4
                  %s5737 = smul.u32 %s5735, 4
                  %s5738 = scalar_lea.vmem %s5719, %s5736 [#allocation22]
                  %s5739 = scalar_lea.vmem %s5721, %s5737
                $region90: #{net_forward.6} parent=77 // loop_footer
                  %s5725 = sadd.s32 %s5723, 1
                $region91: #{net_forward.6} parent=77 // loop_footer_branch
                  %5722 = sbr.rel target = $region87
                $region92: #{net_forward.6} parent=77 // loop_exit
                  _
              $region78: #{net_forward.6} parent=55 // pred_fallthru
                _
            $region56: #{net_forward.6} parent=51 // pred_fallthru
              _
            // Predicated region
            $region57: #{net_forward.6} parent=51 // pred_check
              _
            $region58: #{net_forward.6} parent=51 // pred_check_branch
              %5547 = sbr.rel (0) target = $region60
            $region59: #{net_forward.6} parent=51 // pred_region
              %s5549 = ssub.s32 16, 1
              %s5550 = sdiv.u32.pop %s5536, 25
              %s5551 = srem.u32.pop %s5536, 25
              // While loop
              $region61: #{net_forward.6} parent=59 // loop_pre_header
                _
              $region62: #{net_forward.6} parent=59 // loop_header
                %s5553 = sphi 0, %s5555
                %p5554 = scmp.ge.s32.totalorder %s5553, %s5550
                %s5558 = sphi 0, %s5613
                %s5559 = sphi %s5529, %s5616
                %s5560 = sphi %s5540, %s5617
              $region63: #{net_forward.6} parent=59 // loop_header_branch
                %5557 = sbr.rel (%p5554) target = $region67
              $region64: #{net_forward.6} parent=59 // loop_body
                %v5561 = vld [vmem:[%s5559] sm:%s5549]
                %5562 = vst [vmem:[%s5560] sm:%s5549] %v5561
                %v5563 = vld [vmem:[%s5559 + $0x4] sm:%s5549]
                %5564 = vst [vmem:[%s5560 + $0x4] sm:%s5549] %v5563
                %v5565 = vld [vmem:[%s5559 + $0x8] sm:%s5549]
                %5566 = vst [vmem:[%s5560 + $0x8] sm:%s5549] %v5565
                %v5567 = vld [vmem:[%s5559 + $0xc] sm:%s5549]
                %5568 = vst [vmem:[%s5560 + $0xc] sm:%s5549] %v5567
                %v5569 = vld [vmem:[%s5559 + $0x10] sm:%s5549]
                %5570 = vst [vmem:[%s5560 + $0x10] sm:%s5549] %v5569
                %v5571 = vld [vmem:[%s5559 + $0x14] sm:%s5549]
                %5572 = vst [vmem:[%s5560 + $0x14] sm:%s5549] %v5571
                %v5573 = vld [vmem:[%s5559 + $0x18] sm:%s5549]
                %5574 = vst [vmem:[%s5560 + $0x18] sm:%s5549] %v5573
                %v5575 = vld [vmem:[%s5559 + $0x1c] sm:%s5549]
                %5576 = vst [vmem:[%s5560 + $0x1c] sm:%s5549] %v5575
                %v5577 = vld [vmem:[%s5559 + $0x20] sm:%s5549]
                %5578 = vst [vmem:[%s5560 + $0x20] sm:%s5549] %v5577
                %v5579 = vld [vmem:[%s5559 + $0x24] sm:%s5549]
                %5580 = vst [vmem:[%s5560 + $0x24] sm:%s5549] %v5579
                %v5581 = vld [vmem:[%s5559 + $0x28] sm:%s5549]
                %5582 = vst [vmem:[%s5560 + $0x28] sm:%s5549] %v5581
                %v5583 = vld [vmem:[%s5559 + $0x2c] sm:%s5549]
                %5584 = vst [vmem:[%s5560 + $0x2c] sm:%s5549] %v5583
                %v5585 = vld [vmem:[%s5559 + $0x30] sm:%s5549]
                %5586 = vst [vmem:[%s5560 + $0x30] sm:%s5549] %v5585
                %v5587 = vld [vmem:[%s5559 + $0x34] sm:%s5549]
                %5588 = vst [vmem:[%s5560 + $0x34] sm:%s5549] %v5587
                %v5589 = vld [vmem:[%s5559 + $0x38] sm:%s5549]
                %5590 = vst [vmem:[%s5560 + $0x38] sm:%s5549] %v5589
                %v5591 = vld [vmem:[%s5559 + $0x3c] sm:%s5549]
                %5592 = vst [vmem:[%s5560 + $0x3c] sm:%s5549] %v5591
                %v5593 = vld [vmem:[%s5559 + $0x40] sm:%s5549]
                %5594 = vst [vmem:[%s5560 + $0x40] sm:%s5549] %v5593
                %v5595 = vld [vmem:[%s5559 + $0x44] sm:%s5549]
                %5596 = vst [vmem:[%s5560 + $0x44] sm:%s5549] %v5595
                %v5597 = vld [vmem:[%s5559 + $0x48] sm:%s5549]
                %5598 = vst [vmem:[%s5560 + $0x48] sm:%s5549] %v5597
                %v5599 = vld [vmem:[%s5559 + $0x4c] sm:%s5549]
                %5600 = vst [vmem:[%s5560 + $0x4c] sm:%s5549] %v5599
                %v5601 = vld [vmem:[%s5559 + $0x50] sm:%s5549]
                %5602 = vst [vmem:[%s5560 + $0x50] sm:%s5549] %v5601
                %v5603 = vld [vmem:[%s5559 + $0x54] sm:%s5549]
                %5604 = vst [vmem:[%s5560 + $0x54] sm:%s5549] %v5603
                %v5605 = vld [vmem:[%s5559 + $0x58] sm:%s5549]
                %5606 = vst [vmem:[%s5560 + $0x58] sm:%s5549] %v5605
                %v5607 = vld [vmem:[%s5559 + $0x5c] sm:%s5549]
                %5608 = vst [vmem:[%s5560 + $0x5c] sm:%s5549] %v5607
                %v5609 = vld [vmem:[%s5559 + $0x60] sm:%s5549]
                %5610 = vst [vmem:[%s5560 + $0x60] sm:%s5549] %v5609
                %s5611 = sadd.s32 1, %s5558
                %p5612 = scmp.ge.s32.totalorder %s5611, %s5550
                %s5613 = scalar_select %p5612, 0, %s5611
                %s5614 = smul.u32 %s5613, 100
                %s5615 = smul.u32 %s5613, 100
                %s5616 = scalar_lea.vmem %s5529, %s5614 [#allocation22]
                %s5617 = scalar_lea.vmem %s5540, %s5615
              $region65: #{net_forward.6} parent=59 // loop_footer
                %s5555 = sadd.s32 %s5553, 1
              $region66: #{net_forward.6} parent=59 // loop_footer_branch
                %5552 = sbr.rel target = $region62
              $region67: #{net_forward.6} parent=59 // loop_exit
                _
              %s5618 = sdiv.u32.pop %s5536, 25
              %s5619 = srem.u32.pop %s5536, 25
              %s5620 = smul.u32 %s5618, 25
              %s5621 = smul.u32 4, %s5620
              %s5622 = scalar_lea.vmem %s5529, %s5621 [#allocation22]
              %s5623 = smul.u32 4, %s5620
              %s5624 = scalar_lea.vmem %s5540, %s5623
              // While loop
              $region68: #{net_forward.6} parent=59 // loop_pre_header
                _
              $region69: #{net_forward.6} parent=59 // loop_header
                %s5626 = sphi 0, %s5628
                %p5627 = scmp.ge.s32.totalorder %s5626, %s5619
                %s5631 = sphi 0, %s5638
                %s5632 = sphi %s5622, %s5641
                %s5633 = sphi %s5624, %s5642
              $region70: #{net_forward.6} parent=59 // loop_header_branch
                %5630 = sbr.rel (%p5627) target = $region74
              $region71: #{net_forward.6} parent=59 // loop_body
                %v5634 = vld [vmem:[%s5632] sm:%s5549]
                %5635 = vst [vmem:[%s5633] sm:%s5549] %v5634
                %s5636 = sadd.s32 1, %s5631
                %p5637 = scmp.ge.s32.totalorder %s5636, %s5619
                %s5638 = scalar_select %p5637, 0, %s5636
                %s5639 = smul.u32 %s5638, 4
                %s5640 = smul.u32 %s5638, 4
                %s5641 = scalar_lea.vmem %s5622, %s5639 [#allocation22]
                %s5642 = scalar_lea.vmem %s5624, %s5640
              $region72: #{net_forward.6} parent=59 // loop_footer
                %s5628 = sadd.s32 %s5626, 1
              $region73: #{net_forward.6} parent=59 // loop_footer_branch
                %5625 = sbr.rel target = $region69
              $region74: #{net_forward.6} parent=59 // loop_exit
                _
            $region60: #{net_forward.6} parent=51 // pred_fallthru
              _
          $region52: #{net_forward.6} parent=47 // pred_fallthru
            _
          %5740 = vnop
        $region48: #{net_forward.6} parent=43 // pred_fallthru
          _
      $region44: #{net_forward.6} parent=5 // pred_fallthru
        _
      %p5741 = scmp.le.s32.totalorder 2, %s33
      // Predicated region
      $region93: #{net_forward.6} parent=5 // pred_check
        %p5742 = pneg %p5741
      $region94: #{net_forward.6} parent=5 // pred_check_branch
        %5744 = sbr.rel (%p5742) target = $region96
      $region95: #{net_forward.6} parent=5 // pred_region
        %s5745 = ssub.s32 %s33, 2
        // Predicated region
        $region97: #{net_forward.6} parent=95 // pred_check
          %p5746 = pneg %p220
        $region98: #{net_forward.6} parent=95 // pred_check_branch
          %5748 = sbr.rel (%p5746) target = $region100
        $region99: #{net_forward.6} parent=95 // pred_region
          %s5749 = sand.u32 %s205, 1
          %s5750 = sand.u32 %s205, 1
          %s5751 = smul.addr %s5750, 100
          %s5752 = scalar_lea.vmem [#allocation22], %s5751
        $region100: #{net_forward.6} parent=95 // pred_fallthru
          _
      $region96: #{net_forward.6} parent=5 // pred_fallthru
        _
    $region6: #{net_forward.6} parent=1 // loop_footer
      %s37 = sadd.s32 1, %s33
    $region7: #{net_forward.6} parent=1 // loop_footer_branch
      %32 = sbr.rel target = $region3
    $region8: #{net_forward.6} parent=1 // loop_exit
      _

// kernel: net_forward.7
$region0: #{net_forward.7}
  #allocation0 [shape = 'u32[]', space=smem, size = 0x4, offset = 0x4, fixed_abs, tag = 'smem constant byte address 0x4 - core index']
  #allocation1 [shape = 'u32[72,128]{1,0:T(1,128)}', space=vmem, size = 0x9000, scoped, tag = 'internal scratch']
  #allocation2 [shape = 'u32[2048]{0}', space=vmem, size = 0x2000, scoped, tag = 'scoped memory for net_forward.7']
  #allocation3 [shape = 'u32[2048]{0}', space=vmem, size = 0x2000, scoped, tag = 'scoped memory for net_forward.7']
  #allocation4 [shape = 'u32[2048]{0}', space=vmem, size = 0x2000, scoped, tag = 'scoped memory for net_forward.7']
  #allocation5 [shape = 'u32[2048]{0}', space=vmem, size = 0x2000, scoped, tag = 'scoped memory for net_forward.7']
  #allocation6 [shape = 'u32[2048]{0}', space=vmem, size = 0x2000, scoped, tag = 'scoped memory for net_forward.7']
  #allocation7 [shape = 'u32[2048]{0}', space=vmem, size = 0x2000, scoped, tag = 'scoped memory for net_forward.7']
  #allocation8 [shape = 'u32[2048]{0}', space=vmem, size = 0x2000, scoped, tag = 'scoped memory for net_forward.7']
  #allocation9 [shape = 'u32[2048]{0}', space=vmem, size = 0x2000, scoped, tag = 'scoped memory for net_forward.7']
  #allocation10 [shape = 'u32[2048]{0}', space=vmem, size = 0x2000, scoped, tag = 'scoped memory for net_forward.7']
  #allocation11 [shape = 'u32[2048]{0}', space=vmem, size = 0x2000, scoped, tag = 'scoped memory for net_forward.7']
  #allocation12 [shape = 'u32[2048]{0}', space=vmem, size = 0x2000, scoped, tag = 'scoped memory for net_forward.7']
  #allocation13 [shape = 'u32[2048]{0}', space=vmem, size = 0x2000, scoped, tag = 'scoped memory for net_forward.7']
  #allocation14 [shape = 'u32[2048]{0}', space=vmem, size = 0x2000, scoped, tag = 'scoped memory for net_forward.7']
  #allocation15 [shape = 'u32[2048]{0}', space=vmem, size = 0x2000, scoped, tag = 'scoped memory for net_forward.7']
  #allocation16 [shape = 'u32[2048]{0}', space=vmem, size = 0x2000, scoped, tag = 'scoped memory for net_forward.7']
  #allocation17 [shape = 'u32[2048]{0}', space=vmem, size = 0x2000, scoped, tag = 'scoped memory for net_forward.7']
  #allocation18 [shape = 'u32[2048]{0}', space=vmem, size = 0x2000, scoped, tag = 'scoped memory for net_forward.7']
  #allocation19 [shape = 'u32[2048]{0}', space=vmem, size = 0x2000, scoped, tag = 'scoped memory for net_forward.7']
  #allocation20 [shape = 'u32[2048]{0}', space=vmem, size = 0x2000, scoped, tag = 'scoped memory for net_forward.7']
  #allocation21 [shape = 'u32[2048]{0}', space=vmem, size = 0x2000, scoped, tag = 'scoped memory for net_forward.7']
  %s0 = inlined_call_operand.vmem [shape: bf16[150,16], index: 0, kind: input, shape index: {}]
  %s1 = inlined_call_operand.vmem [shape: f32[1,16], index: 1, kind: input, shape index: {}]
  %s2 = inlined_call_operand.vmem [shape: bf16[1,50,150], index: 2, kind: input, shape index: {}]
  %s3 = inlined_call_operand.<no memory space> [shape: bf16[], index: 3, kind: input, shape index: {}]
  %s4 = inlined_call_operand.vmem [shape: bf16[1,50,150], index: 4, kind: input, shape index: {}]
  %s5 = inlined_call_operand.vmem [shape: bf16[1,50,150], index: 5, kind: input, shape index: {}]
  %s6 = inlined_call_operand.vmem [shape: bf16[1,50,150], index: 6, kind: input, shape index: {}]
  %s7 = inlined_call_operand.vmem [shape: bf16[50,16], index: 7, kind: output, shape index: {}]
  %s8 = sld [smem:[#allocation0]]
  $region101: #{net_forward.7} parent=0
    _
  %s10 = ssub.s32 1, %s8
  %s11 = scalar_select 0, %s10, %s8
  %v12 = vstv %s3
  %v13 = vunpack.i.l.bf16 %v12
  %v15 = vunpack.i.h.bf16 %v12
  %v17 = vstv %s3
  %v18 = vunpack.i.l.bf16 %v17
  %v20 = vunpack.i.h.bf16 %v17
  %v22 = vstv %s3
  %v23 = vunpack.i.l.bf16 %v22
  %v25 = vunpack.i.h.bf16 %v22
  %v27 = vstv %s3
  %v28 = vunpack.i.l.bf16 %v27
  %v30 = vunpack.i.h.bf16 %v27
  $region1: #{net_forward.7} parent=0
    #allocation22 [shape = 'u8[16384]{0}', space=vmem, size = 0x4000, scoped, tag = 'output window, operand 0']
    loop: start=0, step=1, limit=4
    $region2: #{net_forward.7} parent=1 // loop_pre_header
      _
    $region3: #{net_forward.7} parent=1 // loop_header
      %s33 = sphi 0, %s37
      %p34 = scmp.ge.s32.totalorder %s33, 4
      %s47 = sphi 0, %s49
      %s50 = sphi 0, %s47
      %s51 = sphi 0, %s50
      %s67 = sphi 0, %s51
      %s77 = sphi 0, %s79
      %s80 = sphi 0, %s77
      %s81 = sphi 0, %s80
      %s97 = sphi 0, %s81
      %s107 = sphi 0, %s109
      %s110 = sphi 0, %s107
      %s111 = sphi 0, %s110
      %s127 = sphi 0, %s111
      %s133 = sphi 0, %s135
      %s136 = sphi 0, %s133
      %s137 = sphi 0, %s136
      %s153 = sphi 0, %s137
      %s157 = sphi 0, %s157
      %s159 = sphi 0, %s157
      %s160 = sphi 0, %s159
      %s174 = sphi 0, %s160
      %s178 = sphi 0, %s178
      %s180 = sphi 0, %s178
      %s181 = sphi 0, %s180
      %s195 = sphi 0, %s181
      %s201 = sphi 0, %s203
      %s204 = sphi 0, %s201
      %s205 = sphi 0, %s204
      %s221 = sphi 0, %s205
    $region4: #{net_forward.7} parent=1 // loop_header_branch
      %36 = sbr.rel (%p34) target = $region8
    $region5: #{net_forward.7} parent=1 // loop_body
      %s38 = ssub.s32 %s33, 1
      %s39 = ssub.s32 %s33, 2
      %s40 = sadd.s32 %s33, 1
      %s43 = ssub.s32 0, 0
      %s44 = ssub.s32 %s33, %s40
      %s45 = sor.u32 %s43, %s44
      %p46 = scmp.eq.s32.totalorder %s45, 0
      %s48 = sadd.s32 %s47, 1
      %s49 = scalar_select %p46, %s47, %s48
      %p52 = pneg %p46
      %p53 = scmp.eq.s32.totalorder %s33, 1
      %p54 = por %p52, %p53
      %p55 = scmp.ne.s32.totalorder %s47, %s50
      %p56 = scmp.eq.s32.totalorder %s33, 0
      %p57 = por %p55, %p56
      %p58 = scmp.ne.s32.totalorder %s47, %s50
      %p59 = scmp.eq.s32.totalorder %s38, 1
      %p60 = por %p58, %p59
      %p61 = scmp.ne.s32.totalorder %s50, %s51
      %p62 = scmp.eq.s32.totalorder %s38, 0
      %p63 = por %p61, %p62
      %p64 = scmp.ne.s32.totalorder %s50, %s51
      %p65 = scmp.eq.s32.totalorder %s39, 1
      %p66 = por %p64, %p65
      %p68 = scmp.ne.s32.totalorder %s51, %s67
      %p69 = scmp.eq.s32.totalorder %s39, 0
      %p70 = por %p68, %p69
      %s73 = ssub.s32 0, 0
      %s74 = ssub.s32 %s33, %s40
      %s75 = sor.u32 %s73, %s74
      %p76 = scmp.eq.s32.totalorder %s75, 0
      %s78 = sadd.s32 %s77, 1
      %s79 = scalar_select %p76, %s77, %s78
      %p82 = pneg %p76
      %p83 = scmp.eq.s32.totalorder %s33, 1
      %p84 = por %p82, %p83
      %p85 = scmp.ne.s32.totalorder %s77, %s80
      %p86 = scmp.eq.s32.totalorder %s33, 0
      %p87 = por %p85, %p86
      %p88 = scmp.ne.s32.totalorder %s77, %s80
      %p89 = scmp.eq.s32.totalorder %s38, 1
      %p90 = por %p88, %p89
      %p91 = scmp.ne.s32.totalorder %s80, %s81
      %p92 = scmp.eq.s32.totalorder %s38, 0
      %p93 = por %p91, %p92
      %p94 = scmp.ne.s32.totalorder %s80, %s81
      %p95 = scmp.eq.s32.totalorder %s39, 1
      %p96 = por %p94, %p95
      %p98 = scmp.ne.s32.totalorder %s81, %s97
      %p99 = scmp.eq.s32.totalorder %s39, 0
      %p100 = por %p98, %p99
      %s103 = ssub.s32 0, 0
      %s104 = ssub.s32 %s33, %s40
      %s105 = sor.u32 %s103, %s104
      %p106 = scmp.eq.s32.totalorder %s105, 0
      %s108 = sadd.s32 %s107, 1
      %s109 = scalar_select %p106, %s107, %s108
      %p112 = pneg %p106
      %p113 = scmp.eq.s32.totalorder %s33, 1
      %p114 = por %p112, %p113
      %p115 = scmp.ne.s32.totalorder %s107, %s110
      %p116 = scmp.eq.s32.totalorder %s33, 0
      %p117 = por %p115, %p116
      %p118 = scmp.ne.s32.totalorder %s107, %s110
      %p119 = scmp.eq.s32.totalorder %s38, 1
      %p120 = por %p118, %p119
      %p121 = scmp.ne.s32.totalorder %s110, %s111
      %p122 = scmp.eq.s32.totalorder %s38, 0
      %p123 = por %p121, %p122
      %p124 = scmp.ne.s32.totalorder %s110, %s111
      %p125 = scmp.eq.s32.totalorder %s39, 1
      %p126 = por %p124, %p125
      %p128 = scmp.ne.s32.totalorder %s111, %s127
      %p129 = scmp.eq.s32.totalorder %s39, 0
      %p130 = por %p128, %p129
      %s131 = ssub.s32 %s33, %s40
      %p132 = scmp.eq.s32.totalorder %s131, 0
      %s134 = sadd.s32 %s133, 1
      %s135 = scalar_select %p132, %s133, %s134
      %p138 = pneg %p132
      %p139 = scmp.eq.s32.totalorder %s33, 1
      %p140 = por %p138, %p139
      %p141 = scmp.ne.s32.totalorder %s133, %s136
      %p142 = scmp.eq.s32.totalorder %s33, 0
      %p143 = por %p141, %p142
      %p144 = scmp.ne.s32.totalorder %s133, %s136
      %p145 = scmp.eq.s32.totalorder %s38, 1
      %p146 = por %p144, %p145
      %p147 = scmp.ne.s32.totalorder %s136, %s137
      %p148 = scmp.eq.s32.totalorder %s38, 0
      %p149 = por %p147, %p148
      %p150 = scmp.ne.s32.totalorder %s136, %s137
      %p151 = scmp.eq.s32.totalorder %s39, 1
      %p152 = por %p150, %p151
      %p154 = scmp.ne.s32.totalorder %s137, %s153
      %p155 = scmp.eq.s32.totalorder %s39, 0
      %p156 = por %p154, %p155
      %s158 = sadd.s32 %s157, 1
      %p161 = scmp.eq.s32.totalorder %s33, 1
      %p162 = scmp.ne.s32.totalorder %s157, %s159
      %p163 = scmp.eq.s32.totalorder %s33, 0
      %p164 = por %p162, %p163
      %p165 = scmp.ne.s32.totalorder %s157, %s159
      %p166 = scmp.eq.s32.totalorder %s38, 1
      %p167 = por %p165, %p166
      %p168 = scmp.ne.s32.totalorder %s159, %s160
      %p169 = scmp.eq.s32.totalorder %s38, 0
      %p170 = por %p168, %p169
      %p171 = scmp.ne.s32.totalorder %s159, %s160
      %p172 = scmp.eq.s32.totalorder %s39, 1
      %p173 = por %p171, %p172
      %p175 = scmp.ne.s32.totalorder %s160, %s174
      %p176 = scmp.eq.s32.totalorder %s39, 0
      %p177 = por %p175, %p176
      %s179 = sadd.s32 %s178, 1
      %p182 = scmp.eq.s32.totalorder %s33, 1
      %p183 = scmp.ne.s32.totalorder %s178, %s180
      %p184 = scmp.eq.s32.totalorder %s33, 0
      %p185 = por %p183, %p184
      %p186 = scmp.ne.s32.totalorder %s178, %s180
      %p187 = scmp.eq.s32.totalorder %s38, 1
      %p188 = por %p186, %p187
      %p189 = scmp.ne.s32.totalorder %s180, %s181
      %p190 = scmp.eq.s32.totalorder %s38, 0
      %p191 = por %p189, %p190
      %p192 = scmp.ne.s32.totalorder %s180, %s181
      %p193 = scmp.eq.s32.totalorder %s39, 1
      %p194 = por %p192, %p193
      %p196 = scmp.ne.s32.totalorder %s181, %s195
      %p197 = scmp.eq.s32.totalorder %s39, 0
      %p198 = por %p196, %p197
      %s199 = ssub.s32 %s33, %s40
      %p200 = scmp.eq.s32.totalorder %s199, 0
      %s202 = sadd.s32 %s201, 1
      %s203 = scalar_select %p200, %s201, %s202
      %p206 = pneg %p200
      %p207 = scmp.eq.s32.totalorder %s33, 1
      %p208 = por %p206, %p207
      %p209 = scmp.ne.s32.totalorder %s201, %s204
      %p210 = scmp.eq.s32.totalorder %s33, 0
      %p211 = por %p209, %p210
      %p212 = scmp.ne.s32.totalorder %s201, %s204
      %p213 = scmp.eq.s32.totalorder %s38, 1
      %p214 = por %p212, %p213
      %p215 = scmp.ne.s32.totalorder %s204, %s205
      %p216 = scmp.eq.s32.totalorder %s38, 0
      %p217 = por %p215, %p216
      %p218 = scmp.ne.s32.totalorder %s204, %s205
      %p219 = scmp.eq.s32.totalorder %s39, 1
      %p220 = por %p218, %p219
      %p222 = scmp.ne.s32.totalorder %s205, %s221
      %p223 = scmp.eq.s32.totalorder %s39, 0
      %p224 = por %p222, %p223
      %p225 = scmp.le.s32.totalorder 1, %s33
      %p226 = scmp.lt.s32.totalorder %s33, 3
      %p227 = pnand %p225, %p226
      %p228 = pneg %p227
      // Predicated region
      $region9: #{net_forward.7} parent=5 // pred_check
        _
      $region10: #{net_forward.7} parent=5 // pred_check_branch
        %230 = sbr.rel (%p227) target = $region12
      $region11: #{net_forward.7} parent=5 // pred_region
        %s231 = ssub.s32 %s33, 1
        // Predicated region
        $region13: #{net_forward.7} parent=11 // pred_check
          %p232 = pneg %p170
        $region14: #{net_forward.7} parent=11 // pred_check_branch
          %234 = sbr.rel (%p232) target = $region16
        $region15: #{net_forward.7} parent=11 // pred_region
          _
        $region16: #{net_forward.7} parent=11 // pred_fallthru
          _
        // Predicated region
        $region17: #{net_forward.7} parent=11 // pred_check
          %p235 = pneg %p191
        $region18: #{net_forward.7} parent=11 // pred_check_branch
          %237 = sbr.rel (%p235) target = $region20
        $region19: #{net_forward.7} parent=11 // pred_region
          _
        $region20: #{net_forward.7} parent=11 // pred_fallthru
          _
      $region12: #{net_forward.7} parent=5 // pred_fallthru
        _
      %p238 = scmp.lt.s32.totalorder %s33, 2
      // Predicated region
      $region21: #{net_forward.7} parent=5 // pred_check
        %p239 = pneg %p238
      $region22: #{net_forward.7} parent=5 // pred_check_branch
        %241 = sbr.rel (%p239) target = $region24
      $region23: #{net_forward.7} parent=5 // pred_region
        // Predicated region
        $region25: #{net_forward.7} parent=23 // pred_check
          %p242 = pneg %p57
        $region26: #{net_forward.7} parent=23 // pred_check_branch
          %244 = sbr.rel (%p242) target = $region28
        $region27: #{net_forward.7} parent=23 // pred_region
          %s246 = smul.u32 4, %s33
          %s247 = ssub.s32 1, 0
          %s248 = smul.u32 4, %s247
          %s249 = ssub.s32 7, %s246
          %p250 = scmp.lt.s32.totalorder %s249, 4
          %s251 = scalar_select %p250, %s249, 4
          %s252 = smul.u32 %s248, %s251
          %s253 = smul.u32 %s252, 2
          %p254 = scmp.lt.s32.totalorder 0, 0
          %s255 = scalar_select %p254, 0, 0
          %p256 = scmp.lt.s32.totalorder %s246, 6
          %s257 = scalar_select %p256, %s246, 6
          %s258 = smul.addr %s257, 2
          %s259 = smul.addr %s255, 14
          %s260 = sadd.s32 %s258, %s259
          %s261 = smul.addr %s260, 4
          %s262 = scalar_lea.vmem %s2, %s261
          %s264 = smul.u32 4, %s33
          %s265 = ssub.s32 1, 0
          %s266 = smul.u32 4, %s265
          %s267 = ssub.s32 7, %s264
          %p268 = scmp.lt.s32.totalorder %s267, 4
          %s269 = scalar_select %p268, %s267, 4
          %s270 = smul.u32 %s266, %s269
          %s271 = smul.u32 %s270, 2
        $region28: #{net_forward.7} parent=23 // pred_fallthru
          _
        // Predicated region
        $region29: #{net_forward.7} parent=23 // pred_check
          %p272 = pneg %p87
        $region30: #{net_forward.7} parent=23 // pred_check_branch
          %274 = sbr.rel (%p272) target = $region32
        $region31: #{net_forward.7} parent=23 // pred_region
          %s276 = smul.u32 4, %s33
          %s277 = ssub.s32 1, 0
          %s278 = smul.u32 4, %s277
          %s279 = ssub.s32 7, %s276
          %p280 = scmp.lt.s32.totalorder %s279, 4
          %s281 = scalar_select %p280, %s279, 4
          %s282 = smul.u32 %s278, %s281
          %s283 = smul.u32 %s282, 2
          %p284 = scmp.lt.s32.totalorder 0, 0
          %s285 = scalar_select %p284, 0, 0
          %p286 = scmp.lt.s32.totalorder %s276, 6
          %s287 = scalar_select %p286, %s276, 6
          %s288 = smul.addr %s287, 2
          %s289 = smul.addr %s285, 14
          %s290 = sadd.s32 %s288, %s289
          %s291 = smul.addr %s290, 4
          %s292 = scalar_lea.vmem %s4, %s291
          %s294 = smul.u32 4, %s33
          %s295 = ssub.s32 1, 0
          %s296 = smul.u32 4, %s295
          %s297 = ssub.s32 7, %s294
          %p298 = scmp.lt.s32.totalorder %s297, 4
          %s299 = scalar_select %p298, %s297, 4
          %s300 = smul.u32 %s296, %s299
          %s301 = smul.u32 %s300, 2
        $region32: #{net_forward.7} parent=23 // pred_fallthru
          _
        // Predicated region
        $region33: #{net_forward.7} parent=23 // pred_check
          %p302 = pneg %p117
        $region34: #{net_forward.7} parent=23 // pred_check_branch
          %304 = sbr.rel (%p302) target = $region36
        $region35: #{net_forward.7} parent=23 // pred_region
          %s306 = smul.u32 4, %s33
          %s307 = ssub.s32 1, 0
          %s308 = smul.u32 4, %s307
          %s309 = ssub.s32 7, %s306
          %p310 = scmp.lt.s32.totalorder %s309, 4
          %s311 = scalar_select %p310, %s309, 4
          %s312 = smul.u32 %s308, %s311
          %s313 = smul.u32 %s312, 2
          %p314 = scmp.lt.s32.totalorder 0, 0
          %s315 = scalar_select %p314, 0, 0
          %p316 = scmp.lt.s32.totalorder %s306, 6
          %s317 = scalar_select %p316, %s306, 6
          %s318 = smul.addr %s317, 2
          %s319 = smul.addr %s315, 14
          %s320 = sadd.s32 %s318, %s319
          %s321 = smul.addr %s320, 4
          %s322 = scalar_lea.vmem %s5, %s321
          %s324 = smul.u32 4, %s33
          %s325 = ssub.s32 1, 0
          %s326 = smul.u32 4, %s325
          %s327 = ssub.s32 7, %s324
          %p328 = scmp.lt.s32.totalorder %s327, 4
          %s329 = scalar_select %p328, %s327, 4
          %s330 = smul.u32 %s326, %s329
          %s331 = smul.u32 %s330, 2
        $region36: #{net_forward.7} parent=23 // pred_fallthru
          _
        // Predicated region
        $region37: #{net_forward.7} parent=23 // pred_check
          %p332 = pneg %p143
        $region38: #{net_forward.7} parent=23 // pred_check_branch
          %334 = sbr.rel (%p332) target = $region40
        $region39: #{net_forward.7} parent=23 // pred_region
          %s335 = smul.u32 4, %s33
          %s336 = ssub.s32 7, %s335
          %p337 = scmp.lt.s32.totalorder %s336, 4
          %s338 = scalar_select %p337, %s336, 4
          %s339 = smul.u32 4, %s338
          %s340 = smul.u32 %s339, 2
          %p341 = scmp.lt.s32.totalorder %s335, 6
          %s342 = scalar_select %p341, %s335, 6
          %s343 = smul.addr %s342, 2
          %s344 = smul.addr %s343, 4
          %s345 = scalar_lea.vmem %s6, %s344
          %s346 = smul.u32 4, %s33
          %s347 = ssub.s32 7, %s346
          %p348 = scmp.lt.s32.totalorder %s347, 4
          %s349 = scalar_select %p348, %s347, 4
          %s350 = smul.u32 4, %s349
          %s351 = smul.u32 %s350, 2
        $region40: #{net_forward.7} parent=23 // pred_fallthru
          _
      $region24: #{net_forward.7} parent=5 // pred_fallthru
        _
      %p352 = scmp.le.s32.totalorder 1, %s33
      %p353 = scmp.lt.s32.totalorder %s33, 3
      %p354 = pnand %p352, %p353
      %p355 = pneg %p354
      // Predicated region
      $region41: #{net_forward.7} parent=5 // pred_check
        _
      $region42: #{net_forward.7} parent=5 // pred_check_branch
        %357 = sbr.rel (%p354) target = $region44
      $region43: #{net_forward.7} parent=5 // pred_region
        #allocation23 [shape = 'u8[65536]{0}', space=vmem, size = 0x10000, dematerialized = true, scoped, tag = 'FusionAdapter Buffer %fusion.9 = bf16[4,50,150]{2,1,0:T(8,128)(2,1)} fusion(%param_2.205, %param_3.105, %param_4.8, %param_5.7, %param_6.5), kind=kLoop, calls=%fused_computation.109.clone, metadata={op_name="jit(net_forward)/concatenate" stack_frame_id=19}']
        %s358 = ssub.s32 %s33, 1
        %s360 = smul.u32 4, %s38
        %s361 = ssub.s32 1, 0
        %s362 = smul.u32 4, %s361
        %s363 = ssub.s32 7, %s360
        %p364 = scmp.lt.s32.totalorder %s363, 4
        %s365 = scalar_select %p364, %s363, 4
        %s366 = smul.u32 %s362, %s365
        %s367 = smul.u32 %s366, 2
        %p368 = scmp.lt.s32.totalorder 0, 0
        %s369 = scalar_select %p368, 0, 0
        %p370 = scmp.lt.s32.totalorder %s360, 6
        %s371 = scalar_select %p370, %s360, 6
        %s372 = smul.addr %s371, 2
        %s373 = smul.addr %s369, 14
        %s374 = sadd.s32 %s372, %s373
        %s375 = smul.addr %s374, 4
        %s376 = scalar_lea.vmem %s2, %s375
        %p377 = pneg %p63
        %p378 = pneg %p60
        %s380 = smul.u32 4, %s38
        %s381 = ssub.s32 1, 0
        %s382 = smul.u32 4, %s381
        %s383 = ssub.s32 7, %s380
        %p384 = scmp.lt.s32.totalorder %s383, 4
        %s385 = scalar_select %p384, %s383, 4
        %s386 = smul.u32 %s382, %s385
        %s387 = smul.u32 %s386, 2
        %p388 = scmp.lt.s32.totalorder 0, 0
        %s389 = scalar_select %p388, 0, 0
        %p390 = scmp.lt.s32.totalorder %s380, 6
        %s391 = scalar_select %p390, %s380, 6
        %s392 = smul.addr %s391, 2
        %s393 = smul.addr %s389, 14
        %s394 = sadd.s32 %s392, %s393
        %s395 = smul.addr %s394, 4
        %s396 = scalar_lea.vmem %s4, %s395
        %p397 = pneg %p93
        %p398 = pneg %p90
        %s400 = smul.u32 4, %s38
        %s401 = ssub.s32 1, 0
        %s402 = smul.u32 4, %s401
        %s403 = ssub.s32 7, %s400
        %p404 = scmp.lt.s32.totalorder %s403, 4
        %s405 = scalar_select %p404, %s403, 4
        %s406 = smul.u32 %s402, %s405
        %s407 = smul.u32 %s406, 2
        %p408 = scmp.lt.s32.totalorder 0, 0
        %s409 = scalar_select %p408, 0, 0
        %p410 = scmp.lt.s32.totalorder %s400, 6
        %s411 = scalar_select %p410, %s400, 6
        %s412 = smul.addr %s411, 2
        %s413 = smul.addr %s409, 14
        %s414 = sadd.s32 %s412, %s413
        %s415 = smul.addr %s414, 4
        %s416 = scalar_lea.vmem %s5, %s415
        %p417 = pneg %p123
        %p418 = pneg %p120
        %s419 = smul.u32 4, %s38
        %s420 = ssub.s32 7, %s419
        %p421 = scmp.lt.s32.totalorder %s420, 4
        %s422 = scalar_select %p421, %s420, 4
        %s423 = smul.u32 4, %s422
        %s424 = smul.u32 %s423, 2
        %p425 = scmp.lt.s32.totalorder %s419, 6
        %s426 = scalar_select %p425, %s419, 6
        %s427 = smul.addr %s426, 2
        %s428 = smul.addr %s427, 4
        %s429 = scalar_lea.vmem %s6, %s428
        %p430 = pneg %p149
        %p431 = pneg %p146
        %p432 = pneg %p170
        %p433 = pneg %p167
        %p434 = pneg %p191
        %p435 = pneg %p188
        %p436 = pneg %p217
        %p437 = pneg %p214
        %s438 = sand.u32 %s204, 1
        %s439 = sand.u32 %s204, 1
        %s440 = smul.addr %s439, 16
        %s441 = scalar_lea.vmem [#allocation22], %s440
        %s443 = smul.u32 4, %s38
        %s444 = ssub.s32 1, 0
        %s445 = smul.u32 4, %s444
        %s446 = ssub.s32 7, %s443
        %p447 = scmp.lt.s32.totalorder %s446, 4
        %s448 = scalar_select %p447, %s446, 4
        %s449 = smul.u32 %s445, %s448
        %s450 = smul.u32 %s449, 2
        %p451 = scmp.lt.s32.totalorder 0, 0
        %s452 = scalar_select %p451, 0, 0
        %p453 = scmp.lt.s32.totalorder %s443, 6
        %s454 = scalar_select %p453, %s443, 6
        %s455 = smul.addr %s454, 2
        %s456 = smul.addr %s452, 14
        %s457 = sadd.s32 %s455, %s456
        %s458 = smul.addr %s457, 4
        %s459 = scalar_lea.vmem %s2, %s458
        %s461 = smul.u32 4, %s38
        %s462 = ssub.s32 1, 0
        %s463 = smul.u32 4, %s462
        %s464 = ssub.s32 7, %s461
        %p465 = scmp.lt.s32.totalorder %s464, 4
        %s466 = scalar_select %p465, %s464, 4
        %s467 = smul.u32 %s463, %s466
        %s468 = smul.u32 %s467, 2
        %s470 = smul.u32 4, %s38
        %s471 = ssub.s32 1, 0
        %s472 = smul.u32 4, %s471
        %s473 = ssub.s32 7, %s470
        %p474 = scmp.lt.s32.totalorder %s473, 4
        %s475 = scalar_select %p474, %s473, 4
        %s476 = smul.u32 %s472, %s475
        %s477 = smul.u32 %s476, 2
        %p478 = scmp.lt.s32.totalorder 0, 0
        %s479 = scalar_select %p478, 0, 0
        %p480 = scmp.lt.s32.totalorder %s470, 6
        %s481 = scalar_select %p480, %s470, 6
        %s482 = smul.addr %s481, 2
        %s483 = smul.addr %s479, 14
        %s484 = sadd.s32 %s482, %s483
        %s485 = smul.addr %s484, 4
        %s486 = scalar_lea.vmem %s4, %s485
        %s488 = smul.u32 4, %s38
        %s489 = ssub.s32 1, 0
        %s490 = smul.u32 4, %s489
        %s491 = ssub.s32 7, %s488
        %p492 = scmp.lt.s32.totalorder %s491, 4
        %s493 = scalar_select %p492, %s491, 4
        %s494 = smul.u32 %s490, %s493
        %s495 = smul.u32 %s494, 2
        %s497 = smul.u32 4, %s38
        %s498 = ssub.s32 1, 0
        %s499 = smul.u32 4, %s498
        %s500 = ssub.s32 7, %s497
        %p501 = scmp.lt.s32.totalorder %s500, 4
        %s502 = scalar_select %p501, %s500, 4
        %s503 = smul.u32 %s499, %s502
        %s504 = smul.u32 %s503, 2
        %p505 = scmp.lt.s32.totalorder 0, 0
        %s506 = scalar_select %p505, 0, 0
        %p507 = scmp.lt.s32.totalorder %s497, 6
        %s508 = scalar_select %p507, %s497, 6
        %s509 = smul.addr %s508, 2
        %s510 = smul.addr %s506, 14
        %s511 = sadd.s32 %s509, %s510
        %s512 = smul.addr %s511, 4
        %s513 = scalar_lea.vmem %s5, %s512
        %s515 = smul.u32 4, %s38
        %s516 = ssub.s32 1, 0
        %s517 = smul.u32 4, %s516
        %s518 = ssub.s32 7, %s515
        %p519 = scmp.lt.s32.totalorder %s518, 4
        %s520 = scalar_select %p519, %s518, 4
        %s521 = smul.u32 %s517, %s520
        %s522 = smul.u32 %s521, 2
        %s523 = smul.u32 4, %s38
        %s524 = ssub.s32 7, %s523
        %p525 = scmp.lt.s32.totalorder %s524, 4
        %s526 = scalar_select %p525, %s524, 4
        %s527 = smul.u32 4, %s526
        %s528 = smul.u32 %s527, 2
        %p529 = scmp.lt.s32.totalorder %s523, 6
        %s530 = scalar_select %p529, %s523, 6
        %s531 = smul.addr %s530, 2
        %s532 = smul.addr %s531, 4
        %s533 = scalar_lea.vmem %s6, %s532
        %s534 = smul.u32 4, %s38
        %s535 = ssub.s32 7, %s534
        %p536 = scmp.lt.s32.totalorder %s535, 4
        %s537 = scalar_select %p536, %s535, 4
        %s538 = smul.u32 4, %s537
        %s539 = smul.u32 %s538, 2
        %s540 = smul.u32 4, %s38
        %s541 = ssub.s32 7, %s540
        %p542 = scmp.lt.s32.totalorder %s541, 4
        %s543 = scalar_select %p542, %s541, 4
        %s544 = smul.u32 4, %s543
        %s545 = ssub.s32 0, 0
        %p546 = scmp.lt.s32.totalorder %s545, 0
        %s547 = scalar_select %p546, 0, 255
        %s548 = sshrl.u32 %s547, 1
        %s549 = sor.u32 %s547, %s548
        %s550 = sand.u32 %s549, 85
        %s551 = sshrl.u32 %s550, 1
        %s552 = sor.u32 %s550, %s551
        %s553 = sand.u32 51, %s552
        %s554 = sshrl.u32 %s553, 2
        %s555 = sor.u32 %s553, %s554
        %s556 = sand.u32 15, %s555
        %v557 = vld [vmem:[%s459] sm:%s556]
        %v558 = vunpack.c.l.bf16 %v557
        %v559 = vunpack.c.h.bf16 %v557
        %s560 = smul.u32 4, %s38
        %s561 = ssub.s32 0, 0
        %p562 = scmp.lt.s32.totalorder %s561, 0
        %s563 = scalar_select %p562, 0, 255
        %s564 = sshrl.u32 %s563, 1
        %s565 = sor.u32 %s563, %s564
        %s566 = sand.u32 %s565, 85
        %s567 = sshrl.u32 %s566, 1
        %s568 = sor.u32 %s566, %s567
        %s569 = sand.u32 51, %s568
        %s570 = sshrl.u32 %s569, 2
        %s571 = sor.u32 %s569, %s570
        %s572 = sand.u32 15, %s571
        %v573 = vld [vmem:[%s486] sm:%s572]
        %v574 = vunpack.c.l.bf16 %v573
        %v575 = vunpack.c.h.bf16 %v573
        %s576 = smul.u32 4, %s38
        %s577 = ssub.s32 0, 0
        %p578 = scmp.lt.s32.totalorder %s577, 0
        %s579 = scalar_select %p578, 0, 255
        %s580 = sshrl.u32 %s579, 1
        %s581 = sor.u32 %s579, %s580
        %s582 = sand.u32 %s581, 85
        %s583 = sshrl.u32 %s582, 1
        %s584 = sor.u32 %s582, %s583
        %s585 = sand.u32 51, %s584
        %s586 = sshrl.u32 %s585, 2
        %s587 = sor.u32 %s585, %s586
        %s588 = sand.u32 15, %s587
        %v589 = vld [vmem:[%s513] sm:%s588]
        %v590 = vunpack.c.l.bf16 %v589
        %v591 = vunpack.c.h.bf16 %v589
        %s592 = smul.u32 4, %s38
        %s594 = sor.u32 255, 127
        %s595 = sand.u32 %s594, 85
        %s596 = sshrl.u32 %s595, 1
        %s597 = sor.u32 %s595, %s596
        %s598 = sand.u32 51, %s597
        %s599 = sshrl.u32 %s598, 2
        %s600 = sor.u32 %s598, %s599
        %s601 = sand.u32 15, %s600
        %v602 = vld [vmem:[%s533] sm:%s601]
        %v603 = vunpack.c.l.bf16 %v602
        %v604 = vunpack.c.h.bf16 %v602
        %s605 = smul.addr %s534, 8
        %v606 = vlaneseq
        %v607 = vshrl.u32 %v606, 7
        %v608 = vstv %s605
        %v609 = vadd.s32 %v607, %v608
        %vm610 = vcmp.lt.s32.totalorder %v609, 50
        %v611 = vsel %vm610, %v603, %v28
        %v612 = vlaneseq
        %v613 = vand.u32 %v612, 127
        %vm615 = vcmp.lt.s32.totalorder %v613, 150
        %v616 = vsel %vm615, %v611, %v28
        %617 = xla_tuple %v616, %v23
        %618 = xla_tuple %617
        %v619 = vmax.f32 %v616, %v23
        %620 = xla_tuple %v619
        %621 = xla_tuple %v619, %v18
        %622 = xla_tuple %621
        %v623 = vmax.f32 %v619, %v18
        %624 = xla_tuple %v623
        %625 = xla_tuple %v623, %v13
        %626 = xla_tuple %625
        %v627 = vmax.f32 %v623, %v13
        %628 = xla_tuple %v627
        %v629 = vpack.c.bf16 0.0, %v627
        %s631 = ssub.s32 16, 1
        %632 = vst [vmem:[#allocation23] sm:%s631] %v629
        %s633 = scalar_lea.vmem %s459, 4
        %s634 = ssub.s32 0, 0
        %p635 = scmp.lt.s32.totalorder %s634, 0
        %s636 = scalar_select %p635, 0, 255
        %s637 = sshrl.u32 %s636, 1
        %s638 = sor.u32 %s636, %s637
        %s639 = sand.u32 %s638, 85
        %s640 = sshrl.u32 %s639, 1
        %s641 = sor.u32 %s639, %s640
        %s642 = sand.u32 51, %s641
        %s643 = sshrl.u32 %s642, 2
        %s644 = sor.u32 %s642, %s643
        %s645 = sand.u32 15, %s644
        %v646 = vld [vmem:[%s633] sm:%s645]
        %v647 = vunpack.c.l.bf16 %v646
        %v648 = vunpack.c.h.bf16 %v646
        %s649 = scalar_lea.vmem %s486, 4
        %s650 = ssub.s32 0, 0
        %p651 = scmp.lt.s32.totalorder %s650, 0
        %s652 = scalar_select %p651, 0, 255
        %s653 = sshrl.u32 %s652, 1
        %s654 = sor.u32 %s652, %s653
        %s655 = sand.u32 %s654, 85
        %s656 = sshrl.u32 %s655, 1
        %s657 = sor.u32 %s655, %s656
        %s658 = sand.u32 51, %s657
        %s659 = sshrl.u32 %s658, 2
        %s660 = sor.u32 %s658, %s659
        %s661 = sand.u32 15, %s660
        %v662 = vld [vmem:[%s649] sm:%s661]
        %v663 = vunpack.c.l.bf16 %v662
        %v664 = vunpack.c.h.bf16 %v662
        %s665 = scalar_lea.vmem %s513, 4
        %s666 = ssub.s32 0, 0
        %p667 = scmp.lt.s32.totalorder %s666, 0
        %s668 = scalar_select %p667, 0, 255
        %s669 = sshrl.u32 %s668, 1
        %s670 = sor.u32 %s668, %s669
        %s671 = sand.u32 %s670, 85
        %s672 = sshrl.u32 %s671, 1
        %s673 = sor.u32 %s671, %s672
        %s674 = sand.u32 51, %s673
        %s675 = sshrl.u32 %s674, 2
        %s676 = sor.u32 %s674, %s675
        %s677 = sand.u32 15, %s676
        %v678 = vld [vmem:[%s665] sm:%s677]
        %v679 = vunpack.c.l.bf16 %v678
        %v680 = vunpack.c.h.bf16 %v678
        %s681 = scalar_lea.vmem %s533, 4
        %s683 = sor.u32 255, 127
        %s684 = sand.u32 %s683, 85
        %s685 = sshrl.u32 %s684, 1
        %s686 = sor.u32 %s684, %s685
        %s687 = sand.u32 51, %s686
        %s688 = sshrl.u32 %s687, 2
        %s689 = sor.u32 %s687, %s688
        %s690 = sand.u32 15, %s689
        %v691 = vld [vmem:[%s681] sm:%s690]
        %v692 = vunpack.c.l.bf16 %v691
        %v693 = vunpack.c.h.bf16 %v691
        %s694 = smul.addr %s534, 8
        %v695 = vlaneseq
        %v696 = vshrl.u32 %v695, 7
        %v697 = vstv %s694
        %v698 = vadd.s32 %v696, %v697
        %vm699 = vcmp.lt.s32.totalorder %v698, 50
        %v700 = vsel %vm699, %v692, %v28
        %v701 = vlaneseq
        %v702 = vand.u32 %v701, 127
        %v703 = vadd.s32 %v702, 128
        %vm704 = vcmp.lt.s32.totalorder %v703, 150
        %v705 = vsel %vm704, %v700, %v28
        %706 = xla_tuple %v705, %v23
        %707 = xla_tuple %706
        %v708 = vmax.f32 %v705, %v23
        %709 = xla_tuple %v708
        %710 = xla_tuple %v708, %v18
        %711 = xla_tuple %710
        %v712 = vmax.f32 %v708, %v18
        %713 = xla_tuple %v712
        %714 = xla_tuple %v712, %v13
        %715 = xla_tuple %714
        %v716 = vmax.f32 %v712, %v13
        %717 = xla_tuple %v716
        %s718 = scalar_lea.vmem [#allocation23], 4
        %v719 = vpack.c.bf16 0.0, %v716
        %s721 = ssub.s32 16, 1
        %722 = vst [vmem:[%s718] sm:%s721] %v719
        %s723 = scalar_lea.vmem %s459, 8
        %s724 = ssub.s32 0, 0
        %p725 = scmp.lt.s32.totalorder %s724, 0
        %s726 = scalar_select %p725, 0, 255
        %s727 = sshrl.u32 %s726, 1
        %s728 = sor.u32 %s726, %s727
        %s729 = sand.u32 %s728, 85
        %s730 = sshrl.u32 %s729, 1
        %s731 = sor.u32 %s729, %s730
        %s732 = sand.u32 51, %s731
        %s733 = sshrl.u32 %s732, 2
        %s734 = sor.u32 %s732, %s733
        %s735 = sand.u32 15, %s734
        %v736 = vld [vmem:[%s723] sm:%s735]
        %v737 = vunpack.c.l.bf16 %v736
        %v738 = vunpack.c.h.bf16 %v736
        %s739 = scalar_lea.vmem %s486, 8
        %s740 = ssub.s32 0, 0
        %p741 = scmp.lt.s32.totalorder %s740, 0
        %s742 = scalar_select %p741, 0, 255
        %s743 = sshrl.u32 %s742, 1
        %s744 = sor.u32 %s742, %s743
        %s745 = sand.u32 %s744, 85
        %s746 = sshrl.u32 %s745, 1
        %s747 = sor.u32 %s745, %s746
        %s748 = sand.u32 51, %s747
        %s749 = sshrl.u32 %s748, 2
        %s750 = sor.u32 %s748, %s749
        %s751 = sand.u32 15, %s750
        %v752 = vld [vmem:[%s739] sm:%s751]
        %v753 = vunpack.c.l.bf16 %v752
        %v754 = vunpack.c.h.bf16 %v752
        %s755 = scalar_lea.vmem %s513, 8
        %s756 = ssub.s32 0, 0
        %p757 = scmp.lt.s32.totalorder %s756, 0
        %s758 = scalar_select %p757, 0, 255
        %s759 = sshrl.u32 %s758, 1
        %s760 = sor.u32 %s758, %s759
        %s761 = sand.u32 %s760, 85
        %s762 = sshrl.u32 %s761, 1
        %s763 = sor.u32 %s761, %s762
        %s764 = sand.u32 51, %s763
        %s765 = sshrl.u32 %s764, 2
        %s766 = sor.u32 %s764, %s765
        %s767 = sand.u32 15, %s766
        %v768 = vld [vmem:[%s755] sm:%s767]
        %v769 = vunpack.c.l.bf16 %v768
        %v770 = vunpack.c.h.bf16 %v768
        %s771 = scalar_lea.vmem %s533, 8
        %s773 = sor.u32 255, 127
        %s774 = sand.u32 %s773, 85
        %s775 = sshrl.u32 %s774, 1
        %s776 = sor.u32 %s774, %s775
        %s777 = sand.u32 51, %s776
        %s778 = sshrl.u32 %s777, 2
        %s779 = sor.u32 %s777, %s778
        %s780 = sand.u32 15, %s779
        %v781 = vld [vmem:[%s771] sm:%s780]
        %v782 = vunpack.c.l.bf16 %v781
        %v783 = vunpack.c.h.bf16 %v781
        %s784 = sadd.s32 %s534, 1
        %s785 = smul.addr %s784, 8
        %v786 = vlaneseq
        %v787 = vshrl.u32 %v786, 7
        %v788 = vstv %s785
        %v789 = vadd.s32 %v787, %v788
        %vm790 = vcmp.lt.s32.totalorder %v789, 50
        %v791 = vsel %vm790, %v782, %v28
        %v792 = vlaneseq
        %v793 = vand.u32 %v792, 127
        %vm795 = vcmp.lt.s32.totalorder %v793, 150
        %v796 = vsel %vm795, %v791, %v28
        %797 = xla_tuple %v796, %v23
        %798 = xla_tuple %797
        %v799 = vmax.f32 %v796, %v23
        %800 = xla_tuple %v799
        %801 = xla_tuple %v799, %v18
        %802 = xla_tuple %801
        %v803 = vmax.f32 %v799, %v18
        %804 = xla_tuple %v803
        %805 = xla_tuple %v803, %v13
        %806 = xla_tuple %805
        %v807 = vmax.f32 %v803, %v13
        %808 = xla_tuple %v807
        %s809 = scalar_lea.vmem [#allocation23], 8
        %v810 = vpack.c.bf16 0.0, %v807
        %s812 = ssub.s32 16, 1
        %813 = vst [vmem:[%s809] sm:%s812] %v810
        %s814 = scalar_lea.vmem %s459, 12
        %s815 = ssub.s32 0, 0
        %p816 = scmp.lt.s32.totalorder %s815, 0
        %s817 = scalar_select %p816, 0, 255
        %s818 = sshrl.u32 %s817, 1
        %s819 = sor.u32 %s817, %s818
        %s820 = sand.u32 %s819, 85
        %s821 = sshrl.u32 %s820, 1
        %s822 = sor.u32 %s820, %s821
        %s823 = sand.u32 51, %s822
        %s824 = sshrl.u32 %s823, 2
        %s825 = sor.u32 %s823, %s824
        %s826 = sand.u32 15, %s825
        %v827 = vld [vmem:[%s814] sm:%s826]
        %v828 = vunpack.c.l.bf16 %v827
        %v829 = vunpack.c.h.bf16 %v827
        %s830 = scalar_lea.vmem %s486, 12
        %s831 = ssub.s32 0, 0
        %p832 = scmp.lt.s32.totalorder %s831, 0
        %s833 = scalar_select %p832, 0, 255
        %s834 = sshrl.u32 %s833, 1
        %s835 = sor.u32 %s833, %s834
        %s836 = sand.u32 %s835, 85
        %s837 = sshrl.u32 %s836, 1
        %s838 = sor.u32 %s836, %s837
        %s839 = sand.u32 51, %s838
        %s840 = sshrl.u32 %s839, 2
        %s841 = sor.u32 %s839, %s840
        %s842 = sand.u32 15, %s841
        %v843 = vld [vmem:[%s830] sm:%s842]
        %v844 = vunpack.c.l.bf16 %v843
        %v845 = vunpack.c.h.bf16 %v843
        %s846 = scalar_lea.vmem %s513, 12
        %s847 = ssub.s32 0, 0
        %p848 = scmp.lt.s32.totalorder %s847, 0
        %s849 = scalar_select %p848, 0, 255
        %s850 = sshrl.u32 %s849, 1
        %s851 = sor.u32 %s849, %s850
        %s852 = sand.u32 %s851, 85
        %s853 = sshrl.u32 %s852, 1
        %s854 = sor.u32 %s852, %s853
        %s855 = sand.u32 51, %s854
        %s856 = sshrl.u32 %s855, 2
        %s857 = sor.u32 %s855, %s856
        %s858 = sand.u32 15, %s857
        %v859 = vld [vmem:[%s846] sm:%s858]
        %v860 = vunpack.c.l.bf16 %v859
        %v861 = vunpack.c.h.bf16 %v859
        %s862 = scalar_lea.vmem %s533, 12
        %s864 = sor.u32 255, 127
        %s865 = sand.u32 %s864, 85
        %s866 = sshrl.u32 %s865, 1
        %s867 = sor.u32 %s865, %s866
        %s868 = sand.u32 51, %s867
        %s869 = sshrl.u32 %s868, 2
        %s870 = sor.u32 %s868, %s869
        %s871 = sand.u32 15, %s870
        %v872 = vld [vmem:[%s862] sm:%s871]
        %v873 = vunpack.c.l.bf16 %v872
        %v874 = vunpack.c.h.bf16 %v872
        %s875 = sadd.s32 %s534, 1
        %s876 = smul.addr %s875, 8
        %v877 = vlaneseq
        %v878 = vshrl.u32 %v877, 7
        %v879 = vstv %s876
        %v880 = vadd.s32 %v878, %v879
        %vm881 = vcmp.lt.s32.totalorder %v880, 50
        %v882 = vsel %vm881, %v873, %v28
        %v883 = vlaneseq
        %v884 = vand.u32 %v883, 127
        %v885 = vadd.s32 %v884, 128
        %vm886 = vcmp.lt.s32.totalorder %v885, 150
        %v887 = vsel %vm886, %v882, %v28
        %888 = xla_tuple %v887, %v23
        %889 = xla_tuple %888
        %v890 = vmax.f32 %v887, %v23
        %891 = xla_tuple %v890
        %892 = xla_tuple %v890, %v18
        %893 = xla_tuple %892
        %v894 = vmax.f32 %v890, %v18
        %895 = xla_tuple %v894
        %896 = xla_tuple %v894, %v13
        %897 = xla_tuple %896
        %v898 = vmax.f32 %v894, %v13
        %899 = xla_tuple %v898
        %s900 = scalar_lea.vmem [#allocation23], 12
        %v901 = vpack.c.bf16 0.0, %v898
        %s903 = ssub.s32 16, 1
        %904 = vst [vmem:[%s900] sm:%s903] %v901
        %s905 = scalar_lea.vmem %s459, 16
        %s906 = ssub.s32 0, 0
        %p907 = scmp.lt.s32.totalorder %s906, 0
        %s908 = scalar_select %p907, 0, 255
        %s909 = sshrl.u32 %s908, 1
        %s910 = sor.u32 %s908, %s909
        %s911 = sand.u32 %s910, 85
        %s912 = sshrl.u32 %s911, 1
        %s913 = sor.u32 %s911, %s912
        %s914 = sand.u32 51, %s913
        %s915 = sshrl.u32 %s914, 2
        %s916 = sor.u32 %s914, %s915
        %s917 = sand.u32 15, %s916
        %v918 = vld [vmem:[%s905] sm:%s917]
        %v919 = vunpack.c.l.bf16 %v918
        %v920 = vunpack.c.h.bf16 %v918
        %s921 = scalar_lea.vmem %s486, 16
        %s922 = ssub.s32 0, 0
        %p923 = scmp.lt.s32.totalorder %s922, 0
        %s924 = scalar_select %p923, 0, 255
        %s925 = sshrl.u32 %s924, 1
        %s926 = sor.u32 %s924, %s925
        %s927 = sand.u32 %s926, 85
        %s928 = sshrl.u32 %s927, 1
        %s929 = sor.u32 %s927, %s928
        %s930 = sand.u32 51, %s929
        %s931 = sshrl.u32 %s930, 2
        %s932 = sor.u32 %s930, %s931
        %s933 = sand.u32 15, %s932
        %v934 = vld [vmem:[%s921] sm:%s933]
        %v935 = vunpack.c.l.bf16 %v934
        %v936 = vunpack.c.h.bf16 %v934
        %s937 = scalar_lea.vmem %s513, 16
        %s938 = ssub.s32 0, 0
        %p939 = scmp.lt.s32.totalorder %s938, 0
        %s940 = scalar_select %p939, 0, 255
        %s941 = sshrl.u32 %s940, 1
        %s942 = sor.u32 %s940, %s941
        %s943 = sand.u32 %s942, 85
        %s944 = sshrl.u32 %s943, 1
        %s945 = sor.u32 %s943, %s944
        %s946 = sand.u32 51, %s945
        %s947 = sshrl.u32 %s946, 2
        %s948 = sor.u32 %s946, %s947
        %s949 = sand.u32 15, %s948
        %v950 = vld [vmem:[%s937] sm:%s949]
        %v951 = vunpack.c.l.bf16 %v950
        %v952 = vunpack.c.h.bf16 %v950
        %s953 = scalar_lea.vmem %s533, 16
        %s955 = sor.u32 255, 127
        %s956 = sand.u32 %s955, 85
        %s957 = sshrl.u32 %s956, 1
        %s958 = sor.u32 %s956, %s957
        %s959 = sand.u32 51, %s958
        %s960 = sshrl.u32 %s959, 2
        %s961 = sor.u32 %s959, %s960
        %s962 = sand.u32 15, %s961
        %v963 = vld [vmem:[%s953] sm:%s962]
        %v964 = vunpack.c.l.bf16 %v963
        %v965 = vunpack.c.h.bf16 %v963
        %s966 = sadd.s32 %s534, 2
        %s967 = smul.addr %s966, 8
        %v968 = vlaneseq
        %v969 = vshrl.u32 %v968, 7
        %v970 = vstv %s967
        %v971 = vadd.s32 %v969, %v970
        %vm972 = vcmp.lt.s32.totalorder %v971, 50
        %v973 = vsel %vm972, %v964, %v28
        %v974 = vlaneseq
        %v975 = vand.u32 %v974, 127
        %vm977 = vcmp.lt.s32.totalorder %v975, 150
        %v978 = vsel %vm977, %v973, %v28
        %979 = xla_tuple %v978, %v23
        %980 = xla_tuple %979
        %v981 = vmax.f32 %v978, %v23
        %982 = xla_tuple %v981
        %983 = xla_tuple %v981, %v18
        %984 = xla_tuple %983
        %v985 = vmax.f32 %v981, %v18
        %986 = xla_tuple %v985
        %987 = xla_tuple %v985, %v13
        %988 = xla_tuple %987
        %v989 = vmax.f32 %v985, %v13
        %990 = xla_tuple %v989
        %s991 = scalar_lea.vmem [#allocation23], 16
        %v992 = vpack.c.bf16 0.0, %v989
        %s994 = ssub.s32 16, 1
        %995 = vst [vmem:[%s991] sm:%s994] %v992
        %s996 = scalar_lea.vmem %s459, 20
        %s997 = ssub.s32 0, 0
        %p998 = scmp.lt.s32.totalorder %s997, 0
        %s999 = scalar_select %p998, 0, 255
        %s1000 = sshrl.u32 %s999, 1
        %s1001 = sor.u32 %s999, %s1000
        %s1002 = sand.u32 %s1001, 85
        %s1003 = sshrl.u32 %s1002, 1
        %s1004 = sor.u32 %s1002, %s1003
        %s1005 = sand.u32 51, %s1004
        %s1006 = sshrl.u32 %s1005, 2
        %s1007 = sor.u32 %s1005, %s1006
        %s1008 = sand.u32 15, %s1007
        %v1009 = vld [vmem:[%s996] sm:%s1008]
        %v1010 = vunpack.c.l.bf16 %v1009
        %v1011 = vunpack.c.h.bf16 %v1009
        %s1012 = scalar_lea.vmem %s486, 20
        %s1013 = ssub.s32 0, 0
        %p1014 = scmp.lt.s32.totalorder %s1013, 0
        %s1015 = scalar_select %p1014, 0, 255
        %s1016 = sshrl.u32 %s1015, 1
        %s1017 = sor.u32 %s1015, %s1016
        %s1018 = sand.u32 %s1017, 85
        %s1019 = sshrl.u32 %s1018, 1
        %s1020 = sor.u32 %s1018, %s1019
        %s1021 = sand.u32 51, %s1020
        %s1022 = sshrl.u32 %s1021, 2
        %s1023 = sor.u32 %s1021, %s1022
        %s1024 = sand.u32 15, %s1023
        %v1025 = vld [vmem:[%s1012] sm:%s1024]
        %v1026 = vunpack.c.l.bf16 %v1025
        %v1027 = vunpack.c.h.bf16 %v1025
        %s1028 = scalar_lea.vmem %s513, 20
        %s1029 = ssub.s32 0, 0
        %p1030 = scmp.lt.s32.totalorder %s1029, 0
        %s1031 = scalar_select %p1030, 0, 255
        %s1032 = sshrl.u32 %s1031, 1
        %s1033 = sor.u32 %s1031, %s1032
        %s1034 = sand.u32 %s1033, 85
        %s1035 = sshrl.u32 %s1034, 1
        %s1036 = sor.u32 %s1034, %s1035
        %s1037 = sand.u32 51, %s1036
        %s1038 = sshrl.u32 %s1037, 2
        %s1039 = sor.u32 %s1037, %s1038
        %s1040 = sand.u32 15, %s1039
        %v1041 = vld [vmem:[%s1028] sm:%s1040]
        %v1042 = vunpack.c.l.bf16 %v1041
        %v1043 = vunpack.c.h.bf16 %v1041
        %s1044 = scalar_lea.vmem %s533, 20
        %s1046 = sor.u32 255, 127
        %s1047 = sand.u32 %s1046, 85
        %s1048 = sshrl.u32 %s1047, 1
        %s1049 = sor.u32 %s1047, %s1048
        %s1050 = sand.u32 51, %s1049
        %s1051 = sshrl.u32 %s1050, 2
        %s1052 = sor.u32 %s1050, %s1051
        %s1053 = sand.u32 15, %s1052
        %v1054 = vld [vmem:[%s1044] sm:%s1053]
        %v1055 = vunpack.c.l.bf16 %v1054
        %v1056 = vunpack.c.h.bf16 %v1054
        %s1057 = sadd.s32 %s534, 2
        %s1058 = smul.addr %s1057, 8
        %v1059 = vlaneseq
        %v1060 = vshrl.u32 %v1059, 7
        %v1061 = vstv %s1058
        %v1062 = vadd.s32 %v1060, %v1061
        %vm1063 = vcmp.lt.s32.totalorder %v1062, 50
        %v1064 = vsel %vm1063, %v1055, %v28
        %v1065 = vlaneseq
        %v1066 = vand.u32 %v1065, 127
        %v1067 = vadd.s32 %v1066, 128
        %vm1068 = vcmp.lt.s32.totalorder %v1067, 150
        %v1069 = vsel %vm1068, %v1064, %v28
        %1070 = xla_tuple %v1069, %v23
        %1071 = xla_tuple %1070
        %v1072 = vmax.f32 %v1069, %v23
        %1073 = xla_tuple %v1072
        %1074 = xla_tuple %v1072, %v18
        %1075 = xla_tuple %1074
        %v1076 = vmax.f32 %v1072, %v18
        %1077 = xla_tuple %v1076
        %1078 = xla_tuple %v1076, %v13
        %1079 = xla_tuple %1078
        %v1080 = vmax.f32 %v1076, %v13
        %1081 = xla_tuple %v1080
        %s1082 = scalar_lea.vmem [#allocation23], 20
        %v1083 = vpack.c.bf16 0.0, %v1080
        %s1085 = ssub.s32 16, 1
        %1086 = vst [vmem:[%s1082] sm:%s1085] %v1083
        %s1087 = scalar_lea.vmem %s459, 24
        %s1088 = sadd.s32 %s461, 3
        %s1089 = ssub.s32 0, 0
        %s1090 = ssub.s32 6, %s1088
        %s1091 = sor.u32 %s1089, %s1090
        %p1092 = scmp.lt.s32.totalorder %s1091, 0
        %s1093 = scalar_select %p1092, 0, 255
        %s1094 = sshrl.u32 %s1093, 1
        %s1095 = sor.u32 %s1093, %s1094
        %s1096 = sand.u32 %s1095, 85
        %s1097 = sshrl.u32 %s1096, 1
        %s1098 = sor.u32 %s1096, %s1097
        %s1099 = sand.u32 51, %s1098
        %s1100 = sshrl.u32 %s1099, 2
        %s1101 = sor.u32 %s1099, %s1100
        %s1102 = sand.u32 15, %s1101
        %v1103 = vld [vmem:[%s1087] sm:%s1102]
        %v1104 = vunpack.c.l.bf16 %v1103
        %v1105 = vunpack.c.h.bf16 %v1103
        %s1106 = sadd.s32 %s560, 3
        %s1107 = ssub.s32 6, %s1106
        %s1108 = sor.u32 4294967293, %s1107
        %v1109 = vstv %s1108
        %vm1110 = vcmp.lt.s32.totalorder %v1109, 0
        %v1111 = vsel %vm1110, %v13, %v1104
        %s1112 = sadd.s32 %s560, 3
        %s1113 = smul.addr %s1112, 8
        %v1114 = vlaneseq
        %v1115 = vshrl.u32 %v1114, 7
        %v1116 = vstv %s1113
        %v1117 = vadd.s32 %v1115, %v1116
        %vm1118 = vcmp.lt.s32.totalorder %v1117, 50
        %v1119 = vsel %vm1118, %v1111, %v13
        %v1120 = vlaneseq
        %v1121 = vand.u32 %v1120, 127
        %vm1123 = vcmp.lt.s32.totalorder %v1121, 150
        %v1124 = vsel %vm1123, %v1119, %v13
        %s1125 = scalar_lea.vmem %s486, 24
        %s1126 = sadd.s32 %s488, 3
        %s1127 = ssub.s32 0, 0
        %s1128 = ssub.s32 6, %s1126
        %s1129 = sor.u32 %s1127, %s1128
        %p1130 = scmp.lt.s32.totalorder %s1129, 0
        %s1131 = scalar_select %p1130, 0, 255
        %s1132 = sshrl.u32 %s1131, 1
        %s1133 = sor.u32 %s1131, %s1132
        %s1134 = sand.u32 %s1133, 85
        %s1135 = sshrl.u32 %s1134, 1
        %s1136 = sor.u32 %s1134, %s1135
        %s1137 = sand.u32 51, %s1136
        %s1138 = sshrl.u32 %s1137, 2
        %s1139 = sor.u32 %s1137, %s1138
        %s1140 = sand.u32 15, %s1139
        %v1141 = vld [vmem:[%s1125] sm:%s1140]
        %v1142 = vunpack.c.l.bf16 %v1141
        %v1143 = vunpack.c.h.bf16 %v1141
        %s1144 = sadd.s32 %s576, 3
        %s1145 = ssub.s32 6, %s1144
        %s1146 = sor.u32 4294967294, %s1145
        %v1147 = vstv %s1146
        %vm1148 = vcmp.lt.s32.totalorder %v1147, 0
        %v1149 = vsel %vm1148, %v18, %v1142
        %s1150 = sadd.s32 %s576, 3
        %s1151 = smul.addr %s1150, 8
        %v1152 = vlaneseq
        %v1153 = vshrl.u32 %v1152, 7
        %v1154 = vstv %s1151
        %v1155 = vadd.s32 %v1153, %v1154
        %vm1156 = vcmp.lt.s32.totalorder %v1155, 50
        %v1157 = vsel %vm1156, %v1149, %v18
        %v1158 = vlaneseq
        %v1159 = vand.u32 %v1158, 127
        %vm1161 = vcmp.lt.s32.totalorder %v1159, 150
        %v1162 = vsel %vm1161, %v1157, %v18
        %s1163 = scalar_lea.vmem %s513, 24
        %s1164 = sadd.s32 %s515, 3
        %s1165 = ssub.s32 0, 0
        %s1166 = ssub.s32 6, %s1164
        %s1167 = sor.u32 %s1165, %s1166
        %p1168 = scmp.lt.s32.totalorder %s1167, 0
        %s1169 = scalar_select %p1168, 0, 255
        %s1170 = sshrl.u32 %s1169, 1
        %s1171 = sor.u32 %s1169, %s1170
        %s1172 = sand.u32 %s1171, 85
        %s1173 = sshrl.u32 %s1172, 1
        %s1174 = sor.u32 %s1172, %s1173
        %s1175 = sand.u32 51, %s1174
        %s1176 = sshrl.u32 %s1175, 2
        %s1177 = sor.u32 %s1175, %s1176
        %s1178 = sand.u32 15, %s1177
        %v1179 = vld [vmem:[%s1163] sm:%s1178]
        %v1180 = vunpack.c.l.bf16 %v1179
        %v1181 = vunpack.c.h.bf16 %v1179
        %s1182 = sadd.s32 %s592, 3
        %s1183 = ssub.s32 6, %s1182
        %s1184 = scalar_lea.vmem %s533, 24
        %s1185 = sadd.s32 %s534, 3
        %s1186 = ssub.s32 6, %s1185
        %p1187 = scmp.lt.s32.totalorder %s1186, 0
        %s1188 = scalar_select %p1187, 0, 255
        %s1189 = sshrl.u32 %s1188, 1
        %s1190 = sor.u32 %s1188, %s1189
        %s1191 = sand.u32 %s1190, 85
        %s1192 = sshrl.u32 %s1191, 1
        %s1193 = sor.u32 %s1191, %s1192
        %s1194 = sand.u32 51, %s1193
        %s1195 = sshrl.u32 %s1194, 2
        %s1196 = sor.u32 %s1194, %s1195
        %s1197 = sand.u32 15, %s1196
        %v1198 = vld [vmem:[%s1184] sm:%s1197]
        %v1199 = vunpack.c.l.bf16 %v1198
        %v1200 = vunpack.c.h.bf16 %v1198
        %s1201 = sadd.s32 %s534, 3
        %s1202 = ssub.s32 6, %s1201
        %v1203 = vstv %s1202
        %vm1204 = vcmp.lt.s32.totalorder %v1203, 0
        %v1205 = vsel %vm1204, %v28, %v1199
        %s1206 = sadd.s32 %s534, 3
        %s1207 = smul.addr %s1206, 8
        %v1208 = vlaneseq
        %v1209 = vshrl.u32 %v1208, 7
        %v1210 = vstv %s1207
        %v1211 = vadd.s32 %v1209, %v1210
        %vm1212 = vcmp.lt.s32.totalorder %v1211, 50
        %v1213 = vsel %vm1212, %v1205, %v28
        %v1214 = vlaneseq
        %v1215 = vand.u32 %v1214, 127
        %vm1217 = vcmp.lt.s32.totalorder %v1215, 150
        %v1218 = vsel %vm1217, %v1213, %v28
        %1219 = xla_tuple %v1218, %v23
        %1220 = xla_tuple %1219
        %v1221 = vmax.f32 %v1218, %v23
        %1222 = xla_tuple %v1221
        %1223 = xla_tuple %v1221, %v1162
        %1224 = xla_tuple %1223
        %v1225 = vmax.f32 %v1221, %v1162
        %1226 = xla_tuple %v1225
        %1227 = xla_tuple %v1225, %v1124
        %1228 = xla_tuple %1227
        %v1229 = vmax.f32 %v1225, %v1124
        %1230 = xla_tuple %v1229
        %s1231 = scalar_lea.vmem [#allocation23], 24
        %v1232 = vpack.c.bf16 0.0, %v1229
        %s1234 = ssub.s32 16, 1
        %1235 = vst [vmem:[%s1231] sm:%s1234] %v1232
        %s1236 = scalar_lea.vmem %s459, 28
        %s1237 = sadd.s32 %s461, 3
        %s1238 = ssub.s32 0, 0
        %s1239 = ssub.s32 6, %s1237
        %s1240 = sor.u32 %s1238, %s1239
        %p1241 = scmp.lt.s32.totalorder %s1240, 0
        %s1242 = scalar_select %p1241, 0, 255
        %s1243 = sshrl.u32 %s1242, 1
        %s1244 = sor.u32 %s1242, %s1243
        %s1245 = sand.u32 %s1244, 85
        %s1246 = sshrl.u32 %s1245, 1
        %s1247 = sor.u32 %s1245, %s1246
        %s1248 = sand.u32 51, %s1247
        %s1249 = sshrl.u32 %s1248, 2
        %s1250 = sor.u32 %s1248, %s1249
        %s1251 = sand.u32 15, %s1250
        %v1252 = vld [vmem:[%s1236] sm:%s1251]
        %v1253 = vunpack.c.l.bf16 %v1252
        %v1254 = vunpack.c.h.bf16 %v1252
        %s1255 = sadd.s32 %s560, 3
        %s1256 = ssub.s32 6, %s1255
        %s1257 = sor.u32 4294967293, %s1256
        %v1258 = vstv %s1257
        %vm1259 = vcmp.lt.s32.totalorder %v1258, 0
        %v1260 = vsel %vm1259, %v13, %v1253
        %s1261 = sadd.s32 %s560, 3
        %s1262 = smul.addr %s1261, 8
        %v1263 = vlaneseq
        %v1264 = vshrl.u32 %v1263, 7
        %v1265 = vstv %s1262
        %v1266 = vadd.s32 %v1264, %v1265
        %vm1267 = vcmp.lt.s32.totalorder %v1266, 50
        %v1268 = vsel %vm1267, %v1260, %v13
        %v1269 = vlaneseq
        %v1270 = vand.u32 %v1269, 127
        %v1271 = vadd.s32 %v1270, 128
        %vm1272 = vcmp.lt.s32.totalorder %v1271, 150
        %v1273 = vsel %vm1272, %v1268, %v13
        %s1274 = scalar_lea.vmem %s486, 28
        %s1275 = sadd.s32 %s488, 3
        %s1276 = ssub.s32 0, 0
        %s1277 = ssub.s32 6, %s1275
        %s1278 = sor.u32 %s1276, %s1277
        %p1279 = scmp.lt.s32.totalorder %s1278, 0
        %s1280 = scalar_select %p1279, 0, 255
        %s1281 = sshrl.u32 %s1280, 1
        %s1282 = sor.u32 %s1280, %s1281
        %s1283 = sand.u32 %s1282, 85
        %s1284 = sshrl.u32 %s1283, 1
        %s1285 = sor.u32 %s1283, %s1284
        %s1286 = sand.u32 51, %s1285
        %s1287 = sshrl.u32 %s1286, 2
        %s1288 = sor.u32 %s1286, %s1287
        %s1289 = sand.u32 15, %s1288
        %v1290 = vld [vmem:[%s1274] sm:%s1289]
        %v1291 = vunpack.c.l.bf16 %v1290
        %v1292 = vunpack.c.h.bf16 %v1290
        %s1293 = sadd.s32 %s576, 3
        %s1294 = ssub.s32 6, %s1293
        %s1295 = sor.u32 4294967294, %s1294
        %v1296 = vstv %s1295
        %vm1297 = vcmp.lt.s32.totalorder %v1296, 0
        %v1298 = vsel %vm1297, %v18, %v1291
        %s1299 = sadd.s32 %s576, 3
        %s1300 = smul.addr %s1299, 8
        %v1301 = vlaneseq
        %v1302 = vshrl.u32 %v1301, 7
        %v1303 = vstv %s1300
        %v1304 = vadd.s32 %v1302, %v1303
        %vm1305 = vcmp.lt.s32.totalorder %v1304, 50
        %v1306 = vsel %vm1305, %v1298, %v18
        %v1307 = vlaneseq
        %v1308 = vand.u32 %v1307, 127
        %v1309 = vadd.s32 %v1308, 128
        %vm1310 = vcmp.lt.s32.totalorder %v1309, 150
        %v1311 = vsel %vm1310, %v1306, %v18
        %s1312 = scalar_lea.vmem %s513, 28
        %s1313 = sadd.s32 %s515, 3
        %s1314 = ssub.s32 0, 0
        %s1315 = ssub.s32 6, %s1313
        %s1316 = sor.u32 %s1314, %s1315
        %p1317 = scmp.lt.s32.totalorder %s1316, 0
        %s1318 = scalar_select %p1317, 0, 255
        %s1319 = sshrl.u32 %s1318, 1
        %s1320 = sor.u32 %s1318, %s1319
        %s1321 = sand.u32 %s1320, 85
        %s1322 = sshrl.u32 %s1321, 1
        %s1323 = sor.u32 %s1321, %s1322
        %s1324 = sand.u32 51, %s1323
        %s1325 = sshrl.u32 %s1324, 2
        %s1326 = sor.u32 %s1324, %s1325
        %s1327 = sand.u32 15, %s1326
        %v1328 = vld [vmem:[%s1312] sm:%s1327]
        %v1329 = vunpack.c.l.bf16 %v1328
        %v1330 = vunpack.c.h.bf16 %v1328
        %s1331 = sadd.s32 %s592, 3
        %s1332 = ssub.s32 6, %s1331
        %s1333 = scalar_lea.vmem %s533, 28
        %s1334 = sadd.s32 %s534, 3
        %s1335 = ssub.s32 6, %s1334
        %p1336 = scmp.lt.s32.totalorder %s1335, 0
        %s1337 = scalar_select %p1336, 0, 255
        %s1338 = sshrl.u32 %s1337, 1
        %s1339 = sor.u32 %s1337, %s1338
        %s1340 = sand.u32 %s1339, 85
        %s1341 = sshrl.u32 %s1340, 1
        %s1342 = sor.u32 %s1340, %s1341
        %s1343 = sand.u32 51, %s1342
        %s1344 = sshrl.u32 %s1343, 2
        %s1345 = sor.u32 %s1343, %s1344
        %s1346 = sand.u32 15, %s1345
        %v1347 = vld [vmem:[%s1333] sm:%s1346]
        %v1348 = vunpack.c.l.bf16 %v1347
        %v1349 = vunpack.c.h.bf16 %v1347
        %s1350 = sadd.s32 %s534, 3
        %s1351 = ssub.s32 6, %s1350
        %v1352 = vstv %s1351
        %vm1353 = vcmp.lt.s32.totalorder %v1352, 0
        %v1354 = vsel %vm1353, %v28, %v1348
        %s1355 = sadd.s32 %s534, 3
        %s1356 = smul.addr %s1355, 8
        %v1357 = vlaneseq
        %v1358 = vshrl.u32 %v1357, 7
        %v1359 = vstv %s1356
        %v1360 = vadd.s32 %v1358, %v1359
        %vm1361 = vcmp.lt.s32.totalorder %v1360, 50
        %v1362 = vsel %vm1361, %v1354, %v28
        %v1363 = vlaneseq
        %v1364 = vand.u32 %v1363, 127
        %v1365 = vadd.s32 %v1364, 128
        %vm1366 = vcmp.lt.s32.totalorder %v1365, 150
        %v1367 = vsel %vm1366, %v1362, %v28
        %1368 = xla_tuple %v1367, %v23
        %1369 = xla_tuple %1368
        %v1370 = vmax.f32 %v1367, %v23
        %1371 = xla_tuple %v1370
        %1372 = xla_tuple %v1370, %v1311
        %1373 = xla_tuple %1372
        %v1374 = vmax.f32 %v1370, %v1311
        %1375 = xla_tuple %v1374
        %1376 = xla_tuple %v1374, %v1273
        %1377 = xla_tuple %1376
        %v1378 = vmax.f32 %v1374, %v1273
        %1379 = xla_tuple %v1378
        %s1380 = scalar_lea.vmem [#allocation23], 28
        %v1381 = vpack.c.bf16 0.0, %v1378
        %s1383 = ssub.s32 16, 1
        %1384 = vst [vmem:[%s1380] sm:%s1383] %v1381
        %s1385 = smul.addr %s592, 8
        %v1386 = vlaneseq
        %v1387 = vshrl.u32 %v1386, 7
        %v1388 = vstv %s1385
        %v1389 = vadd.s32 %v1387, %v1388
        %vm1390 = vcmp.lt.s32.totalorder %v1389, 50
        %v1391 = vsel %vm1390, %v590, %v23
        %v1392 = vlaneseq
        %v1393 = vand.u32 %v1392, 127
        %vm1395 = vcmp.lt.s32.totalorder %v1393, 150
        %v1396 = vsel %vm1395, %v1391, %v23
        %1397 = xla_tuple %v28, %v1396
        %1398 = xla_tuple %1397
        %v1399 = vmax.f32 %v28, %v1396
        %1400 = xla_tuple %v1399
        %1401 = xla_tuple %v1399, %v18
        %1402 = xla_tuple %1401
        %v1403 = vmax.f32 %v1399, %v18
        %1404 = xla_tuple %v1403
        %1405 = xla_tuple %v1403, %v13
        %1406 = xla_tuple %1405
        %v1407 = vmax.f32 %v1403, %v13
        %1408 = xla_tuple %v1407
        %s1409 = scalar_lea.vmem [#allocation23], 32
        %v1410 = vpack.c.bf16 0.0, %v1407
        %s1412 = ssub.s32 16, 1
        %1413 = vst [vmem:[%s1409] sm:%s1412] %v1410
        %s1414 = scalar_lea.vmem %s459, 4
        %s1415 = scalar_lea.vmem %s486, 4
        %s1416 = scalar_lea.vmem %s513, 4
        %s1417 = smul.addr %s592, 8
        %v1418 = vlaneseq
        %v1419 = vshrl.u32 %v1418, 7
        %v1420 = vstv %s1417
        %v1421 = vadd.s32 %v1419, %v1420
        %vm1422 = vcmp.lt.s32.totalorder %v1421, 50
        %v1423 = vsel %vm1422, %v679, %v23
        %v1424 = vlaneseq
        %v1425 = vand.u32 %v1424, 127
        %v1426 = vadd.s32 %v1425, 128
        %vm1427 = vcmp.lt.s32.totalorder %v1426, 150
        %v1428 = vsel %vm1427, %v1423, %v23
        %1429 = xla_tuple %v28, %v1428
        %1430 = xla_tuple %1429
        %v1431 = vmax.f32 %v28, %v1428
        %1432 = xla_tuple %v1431
        %1433 = xla_tuple %v1431, %v18
        %1434 = xla_tuple %1433
        %v1435 = vmax.f32 %v1431, %v18
        %1436 = xla_tuple %v1435
        %1437 = xla_tuple %v1435, %v13
        %1438 = xla_tuple %1437
        %v1439 = vmax.f32 %v1435, %v13
        %1440 = xla_tuple %v1439
        %s1441 = scalar_lea.vmem [#allocation23], 36
        %v1442 = vpack.c.bf16 0.0, %v1439
        %s1444 = ssub.s32 16, 1
        %1445 = vst [vmem:[%s1441] sm:%s1444] %v1442
        %s1446 = scalar_lea.vmem %s459, 8
        %s1447 = scalar_lea.vmem %s486, 8
        %s1448 = scalar_lea.vmem %s513, 8
        %s1449 = sadd.s32 %s592, 1
        %s1450 = smul.addr %s1449, 8
        %v1451 = vlaneseq
        %v1452 = vshrl.u32 %v1451, 7
        %v1453 = vstv %s1450
        %v1454 = vadd.s32 %v1452, %v1453
        %vm1455 = vcmp.lt.s32.totalorder %v1454, 50
        %v1456 = vsel %vm1455, %v769, %v23
        %v1457 = vlaneseq
        %v1458 = vand.u32 %v1457, 127
        %vm1460 = vcmp.lt.s32.totalorder %v1458, 150
        %v1461 = vsel %vm1460, %v1456, %v23
        %1462 = xla_tuple %v28, %v1461
        %1463 = xla_tuple %1462
        %v1464 = vmax.f32 %v28, %v1461
        %1465 = xla_tuple %v1464
        %1466 = xla_tuple %v1464, %v18
        %1467 = xla_tuple %1466
        %v1468 = vmax.f32 %v1464, %v18
        %1469 = xla_tuple %v1468
        %1470 = xla_tuple %v1468, %v13
        %1471 = xla_tuple %1470
        %v1472 = vmax.f32 %v1468, %v13
        %1473 = xla_tuple %v1472
        %s1474 = scalar_lea.vmem [#allocation23], 40
        %v1475 = vpack.c.bf16 0.0, %v1472
        %s1477 = ssub.s32 16, 1
        %1478 = vst [vmem:[%s1474] sm:%s1477] %v1475
        %s1479 = scalar_lea.vmem %s459, 12
        %s1480 = scalar_lea.vmem %s486, 12
        %s1481 = scalar_lea.vmem %s513, 12
        %s1482 = sadd.s32 %s592, 1
        %s1483 = smul.addr %s1482, 8
        %v1484 = vlaneseq
        %v1485 = vshrl.u32 %v1484, 7
        %v1486 = vstv %s1483
        %v1487 = vadd.s32 %v1485, %v1486
        %vm1488 = vcmp.lt.s32.totalorder %v1487, 50
        %v1489 = vsel %vm1488, %v860, %v23
        %v1490 = vlaneseq
        %v1491 = vand.u32 %v1490, 127
        %v1492 = vadd.s32 %v1491, 128
        %vm1493 = vcmp.lt.s32.totalorder %v1492, 150
        %v1494 = vsel %vm1493, %v1489, %v23
        %1495 = xla_tuple %v28, %v1494
        %1496 = xla_tuple %1495
        %v1497 = vmax.f32 %v28, %v1494
        %1498 = xla_tuple %v1497
        %1499 = xla_tuple %v1497, %v18
        %1500 = xla_tuple %1499
        %v1501 = vmax.f32 %v1497, %v18
        %1502 = xla_tuple %v1501
        %1503 = xla_tuple %v1501, %v13
        %1504 = xla_tuple %1503
        %v1505 = vmax.f32 %v1501, %v13
        %1506 = xla_tuple %v1505
        %s1507 = scalar_lea.vmem [#allocation23], 44
        %v1508 = vpack.c.bf16 0.0, %v1505
        %s1510 = ssub.s32 16, 1
        %1511 = vst [vmem:[%s1507] sm:%s1510] %v1508
        %s1512 = scalar_lea.vmem %s459, 16
        %s1513 = scalar_lea.vmem %s486, 16
        %s1514 = scalar_lea.vmem %s513, 16
        %s1515 = sadd.s32 %s592, 2
        %s1516 = smul.addr %s1515, 8
        %v1517 = vlaneseq
        %v1518 = vshrl.u32 %v1517, 7
        %v1519 = vstv %s1516
        %v1520 = vadd.s32 %v1518, %v1519
        %vm1521 = vcmp.lt.s32.totalorder %v1520, 50
        %v1522 = vsel %vm1521, %v951, %v23
        %v1523 = vlaneseq
        %v1524 = vand.u32 %v1523, 127
        %vm1526 = vcmp.lt.s32.totalorder %v1524, 150
        %v1527 = vsel %vm1526, %v1522, %v23
        %1528 = xla_tuple %v28, %v1527
        %1529 = xla_tuple %1528
        %v1530 = vmax.f32 %v28, %v1527
        %1531 = xla_tuple %v1530
        %1532 = xla_tuple %v1530, %v18
        %1533 = xla_tuple %1532
        %v1534 = vmax.f32 %v1530, %v18
        %1535 = xla_tuple %v1534
        %1536 = xla_tuple %v1534, %v13
        %1537 = xla_tuple %1536
        %v1538 = vmax.f32 %v1534, %v13
        %1539 = xla_tuple %v1538
        %s1540 = scalar_lea.vmem [#allocation23], 48
        %v1541 = vpack.c.bf16 0.0, %v1538
        %s1543 = ssub.s32 16, 1
        %1544 = vst [vmem:[%s1540] sm:%s1543] %v1541
        %s1545 = scalar_lea.vmem %s459, 20
        %s1546 = scalar_lea.vmem %s486, 20
        %s1547 = scalar_lea.vmem %s513, 20
        %s1548 = sadd.s32 %s592, 2
        %s1549 = smul.addr %s1548, 8
        %v1550 = vlaneseq
        %v1551 = vshrl.u32 %v1550, 7
        %v1552 = vstv %s1549
        %v1553 = vadd.s32 %v1551, %v1552
        %vm1554 = vcmp.lt.s32.totalorder %v1553, 50
        %v1555 = vsel %vm1554, %v1042, %v23
        %v1556 = vlaneseq
        %v1557 = vand.u32 %v1556, 127
        %v1558 = vadd.s32 %v1557, 128
        %vm1559 = vcmp.lt.s32.totalorder %v1558, 150
        %v1560 = vsel %vm1559, %v1555, %v23
        %1561 = xla_tuple %v28, %v1560
        %1562 = xla_tuple %1561
        %v1563 = vmax.f32 %v28, %v1560
        %1564 = xla_tuple %v1563
        %1565 = xla_tuple %v1563, %v18
        %1566 = xla_tuple %1565
        %v1567 = vmax.f32 %v1563, %v18
        %1568 = xla_tuple %v1567
        %1569 = xla_tuple %v1567, %v13
        %1570 = xla_tuple %1569
        %v1571 = vmax.f32 %v1567, %v13
        %1572 = xla_tuple %v1571
        %s1573 = scalar_lea.vmem [#allocation23], 52
        %v1574 = vpack.c.bf16 0.0, %v1571
        %s1576 = ssub.s32 16, 1
        %1577 = vst [vmem:[%s1573] sm:%s1576] %v1574
        %s1578 = scalar_lea.vmem %s459, 24
        %s1579 = sadd.s32 %s560, 3
        %s1580 = ssub.s32 6, %s1579
        %s1581 = sor.u32 4294967294, %s1580
        %v1582 = vstv %s1581
        %vm1583 = vcmp.lt.s32.totalorder %v1582, 0
        %v1584 = vsel %vm1583, %v13, %v1104
        %s1585 = sadd.s32 %s560, 3
        %s1586 = smul.addr %s1585, 8
        %v1587 = vlaneseq
        %v1588 = vshrl.u32 %v1587, 7
        %v1589 = vstv %s1586
        %v1590 = vadd.s32 %v1588, %v1589
        %vm1591 = vcmp.lt.s32.totalorder %v1590, 50
        %v1592 = vsel %vm1591, %v1584, %v13
        %v1593 = vlaneseq
        %v1594 = vand.u32 %v1593, 127
        %vm1596 = vcmp.lt.s32.totalorder %v1594, 150
        %v1597 = vsel %vm1596, %v1592, %v13
        %s1598 = scalar_lea.vmem %s486, 24
        %s1599 = sadd.s32 %s576, 3
        %s1600 = ssub.s32 6, %s1599
        %s1601 = scalar_lea.vmem %s513, 24
        %s1602 = sadd.s32 %s592, 3
        %s1603 = ssub.s32 6, %s1602
        %v1604 = vstv %s1603
        %vm1605 = vcmp.lt.s32.totalorder %v1604, 0
        %v1606 = vsel %vm1605, %v23, %v1180
        %s1607 = sadd.s32 %s592, 3
        %s1608 = smul.addr %s1607, 8
        %v1609 = vlaneseq
        %v1610 = vshrl.u32 %v1609, 7
        %v1611 = vstv %s1608
        %v1612 = vadd.s32 %v1610, %v1611
        %vm1613 = vcmp.lt.s32.totalorder %v1612, 50
        %v1614 = vsel %vm1613, %v1606, %v23
        %v1615 = vlaneseq
        %v1616 = vand.u32 %v1615, 127
        %vm1618 = vcmp.lt.s32.totalorder %v1616, 150
        %v1619 = vsel %vm1618, %v1614, %v23
        %1620 = xla_tuple %v28, %v1619
        %1621 = xla_tuple %1620
        %v1622 = vmax.f32 %v28, %v1619
        %1623 = xla_tuple %v1622
        %1624 = xla_tuple %v1622, %v18
        %1625 = xla_tuple %1624
        %v1626 = vmax.f32 %v1622, %v18
        %1627 = xla_tuple %v1626
        %1628 = xla_tuple %v1626, %v1597
        %1629 = xla_tuple %1628
        %v1630 = vmax.f32 %v1626, %v1597
        %1631 = xla_tuple %v1630
        %s1632 = scalar_lea.vmem [#allocation23], 56
        %v1633 = vpack.c.bf16 0.0, %v1630
        %s1635 = ssub.s32 16, 1
        %1636 = vst [vmem:[%s1632] sm:%s1635] %v1633
        %s1637 = scalar_lea.vmem %s459, 28
        %s1638 = sadd.s32 %s560, 3
        %s1639 = ssub.s32 6, %s1638
        %s1640 = sor.u32 4294967294, %s1639
        %v1641 = vstv %s1640
        %vm1642 = vcmp.lt.s32.totalorder %v1641, 0
        %v1643 = vsel %vm1642, %v13, %v1253
        %s1644 = sadd.s32 %s560, 3
        %s1645 = smul.addr %s1644, 8
        %v1646 = vlaneseq
        %v1647 = vshrl.u32 %v1646, 7
        %v1648 = vstv %s1645
        %v1649 = vadd.s32 %v1647, %v1648
        %vm1650 = vcmp.lt.s32.totalorder %v1649, 50
        %v1651 = vsel %vm1650, %v1643, %v13
        %v1652 = vlaneseq
        %v1653 = vand.u32 %v1652, 127
        %v1654 = vadd.s32 %v1653, 128
        %vm1655 = vcmp.lt.s32.totalorder %v1654, 150
        %v1656 = vsel %vm1655, %v1651, %v13
        %s1657 = scalar_lea.vmem %s486, 28
        %s1658 = sadd.s32 %s576, 3
        %s1659 = ssub.s32 6, %s1658
        %s1660 = scalar_lea.vmem %s513, 28
        %s1661 = sadd.s32 %s592, 3
        %s1662 = ssub.s32 6, %s1661
        %v1663 = vstv %s1662
        %vm1664 = vcmp.lt.s32.totalorder %v1663, 0
        %v1665 = vsel %vm1664, %v23, %v1329
        %s1666 = sadd.s32 %s592, 3
        %s1667 = smul.addr %s1666, 8
        %v1668 = vlaneseq
        %v1669 = vshrl.u32 %v1668, 7
        %v1670 = vstv %s1667
        %v1671 = vadd.s32 %v1669, %v1670
        %vm1672 = vcmp.lt.s32.totalorder %v1671, 50
        %v1673 = vsel %vm1672, %v1665, %v23
        %v1674 = vlaneseq
        %v1675 = vand.u32 %v1674, 127
        %v1676 = vadd.s32 %v1675, 128
        %vm1677 = vcmp.lt.s32.totalorder %v1676, 150
        %v1678 = vsel %vm1677, %v1673, %v23
        %1679 = xla_tuple %v28, %v1678
        %1680 = xla_tuple %1679
        %v1681 = vmax.f32 %v28, %v1678
        %1682 = xla_tuple %v1681
        %1683 = xla_tuple %v1681, %v18
        %1684 = xla_tuple %1683
        %v1685 = vmax.f32 %v1681, %v18
        %1686 = xla_tuple %v1685
        %1687 = xla_tuple %v1685, %v1656
        %1688 = xla_tuple %1687
        %v1689 = vmax.f32 %v1685, %v1656
        %1690 = xla_tuple %v1689
        %s1691 = scalar_lea.vmem [#allocation23], 60
        %v1692 = vpack.c.bf16 0.0, %v1689
        %s1694 = ssub.s32 16, 1
        %1695 = vst [vmem:[%s1691] sm:%s1694] %v1692
        %s1696 = smul.addr %s576, 8
        %v1697 = vlaneseq
        %v1698 = vshrl.u32 %v1697, 7
        %v1699 = vstv %s1696
        %v1700 = vadd.s32 %v1698, %v1699
        %vm1701 = vcmp.lt.s32.totalorder %v1700, 50
        %v1702 = vsel %vm1701, %v574, %v18
        %v1703 = vlaneseq
        %v1704 = vand.u32 %v1703, 127
        %vm1706 = vcmp.lt.s32.totalorder %v1704, 150
        %v1707 = vsel %vm1706, %v1702, %v18
        %1708 = xla_tuple %v28, %v23
        %1709 = xla_tuple %1708
        %v1710 = vmax.f32 %v28, %v23
        %1711 = xla_tuple %v1710
        %1712 = xla_tuple %v1710, %v1707
        %1713 = xla_tuple %1712
        %v1714 = vmax.f32 %v1710, %v1707
        %1715 = xla_tuple %v1714
        %1716 = xla_tuple %v1714, %v13
        %1717 = xla_tuple %1716
        %v1718 = vmax.f32 %v1714, %v13
        %1719 = xla_tuple %v1718
        %s1720 = scalar_lea.vmem [#allocation23], 64
        %v1721 = vpack.c.bf16 0.0, %v1718
        %s1723 = ssub.s32 16, 1
        %1724 = vst [vmem:[%s1720] sm:%s1723] %v1721
        %s1725 = scalar_lea.vmem %s459, 4
        %s1726 = scalar_lea.vmem %s486, 4
        %s1727 = smul.addr %s576, 8
        %v1728 = vlaneseq
        %v1729 = vshrl.u32 %v1728, 7
        %v1730 = vstv %s1727
        %v1731 = vadd.s32 %v1729, %v1730
        %vm1732 = vcmp.lt.s32.totalorder %v1731, 50
        %v1733 = vsel %vm1732, %v663, %v18
        %v1734 = vlaneseq
        %v1735 = vand.u32 %v1734, 127
        %v1736 = vadd.s32 %v1735, 128
        %vm1737 = vcmp.lt.s32.totalorder %v1736, 150
        %v1738 = vsel %vm1737, %v1733, %v18
        %s1739 = scalar_lea.vmem %s513, 4
        %1740 = xla_tuple %v28, %v23
        %1741 = xla_tuple %1740
        %v1742 = vmax.f32 %v28, %v23
        %1743 = xla_tuple %v1742
        %1744 = xla_tuple %v1742, %v1738
        %1745 = xla_tuple %1744
        %v1746 = vmax.f32 %v1742, %v1738
        %1747 = xla_tuple %v1746
        %1748 = xla_tuple %v1746, %v13
        %1749 = xla_tuple %1748
        %v1750 = vmax.f32 %v1746, %v13
        %1751 = xla_tuple %v1750
        %s1752 = scalar_lea.vmem [#allocation23], 68
        %v1753 = vpack.c.bf16 0.0, %v1750
        %s1755 = ssub.s32 16, 1
        %1756 = vst [vmem:[%s1752] sm:%s1755] %v1753
        %s1757 = scalar_lea.vmem %s459, 8
        %s1758 = scalar_lea.vmem %s486, 8
        %s1759 = sadd.s32 %s576, 1
        %s1760 = smul.addr %s1759, 8
        %v1761 = vlaneseq
        %v1762 = vshrl.u32 %v1761, 7
        %v1763 = vstv %s1760
        %v1764 = vadd.s32 %v1762, %v1763
        %vm1765 = vcmp.lt.s32.totalorder %v1764, 50
        %v1766 = vsel %vm1765, %v753, %v18
        %v1767 = vlaneseq
        %v1768 = vand.u32 %v1767, 127
        %vm1770 = vcmp.lt.s32.totalorder %v1768, 150
        %v1771 = vsel %vm1770, %v1766, %v18
        %s1772 = scalar_lea.vmem %s513, 8
        %1773 = xla_tuple %v28, %v23
        %1774 = xla_tuple %1773
        %v1775 = vmax.f32 %v28, %v23
        %1776 = xla_tuple %v1775
        %1777 = xla_tuple %v1775, %v1771
        %1778 = xla_tuple %1777
        %v1779 = vmax.f32 %v1775, %v1771
        %1780 = xla_tuple %v1779
        %1781 = xla_tuple %v1779, %v13
        %1782 = xla_tuple %1781
        %v1783 = vmax.f32 %v1779, %v13
        %1784 = xla_tuple %v1783
        %s1785 = scalar_lea.vmem [#allocation23], 72
        %v1786 = vpack.c.bf16 0.0, %v1783
        %s1788 = ssub.s32 16, 1
        %1789 = vst [vmem:[%s1785] sm:%s1788] %v1786
        %s1790 = scalar_lea.vmem %s459, 12
        %s1791 = scalar_lea.vmem %s486, 12
        %s1792 = sadd.s32 %s576, 1
        %s1793 = smul.addr %s1792, 8
        %v1794 = vlaneseq
        %v1795 = vshrl.u32 %v1794, 7
        %v1796 = vstv %s1793
        %v1797 = vadd.s32 %v1795, %v1796
        %vm1798 = vcmp.lt.s32.totalorder %v1797, 50
        %v1799 = vsel %vm1798, %v844, %v18
        %v1800 = vlaneseq
        %v1801 = vand.u32 %v1800, 127
        %v1802 = vadd.s32 %v1801, 128
        %vm1803 = vcmp.lt.s32.totalorder %v1802, 150
        %v1804 = vsel %vm1803, %v1799, %v18
        %s1805 = scalar_lea.vmem %s513, 12
        %1806 = xla_tuple %v28, %v23
        %1807 = xla_tuple %1806
        %v1808 = vmax.f32 %v28, %v23
        %1809 = xla_tuple %v1808
        %1810 = xla_tuple %v1808, %v1804
        %1811 = xla_tuple %1810
        %v1812 = vmax.f32 %v1808, %v1804
        %1813 = xla_tuple %v1812
        %1814 = xla_tuple %v1812, %v13
        %1815 = xla_tuple %1814
        %v1816 = vmax.f32 %v1812, %v13
        %1817 = xla_tuple %v1816
        %s1818 = scalar_lea.vmem [#allocation23], 76
        %v1819 = vpack.c.bf16 0.0, %v1816
        %s1821 = ssub.s32 16, 1
        %1822 = vst [vmem:[%s1818] sm:%s1821] %v1819
        %s1823 = scalar_lea.vmem %s459, 16
        %s1824 = scalar_lea.vmem %s486, 16
        %s1825 = sadd.s32 %s576, 2
        %s1826 = smul.addr %s1825, 8
        %v1827 = vlaneseq
        %v1828 = vshrl.u32 %v1827, 7
        %v1829 = vstv %s1826
        %v1830 = vadd.s32 %v1828, %v1829
        %vm1831 = vcmp.lt.s32.totalorder %v1830, 50
        %v1832 = vsel %vm1831, %v935, %v18
        %v1833 = vlaneseq
        %v1834 = vand.u32 %v1833, 127
        %vm1836 = vcmp.lt.s32.totalorder %v1834, 150
        %v1837 = vsel %vm1836, %v1832, %v18
        %s1838 = scalar_lea.vmem %s513, 16
        %1839 = xla_tuple %v28, %v23
        %1840 = xla_tuple %1839
        %v1841 = vmax.f32 %v28, %v23
        %1842 = xla_tuple %v1841
        %1843 = xla_tuple %v1841, %v1837
        %1844 = xla_tuple %1843
        %v1845 = vmax.f32 %v1841, %v1837
        %1846 = xla_tuple %v1845
        %1847 = xla_tuple %v1845, %v13
        %1848 = xla_tuple %1847
        %v1849 = vmax.f32 %v1845, %v13
        %1850 = xla_tuple %v1849
        %s1851 = scalar_lea.vmem [#allocation23], 80
        %v1852 = vpack.c.bf16 0.0, %v1849
        %s1854 = ssub.s32 16, 1
        %1855 = vst [vmem:[%s1851] sm:%s1854] %v1852
        %s1856 = scalar_lea.vmem %s459, 20
        %s1857 = scalar_lea.vmem %s486, 20
        %s1858 = sadd.s32 %s576, 2
        %s1859 = smul.addr %s1858, 8
        %v1860 = vlaneseq
        %v1861 = vshrl.u32 %v1860, 7
        %v1862 = vstv %s1859
        %v1863 = vadd.s32 %v1861, %v1862
        %vm1864 = vcmp.lt.s32.totalorder %v1863, 50
        %v1865 = vsel %vm1864, %v1026, %v18
        %v1866 = vlaneseq
        %v1867 = vand.u32 %v1866, 127
        %v1868 = vadd.s32 %v1867, 128
        %vm1869 = vcmp.lt.s32.totalorder %v1868, 150
        %v1870 = vsel %vm1869, %v1865, %v18
        %s1871 = scalar_lea.vmem %s513, 20
        %1872 = xla_tuple %v28, %v23
        %1873 = xla_tuple %1872
        %v1874 = vmax.f32 %v28, %v23
        %1875 = xla_tuple %v1874
        %1876 = xla_tuple %v1874, %v1870
        %1877 = xla_tuple %1876
        %v1878 = vmax.f32 %v1874, %v1870
        %1879 = xla_tuple %v1878
        %1880 = xla_tuple %v1878, %v13
        %1881 = xla_tuple %1880
        %v1882 = vmax.f32 %v1878, %v13
        %1883 = xla_tuple %v1882
        %s1884 = scalar_lea.vmem [#allocation23], 84
        %v1885 = vpack.c.bf16 0.0, %v1882
        %s1887 = ssub.s32 16, 1
        %1888 = vst [vmem:[%s1884] sm:%s1887] %v1885
        %s1889 = scalar_lea.vmem %s459, 24
        %s1890 = sadd.s32 %s560, 3
        %s1891 = ssub.s32 6, %s1890
        %s1892 = scalar_lea.vmem %s486, 24
        %s1893 = sadd.s32 %s576, 3
        %s1894 = ssub.s32 6, %s1893
        %v1895 = vstv %s1894
        %vm1896 = vcmp.lt.s32.totalorder %v1895, 0
        %v1897 = vsel %vm1896, %v18, %v1142
        %s1898 = sadd.s32 %s576, 3
        %s1899 = smul.addr %s1898, 8
        %v1900 = vlaneseq
        %v1901 = vshrl.u32 %v1900, 7
        %v1902 = vstv %s1899
        %v1903 = vadd.s32 %v1901, %v1902
        %vm1904 = vcmp.lt.s32.totalorder %v1903, 50
        %v1905 = vsel %vm1904, %v1897, %v18
        %v1906 = vlaneseq
        %v1907 = vand.u32 %v1906, 127
        %vm1909 = vcmp.lt.s32.totalorder %v1907, 150
        %v1910 = vsel %vm1909, %v1905, %v18
        %s1911 = scalar_lea.vmem %s513, 24
        %s1912 = sadd.s32 %s592, 3
        %s1913 = ssub.s32 6, %s1912
        %1914 = xla_tuple %v28, %v23
        %1915 = xla_tuple %1914
        %v1916 = vmax.f32 %v28, %v23
        %1917 = xla_tuple %v1916
        %1918 = xla_tuple %v1916, %v1910
        %1919 = xla_tuple %1918
        %v1920 = vmax.f32 %v1916, %v1910
        %1921 = xla_tuple %v1920
        %1922 = xla_tuple %v1920, %v13
        %1923 = xla_tuple %1922
        %v1924 = vmax.f32 %v1920, %v13
        %1925 = xla_tuple %v1924
        %s1926 = scalar_lea.vmem [#allocation23], 88
        %v1927 = vpack.c.bf16 0.0, %v1924
        %s1929 = ssub.s32 16, 1
        %1930 = vst [vmem:[%s1926] sm:%s1929] %v1927
        %s1931 = scalar_lea.vmem %s459, 28
        %s1932 = sadd.s32 %s560, 3
        %s1933 = ssub.s32 6, %s1932
        %s1934 = scalar_lea.vmem %s486, 28
        %s1935 = sadd.s32 %s576, 3
        %s1936 = ssub.s32 6, %s1935
        %v1937 = vstv %s1936
        %vm1938 = vcmp.lt.s32.totalorder %v1937, 0
        %v1939 = vsel %vm1938, %v18, %v1291
        %s1940 = sadd.s32 %s576, 3
        %s1941 = smul.addr %s1940, 8
        %v1942 = vlaneseq
        %v1943 = vshrl.u32 %v1942, 7
        %v1944 = vstv %s1941
        %v1945 = vadd.s32 %v1943, %v1944
        %vm1946 = vcmp.lt.s32.totalorder %v1945, 50
        %v1947 = vsel %vm1946, %v1939, %v18
        %v1948 = vlaneseq
        %v1949 = vand.u32 %v1948, 127
        %v1950 = vadd.s32 %v1949, 128
        %vm1951 = vcmp.lt.s32.totalorder %v1950, 150
        %v1952 = vsel %vm1951, %v1947, %v18
        %s1953 = scalar_lea.vmem %s513, 28
        %s1954 = sadd.s32 %s592, 3
        %s1955 = ssub.s32 6, %s1954
        %1956 = xla_tuple %v28, %v23
        %1957 = xla_tuple %1956
        %v1958 = vmax.f32 %v28, %v23
        %1959 = xla_tuple %v1958
        %1960 = xla_tuple %v1958, %v1952
        %1961 = xla_tuple %1960
        %v1962 = vmax.f32 %v1958, %v1952
        %1963 = xla_tuple %v1962
        %1964 = xla_tuple %v1962, %v13
        %1965 = xla_tuple %1964
        %v1966 = vmax.f32 %v1962, %v13
        %1967 = xla_tuple %v1966
        %s1968 = scalar_lea.vmem [#allocation23], 92
        %v1969 = vpack.c.bf16 0.0, %v1966
        %s1971 = ssub.s32 16, 1
        %1972 = vst [vmem:[%s1968] sm:%s1971] %v1969
        %s1973 = smul.addr %s560, 8
        %v1974 = vlaneseq
        %v1975 = vshrl.u32 %v1974, 7
        %v1976 = vstv %s1973
        %v1977 = vadd.s32 %v1975, %v1976
        %vm1978 = vcmp.lt.s32.totalorder %v1977, 50
        %v1979 = vsel %vm1978, %v558, %v13
        %v1980 = vlaneseq
        %v1981 = vand.u32 %v1980, 127
        %vm1983 = vcmp.lt.s32.totalorder %v1981, 150
        %v1984 = vsel %vm1983, %v1979, %v13
        %1985 = xla_tuple %v28, %v23
        %1986 = xla_tuple %1985
        %v1987 = vmax.f32 %v28, %v23
        %1988 = xla_tuple %v1987
        %1989 = xla_tuple %v1987, %v18
        %1990 = xla_tuple %1989
        %v1991 = vmax.f32 %v1987, %v18
        %1992 = xla_tuple %v1991
        %1993 = xla_tuple %v1991, %v1984
        %1994 = xla_tuple %1993
        %v1995 = vmax.f32 %v1991, %v1984
        %1996 = xla_tuple %v1995
        %s1997 = scalar_lea.vmem [#allocation23], 96
        %v1998 = vpack.c.bf16 0.0, %v1995
        %s2000 = ssub.s32 16, 1
        %2001 = vst [vmem:[%s1997] sm:%s2000] %v1998
        %s2002 = scalar_lea.vmem %s459, 4
        %s2003 = smul.addr %s560, 8
        %v2004 = vlaneseq
        %v2005 = vshrl.u32 %v2004, 7
        %v2006 = vstv %s2003
        %v2007 = vadd.s32 %v2005, %v2006
        %vm2008 = vcmp.lt.s32.totalorder %v2007, 50
        %v2009 = vsel %vm2008, %v647, %v13
        %v2010 = vlaneseq
        %v2011 = vand.u32 %v2010, 127
        %v2012 = vadd.s32 %v2011, 128
        %vm2013 = vcmp.lt.s32.totalorder %v2012, 150
        %v2014 = vsel %vm2013, %v2009, %v13
        %s2015 = scalar_lea.vmem %s486, 4
        %s2016 = scalar_lea.vmem %s513, 4
        %2017 = xla_tuple %v28, %v23
        %2018 = xla_tuple %2017
        %v2019 = vmax.f32 %v28, %v23
        %2020 = xla_tuple %v2019
        %2021 = xla_tuple %v2019, %v18
        %2022 = xla_tuple %2021
        %v2023 = vmax.f32 %v2019, %v18
        %2024 = xla_tuple %v2023
        %2025 = xla_tuple %v2023, %v2014
        %2026 = xla_tuple %2025
        %v2027 = vmax.f32 %v2023, %v2014
        %2028 = xla_tuple %v2027
        %s2029 = scalar_lea.vmem [#allocation23], 100
        %v2030 = vpack.c.bf16 0.0, %v2027
        %s2032 = ssub.s32 16, 1
        %2033 = vst [vmem:[%s2029] sm:%s2032] %v2030
        %s2034 = scalar_lea.vmem %s459, 8
        %s2035 = sadd.s32 %s560, 1
        %s2036 = smul.addr %s2035, 8
        %v2037 = vlaneseq
        %v2038 = vshrl.u32 %v2037, 7
        %v2039 = vstv %s2036
        %v2040 = vadd.s32 %v2038, %v2039
        %vm2041 = vcmp.lt.s32.totalorder %v2040, 50
        %v2042 = vsel %vm2041, %v737, %v13
        %v2043 = vlaneseq
        %v2044 = vand.u32 %v2043, 127
        %vm2046 = vcmp.lt.s32.totalorder %v2044, 150
        %v2047 = vsel %vm2046, %v2042, %v13
        %s2048 = scalar_lea.vmem %s486, 8
        %s2049 = scalar_lea.vmem %s513, 8
        %2050 = xla_tuple %v28, %v23
        %2051 = xla_tuple %2050
        %v2052 = vmax.f32 %v28, %v23
        %2053 = xla_tuple %v2052
        %2054 = xla_tuple %v2052, %v18
        %2055 = xla_tuple %2054
        %v2056 = vmax.f32 %v2052, %v18
        %2057 = xla_tuple %v2056
        %2058 = xla_tuple %v2056, %v2047
        %2059 = xla_tuple %2058
        %v2060 = vmax.f32 %v2056, %v2047
        %2061 = xla_tuple %v2060
        %s2062 = scalar_lea.vmem [#allocation23], 104
        %v2063 = vpack.c.bf16 0.0, %v2060
        %s2065 = ssub.s32 16, 1
        %2066 = vst [vmem:[%s2062] sm:%s2065] %v2063
        %s2067 = scalar_lea.vmem %s459, 12
        %s2068 = sadd.s32 %s560, 1
        %s2069 = smul.addr %s2068, 8
        %v2070 = vlaneseq
        %v2071 = vshrl.u32 %v2070, 7
        %v2072 = vstv %s2069
        %v2073 = vadd.s32 %v2071, %v2072
        %vm2074 = vcmp.lt.s32.totalorder %v2073, 50
        %v2075 = vsel %vm2074, %v828, %v13
        %v2076 = vlaneseq
        %v2077 = vand.u32 %v2076, 127
        %v2078 = vadd.s32 %v2077, 128
        %vm2079 = vcmp.lt.s32.totalorder %v2078, 150
        %v2080 = vsel %vm2079, %v2075, %v13
        %s2081 = scalar_lea.vmem %s486, 12
        %s2082 = scalar_lea.vmem %s513, 12
        %2083 = xla_tuple %v28, %v23
        %2084 = xla_tuple %2083
        %v2085 = vmax.f32 %v28, %v23
        %2086 = xla_tuple %v2085
        %2087 = xla_tuple %v2085, %v18
        %2088 = xla_tuple %2087
        %v2089 = vmax.f32 %v2085, %v18
        %2090 = xla_tuple %v2089
        %2091 = xla_tuple %v2089, %v2080
        %2092 = xla_tuple %2091
        %v2093 = vmax.f32 %v2089, %v2080
        %2094 = xla_tuple %v2093
        %s2095 = scalar_lea.vmem [#allocation23], 108
        %v2096 = vpack.c.bf16 0.0, %v2093
        %s2098 = ssub.s32 16, 1
        %2099 = vst [vmem:[%s2095] sm:%s2098] %v2096
        %s2100 = scalar_lea.vmem %s459, 16
        %s2101 = sadd.s32 %s560, 2
        %s2102 = smul.addr %s2101, 8
        %v2103 = vlaneseq
        %v2104 = vshrl.u32 %v2103, 7
        %v2105 = vstv %s2102
        %v2106 = vadd.s32 %v2104, %v2105
        %vm2107 = vcmp.lt.s32.totalorder %v2106, 50
        %v2108 = vsel %vm2107, %v919, %v13
        %v2109 = vlaneseq
        %v2110 = vand.u32 %v2109, 127
        %vm2112 = vcmp.lt.s32.totalorder %v2110, 150
        %v2113 = vsel %vm2112, %v2108, %v13
        %s2114 = scalar_lea.vmem %s486, 16
        %s2115 = scalar_lea.vmem %s513, 16
        %2116 = xla_tuple %v28, %v23
        %2117 = xla_tuple %2116
        %v2118 = vmax.f32 %v28, %v23
        %2119 = xla_tuple %v2118
        %2120 = xla_tuple %v2118, %v18
        %2121 = xla_tuple %2120
        %v2122 = vmax.f32 %v2118, %v18
        %2123 = xla_tuple %v2122
        %2124 = xla_tuple %v2122, %v2113
        %2125 = xla_tuple %2124
        %v2126 = vmax.f32 %v2122, %v2113
        %2127 = xla_tuple %v2126
        %s2128 = scalar_lea.vmem [#allocation23], 112
        %v2129 = vpack.c.bf16 0.0, %v2126
        %s2131 = ssub.s32 16, 1
        %2132 = vst [vmem:[%s2128] sm:%s2131] %v2129
        %s2133 = scalar_lea.vmem %s459, 20
        %s2134 = sadd.s32 %s560, 2
        %s2135 = smul.addr %s2134, 8
        %v2136 = vlaneseq
        %v2137 = vshrl.u32 %v2136, 7
        %v2138 = vstv %s2135
        %v2139 = vadd.s32 %v2137, %v2138
        %vm2140 = vcmp.lt.s32.totalorder %v2139, 50
        %v2141 = vsel %vm2140, %v1010, %v13
        %v2142 = vlaneseq
        %v2143 = vand.u32 %v2142, 127
        %v2144 = vadd.s32 %v2143, 128
        %vm2145 = vcmp.lt.s32.totalorder %v2144, 150
        %v2146 = vsel %vm2145, %v2141, %v13
        %s2147 = scalar_lea.vmem %s486, 20
        %s2148 = scalar_lea.vmem %s513, 20
        %2149 = xla_tuple %v28, %v23
        %2150 = xla_tuple %2149
        %v2151 = vmax.f32 %v28, %v23
        %2152 = xla_tuple %v2151
        %2153 = xla_tuple %v2151, %v18
        %2154 = xla_tuple %2153
        %v2155 = vmax.f32 %v2151, %v18
        %2156 = xla_tuple %v2155
        %2157 = xla_tuple %v2155, %v2146
        %2158 = xla_tuple %2157
        %v2159 = vmax.f32 %v2155, %v2146
        %2160 = xla_tuple %v2159
        %s2161 = scalar_lea.vmem [#allocation23], 116
        %v2162 = vpack.c.bf16 0.0, %v2159
        %s2164 = ssub.s32 16, 1
        %2165 = vst [vmem:[%s2161] sm:%s2164] %v2162
        %s2166 = scalar_lea.vmem %s459, 24
        %s2167 = sadd.s32 %s560, 3
        %s2168 = ssub.s32 6, %s2167
        %v2169 = vstv %s2168
        %vm2170 = vcmp.lt.s32.totalorder %v2169, 0
        %v2171 = vsel %vm2170, %v13, %v1104
        %s2172 = sadd.s32 %s560, 3
        %s2173 = smul.addr %s2172, 8
        %v2174 = vlaneseq
        %v2175 = vshrl.u32 %v2174, 7
        %v2176 = vstv %s2173
        %v2177 = vadd.s32 %v2175, %v2176
        %vm2178 = vcmp.lt.s32.totalorder %v2177, 50
        %v2179 = vsel %vm2178, %v2171, %v13
        %v2180 = vlaneseq
        %v2181 = vand.u32 %v2180, 127
        %vm2183 = vcmp.lt.s32.totalorder %v2181, 150
        %v2184 = vsel %vm2183, %v2179, %v13
        %s2185 = scalar_lea.vmem %s486, 24
        %s2186 = sadd.s32 %s576, 3
        %s2187 = ssub.s32 6, %s2186
        %s2188 = scalar_lea.vmem %s513, 24
        %s2189 = sadd.s32 %s592, 3
        %s2190 = ssub.s32 6, %s2189
        %s2191 = sor.u32 4294967294, %s2190
        %v2192 = vstv %s2191
        %vm2193 = vcmp.lt.s32.totalorder %v2192, 0
        %v2194 = vsel %vm2193, %v23, %v1180
        %s2195 = sadd.s32 %s592, 3
        %s2196 = smul.addr %s2195, 8
        %v2197 = vlaneseq
        %v2198 = vshrl.u32 %v2197, 7
        %v2199 = vstv %s2196
        %v2200 = vadd.s32 %v2198, %v2199
        %vm2201 = vcmp.lt.s32.totalorder %v2200, 50
        %v2202 = vsel %vm2201, %v2194, %v23
        %v2203 = vlaneseq
        %v2204 = vand.u32 %v2203, 127
        %vm2206 = vcmp.lt.s32.totalorder %v2204, 150
        %v2207 = vsel %vm2206, %v2202, %v23
        %2208 = xla_tuple %v28, %v2207
        %2209 = xla_tuple %2208
        %v2210 = vmax.f32 %v28, %v2207
        %2211 = xla_tuple %v2210
        %2212 = xla_tuple %v2210, %v18
        %2213 = xla_tuple %2212
        %v2214 = vmax.f32 %v2210, %v18
        %2215 = xla_tuple %v2214
        %2216 = xla_tuple %v2214, %v2184
        %2217 = xla_tuple %2216
        %v2218 = vmax.f32 %v2214, %v2184
        %2219 = xla_tuple %v2218
        %s2220 = scalar_lea.vmem [#allocation23], 120
        %v2221 = vpack.c.bf16 0.0, %v2218
        %s2223 = ssub.s32 16, 1
        %2224 = vst [vmem:[%s2220] sm:%s2223] %v2221
        %s2225 = scalar_lea.vmem %s459, 28
        %s2226 = sadd.s32 %s560, 3
        %s2227 = ssub.s32 6, %s2226
        %v2228 = vstv %s2227
        %vm2229 = vcmp.lt.s32.totalorder %v2228, 0
        %v2230 = vsel %vm2229, %v13, %v1253
        %s2231 = sadd.s32 %s560, 3
        %s2232 = smul.addr %s2231, 8
        %v2233 = vlaneseq
        %v2234 = vshrl.u32 %v2233, 7
        %v2235 = vstv %s2232
        %v2236 = vadd.s32 %v2234, %v2235
        %vm2237 = vcmp.lt.s32.totalorder %v2236, 50
        %v2238 = vsel %vm2237, %v2230, %v13
        %v2239 = vlaneseq
        %v2240 = vand.u32 %v2239, 127
        %v2241 = vadd.s32 %v2240, 128
        %vm2242 = vcmp.lt.s32.totalorder %v2241, 150
        %v2243 = vsel %vm2242, %v2238, %v13
        %s2244 = scalar_lea.vmem %s486, 28
        %s2245 = sadd.s32 %s576, 3
        %s2246 = ssub.s32 6, %s2245
        %s2247 = scalar_lea.vmem %s513, 28
        %s2248 = sadd.s32 %s592, 3
        %s2249 = ssub.s32 6, %s2248
        %s2250 = sor.u32 4294967294, %s2249
        %v2251 = vstv %s2250
        %vm2252 = vcmp.lt.s32.totalorder %v2251, 0
        %v2253 = vsel %vm2252, %v23, %v1329
        %s2254 = sadd.s32 %s592, 3
        %s2255 = smul.addr %s2254, 8
        %v2256 = vlaneseq
        %v2257 = vshrl.u32 %v2256, 7
        %v2258 = vstv %s2255
        %v2259 = vadd.s32 %v2257, %v2258
        %vm2260 = vcmp.lt.s32.totalorder %v2259, 50
        %v2261 = vsel %vm2260, %v2253, %v23
        %v2262 = vlaneseq
        %v2263 = vand.u32 %v2262, 127
        %v2264 = vadd.s32 %v2263, 128
        %vm2265 = vcmp.lt.s32.totalorder %v2264, 150
        %v2266 = vsel %vm2265, %v2261, %v23
        %2267 = xla_tuple %v28, %v2266
        %2268 = xla_tuple %2267
        %v2269 = vmax.f32 %v28, %v2266
        %2270 = xla_tuple %v2269
        %2271 = xla_tuple %v2269, %v18
        %2272 = xla_tuple %2271
        %v2273 = vmax.f32 %v2269, %v18
        %2274 = xla_tuple %v2273
        %2275 = xla_tuple %v2273, %v2243
        %2276 = xla_tuple %2275
        %v2277 = vmax.f32 %v2273, %v2243
        %2278 = xla_tuple %v2277
        %s2279 = scalar_lea.vmem [#allocation23], 124
        %v2280 = vpack.c.bf16 0.0, %v2277
        %s2282 = ssub.s32 16, 1
        %2283 = vst [vmem:[%s2279] sm:%s2282] %v2280
        %v2285 = vld [vmem:[#allocation23] sm:$0xff]
        %v2286 = vld [vmem:[#allocation23 + $0x8] sm:$0xff]
        %v2287 = vld [vmem:[#allocation23 + $0x10] sm:$0xff]
        %v2288 = vld [vmem:[#allocation23 + $0x18] sm:$0xff]
        %v2289 = vld [vmem:[#allocation23 + $0x20] sm:$0xff]
        %v2290 = vld [vmem:[#allocation23 + $0x28] sm:$0xff]
        %v2291 = vld [vmem:[#allocation23 + $0x30] sm:$0xff]
        %v2292 = vld [vmem:[#allocation23 + $0x38] sm:$0xff]
        %v2293 = vld [vmem:[#allocation23 + $0x40] sm:$0xff]
        %v2294 = vld [vmem:[#allocation23 + $0x48] sm:$0xff]
        %v2295 = vld [vmem:[#allocation23 + $0x50] sm:$0xff]
        %v2296 = vld [vmem:[#allocation23 + $0x58] sm:$0xff]
        %v2297 = vld [vmem:[#allocation23 + $0x60] sm:$0xff]
        %v2298 = vld [vmem:[#allocation23 + $0x68] sm:$0xff]
        %v2299 = vld [vmem:[#allocation23 + $0x70] sm:$0xff]
        %v2300 = vld [vmem:[#allocation23 + $0x78] sm:$0xff]
        %v2301 = vld [vmem:[%s0] sm:$0xf]
        %v2302 = vld [vmem:[%s0 + $0x4] sm:$0xf]
        %v2303 = vld [vmem:[%s0 + $0x8] sm:$0xf]
        %v2304 = vld [vmem:[%s0 + $0xc] sm:$0xf]
        %v2305 = vld [vmem:[%s0 + $0x10] sm:$0xf]
        %v2306 = vld [vmem:[%s0 + $0x14] sm:$0xf]
        %v2307 = vld [vmem:[%s0 + $0x18] sm:$0xf]
        %v2308 = vld [vmem:[%s0 + $0x1c] sm:$0xf]
        %v2309 = vld [vmem:[%s0 + $0x20] sm:$0xf]
        %v2310 = vld [vmem:[%s0 + $0x24] sm:$0xf]
        %v2311 = vld [vmem:[%s0 + $0x28] sm:$0xf]
        %v2312 = vld [vmem:[%s0 + $0x2c] sm:$0xf]
        %v2313 = vld [vmem:[%s0 + $0x30] sm:$0xf]
        %v2314 = vld [vmem:[%s0 + $0x34] sm:$0xf]
        %v2315 = vld [vmem:[%s0 + $0x38] sm:$0xf]
        %v2316 = vld [vmem:[%s0 + $0x3c] sm:$0xf]
        %v2317 = vld [vmem:[%s0 + $0x40] sm:$0xf]
        %v2318 = vld [vmem:[%s0 + $0x44] sm:$0xf]
        %v2319 = vld [vmem:[%s0 + $0x48] sm:$0x7]
        %v2336 = vunpack.c.l.b16 %v2285
        %v2337 = vunpack.c.h.b16 %v2285
        %v2338 = vunpack.c.l.b16 %v2286
        %v2339 = vunpack.c.h.b16 %v2286
        %v2340 = vunpack.c.l.b16 %v2287
        %v2341 = vunpack.c.h.b16 %v2287
        %v2342 = vunpack.c.l.b16 %v2288
        %v2343 = vunpack.c.h.b16 %v2288
        %v2344 = vunpack.c.l.b16 %v2289
        %v2345 = vunpack.c.h.b16 %v2289
        %v2346 = vunpack.c.l.b16 %v2290
        %v2347 = vunpack.c.h.b16 %v2290
        %v2348 = vunpack.c.l.b16 %v2291
        %v2349 = vunpack.c.h.b16 %v2291
        %v2350 = vunpack.c.l.b16 %v2292
        %v2351 = vunpack.c.h.b16 %v2292
        %v2352 = vunpack.c.l.b16 %v2293
        %v2353 = vunpack.c.h.b16 %v2293
        %v2354 = vunpack.c.l.b16 %v2294
        %v2355 = vunpack.c.h.b16 %v2294
        %v2356 = vunpack.c.l.b16 %v2295
        %v2357 = vunpack.c.h.b16 %v2295
        %v2358 = vunpack.c.l.b16 %v2296
        %v2359 = vunpack.c.h.b16 %v2296
        %v2360 = vunpack.c.l.b16 %v2297
        %v2361 = vunpack.c.h.b16 %v2297
        %v2362 = vunpack.c.l.b16 %v2298
        %v2363 = vunpack.c.h.b16 %v2298
        %v2364 = vunpack.c.l.b16 %v2299
        %v2365 = vunpack.c.h.b16 %v2299
        %v2366 = vunpack.c.l.b16 %v2300
        %v2367 = vunpack.c.h.b16 %v2300
        %v2368 = vpack.c.b16 %v2338, %v2336
        %v2369 = vpack.c.b16 %v2339, %v2337
        %v2370 = vpack.c.b16 %v2342, %v2340
        %v2371 = vpack.c.b16 %v2343, %v2341
        %v2372 = vpack.c.b16 %v2346, %v2344
        %v2373 = vpack.c.b16 %v2347, %v2345
        %v2374 = vpack.c.b16 %v2350, %v2348
        %v2375 = vpack.c.b16 %v2351, %v2349
        %v2376 = vpack.c.b16 %v2354, %v2352
        %v2377 = vpack.c.b16 %v2355, %v2353
        %v2378 = vpack.c.b16 %v2358, %v2356
        %v2379 = vpack.c.b16 %v2359, %v2357
        %v2380 = vpack.c.b16 %v2362, %v2360
        %v2381 = vpack.c.b16 %v2363, %v2361
        %v2382 = vpack.c.b16 %v2366, %v2364
        %v2383 = vpack.c.b16 %v2367, %v2365
        %v2411 = vunpack.c.l.b16 %v2301
        %v2412 = vunpack.c.l.b16 %v2302
        %v2413 = vunpack.c.l.b16 %v2303
        %v2414 = vunpack.c.l.b16 %v2304
        %v2415 = vunpack.c.l.b16 %v2305
        %v2416 = vunpack.c.l.b16 %v2306
        %v2417 = vunpack.c.l.b16 %v2307
        %v2418 = vunpack.c.l.b16 %v2308
        %v2419 = vunpack.c.l.b16 %v2309
        %v2420 = vunpack.c.l.b16 %v2310
        %v2421 = vunpack.c.l.b16 %v2311
        %v2422 = vunpack.c.l.b16 %v2312
        %v2423 = vunpack.c.l.b16 %v2313
        %v2424 = vunpack.c.l.b16 %v2314
        %v2425 = vunpack.c.l.b16 %v2315
        %v2426 = vunpack.c.l.b16 %v2316
        %v2427 = vunpack.c.l.b16 %v2317
        %v2428 = vunpack.c.l.b16 %v2318
        %v2429 = vunpack.c.l.b16 %v2319
        %v2430 = vpack.c.b16 %v2412, %v2411
        %v2431 = vpack.c.b16 %v2414, %v2413
        %v2432 = vpack.c.b16 %v2416, %v2415
        %v2433 = vpack.c.b16 %v2418, %v2417
        %v2434 = vpack.c.b16 %v2420, %v2419
        %v2435 = vpack.c.b16 %v2422, %v2421
        %v2436 = vpack.c.b16 %v2424, %v2423
        %v2437 = vpack.c.b16 %v2426, %v2425
        %v2438 = vpack.c.b16 %v2428, %v2427
        %v2439 = vpack.c.b16 %v2429, %v2429
        %vm2449 = vcmask 179200
        %v2451 = vsel %vm2449, %v2369, 0
        %v2454 = vsel %vm2449, %v2371, 0
        %v2457 = vsel %vm2449, %v2373, 0
        %v2460 = vsel %vm2449, %v2375, 0
        %v2463 = vsel %vm2449, %v2377, 0
        %v2466 = vsel %vm2449, %v2379, 0
        %v2469 = vsel %vm2449, %v2381, 0
        %v2472 = vsel %vm2449, %v2383, 0
        %vm2474 = vcmask 1042432
        %v2476 = vsel %vm2474, %v2439, 0
        %2478 = vmatpush.bf16.msra.mxu0 %v2437
        %2479 = vmatpush.bf16.msra.mxu0 %v2436
        %2480 = vmatpush.bf16.msra.mxu0 %v2435
        %2481 = vmatpush.bf16.msra.mxu0 %v2434
        %2482 = vmatpush.bf16.msra.mxu0 %v2433
        %2483 = vmatpush.bf16.msra.mxu0 %v2432
        %2484 = vmatpush.bf16.msra.mxu0 %v2431
        %2485 = vmatpush.bf16.msra.mxu0 %v2430
        %2486 = vmatmul.bf16.gmra.mxu0 %v2368
        %v2487 = vpop.f32.mrf.mxu0
        %v2488 = vadd.f32 0.0, %v2487
        %v2489 = vpop.f32.mrf.mxu0
        %v2490 = vadd.f32 0.0, %v2489
        %2491 = vmatmul.bf16.gmra.mxu0 %v2370
        %v2492 = vpop.f32.mrf.mxu0
        %v2493 = vadd.f32 0.0, %v2492
        %v2494 = vpop.f32.mrf.mxu0
        %v2495 = vadd.f32 0.0, %v2494
        %2496 = vmatmul.bf16.gmra.mxu0 %v2372
        %v2497 = vpop.f32.mrf.mxu0
        %v2498 = vadd.f32 0.0, %v2497
        %v2499 = vpop.f32.mrf.mxu0
        %v2500 = vadd.f32 0.0, %v2499
        %2501 = vmatmul.bf16.gmra.mxu0 %v2374
        %v2502 = vpop.f32.mrf.mxu0
        %v2503 = vadd.f32 0.0, %v2502
        %v2504 = vpop.f32.mrf.mxu0
        %v2505 = vadd.f32 0.0, %v2504
        %2506 = vmatmul.bf16.gmra.mxu0 %v2376
        %v2507 = vpop.f32.mrf.mxu0
        %v2508 = vadd.f32 0.0, %v2507
        %v2509 = vpop.f32.mrf.mxu0
        %v2510 = vadd.f32 0.0, %v2509
        %2511 = vmatmul.bf16.gmra.mxu0 %v2378
        %v2512 = vpop.f32.mrf.mxu0
        %v2513 = vadd.f32 0.0, %v2512
        %v2514 = vpop.f32.mrf.mxu0
        %v2515 = vadd.f32 0.0, %v2514
        %2516 = vmatmul.bf16.gmra.mxu0 %v2380
        %v2517 = vpop.f32.mrf.mxu0
        %v2518 = vadd.f32 0.0, %v2517
        %v2519 = vpop.f32.mrf.mxu0
        %v2520 = vadd.f32 0.0, %v2519
        %2521 = vmatmul.bf16.gmra.mxu0 %v2382
        %v2522 = vpop.f32.mrf.mxu0
        %v2523 = vadd.f32 0.0, %v2522
        %v2524 = vpop.f32.mrf.mxu0
        %v2525 = vadd.f32 0.0, %v2524
        %2526 = vdwg.mxu0
        %2527 = vmatpush.bf16.msra.mxu0 0
        %2528 = vmatpush.bf16.msra.mxu0 0
        %2529 = vmatpush.bf16.msra.mxu0 0
        %2530 = vmatpush.bf16.msra.mxu0 0
        %2531 = vmatpush.bf16.msra.mxu0 0
        %2532 = vmatpush.bf16.msra.mxu0 0
        %2533 = vmatpush.bf16.msra.mxu0 %v2476
        %2534 = vmatpush.bf16.msra.mxu0 %v2438
        %2535 = vmatmul.bf16.gmra.mxu0 %v2451
        %v2536 = vpop.f32.mrf.mxu0
        %v2537 = vadd.f32 %v2488, %v2536
        %v2538 = vpop.f32.mrf.mxu0
        %v2539 = vadd.f32 %v2490, %v2538
        %2540 = vmatmul.bf16.gmra.mxu0 %v2454
        %v2541 = vpop.f32.mrf.mxu0
        %v2542 = vadd.f32 %v2493, %v2541
        %v2543 = vpop.f32.mrf.mxu0
        %v2544 = vadd.f32 %v2495, %v2543
        %2545 = vmatmul.bf16.gmra.mxu0 %v2457
        %v2546 = vpop.f32.mrf.mxu0
        %v2547 = vadd.f32 %v2498, %v2546
        %v2548 = vpop.f32.mrf.mxu0
        %v2549 = vadd.f32 %v2500, %v2548
        %2550 = vmatmul.bf16.gmra.mxu0 %v2460
        %v2551 = vpop.f32.mrf.mxu0
        %v2552 = vadd.f32 %v2503, %v2551
        %v2553 = vpop.f32.mrf.mxu0
        %v2554 = vadd.f32 %v2505, %v2553
        %2555 = vmatmul.bf16.gmra.mxu0 %v2463
        %v2556 = vpop.f32.mrf.mxu0
        %v2557 = vadd.f32 %v2508, %v2556
        %v2558 = vpop.f32.mrf.mxu0
        %v2559 = vadd.f32 %v2510, %v2558
        %2560 = vmatmul.bf16.gmra.mxu0 %v2466
        %v2561 = vpop.f32.mrf.mxu0
        %v2562 = vadd.f32 %v2513, %v2561
        %v2563 = vpop.f32.mrf.mxu0
        %v2564 = vadd.f32 %v2515, %v2563
        %2565 = vmatmul.bf16.gmra.mxu0 %v2469
        %v2566 = vpop.f32.mrf.mxu0
        %v2567 = vadd.f32 %v2518, %v2566
        %v2568 = vpop.f32.mrf.mxu0
        %v2569 = vadd.f32 %v2520, %v2568
        %2570 = vmatmul.bf16.gmra.mxu0 %v2472
        %v2571 = vpop.f32.mrf.mxu0
        %v2572 = vadd.f32 %v2523, %v2571
        %v2573 = vpop.f32.mrf.mxu0
        %v2574 = vadd.f32 %v2525, %v2573
        %2575 = vdwg.mxu0
        %v2576 = vmax.f32 %v2537, %v2547
        %v2577 = vmax.f32 %v2539, %v2549
        %v2578 = vmax.f32 %v2542, %v2552
        %v2579 = vmax.f32 %v2544, %v2554
        %v2580 = vmax.f32 %v2576, %v2557
        %v2581 = vmax.f32 %v2577, %v2559
        %v2582 = vmax.f32 %v2578, %v2562
        %v2583 = vmax.f32 %v2579, %v2564
        %v2584 = vmax.f32 %v2580, %v2567
        %v2585 = vmax.f32 %v2581, %v2569
        %v2586 = vmax.f32 %v2582, %v2572
        %v2587 = vmax.f32 %v2583, %v2574
        %v2588 = vld [vmem:[%s1] sm:$0x1]
        %v2590 = vperm.slane %v2588, 0
        %v2592 = vadd.f32 %v2584, %v2590
        %v2593 = vadd.f32 %v2585, %v2590
        %v2594 = vadd.f32 %v2586, %v2590
        %v2595 = vadd.f32 %v2587, %v2590
        %v2596 = vmax.f32 %v2592, 0.0
        %v2597 = vmax.f32 %v2593, 0.0
        %v2598 = vmax.f32 %v2594, 0.0
        %v2599 = vmax.f32 %v2595, 0.0
        %v2600 = vpack.c.bf16 %v2596, %v2596
        %v2601 = vpack.c.bf16 %v2597, %v2597
        %v2602 = vpack.c.bf16 %v2598, %v2598
        %v2603 = vpack.c.bf16 %v2599, %v2599
        %vm2604 = vcmask 125952
        %2605 = vst.msk [vmem:[%s441] sm:$0xf] %vm2604, %v2600
        %2606 = vst.msk [vmem:[%s441 + $0x4] sm:$0xf] %vm2604, %v2601
        %2607 = vst.msk [vmem:[%s441 + $0x8] sm:$0xf] %vm2604, %v2602
        %2608 = vst.msk [vmem:[%s441 + $0xc] sm:$0xf] %vm2604, %v2603
        %s2609 = sand.u32 %s204, 1
        %s2610 = sand.u32 %s204, 1
        %s2611 = smul.addr %s2610, 16
        %s2612 = scalar_lea.vmem [#allocation22], %s2611
        // Predicated region
        $region45: #{net_forward.7} parent=43 // pred_check
          %p2613 = pneg %p214
        $region46: #{net_forward.7} parent=43 // pred_check_branch
          %2615 = sbr.rel (%p2613) target = $region48
        $region47: #{net_forward.7} parent=43 // pred_region
          %s2616 = smul.u32 4, %s38
          %s2617 = ssub.s32 7, %s2616
          %p2618 = scmp.lt.s32.totalorder %s2617, 4
          %s2619 = scalar_select %p2618, %s2617, 4
          %s2620 = smul.u32 4, %s2619
          %p2621 = scmp.ne.s32.totalorder 0, %s2620
          %s2622 = smul.addr %s2616, 4
          %s2623 = scalar_lea.vmem %s7, %s2622
          // Predicated region
          $region49: #{net_forward.7} parent=47 // pred_check
            %p2624 = pneg %p2621
          $region50: #{net_forward.7} parent=47 // pred_check_branch
            %2626 = sbr.rel (%p2624) target = $region52
          $region51: #{net_forward.7} parent=47 // pred_region
            // Predicated region
            $region53: #{net_forward.7} parent=51 // pred_check
              _
            $region54: #{net_forward.7} parent=51 // pred_check_branch
              %2628 = sbr.rel target = $region56
            $region55: #{net_forward.7} parent=51 // pred_region
              // Predicated region
              $region75: #{net_forward.7} parent=55 // pred_check
                _
              $region76: #{net_forward.7} parent=55 // pred_check_branch
                %2684 = sbr.rel (0) target = $region78
              $region77: #{net_forward.7} parent=55 // pred_region
                %s2686 = ssub.s32 16, 1
                %s2687 = sshrl.u32 %s2619, 2
                // While loop
                $region79: #{net_forward.7} parent=77 // loop_pre_header
                  _
                $region80: #{net_forward.7} parent=77 // loop_header
                  %s2689 = sphi 0, %s2691
                  %p2690 = scmp.ge.s32.totalorder %s2689, %s2687
                  %s2694 = sphi 0, %s2707
                  %s2695 = sphi %s2612, %s2710
                  %s2696 = sphi %s2623, %s2711
                $region81: #{net_forward.7} parent=77 // loop_header_branch
                  %2693 = sbr.rel (%p2690) target = $region85
                $region82: #{net_forward.7} parent=77 // loop_body
                  %v2697 = vld [vmem:[%s2695] sm:%s2686]
                  %2698 = vst [vmem:[%s2696] sm:%s2686] %v2697
                  %v2699 = vld [vmem:[%s2695 + $0x4] sm:%s2686]
                  %2700 = vst [vmem:[%s2696 + $0x4] sm:%s2686] %v2699
                  %v2701 = vld [vmem:[%s2695 + $0x8] sm:%s2686]
                  %2702 = vst [vmem:[%s2696 + $0x8] sm:%s2686] %v2701
                  %v2703 = vld [vmem:[%s2695 + $0xc] sm:%s2686]
                  %2704 = vst [vmem:[%s2696 + $0xc] sm:%s2686] %v2703
                  %s2705 = sadd.s32 1, %s2694
                  %p2706 = scmp.ge.s32.totalorder %s2705, %s2687
                  %s2707 = scalar_select %p2706, 0, %s2705
                  %s2708 = smul.u32 %s2707, 16
                  %s2709 = smul.u32 %s2707, 16
                  %s2710 = scalar_lea.vmem %s2612, %s2708 [#allocation22]
                  %s2711 = scalar_lea.vmem %s2623, %s2709
                $region83: #{net_forward.7} parent=77 // loop_footer
                  %s2691 = sadd.s32 %s2689, 1
                $region84: #{net_forward.7} parent=77 // loop_footer_branch
                  %2688 = sbr.rel target = $region80
                $region85: #{net_forward.7} parent=77 // loop_exit
                  _
                %s2712 = sshrl.u32 %s2619, 2
                %s2713 = sand.u32 %s2619, 3
                %s2714 = smul.u32 %s2712, 4
                %s2715 = smul.u32 4, %s2714
                %s2716 = scalar_lea.vmem %s2612, %s2715 [#allocation22]
                %s2717 = smul.u32 4, %s2714
                %s2718 = scalar_lea.vmem %s2623, %s2717
                // While loop
                $region86: #{net_forward.7} parent=77 // loop_pre_header
                  _
                $region87: #{net_forward.7} parent=77 // loop_header
                  %s2720 = sphi 0, %s2722
                  %p2721 = scmp.ge.s32.totalorder %s2720, %s2713
                  %s2725 = sphi 0, %s2732
                  %s2726 = sphi %s2716, %s2735
                  %s2727 = sphi %s2718, %s2736
                $region88: #{net_forward.7} parent=77 // loop_header_branch
                  %2724 = sbr.rel (%p2721) target = $region92
                $region89: #{net_forward.7} parent=77 // loop_body
                  %v2728 = vld [vmem:[%s2726] sm:%s2686]
                  %2729 = vst [vmem:[%s2727] sm:%s2686] %v2728
                  %s2730 = sadd.s32 1, %s2725
                  %p2731 = scmp.ge.s32.totalorder %s2730, %s2713
                  %s2732 = scalar_select %p2731, 0, %s2730
                  %s2733 = smul.u32 %s2732, 4
                  %s2734 = smul.u32 %s2732, 4
                  %s2735 = scalar_lea.vmem %s2716, %s2733 [#allocation22]
                  %s2736 = scalar_lea.vmem %s2718, %s2734
                $region90: #{net_forward.7} parent=77 // loop_footer
                  %s2722 = sadd.s32 %s2720, 1
                $region91: #{net_forward.7} parent=77 // loop_footer_branch
                  %2719 = sbr.rel target = $region87
                $region92: #{net_forward.7} parent=77 // loop_exit
                  _
              $region78: #{net_forward.7} parent=55 // pred_fallthru
                _
            $region56: #{net_forward.7} parent=51 // pred_fallthru
              _
            // Predicated region
            $region57: #{net_forward.7} parent=51 // pred_check
              _
            $region58: #{net_forward.7} parent=51 // pred_check_branch
              %2630 = sbr.rel (0) target = $region60
            $region59: #{net_forward.7} parent=51 // pred_region
              %s2632 = ssub.s32 16, 1
              %s2633 = sshrl.u32 %s2619, 2
              // While loop
              $region61: #{net_forward.7} parent=59 // loop_pre_header
                _
              $region62: #{net_forward.7} parent=59 // loop_header
                %s2635 = sphi 0, %s2637
                %p2636 = scmp.ge.s32.totalorder %s2635, %s2633
                %s2640 = sphi 0, %s2653
                %s2641 = sphi %s2612, %s2656
                %s2642 = sphi %s2623, %s2657
              $region63: #{net_forward.7} parent=59 // loop_header_branch
                %2639 = sbr.rel (%p2636) target = $region67
              $region64: #{net_forward.7} parent=59 // loop_body
                %v2643 = vld [vmem:[%s2641] sm:%s2632]
                %2644 = vst [vmem:[%s2642] sm:%s2632] %v2643
                %v2645 = vld [vmem:[%s2641 + $0x4] sm:%s2632]
                %2646 = vst [vmem:[%s2642 + $0x4] sm:%s2632] %v2645
                %v2647 = vld [vmem:[%s2641 + $0x8] sm:%s2632]
                %2648 = vst [vmem:[%s2642 + $0x8] sm:%s2632] %v2647
                %v2649 = vld [vmem:[%s2641 + $0xc] sm:%s2632]
                %2650 = vst [vmem:[%s2642 + $0xc] sm:%s2632] %v2649
                %s2651 = sadd.s32 1, %s2640
                %p2652 = scmp.ge.s32.totalorder %s2651, %s2633
                %s2653 = scalar_select %p2652, 0, %s2651
                %s2654 = smul.u32 %s2653, 16
                %s2655 = smul.u32 %s2653, 16
                %s2656 = scalar_lea.vmem %s2612, %s2654 [#allocation22]
                %s2657 = scalar_lea.vmem %s2623, %s2655
              $region65: #{net_forward.7} parent=59 // loop_footer
                %s2637 = sadd.s32 %s2635, 1
              $region66: #{net_forward.7} parent=59 // loop_footer_branch
                %2634 = sbr.rel target = $region62
              $region67: #{net_forward.7} parent=59 // loop_exit
                _
              %s2658 = sshrl.u32 %s2619, 2
              %s2659 = sand.u32 %s2619, 3
              %s2660 = smul.u32 %s2658, 4
              %s2661 = smul.u32 4, %s2660
              %s2662 = scalar_lea.vmem %s2612, %s2661 [#allocation22]
              %s2663 = smul.u32 4, %s2660
              %s2664 = scalar_lea.vmem %s2623, %s2663
              // While loop
              $region68: #{net_forward.7} parent=59 // loop_pre_header
                _
              $region69: #{net_forward.7} parent=59 // loop_header
                %s2666 = sphi 0, %s2668
                %p2667 = scmp.ge.s32.totalorder %s2666, %s2659
                %s2671 = sphi 0, %s2678
                %s2672 = sphi %s2662, %s2681
                %s2673 = sphi %s2664, %s2682
              $region70: #{net_forward.7} parent=59 // loop_header_branch
                %2670 = sbr.rel (%p2667) target = $region74
              $region71: #{net_forward.7} parent=59 // loop_body
                %v2674 = vld [vmem:[%s2672] sm:%s2632]
                %2675 = vst [vmem:[%s2673] sm:%s2632] %v2674
                %s2676 = sadd.s32 1, %s2671
                %p2677 = scmp.ge.s32.totalorder %s2676, %s2659
                %s2678 = scalar_select %p2677, 0, %s2676
                %s2679 = smul.u32 %s2678, 4
                %s2680 = smul.u32 %s2678, 4
                %s2681 = scalar_lea.vmem %s2662, %s2679 [#allocation22]
                %s2682 = scalar_lea.vmem %s2664, %s2680
              $region72: #{net_forward.7} parent=59 // loop_footer
                %s2668 = sadd.s32 %s2666, 1
              $region73: #{net_forward.7} parent=59 // loop_footer_branch
                %2665 = sbr.rel target = $region69
              $region74: #{net_forward.7} parent=59 // loop_exit
                _
            $region60: #{net_forward.7} parent=51 // pred_fallthru
              _
          $region52: #{net_forward.7} parent=47 // pred_fallthru
            _
          %2737 = vnop
        $region48: #{net_forward.7} parent=43 // pred_fallthru
          _
      $region44: #{net_forward.7} parent=5 // pred_fallthru
        _
      %p2738 = scmp.le.s32.totalorder 2, %s33
      // Predicated region
      $region93: #{net_forward.7} parent=5 // pred_check
        %p2739 = pneg %p2738
      $region94: #{net_forward.7} parent=5 // pred_check_branch
        %2741 = sbr.rel (%p2739) target = $region96
      $region95: #{net_forward.7} parent=5 // pred_region
        %s2742 = ssub.s32 %s33, 2
        // Predicated region
        $region97: #{net_forward.7} parent=95 // pred_check
          %p2743 = pneg %p220
        $region98: #{net_forward.7} parent=95 // pred_check_branch
          %2745 = sbr.rel (%p2743) target = $region100
        $region99: #{net_forward.7} parent=95 // pred_region
          %s2746 = sand.u32 %s205, 1
          %s2747 = sand.u32 %s205, 1
          %s2748 = smul.addr %s2747, 16
          %s2749 = scalar_lea.vmem [#allocation22], %s2748
        $region100: #{net_forward.7} parent=95 // pred_fallthru
          _
      $region96: #{net_forward.7} parent=5 // pred_fallthru
        _
    $region6: #{net_forward.7} parent=1 // loop_footer
      %s37 = sadd.s32 1, %s33
    $region7: #{net_forward.7} parent=1 // loop_footer_branch
      %32 = sbr.rel target = $region3
    $region8: #{net_forward.7} parent=1 // loop_exit
      _

// kernel: net_forward.5
$region0: #{net_forward.5}
  #allocation0 [shape = 'u32[]', space=smem, size = 0x4, offset = 0x4, fixed_abs, tag = 'smem constant byte address 0x4 - core index']
  #allocation1 [shape = 'u32[72,128]{1,0:T(1,128)}', space=vmem, size = 0x9000, scoped, tag = 'internal scratch']
  %s0 = inlined_call_operand.vmem [shape: bf16[2,400], index: 0, kind: input, shape index: {}]
  %s1 = inlined_call_operand.vmem [shape: bf16[400,128], index: 1, kind: input, shape index: {}]
  %s2 = inlined_call_operand.vmem [shape: f32[1,128], index: 2, kind: input, shape index: {}]
  %s3 = inlined_call_operand.vmem [shape: bf16[128,128], index: 3, kind: input, shape index: {}]
  %s4 = inlined_call_operand.vmem [shape: f32[1,128], index: 4, kind: input, shape index: {}]
  %s5 = inlined_call_operand.vmem [shape: bf16[128,128], index: 5, kind: input, shape index: {}]
  %s6 = inlined_call_operand.vmem [shape: f32[1,128], index: 6, kind: input, shape index: {}]
  %s7 = inlined_call_operand.hbm [shape: f32[2,128], index: 7, kind: output, shape index: {}]
  %s8 = sld [smem:[#allocation0]]
  $region38: #{net_forward.5} parent=0
    _
  %s10 = ssub.s32 1, %s8
  %s11 = scalar_select 0, %s10, %s8
  $region1: #{net_forward.5} parent=0
    #allocation2 [shape = 'u8[1024]{0}', space=vmem, size = 0x400, scoped, tag = 'output window, operand 0, single buffered']
    #allocation3 [shape = 's32[1]{0}', space=sflag, size = 0x4, scoped, tag = 'scoped memory for net_forward.5']
    %12 = vsyncpa [#allocation3], 0
    // Predicated region
    $region2: #{net_forward.5} parent=1 // pred_check
      _
    $region3: #{net_forward.5} parent=1 // pred_check_branch
      %14 = sbr.rel (0) target = $region5
    $region4: #{net_forward.5} parent=1 // pred_region
      _
    $region5: #{net_forward.5} parent=1 // pred_fallthru
      _
    // Predicated region
    $region6: #{net_forward.5} parent=1 // pred_check
      _
    $region7: #{net_forward.5} parent=1 // pred_check_branch
      %16 = sbr.rel (0) target = $region9
    $region8: #{net_forward.5} parent=1 // pred_region
      _
    $region9: #{net_forward.5} parent=1 // pred_fallthru
      _
    // Predicated region
    $region10: #{net_forward.5} parent=1 // pred_check
      _
    $region11: #{net_forward.5} parent=1 // pred_check_branch
      %18 = sbr.rel (0) target = $region13
    $region12: #{net_forward.5} parent=1 // pred_region
      _
    $region13: #{net_forward.5} parent=1 // pred_fallthru
      _
    // Predicated region
    $region14: #{net_forward.5} parent=1 // pred_check
      _
    $region15: #{net_forward.5} parent=1 // pred_check_branch
      %20 = sbr.rel (0) target = $region17
    $region16: #{net_forward.5} parent=1 // pred_region
      _
    $region17: #{net_forward.5} parent=1 // pred_fallthru
      _
    // Predicated region
    $region18: #{net_forward.5} parent=1 // pred_check
      _
    $region19: #{net_forward.5} parent=1 // pred_check_branch
      %22 = sbr.rel (0) target = $region21
    $region20: #{net_forward.5} parent=1 // pred_region
      _
    $region21: #{net_forward.5} parent=1 // pred_fallthru
      _
    // Predicated region
    $region22: #{net_forward.5} parent=1 // pred_check
      _
    $region23: #{net_forward.5} parent=1 // pred_check_branch
      %24 = sbr.rel (0) target = $region25
    $region24: #{net_forward.5} parent=1 // pred_region
      _
    $region25: #{net_forward.5} parent=1 // pred_fallthru
      _
    // Predicated region
    $region26: #{net_forward.5} parent=1 // pred_check
      _
    $region27: #{net_forward.5} parent=1 // pred_check_branch
      %26 = sbr.rel (0) target = $region29
    $region28: #{net_forward.5} parent=1 // pred_region
      _
    $region29: #{net_forward.5} parent=1 // pred_fallthru
      _
    %v28 = vld [vmem:[%s0] sm:$0xf]
    %v29 = vld [vmem:[%s1] sm:$0xf]
    %v30 = vld [vmem:[%s1 + $0x4] sm:$0xf]
    %v31 = vld [vmem:[%s1 + $0x8] sm:$0xf]
    %v32 = vld [vmem:[%s1 + $0xc] sm:$0xf]
    %v33 = vld [vmem:[%s1 + $0x10] sm:$0xf]
    %v34 = vld [vmem:[%s1 + $0x14] sm:$0xf]
    %v35 = vld [vmem:[%s1 + $0x18] sm:$0xf]
    %v36 = vld [vmem:[%s1 + $0x1c] sm:$0xf]
    %v37 = vld [vmem:[%s1 + $0x20] sm:$0xf]
    %v38 = vld [vmem:[%s1 + $0x24] sm:$0xf]
    %v39 = vld [vmem:[%s1 + $0x28] sm:$0xf]
    %v40 = vld [vmem:[%s1 + $0x2c] sm:$0xf]
    %v41 = vld [vmem:[%s1 + $0x30] sm:$0xf]
    %v42 = vld [vmem:[%s1 + $0x34] sm:$0xf]
    %v43 = vld [vmem:[%s1 + $0x38] sm:$0xf]
    %v44 = vld [vmem:[%s1 + $0x3c] sm:$0xf]
    %v45 = vld [vmem:[%s1 + $0x40] sm:$0xf]
    %v46 = vld [vmem:[%s1 + $0x44] sm:$0xf]
    %v47 = vld [vmem:[%s1 + $0x48] sm:$0xf]
    %v48 = vld [vmem:[%s1 + $0x4c] sm:$0xf]
    %v49 = vld [vmem:[%s1 + $0x50] sm:$0xf]
    %v50 = vld [vmem:[%s1 + $0x54] sm:$0xf]
    %v51 = vld [vmem:[%s1 + $0x58] sm:$0xf]
    %v52 = vld [vmem:[%s1 + $0x5c] sm:$0xf]
    %v53 = vld [vmem:[%s1 + $0x60] sm:$0xf]
    %v54 = vld [vmem:[%s1 + $0x64] sm:$0xf]
    %v55 = vld [vmem:[%s1 + $0x68] sm:$0xf]
    %v56 = vld [vmem:[%s1 + $0x6c] sm:$0xf]
    %v57 = vld [vmem:[%s1 + $0x70] sm:$0xf]
    %v58 = vld [vmem:[%s1 + $0x74] sm:$0xf]
    %v59 = vld [vmem:[%s1 + $0x78] sm:$0xf]
    %v60 = vld [vmem:[%s1 + $0x7c] sm:$0xf]
    %v61 = vld [vmem:[%s1 + $0x80] sm:$0xf]
    %v62 = vld [vmem:[%s1 + $0x84] sm:$0xf]
    %v63 = vld [vmem:[%s1 + $0x88] sm:$0xf]
    %v64 = vld [vmem:[%s1 + $0x8c] sm:$0xf]
    %v65 = vld [vmem:[%s1 + $0x90] sm:$0xf]
    %v66 = vld [vmem:[%s1 + $0x94] sm:$0xf]
    %v67 = vld [vmem:[%s1 + $0x98] sm:$0xf]
    %v68 = vld [vmem:[%s1 + $0x9c] sm:$0xf]
    %v69 = vld [vmem:[%s1 + $0xa0] sm:$0xf]
    %v70 = vld [vmem:[%s1 + $0xa4] sm:$0xf]
    %v71 = vld [vmem:[%s1 + $0xa8] sm:$0xf]
    %v72 = vld [vmem:[%s1 + $0xac] sm:$0xf]
    %v73 = vld [vmem:[%s1 + $0xb0] sm:$0xf]
    %v74 = vld [vmem:[%s1 + $0xb4] sm:$0xf]
    %v75 = vld [vmem:[%s1 + $0xb8] sm:$0xf]
    %v76 = vld [vmem:[%s1 + $0xbc] sm:$0xf]
    %v77 = vld [vmem:[%s1 + $0xc0] sm:$0xf]
    %v78 = vld [vmem:[%s1 + $0xc4] sm:$0xf]
    %v79 = vld [vmem:[%s2] sm:$0x1]
    %v81 = vperm.slane %v79, 0
    %84 = vst [vmem:[#allocation1] ss:$9 sm:$0xff] %v28
    %v85 = vld [vmem:[#allocation1] sm:$0xff]
    %v86 = vld [vmem:[#allocation1 + $0x9] sm:$0xff]
    %v87 = vld [vmem:[#allocation1 + $0x12] sm:$0xff]
    %v88 = vld [vmem:[#allocation1 + $0x1b] sm:$0xff]
    %v142 = vunpack.c.l.b16 %v29
    %v143 = vunpack.c.l.b16 %v30
    %v144 = vunpack.c.l.b16 %v31
    %v145 = vunpack.c.l.b16 %v32
    %v146 = vunpack.c.l.b16 %v33
    %v147 = vunpack.c.l.b16 %v34
    %v148 = vunpack.c.l.b16 %v35
    %v149 = vunpack.c.l.b16 %v36
    %v150 = vunpack.c.l.b16 %v37
    %v151 = vunpack.c.l.b16 %v38
    %v152 = vunpack.c.l.b16 %v39
    %v153 = vunpack.c.l.b16 %v40
    %v154 = vunpack.c.l.b16 %v41
    %v155 = vunpack.c.l.b16 %v42
    %v156 = vunpack.c.l.b16 %v43
    %v157 = vunpack.c.l.b16 %v44
    %v158 = vunpack.c.l.b16 %v45
    %v159 = vunpack.c.l.b16 %v46
    %v160 = vunpack.c.l.b16 %v47
    %v161 = vunpack.c.l.b16 %v48
    %v162 = vunpack.c.l.b16 %v49
    %v163 = vunpack.c.l.b16 %v50
    %v164 = vunpack.c.l.b16 %v51
    %v165 = vunpack.c.l.b16 %v52
    %v166 = vunpack.c.l.b16 %v53
    %v167 = vunpack.c.l.b16 %v54
    %v168 = vunpack.c.l.b16 %v55
    %v169 = vunpack.c.l.b16 %v56
    %v170 = vunpack.c.l.b16 %v57
    %v171 = vunpack.c.l.b16 %v58
    %v172 = vunpack.c.l.b16 %v59
    %v173 = vunpack.c.l.b16 %v60
    %v174 = vunpack.c.l.b16 %v61
    %v175 = vunpack.c.l.b16 %v62
    %v176 = vunpack.c.l.b16 %v63
    %v177 = vunpack.c.l.b16 %v64
    %v178 = vunpack.c.l.b16 %v65
    %v179 = vunpack.c.l.b16 %v66
    %v180 = vunpack.c.l.b16 %v67
    %v181 = vunpack.c.l.b16 %v68
    %v182 = vunpack.c.l.b16 %v69
    %v183 = vunpack.c.l.b16 %v70
    %v184 = vunpack.c.l.b16 %v71
    %v185 = vunpack.c.l.b16 %v72
    %v186 = vunpack.c.l.b16 %v73
    %v187 = vunpack.c.l.b16 %v74
    %v188 = vunpack.c.l.b16 %v75
    %v189 = vunpack.c.l.b16 %v76
    %v190 = vunpack.c.l.b16 %v77
    %v191 = vunpack.c.l.b16 %v78
    %v192 = vpack.c.b16 %v143, %v142
    %v193 = vpack.c.b16 %v145, %v144
    %v194 = vpack.c.b16 %v147, %v146
    %v195 = vpack.c.b16 %v149, %v148
    %v196 = vpack.c.b16 %v151, %v150
    %v197 = vpack.c.b16 %v153, %v152
    %v198 = vpack.c.b16 %v155, %v154
    %v199 = vpack.c.b16 %v157, %v156
    %v200 = vpack.c.b16 %v159, %v158
    %v201 = vpack.c.b16 %v161, %v160
    %v202 = vpack.c.b16 %v163, %v162
    %v203 = vpack.c.b16 %v165, %v164
    %v204 = vpack.c.b16 %v167, %v166
    %v205 = vpack.c.b16 %v169, %v168
    %v206 = vpack.c.b16 %v171, %v170
    %v207 = vpack.c.b16 %v173, %v172
    %v208 = vpack.c.b16 %v175, %v174
    %v209 = vpack.c.b16 %v177, %v176
    %v210 = vpack.c.b16 %v179, %v178
    %v211 = vpack.c.b16 %v181, %v180
    %v212 = vpack.c.b16 %v183, %v182
    %v213 = vpack.c.b16 %v185, %v184
    %v214 = vpack.c.b16 %v187, %v186
    %v215 = vpack.c.b16 %v189, %v188
    %v216 = vpack.c.b16 %v191, %v190
    %vm242 = vcmask 130048
    %v243 = vsel %vm242, %v88, 0
    %245 = vmatpush.bf16.msra.mxu0 %v199
    %246 = vmatpush.bf16.msra.mxu0 %v198
    %247 = vmatpush.bf16.msra.mxu0 %v197
    %248 = vmatpush.bf16.msra.mxu0 %v196
    %249 = vmatpush.bf16.msra.mxu0 %v195
    %250 = vmatpush.bf16.msra.mxu0 %v194
    %251 = vmatpush.bf16.msra.mxu0 %v193
    %252 = vmatpush.bf16.msra.mxu0 %v192
    %253 = vmatmul.bf16.gmra.mxu0 %v85
    %v254 = vpop.f32.mrf.mxu0
    %v255 = vadd.f32 %v81, %v254
    %v256 = vpop.f32.mrf.mxu0
    %257 = vdwg.mxu0
    %258 = vmatpush.bf16.msra.mxu0 %v207
    %259 = vmatpush.bf16.msra.mxu0 %v206
    %260 = vmatpush.bf16.msra.mxu0 %v205
    %261 = vmatpush.bf16.msra.mxu0 %v204
    %262 = vmatpush.bf16.msra.mxu0 %v203
    %263 = vmatpush.bf16.msra.mxu0 %v202
    %264 = vmatpush.bf16.msra.mxu0 %v201
    %265 = vmatpush.bf16.msra.mxu0 %v200
    %266 = vmatmul.bf16.gmra.mxu0 %v86
    %v267 = vpop.f32.mrf.mxu0
    %v268 = vadd.f32 %v255, %v267
    %v269 = vpop.f32.mrf.mxu0
    %270 = vdwg.mxu0
    %271 = vmatpush.bf16.msra.mxu0 %v215
    %272 = vmatpush.bf16.msra.mxu0 %v214
    %273 = vmatpush.bf16.msra.mxu0 %v213
    %274 = vmatpush.bf16.msra.mxu0 %v212
    %275 = vmatpush.bf16.msra.mxu0 %v211
    %276 = vmatpush.bf16.msra.mxu0 %v210
    %277 = vmatpush.bf16.msra.mxu0 %v209
    %278 = vmatpush.bf16.msra.mxu0 %v208
    %279 = vmatmul.bf16.gmra.mxu0 %v87
    %v280 = vpop.f32.mrf.mxu0
    %v281 = vadd.f32 %v268, %v280
    %v282 = vpop.f32.mrf.mxu0
    %283 = vdwg.mxu0
    %284 = vmatpush.bf16.msra.mxu0 0
    %285 = vmatpush.bf16.msra.mxu0 0
    %286 = vmatpush.bf16.msra.mxu0 0
    %287 = vmatpush.bf16.msra.mxu0 0
    %288 = vmatpush.bf16.msra.mxu0 0
    %289 = vmatpush.bf16.msra.mxu0 0
    %290 = vmatpush.bf16.msra.mxu0 0
    %291 = vmatpush.bf16.msra.mxu0 %v216
    %292 = vmatmul.bf16.gmra.mxu0 %v243
    %v293 = vpop.f32.mrf.mxu0
    %v294 = vadd.f32 %v281, %v293
    %v295 = vpop.f32.mrf.mxu0
    %296 = vdwg.mxu0
    %v297 = vmax.f32 %v294, 0.0
    %v298 = vpack.c.bf16 %v297, %v297
    %v299 = vld [vmem:[%s3] sm:$0xf]
    %v300 = vld [vmem:[%s3 + $0x4] sm:$0xf]
    %v301 = vld [vmem:[%s3 + $0x8] sm:$0xf]
    %v302 = vld [vmem:[%s3 + $0xc] sm:$0xf]
    %v303 = vld [vmem:[%s3 + $0x10] sm:$0xf]
    %v304 = vld [vmem:[%s3 + $0x14] sm:$0xf]
    %v305 = vld [vmem:[%s3 + $0x18] sm:$0xf]
    %v306 = vld [vmem:[%s3 + $0x1c] sm:$0xf]
    %v307 = vld [vmem:[%s3 + $0x20] sm:$0xf]
    %v308 = vld [vmem:[%s3 + $0x24] sm:$0xf]
    %v309 = vld [vmem:[%s3 + $0x28] sm:$0xf]
    %v310 = vld [vmem:[%s3 + $0x2c] sm:$0xf]
    %v311 = vld [vmem:[%s3 + $0x30] sm:$0xf]
    %v312 = vld [vmem:[%s3 + $0x34] sm:$0xf]
    %v313 = vld [vmem:[%s3 + $0x38] sm:$0xf]
    %v314 = vld [vmem:[%s3 + $0x3c] sm:$0xf]
    %v315 = vld [vmem:[%s4] sm:$0x1]
    %v317 = vperm.slane %v315, 0
    %v335 = vunpack.c.l.b16 %v299
    %v336 = vunpack.c.l.b16 %v300
    %v337 = vunpack.c.l.b16 %v301
    %v338 = vunpack.c.l.b16 %v302
    %v339 = vunpack.c.l.b16 %v303
    %v340 = vunpack.c.l.b16 %v304
    %v341 = vunpack.c.l.b16 %v305
    %v342 = vunpack.c.l.b16 %v306
    %v343 = vunpack.c.l.b16 %v307
    %v344 = vunpack.c.l.b16 %v308
    %v345 = vunpack.c.l.b16 %v309
    %v346 = vunpack.c.l.b16 %v310
    %v347 = vunpack.c.l.b16 %v311
    %v348 = vunpack.c.l.b16 %v312
    %v349 = vunpack.c.l.b16 %v313
    %v350 = vunpack.c.l.b16 %v314
    %v351 = vpack.c.b16 %v336, %v335
    %v352 = vpack.c.b16 %v338, %v337
    %v353 = vpack.c.b16 %v340, %v339
    %v354 = vpack.c.b16 %v342, %v341
    %v355 = vpack.c.b16 %v344, %v343
    %v356 = vpack.c.b16 %v346, %v345
    %v357 = vpack.c.b16 %v348, %v347
    %v358 = vpack.c.b16 %v350, %v349
    %367 = vmatpush.bf16.msra.mxu0 %v358
    %368 = vmatpush.bf16.msra.mxu0 %v357
    %369 = vmatpush.bf16.msra.mxu0 %v356
    %370 = vmatpush.bf16.msra.mxu0 %v355
    %371 = vmatpush.bf16.msra.mxu0 %v354
    %372 = vmatpush.bf16.msra.mxu0 %v353
    %373 = vmatpush.bf16.msra.mxu0 %v352
    %374 = vmatpush.bf16.msra.mxu0 %v351
    %375 = vmatmul.bf16.gmra.mxu0 %v298
    %v376 = vpop.f32.mrf.mxu0
    %v377 = vadd.f32 %v317, %v376
    %v378 = vpop.f32.mrf.mxu0
    %379 = vdwg.mxu0
    %v380 = vmax.f32 %v377, 0.0
    %v381 = vpack.c.bf16 %v380, %v380
    %v382 = vld [vmem:[%s5] sm:$0xf]
    %v383 = vld [vmem:[%s5 + $0x4] sm:$0xf]
    %v384 = vld [vmem:[%s5 + $0x8] sm:$0xf]
    %v385 = vld [vmem:[%s5 + $0xc] sm:$0xf]
    %v386 = vld [vmem:[%s5 + $0x10] sm:$0xf]
    %v387 = vld [vmem:[%s5 + $0x14] sm:$0xf]
    %v388 = vld [vmem:[%s5 + $0x18] sm:$0xf]
    %v389 = vld [vmem:[%s5 + $0x1c] sm:$0xf]
    %v390 = vld [vmem:[%s5 + $0x20] sm:$0xf]
    %v391 = vld [vmem:[%s5 + $0x24] sm:$0xf]
    %v392 = vld [vmem:[%s5 + $0x28] sm:$0xf]
    %v393 = vld [vmem:[%s5 + $0x2c] sm:$0xf]
    %v394 = vld [vmem:[%s5 + $0x30] sm:$0xf]
    %v395 = vld [vmem:[%s5 + $0x34] sm:$0xf]
    %v396 = vld [vmem:[%s5 + $0x38] sm:$0xf]
    %v397 = vld [vmem:[%s5 + $0x3c] sm:$0xf]
    %v398 = vld [vmem:[%s6] sm:$0x1]
    %v400 = vperm.slane %v398, 0
    %v418 = vunpack.c.l.b16 %v382
    %v419 = vunpack.c.l.b16 %v383
    %v420 = vunpack.c.l.b16 %v384
    %v421 = vunpack.c.l.b16 %v385
    %v422 = vunpack.c.l.b16 %v386
    %v423 = vunpack.c.l.b16 %v387
    %v424 = vunpack.c.l.b16 %v388
    %v425 = vunpack.c.l.b16 %v389
    %v426 = vunpack.c.l.b16 %v390
    %v427 = vunpack.c.l.b16 %v391
    %v428 = vunpack.c.l.b16 %v392
    %v429 = vunpack.c.l.b16 %v393
    %v430 = vunpack.c.l.b16 %v394
    %v431 = vunpack.c.l.b16 %v395
    %v432 = vunpack.c.l.b16 %v396
    %v433 = vunpack.c.l.b16 %v397
    %v434 = vpack.c.b16 %v419, %v418
    %v435 = vpack.c.b16 %v421, %v420
    %v436 = vpack.c.b16 %v423, %v422
    %v437 = vpack.c.b16 %v425, %v424
    %v438 = vpack.c.b16 %v427, %v426
    %v439 = vpack.c.b16 %v429, %v428
    %v440 = vpack.c.b16 %v431, %v430
    %v441 = vpack.c.b16 %v433, %v432
    %450 = vmatpush.bf16.msra.mxu0 %v441
    %451 = vmatpush.bf16.msra.mxu0 %v440
    %452 = vmatpush.bf16.msra.mxu0 %v439
    %453 = vmatpush.bf16.msra.mxu0 %v438
    %454 = vmatpush.bf16.msra.mxu0 %v437
    %455 = vmatpush.bf16.msra.mxu0 %v436
    %456 = vmatpush.bf16.msra.mxu0 %v435
    %457 = vmatpush.bf16.msra.mxu0 %v434
    %458 = vmatmul.bf16.gmra.mxu0 %v381
    %v459 = vpop.f32.mrf.mxu0
    %v460 = vadd.f32 %v400, %v459
    %v461 = vpop.f32.mrf.mxu0
    %462 = vdwg.mxu0
    %463 = vst [vmem:[#allocation2] sm:$0x3] %v460
    // Predicated region
    $region30: #{net_forward.5} parent=1 // pred_check
      _
    $region31: #{net_forward.5} parent=1 // pred_check_branch
      %465 = sbr.rel (0) target = $region33
    $region32: #{net_forward.5} parent=1 // pred_region
      %467 = vsyncadd [#allocation3], 0
      %s469 = sshll.u32 [#allocation2], 4
      %s470 = int_to_ptr.vmem [resolvable:$true] %s469
      %s471 = sshll.u32 %s7, 4
      %s472 = int_to_ptr.hbm [resolvable:$true] %s471
      %474 = dma.vmem_to_hbm [thread:$0]  %s470, 32, %s472, [#allocation3]
    $region33: #{net_forward.5} parent=1 // pred_fallthru
      _
    // Predicated region
    $region34: #{net_forward.5} parent=1 // pred_check
      _
    $region35: #{net_forward.5} parent=1 // pred_check_branch
      %476 = sbr.rel (0) target = $region37
    $region36: #{net_forward.5} parent=1 // pred_region
      %478 = dma.done [#allocation3], 32
    $region37: #{net_forward.5} parent=1 // pred_fallthru
      _
    %479 = vsyncpa [#allocation3], 1

</llo_original>
